<compile_context>
chip_gen: v7x
topology: tpu7x:2x2x1
jax: 0.10.0
libtpu: 0.0.40
codegen_flags: <defaults>
</compile_context>

<pallas_src>
import functools

import jax
import jax.numpy as jnp
from jax.experimental import pallas as pl
from jax.experimental.pallas import tpu as pltpu


def _round_up(x, m):
    return ((x + m - 1) // m) * m


def _fused_cnn_kernel(x_ref, w0_ref, wm_ref, wl_ref, b_ref, mask_ref, o_ref,
                      act_ref, patch_ref, *, H, W, C, CIN, COUT, L,
                      AOFF, PPAD, AW):
    """Fused L-layer 3x3 'same' conv stack for one batch element.

    Layouts (channels on sublanes, flattened padded spatial on lanes):
      x_ref:    (1, CIN, PPAD)   input, CIN=8 (2 real channels + zero pad),
                                 PPAD = lane-padded (H+2)*(W+2)
      w0_ref:   (C, 9*CIN)       layer-0 weights, w0[co, (dy*3+dx)*CIN + ci]
      wm_ref:   (L-2, C, 9*C)    hidden-layer weights (same K layout)
      wl_ref:   (COUT, 9*C)      last-layer weights (COUT=8, only 2 real)
      b_ref:    (L, C, 1)        biases (zero-padded)
      mask_ref: (1, PPAD)        1.0 on interior pixels, 0.0 on halo / lane pad
      o_ref:    (1, COUT, PPAD)  last-layer output
      act_ref:  (C, AW)   VMEM   resident activation; valid = [AOFF, AOFF+PPAD)
      patch_ref:(9*C, PPAD) VMEM full per-layer im2col block (K <= 9*C rows)
    """
    WP = W + 2

    # Re-initialize ONLY the margin columns each grid step (the valid region
    # is fully overwritten below / by each layer's masked writeback).  Margins
    # must be zero so the shifted 3x3 tap windows never read junk (NaN) that
    # could survive the interior mask.
    act_ref[:, 0:AOFF] = jnp.zeros((C, AOFF), jnp.float32)
    act_ref[:, AOFF + PPAD:AW] = jnp.zeros((C, AW - AOFF - PPAD), jnp.float32)

    # Place the input.  Only the first CIN rows are written; layer 0 never
    # reads rows >= CIN, and they are overwritten by layer 0's output.
    act_ref[:CIN, AOFF:AOFF + PPAD] = x_ref[0]

    mask = mask_ref[...]                                       # (1, PPAD)

    def conv(cin, w, bias):
        # Build the full 9*cin-row im2col patch with 9 static-lane-offset
        # copies straight from the resident activation ref, then issue ONE
        # K = 9*cin matmul for the whole layer.
        for dy in range(3):
            for dx in range(3):
                s = AOFF + (dy - 1) * WP + (dx - 1)            # static offsets
                k = (dy * 3 + dx) * cin
                patch_ref[k:k + cin, :] = act_ref[:cin, s:s + PPAD]
        acc = jnp.dot(w, patch_ref[:9 * cin, :],
                      preferred_element_type=jnp.float32)
        return acc + bias                                      # (cout, PPAD)

    # ---- Layer 0: CIN input channels -> K = 9*CIN (= 72) -------------------
    a = conv(CIN, w0_ref[...], b_ref[0])
    act_ref[:, AOFF:AOFF + PPAD] = jnp.maximum(a, 0.0) * mask

    # ---- Hidden layers: K = 9*C (= 288) -------------------------------------
    for l in range(L - 2):                                     # static unroll
        a = conv(C, wm_ref[l], b_ref[l + 1])
        act_ref[:, AOFF:AOFF + PPAD] = jnp.maximum(a, 0.0) * mask

    # ---- Last layer: COUT output rows, no ReLU ------------------------------
    # (halo / lane-pad columns are discarded by the host-side slice).
    a = conv(C, wl_ref[...], b_ref[L - 1][:COUT, :])
    o_ref[0] = a.astype(o_ref.dtype)


def _prep_operands(params, C, CIN, COUT, PPAD, H, W):
    """Zero-pad and reshape weights/biases to the flipped uniform layout."""
    P = (H + 2) * (W + 2)
    L = len(params)

    def flip(w, cin_pad, cout_pad):
        # (3,3,cin,cout) -> pad -> (cout_pad,3,3,cin_pad) -> (cout_pad, 9*cin_pad)
        cin, cout = w.shape[2], w.shape[3]
        w_p = jnp.pad(w, ((0, 0), (0, 0), (0, cin_pad - cin),
                          (0, cout_pad - cout)))
        return jnp.transpose(w_p, (3, 0, 1, 2)).reshape(cout_pad, 9 * cin_pad)

    w0 = flip(params[0][0], CIN, C).astype(jnp.float32)          # (C, 9*CIN)
    wm = jnp.stack([flip(w, C, C) for w, _ in params[1:L - 1]]
                   ).astype(jnp.float32)                         # (L-2, C, 9C)
    wl = flip(params[L - 1][0], C, COUT).astype(jnp.float32)     # (COUT, 9C)

    bk = jnp.stack([jnp.pad(b, (0, C - b.shape[0])) for _, b in params]
                   ).astype(jnp.float32)[:, :, None]             # (L, C, 1)

    r = jnp.arange(H + 2)
    c = jnp.arange(W + 2)
    interior = ((r[:, None] >= 1) & (r[:, None] <= H)
                & (c[None, :] >= 1) & (c[None, :] <= W))
    mask = jnp.pad(interior.astype(jnp.float32).reshape(1, P),
                   ((0, 0), (0, PPAD - P)))                      # (1, PPAD)
    return w0, wm, wl, bk, mask


@jax.jit
def spectral_operator_cnn_forward(x_nchw, params):
    """Forward pass. Input/output are NCHW float32 (matches PyTorch)."""
    N, cin0, H, W = x_nchw.shape
    C = params[0][0].shape[3]                  # hidden channel count
    c_out = params[-1][0].shape[3]             # final output channels (2)
    L = len(params)
    assert L >= 3, "expected first + >=1 hidden + last conv layers"

    P = (H + 2) * (W + 2)
    PPAD = _round_up(P, 128)                   # lane-dense working width (384)
    CIN = _round_up(cin0, 8)                   # one sublane tile of input (8)
    COUT = _round_up(c_out, 8)                 # one sublane tile of output (8)
    AOFF = 128                                 # aligned start of valid region
    AW = AOFF + PPAD + 128                     # + left/right zero margins
    assert AOFF >= W + 3 and AW - AOFF - PPAD >= W + 3

    # NCHW in -> channel pad to CIN, 1-pixel spatial halo, flatten spatial,
    # lane-pad to PPAD.  No transposes needed at all.
    x_prep = jnp.pad(x_nchw.astype(jnp.float32),
                     ((0, 0), (0, CIN - cin0), (1, 1), (1, 1)))
    x_prep = jnp.pad(x_prep.reshape(N, CIN, P),
                     ((0, 0), (0, 0), (0, PPAD - P)))            # (N, CIN, PPAD)

    w0, wm, wl, bk, mask = _prep_operands(params, C, CIN, COUT, PPAD, H, W)

    kernel = functools.partial(_fused_cnn_kernel, H=H, W=W, C=C, CIN=CIN,
                               COUT=COUT, L=L, AOFF=AOFF, PPAD=PPAD, AW=AW)
    out = pl.pallas_call(
        kernel,
        out_shape=jax.ShapeDtypeStruct((N, COUT, PPAD), jnp.float32),
        grid_spec=pltpu.PrefetchScalarGridSpec(
            num_scalar_prefetch=0,
            grid=(N,),
            in_specs=[
                pl.BlockSpec((1, CIN, PPAD), lambda n: (n, 0, 0)),     # input
                pl.BlockSpec((C, 9 * CIN), lambda n: (0, 0)),          # w0
                pl.BlockSpec((L - 2, C, 9 * C), lambda n: (0, 0, 0)),  # w mid
                pl.BlockSpec((COUT, 9 * C), lambda n: (0, 0)),         # w last
                pl.BlockSpec((L, C, 1), lambda n: (0, 0, 0)),          # biases
                pl.BlockSpec((1, PPAD), lambda n: (0, 0)),             # mask
            ],
            out_specs=pl.BlockSpec((1, COUT, PPAD), lambda n: (n, 0, 0)),
            scratch_shapes=[
                pltpu.VMEM((C, AW), jnp.float32),         # resident activation
                pltpu.VMEM((9 * C, PPAD), jnp.float32),   # per-layer im2col
            ],
        ),
        compiler_params=pltpu.CompilerParams(
            dimension_semantics=("parallel",)),
    )(x_prep, w0, wm, wl, bk, mask)

    # Lane-dense kernel output -> NCHW (cheap glue in XLA).
    out = out[:, :c_out, :P].reshape(N, c_out, H + 2, W + 2)
    return out[:, :, 1:H + 1, 1:W + 1]


def init_params(key, hidden_channels=32, num_hidden_layers=3):
    """Deterministic parameter init (PyTorch-style uniform bounds), HWIO."""
    chans = [2] + [hidden_channels] * (num_hidden_layers + 1) + [2]
    params = []
    for i in range(len(chans) - 1):
        cin, cout = chans[i], chans[i + 1]
        key, kw, kb = jax.random.split(key, 3)
        bound = 1.0 / jnp.sqrt(cin * 3.0 * 3.0)
        w = jax.random.uniform(kw, (3, 3, cin, cout), jnp.float32,
                               -bound, bound)
        b = jax.random.uniform(kb, (cout,), jnp.float32, -bound, bound)
        params.append((w, b))
    return params


def _reference_forward(x_nchw, params):
    """Pure-JAX reference (lax.conv) for correctness checking."""
    x = jnp.transpose(x_nchw, (0, 2, 3, 1))
    n_layers = len(params)
    for i, (w, b) in enumerate(params):
        y = jax.lax.conv_general_dilated(
            x, w, window_strides=(1, 1), padding="SAME",
            dimension_numbers=("NHWC", "HWIO", "NHWC"))
        y = y + b
        if i < n_layers - 1:
            y = jnp.maximum(y, 0.0)
        x = y
    return jnp.transpose(x, (0, 3, 1, 2))


if __name__ == "__main__":
    key = jax.random.PRNGKey(0)
    key, k_x, k_p = jax.random.split(key, 3)

    # Small shapes: batch=2, 2 spectral channels (real/imag), 16x16 modes,
    # hidden_channels=32, num_hidden_layers=3 -> 5 conv layers.
    x = jax.random.normal(k_x, (2, 2, 16, 16), dtype=jnp.float32)
    params = init_params(k_p, hidden_channels=32, num_hidden_layers=3)

    out = spectral_operator_cnn_forward(x, params)
    out = jax.block_until_ready(out)

    ref = _reference_forward(x, params)
    assert out.shape == (2, 2, 16, 16), out.shape
    assert jnp.allclose(out, ref, atol=1e-4, rtol=1e-4), (
        float(jnp.max(jnp.abs(out - ref))))

    print("KERNEL_OK")
</pallas_src>

<mosaic_0001>
module attributes {stable_mosaic.version = 11 : i64} {
  func.func @_fused_cnn_kernel(%arg0: i32, %arg1: memref<1x8x384xf32, #tpu.memory_space<vmem>>, %arg2: memref<32x72xf32, #tpu.memory_space<vmem>>, %arg3: memref<3x32x288xf32, #tpu.memory_space<vmem>>, %arg4: memref<8x288xf32, #tpu.memory_space<vmem>>, %arg5: memref<5x32x1xf32, #tpu.memory_space<vmem>>, %arg6: memref<1x384xf32, #tpu.memory_space<vmem>>, %arg7: memref<1x8x384xf32, #tpu.memory_space<vmem>>, %arg8: memref<32x640xf32, #tpu.memory_space<vmem>>, %arg9: memref<288x384xf32, #tpu.memory_space<vmem>>) attributes {dimension_semantics = [#tpu.dimension_semantics<parallel>], iteration_bounds = array<i64: 2>, scalar_prefetch = 0 : i64, scratch_operands = 2 : i64, tpu.core_type = #tpu.core_type<tc>, window_params = [{transform_indices = @transform_0, window_bounds = array<i64: 1, 8, 384>}, {pipeline_mode = #tpu.pipeline_mode<synchronous>, transform_indices = @transform_1, window_bounds = array<i64: 32, 72>}, {pipeline_mode = #tpu.pipeline_mode<synchronous>, transform_indices = @transform_2, window_bounds = array<i64: 3, 32, 288>}, {pipeline_mode = #tpu.pipeline_mode<synchronous>, transform_indices = @transform_3, window_bounds = array<i64: 8, 288>}, {pipeline_mode = #tpu.pipeline_mode<synchronous>, transform_indices = @transform_4, window_bounds = array<i64: 5, 32, 1>}, {pipeline_mode = #tpu.pipeline_mode<synchronous>, transform_indices = @transform_5, window_bounds = array<i64: 1, 384>}, {transform_indices = @transform_6, window_bounds = array<i64: 1, 8, 384>}]} {
    %cst = arith.constant 0.000000e+00 : f32
    %0 = vector.broadcast %cst : f32 to vector<32x128xf32>
    %c0 = arith.constant 0 : index
    %c0_0 = arith.constant 0 : index
    %1 = vector.load %arg8[%c0, %c0_0] : memref<32x640xf32, #tpu.memory_space<vmem>>, vector<32x128xf32>
    tpu.vector_store %arg8[%c0, %c0_0], %0 {strides = array<i32>} : memref<32x640xf32, #tpu.memory_space<vmem>>, vector<32x128xf32>,
    %cst_1 = arith.constant 0.000000e+00 : f32
    %2 = vector.broadcast %cst_1 : f32 to vector<32x128xf32>
    %c0_2 = arith.constant 0 : index
    %c512 = arith.constant 512 : index
    %3 = vector.load %arg8[%c0_2, %c512] : memref<32x640xf32, #tpu.memory_space<vmem>>, vector<32x128xf32>
    tpu.vector_store %arg8[%c0_2, %c512], %2 {strides = array<i32>} : memref<32x640xf32, #tpu.memory_space<vmem>>, vector<32x128xf32>,
    %c0_3 = arith.constant 0 : index
    %c0_4 = arith.constant 0 : index
    %c0_5 = arith.constant 0 : index
    %4 = vector.load %arg1[%c0_3, %c0_4, %c0_5] : memref<1x8x384xf32, #tpu.memory_space<vmem>>, vector<1x8x384xf32>
    %5 = vector.shape_cast %4 : vector<1x8x384xf32> to vector<8x384xf32>
    %c0_6 = arith.constant 0 : index
    %c128 = arith.constant 128 : index
    %6 = vector.load %arg8[%c0_6, %c128] : memref<32x640xf32, #tpu.memory_space<vmem>>, vector<8x384xf32>
    tpu.vector_store %arg8[%c0_6, %c128], %5 {strides = array<i32>} : memref<32x640xf32, #tpu.memory_space<vmem>>, vector<8x384xf32>,
    %c0_7 = arith.constant 0 : index
    %c0_8 = arith.constant 0 : index
    %7 = vector.load %arg6[%c0_7, %c0_8] : memref<1x384xf32, #tpu.memory_space<vmem>>, vector<1x384xf32>
    %c0_9 = arith.constant 0 : index
    %c0_10 = arith.constant 0 : index
    %8 = vector.load %arg2[%c0_9, %c0_10] : memref<32x72xf32, #tpu.memory_space<vmem>>, vector<32x72xf32>
    %c0_11 = arith.constant 0 : index
    %c0_12 = arith.constant 0 : index
    %c0_13 = arith.constant 0 : index
    %9 = vector.load %arg5[%c0_11, %c0_12, %c0_13] : memref<5x32x1xf32, #tpu.memory_space<vmem>>, vector<1x32x1xf32>
    %10 = vector.shape_cast %9 : vector<1x32x1xf32> to vector<32x1xf32>
    %c0_14 = arith.constant 0 : index
    %c109 = arith.constant 109 : index
    %11 = vector.load %arg8[%c0_14, %c109] : memref<32x640xf32, #tpu.memory_space<vmem>>, vector<8x384xf32>
    %c0_15 = arith.constant 0 : index
    %c0_16 = arith.constant 0 : index
    %12 = vector.load %arg9[%c0_15, %c0_16] : memref<288x384xf32, #tpu.memory_space<vmem>>, vector<8x384xf32>
    tpu.vector_store %arg9[%c0_15, %c0_16], %11 {strides = array<i32>} : memref<288x384xf32, #tpu.memory_space<vmem>>, vector<8x384xf32>,
    %c0_17 = arith.constant 0 : index
    %c110 = arith.constant 110 : index
    %13 = vector.load %arg8[%c0_17, %c110] : memref<32x640xf32, #tpu.memory_space<vmem>>, vector<8x384xf32>
    %c8 = arith.constant 8 : index
    %c0_18 = arith.constant 0 : index
    %14 = vector.load %arg9[%c8, %c0_18] : memref<288x384xf32, #tpu.memory_space<vmem>>, vector<8x384xf32>
    tpu.vector_store %arg9[%c8, %c0_18], %13 {strides = array<i32>} : memref<288x384xf32, #tpu.memory_space<vmem>>, vector<8x384xf32>,
    %c0_19 = arith.constant 0 : index
    %c111 = arith.constant 111 : index
    %15 = vector.load %arg8[%c0_19, %c111] : memref<32x640xf32, #tpu.memory_space<vmem>>, vector<8x384xf32>
    %c16 = arith.constant 16 : index
    %c0_20 = arith.constant 0 : index
    %16 = vector.load %arg9[%c16, %c0_20] : memref<288x384xf32, #tpu.memory_space<vmem>>, vector<8x384xf32>
    tpu.vector_store %arg9[%c16, %c0_20], %15 {strides = array<i32>} : memref<288x384xf32, #tpu.memory_space<vmem>>, vector<8x384xf32>,
    %c0_21 = arith.constant 0 : index
    %c127 = arith.constant 127 : index
    %17 = vector.load %arg8[%c0_21, %c127] : memref<32x640xf32, #tpu.memory_space<vmem>>, vector<8x384xf32>
    %c24 = arith.constant 24 : index
    %c0_22 = arith.constant 0 : index
    %18 = vector.load %arg9[%c24, %c0_22] : memref<288x384xf32, #tpu.memory_space<vmem>>, vector<8x384xf32>
    tpu.vector_store %arg9[%c24, %c0_22], %17 {strides = array<i32>} : memref<288x384xf32, #tpu.memory_space<vmem>>, vector<8x384xf32>,
    %c0_23 = arith.constant 0 : index
    %c128_24 = arith.constant 128 : index
    %19 = vector.load %arg8[%c0_23, %c128_24] : memref<32x640xf32, #tpu.memory_space<vmem>>, vector<8x384xf32>
    %c32 = arith.constant 32 : index
    %c0_25 = arith.constant 0 : index
    %20 = vector.load %arg9[%c32, %c0_25] : memref<288x384xf32, #tpu.memory_space<vmem>>, vector<8x384xf32>
    tpu.vector_store %arg9[%c32, %c0_25], %19 {strides = array<i32>} : memref<288x384xf32, #tpu.memory_space<vmem>>, vector<8x384xf32>,
    %c0_26 = arith.constant 0 : index
    %c129 = arith.constant 129 : index
    %21 = vector.load %arg8[%c0_26, %c129] : memref<32x640xf32, #tpu.memory_space<vmem>>, vector<8x384xf32>
    %c40 = arith.constant 40 : index
    %c0_27 = arith.constant 0 : index
    %22 = vector.load %arg9[%c40, %c0_27] : memref<288x384xf32, #tpu.memory_space<vmem>>, vector<8x384xf32>
    tpu.vector_store %arg9[%c40, %c0_27], %21 {strides = array<i32>} : memref<288x384xf32, #tpu.memory_space<vmem>>, vector<8x384xf32>,
    %c0_28 = arith.constant 0 : index
    %c145 = arith.constant 145 : index
    %23 = vector.load %arg8[%c0_28, %c145] : memref<32x640xf32, #tpu.memory_space<vmem>>, vector<8x384xf32>
    %c48 = arith.constant 48 : index
    %c0_29 = arith.constant 0 : index
    %24 = vector.load %arg9[%c48, %c0_29] : memref<288x384xf32, #tpu.memory_space<vmem>>, vector<8x384xf32>
    tpu.vector_store %arg9[%c48, %c0_29], %23 {strides = array<i32>} : memref<288x384xf32, #tpu.memory_space<vmem>>, vector<8x384xf32>,
    %c0_30 = arith.constant 0 : index
    %c146 = arith.constant 146 : index
    %25 = vector.load %arg8[%c0_30, %c146] : memref<32x640xf32, #tpu.memory_space<vmem>>, vector<8x384xf32>
    %c56 = arith.constant 56 : index
    %c0_31 = arith.constant 0 : index
    %26 = vector.load %arg9[%c56, %c0_31] : memref<288x384xf32, #tpu.memory_space<vmem>>, vector<8x384xf32>
    tpu.vector_store %arg9[%c56, %c0_31], %25 {strides = array<i32>} : memref<288x384xf32, #tpu.memory_space<vmem>>, vector<8x384xf32>,
    %c0_32 = arith.constant 0 : index
    %c147 = arith.constant 147 : index
    %27 = vector.load %arg8[%c0_32, %c147] : memref<32x640xf32, #tpu.memory_space<vmem>>, vector<8x384xf32>
    %c64 = arith.constant 64 : index
    %c0_33 = arith.constant 0 : index
    %28 = vector.load %arg9[%c64, %c0_33] : memref<288x384xf32, #tpu.memory_space<vmem>>, vector<8x384xf32>
    tpu.vector_store %arg9[%c64, %c0_33], %27 {strides = array<i32>} : memref<288x384xf32, #tpu.memory_space<vmem>>, vector<8x384xf32>,
    %c0_34 = arith.constant 0 : index
    %c0_35 = arith.constant 0 : index
    %29 = vector.load %arg9[%c0_34, %c0_35] : memref<288x384xf32, #tpu.memory_space<vmem>>, vector<72x384xf32>
    %cst_36 = arith.constant dense<0.000000e+00> : vector<32x384xf32>
    %30 = tpu.matmul %8, %29, %cst_36 {dimension_numbers = #tpu.dot_dimension_numbers<[1], [0], [0], [1], [0, 0, 1, 1], [], []>} : vector<32x72xf32>, vector<72x384xf32>, vector<32x384xf32> -> vector<32x384xf32>
    %31 = vector.broadcast %10 : vector<32x1xf32> to vector<32x384xf32>
    %32 = arith.addf %30, %31 : vector<32x384xf32>
    %cst_37 = arith.constant 0.000000e+00 : f32
    %33 = vector.broadcast %cst_37 : f32 to vector<32x384xf32>
    %34 = arith.maximumf %32, %33 : vector<32x384xf32>
    %35 = vector.broadcast %7 : vector<1x384xf32> to vector<32x384xf32>
    %36 = arith.mulf %34, %35 : vector<32x384xf32>
    %c0_38 = arith.constant 0 : index
    %c128_39 = arith.constant 128 : index
    %37 = vector.load %arg8[%c0_38, %c128_39] : memref<32x640xf32, #tpu.memory_space<vmem>>, vector<32x384xf32>
    tpu.vector_store %arg8[%c0_38, %c128_39], %36 {strides = array<i32>} : memref<32x640xf32, #tpu.memory_space<vmem>>, vector<32x384xf32>,
    %c0_40 = arith.constant 0 : index
    %c0_41 = arith.constant 0 : index
    %c0_42 = arith.constant 0 : index
    %38 = vector.load %arg3[%c0_40, %c0_41, %c0_42] : memref<3x32x288xf32, #tpu.memory_space<vmem>>, vector<1x32x288xf32>
    %39 = vector.shape_cast %38 : vector<1x32x288xf32> to vector<32x288xf32>
    %c1 = arith.constant 1 : index
    %c0_43 = arith.constant 0 : index
    %c0_44 = arith.constant 0 : index
    %40 = vector.load %arg5[%c1, %c0_43, %c0_44] : memref<5x32x1xf32, #tpu.memory_space<vmem>>, vector<1x32x1xf32>
    %41 = vector.shape_cast %40 : vector<1x32x1xf32> to vector<32x1xf32>
    %c0_45 = arith.constant 0 : index
    %c109_46 = arith.constant 109 : index
    %42 = vector.load %arg8[%c0_45, %c109_46] : memref<32x640xf32, #tpu.memory_space<vmem>>, vector<32x384xf32>
    %c0_47 = arith.constant 0 : index
    %c0_48 = arith.constant 0 : index
    %43 = vector.load %arg9[%c0_47, %c0_48] : memref<288x384xf32, #tpu.memory_space<vmem>>, vector<32x384xf32>
    tpu.vector_store %arg9[%c0_47, %c0_48], %42 {strides = array<i32>} : memref<288x384xf32, #tpu.memory_space<vmem>>, vector<32x384xf32>,
    %c0_49 = arith.constant 0 : index
    %c110_50 = arith.constant 110 : index
    %44 = vector.load %arg8[%c0_49, %c110_50] : memref<32x640xf32, #tpu.memory_space<vmem>>, vector<32x384xf32>
    %c32_51 = arith.constant 32 : index
    %c0_52 = arith.constant 0 : index
    %45 = vector.load %arg9[%c32_51, %c0_52] : memref<288x384xf32, #tpu.memory_space<vmem>>, vector<32x384xf32>
    tpu.vector_store %arg9[%c32_51, %c0_52], %44 {strides = array<i32>} : memref<288x384xf32, #tpu.memory_space<vmem>>, vector<32x384xf32>,
    %c0_53 = arith.constant 0 : index
    %c111_54 = arith.constant 111 : index
    %46 = vector.load %arg8[%c0_53, %c111_54] : memref<32x640xf32, #tpu.memory_space<vmem>>, vector<32x384xf32>
    %c64_55 = arith.constant 64 : index
    %c0_56 = arith.constant 0 : index
    %47 = vector.load %arg9[%c64_55, %c0_56] : memref<288x384xf32, #tpu.memory_space<vmem>>, vector<32x384xf32>
    tpu.vector_store %arg9[%c64_55, %c0_56], %46 {strides = array<i32>} : memref<288x384xf32, #tpu.memory_space<vmem>>, vector<32x384xf32>,
    %c0_57 = arith.constant 0 : index
    %c127_58 = arith.constant 127 : index
    %48 = vector.load %arg8[%c0_57, %c127_58] : memref<32x640xf32, #tpu.memory_space<vmem>>, vector<32x384xf32>
    %c96 = arith.constant 96 : index
    %c0_59 = arith.constant 0 : index
    %49 = vector.load %arg9[%c96, %c0_59] : memref<288x384xf32, #tpu.memory_space<vmem>>, vector<32x384xf32>
    tpu.vector_store %arg9[%c96, %c0_59], %48 {strides = array<i32>} : memref<288x384xf32, #tpu.memory_space<vmem>>, vector<32x384xf32>,
    %c0_60 = arith.constant 0 : index
    %c128_61 = arith.constant 128 : index
    %50 = vector.load %arg8[%c0_60, %c128_61] : memref<32x640xf32, #tpu.memory_space<vmem>>, vector<32x384xf32>
    %c128_62 = arith.constant 128 : index
    %c0_63 = arith.constant 0 : index
    %51 = vector.load %arg9[%c128_62, %c0_63] : memref<288x384xf32, #tpu.memory_space<vmem>>, vector<32x384xf32>
    tpu.vector_store %arg9[%c128_62, %c0_63], %50 {strides = array<i32>} : memref<288x384xf32, #tpu.memory_space<vmem>>, vector<32x384xf32>,
    %c0_64 = arith.constant 0 : index
    %c129_65 = arith.constant 129 : index
    %52 = vector.load %arg8[%c0_64, %c129_65] : memref<32x640xf32, #tpu.memory_space<vmem>>, vector<32x384xf32>
    %c160 = arith.constant 160 : index
    %c0_66 = arith.constant 0 : index
    %53 = vector.load %arg9[%c160, %c0_66] : memref<288x384xf32, #tpu.memory_space<vmem>>, vector<32x384xf32>
    tpu.vector_store %arg9[%c160, %c0_66], %52 {strides = array<i32>} : memref<288x384xf32, #tpu.memory_space<vmem>>, vector<32x384xf32>,
    %c0_67 = arith.constant 0 : index
    %c145_68 = arith.constant 145 : index
    %54 = vector.load %arg8[%c0_67, %c145_68] : memref<32x640xf32, #tpu.memory_space<vmem>>, vector<32x384xf32>
    %c192 = arith.constant 192 : index
    %c0_69 = arith.constant 0 : index
    %55 = vector.load %arg9[%c192, %c0_69] : memref<288x384xf32, #tpu.memory_space<vmem>>, vector<32x384xf32>
    tpu.vector_store %arg9[%c192, %c0_69], %54 {strides = array<i32>} : memref<288x384xf32, #tpu.memory_space<vmem>>, vector<32x384xf32>,
    %c0_70 = arith.constant 0 : index
    %c146_71 = arith.constant 146 : index
    %56 = vector.load %arg8[%c0_70, %c146_71] : memref<32x640xf32, #tpu.memory_space<vmem>>, vector<32x384xf32>
    %c224 = arith.constant 224 : index
    %c0_72 = arith.constant 0 : index
    %57 = vector.load %arg9[%c224, %c0_72] : memref<288x384xf32, #tpu.memory_space<vmem>>, vector<32x384xf32>
    tpu.vector_store %arg9[%c224, %c0_72], %56 {strides = array<i32>} : memref<288x384xf32, #tpu.memory_space<vmem>>, vector<32x384xf32>,
    %c0_73 = arith.constant 0 : index
    %c147_74 = arith.constant 147 : index
    %58 = vector.load %arg8[%c0_73, %c147_74] : memref<32x640xf32, #tpu.memory_space<vmem>>, vector<32x384xf32>
    %c256 = arith.constant 256 : index
    %c0_75 = arith.constant 0 : index
    %59 = vector.load %arg9[%c256, %c0_75] : memref<288x384xf32, #tpu.memory_space<vmem>>, vector<32x384xf32>
    tpu.vector_store %arg9[%c256, %c0_75], %58 {strides = array<i32>} : memref<288x384xf32, #tpu.memory_space<vmem>>, vector<32x384xf32>,
    %c0_76 = arith.constant 0 : index
    %c0_77 = arith.constant 0 : index
    %60 = vector.load %arg9[%c0_76, %c0_77] : memref<288x384xf32, #tpu.memory_space<vmem>>, vector<288x384xf32>
    %cst_78 = arith.constant dense<0.000000e+00> : vector<32x384xf32>
    %61 = tpu.matmul %39, %60, %cst_78 {dimension_numbers = #tpu.dot_dimension_numbers<[1], [0], [0], [1], [0, 0, 1, 1], [], []>} : vector<32x288xf32>, vector<288x384xf32>, vector<32x384xf32> -> vector<32x384xf32>
    %62 = vector.broadcast %41 : vector<32x1xf32> to vector<32x384xf32>
    %63 = arith.addf %61, %62 : vector<32x384xf32>
    %cst_79 = arith.constant 0.000000e+00 : f32
    %64 = vector.broadcast %cst_79 : f32 to vector<32x384xf32>
    %65 = arith.maximumf %63, %64 : vector<32x384xf32>
    %66 = vector.broadcast %7 : vector<1x384xf32> to vector<32x384xf32>
    %67 = arith.mulf %65, %66 : vector<32x384xf32>
    %c0_80 = arith.constant 0 : index
    %c128_81 = arith.constant 128 : index
    %68 = vector.load %arg8[%c0_80, %c128_81] : memref<32x640xf32, #tpu.memory_space<vmem>>, vector<32x384xf32>
    tpu.vector_store %arg8[%c0_80, %c128_81], %67 {strides = array<i32>} : memref<32x640xf32, #tpu.memory_space<vmem>>, vector<32x384xf32>,
    %c1_82 = arith.constant 1 : index
    %c0_83 = arith.constant 0 : index
    %c0_84 = arith.constant 0 : index
    %69 = vector.load %arg3[%c1_82, %c0_83, %c0_84] : memref<3x32x288xf32, #tpu.memory_space<vmem>>, vector<1x32x288xf32>
    %70 = vector.shape_cast %69 : vector<1x32x288xf32> to vector<32x288xf32>
    %c2 = arith.constant 2 : index
    %c0_85 = arith.constant 0 : index
    %c0_86 = arith.constant 0 : index
    %71 = vector.load %arg5[%c2, %c0_85, %c0_86] : memref<5x32x1xf32, #tpu.memory_space<vmem>>, vector<1x32x1xf32>
    %72 = vector.shape_cast %71 : vector<1x32x1xf32> to vector<32x1xf32>
    %c0_87 = arith.constant 0 : index
    %c109_88 = arith.constant 109 : index
    %73 = vector.load %arg8[%c0_87, %c109_88] : memref<32x640xf32, #tpu.memory_space<vmem>>, vector<32x384xf32>
    %c0_89 = arith.constant 0 : index
    %c0_90 = arith.constant 0 : index
    %74 = vector.load %arg9[%c0_89, %c0_90] : memref<288x384xf32, #tpu.memory_space<vmem>>, vector<32x384xf32>
    tpu.vector_store %arg9[%c0_89, %c0_90], %73 {strides = array<i32>} : memref<288x384xf32, #tpu.memory_space<vmem>>, vector<32x384xf32>,
    %c0_91 = arith.constant 0 : index
    %c110_92 = arith.constant 110 : index
    %75 = vector.load %arg8[%c0_91, %c110_92] : memref<32x640xf32, #tpu.memory_space<vmem>>, vector<32x384xf32>
    %c32_93 = arith.constant 32 : index
    %c0_94 = arith.constant 0 : index
    %76 = vector.load %arg9[%c32_93, %c0_94] : memref<288x384xf32, #tpu.memory_space<vmem>>, vector<32x384xf32>
    tpu.vector_store %arg9[%c32_93, %c0_94], %75 {strides = array<i32>} : memref<288x384xf32, #tpu.memory_space<vmem>>, vector<32x384xf32>,
    %c0_95 = arith.constant 0 : index
    %c111_96 = arith.constant 111 : index
    %77 = vector.load %arg8[%c0_95, %c111_96] : memref<32x640xf32, #tpu.memory_space<vmem>>, vector<32x384xf32>
    %c64_97 = arith.constant 64 : index
    %c0_98 = arith.constant 0 : index
    %78 = vector.load %arg9[%c64_97, %c0_98] : memref<288x384xf32, #tpu.memory_space<vmem>>, vector<32x384xf32>
    tpu.vector_store %arg9[%c64_97, %c0_98], %77 {strides = array<i32>} : memref<288x384xf32, #tpu.memory_space<vmem>>, vector<32x384xf32>,
    %c0_99 = arith.constant 0 : index
    %c127_100 = arith.constant 127 : index
    %79 = vector.load %arg8[%c0_99, %c127_100] : memref<32x640xf32, #tpu.memory_space<vmem>>, vector<32x384xf32>
    %c96_101 = arith.constant 96 : index
    %c0_102 = arith.constant 0 : index
    %80 = vector.load %arg9[%c96_101, %c0_102] : memref<288x384xf32, #tpu.memory_space<vmem>>, vector<32x384xf32>
    tpu.vector_store %arg9[%c96_101, %c0_102], %79 {strides = array<i32>} : memref<288x384xf32, #tpu.memory_space<vmem>>, vector<32x384xf32>,
    %c0_103 = arith.constant 0 : index
    %c128_104 = arith.constant 128 : index
    %81 = vector.load %arg8[%c0_103, %c128_104] : memref<32x640xf32, #tpu.memory_space<vmem>>, vector<32x384xf32>
    %c128_105 = arith.constant 128 : index
    %c0_106 = arith.constant 0 : index
    %82 = vector.load %arg9[%c128_105, %c0_106] : memref<288x384xf32, #tpu.memory_space<vmem>>, vector<32x384xf32>
    tpu.vector_store %arg9[%c128_105, %c0_106], %81 {strides = array<i32>} : memref<288x384xf32, #tpu.memory_space<vmem>>, vector<32x384xf32>,
    %c0_107 = arith.constant 0 : index
    %c129_108 = arith.constant 129 : index
    %83 = vector.load %arg8[%c0_107, %c129_108] : memref<32x640xf32, #tpu.memory_space<vmem>>, vector<32x384xf32>
    %c160_109 = arith.constant 160 : index
    %c0_110 = arith.constant 0 : index
    %84 = vector.load %arg9[%c160_109, %c0_110] : memref<288x384xf32, #tpu.memory_space<vmem>>, vector<32x384xf32>
    tpu.vector_store %arg9[%c160_109, %c0_110], %83 {strides = array<i32>} : memref<288x384xf32, #tpu.memory_space<vmem>>, vector<32x384xf32>,
    %c0_111 = arith.constant 0 : index
    %c145_112 = arith.constant 145 : index
    %85 = vector.load %arg8[%c0_111, %c145_112] : memref<32x640xf32, #tpu.memory_space<vmem>>, vector<32x384xf32>
    %c192_113 = arith.constant 192 : index
    %c0_114 = arith.constant 0 : index
    %86 = vector.load %arg9[%c192_113, %c0_114] : memref<288x384xf32, #tpu.memory_space<vmem>>, vector<32x384xf32>
    tpu.vector_store %arg9[%c192_113, %c0_114], %85 {strides = array<i32>} : memref<288x384xf32, #tpu.memory_space<vmem>>, vector<32x384xf32>,
    %c0_115 = arith.constant 0 : index
    %c146_116 = arith.constant 146 : index
    %87 = vector.load %arg8[%c0_115, %c146_116] : memref<32x640xf32, #tpu.memory_space<vmem>>, vector<32x384xf32>
    %c224_117 = arith.constant 224 : index
    %c0_118 = arith.constant 0 : index
    %88 = vector.load %arg9[%c224_117, %c0_118] : memref<288x384xf32, #tpu.memory_space<vmem>>, vector<32x384xf32>
    tpu.vector_store %arg9[%c224_117, %c0_118], %87 {strides = array<i32>} : memref<288x384xf32, #tpu.memory_space<vmem>>, vector<32x384xf32>,
    %c0_119 = arith.constant 0 : index
    %c147_120 = arith.constant 147 : index
    %89 = vector.load %arg8[%c0_119, %c147_120] : memref<32x640xf32, #tpu.memory_space<vmem>>, vector<32x384xf32>
    %c256_121 = arith.constant 256 : index
    %c0_122 = arith.constant 0 : index
    %90 = vector.load %arg9[%c256_121, %c0_122] : memref<288x384xf32, #tpu.memory_space<vmem>>, vector<32x384xf32>
    tpu.vector_store %arg9[%c256_121, %c0_122], %89 {strides = array<i32>} : memref<288x384xf32, #tpu.memory_space<vmem>>, vector<32x384xf32>,
    %c0_123 = arith.constant 0 : index
    %c0_124 = arith.constant 0 : index
    %91 = vector.load %arg9[%c0_123, %c0_124] : memref<288x384xf32, #tpu.memory_space<vmem>>, vector<288x384xf32>
    %cst_125 = arith.constant dense<0.000000e+00> : vector<32x384xf32>
    %92 = tpu.matmul %70, %91, %cst_125 {dimension_numbers = #tpu.dot_dimension_numbers<[1], [0], [0], [1], [0, 0, 1, 1], [], []>} : vector<32x288xf32>, vector<288x384xf32>, vector<32x384xf32> -> vector<32x384xf32>
    %93 = vector.broadcast %72 : vector<32x1xf32> to vector<32x384xf32>
    %94 = arith.addf %92, %93 : vector<32x384xf32>
    %cst_126 = arith.constant 0.000000e+00 : f32
    %95 = vector.broadcast %cst_126 : f32 to vector<32x384xf32>
    %96 = arith.maximumf %94, %95 : vector<32x384xf32>
    %97 = vector.broadcast %7 : vector<1x384xf32> to vector<32x384xf32>
    %98 = arith.mulf %96, %97 : vector<32x384xf32>
    %c0_127 = arith.constant 0 : index
    %c128_128 = arith.constant 128 : index
    %99 = vector.load %arg8[%c0_127, %c128_128] : memref<32x640xf32, #tpu.memory_space<vmem>>, vector<32x384xf32>
    tpu.vector_store %arg8[%c0_127, %c128_128], %98 {strides = array<i32>} : memref<32x640xf32, #tpu.memory_space<vmem>>, vector<32x384xf32>,
    %c2_129 = arith.constant 2 : index
    %c0_130 = arith.constant 0 : index
    %c0_131 = arith.constant 0 : index
    %100 = vector.load %arg3[%c2_129, %c0_130, %c0_131] : memref<3x32x288xf32, #tpu.memory_space<vmem>>, vector<1x32x288xf32>
    %101 = vector.shape_cast %100 : vector<1x32x288xf32> to vector<32x288xf32>
    %c3 = arith.constant 3 : index
    %c0_132 = arith.constant 0 : index
    %c0_133 = arith.constant 0 : index
    %102 = vector.load %arg5[%c3, %c0_132, %c0_133] : memref<5x32x1xf32, #tpu.memory_space<vmem>>, vector<1x32x1xf32>
    %103 = vector.shape_cast %102 : vector<1x32x1xf32> to vector<32x1xf32>
    %c0_134 = arith.constant 0 : index
    %c109_135 = arith.constant 109 : index
    %104 = vector.load %arg8[%c0_134, %c109_135] : memref<32x640xf32, #tpu.memory_space<vmem>>, vector<32x384xf32>
    %c0_136 = arith.constant 0 : index
    %c0_137 = arith.constant 0 : index
    %105 = vector.load %arg9[%c0_136, %c0_137] : memref<288x384xf32, #tpu.memory_space<vmem>>, vector<32x384xf32>
    tpu.vector_store %arg9[%c0_136, %c0_137], %104 {strides = array<i32>} : memref<288x384xf32, #tpu.memory_space<vmem>>, vector<32x384xf32>,
    %c0_138 = arith.constant 0 : index
    %c110_139 = arith.constant 110 : index
    %106 = vector.load %arg8[%c0_138, %c110_139] : memref<32x640xf32, #tpu.memory_space<vmem>>, vector<32x384xf32>
    %c32_140 = arith.constant 32 : index
    %c0_141 = arith.constant 0 : index
    %107 = vector.load %arg9[%c32_140, %c0_141] : memref<288x384xf32, #tpu.memory_space<vmem>>, vector<32x384xf32>
    tpu.vector_store %arg9[%c32_140, %c0_141], %106 {strides = array<i32>} : memref<288x384xf32, #tpu.memory_space<vmem>>, vector<32x384xf32>,
    %c0_142 = arith.constant 0 : index
    %c111_143 = arith.constant 111 : index
    %108 = vector.load %arg8[%c0_142, %c111_143] : memref<32x640xf32, #tpu.memory_space<vmem>>, vector<32x384xf32>
    %c64_144 = arith.constant 64 : index
    %c0_145 = arith.constant 0 : index
    %109 = vector.load %arg9[%c64_144, %c0_145] : memref<288x384xf32, #tpu.memory_space<vmem>>, vector<32x384xf32>
    tpu.vector_store %arg9[%c64_144, %c0_145], %108 {strides = array<i32>} : memref<288x384xf32, #tpu.memory_space<vmem>>, vector<32x384xf32>,
    %c0_146 = arith.constant 0 : index
    %c127_147 = arith.constant 127 : index
    %110 = vector.load %arg8[%c0_146, %c127_147] : memref<32x640xf32, #tpu.memory_space<vmem>>, vector<32x384xf32>
    %c96_148 = arith.constant 96 : index
    %c0_149 = arith.constant 0 : index
    %111 = vector.load %arg9[%c96_148, %c0_149] : memref<288x384xf32, #tpu.memory_space<vmem>>, vector<32x384xf32>
    tpu.vector_store %arg9[%c96_148, %c0_149], %110 {strides = array<i32>} : memref<288x384xf32, #tpu.memory_space<vmem>>, vector<32x384xf32>,
    %c0_150 = arith.constant 0 : index
    %c128_151 = arith.constant 128 : index
    %112 = vector.load %arg8[%c0_150, %c128_151] : memref<32x640xf32, #tpu.memory_space<vmem>>, vector<32x384xf32>
    %c128_152 = arith.constant 128 : index
    %c0_153 = arith.constant 0 : index
    %113 = vector.load %arg9[%c128_152, %c0_153] : memref<288x384xf32, #tpu.memory_space<vmem>>, vector<32x384xf32>
    tpu.vector_store %arg9[%c128_152, %c0_153], %112 {strides = array<i32>} : memref<288x384xf32, #tpu.memory_space<vmem>>, vector<32x384xf32>,
    %c0_154 = arith.constant 0 : index
    %c129_155 = arith.constant 129 : index
    %114 = vector.load %arg8[%c0_154, %c129_155] : memref<32x640xf32, #tpu.memory_space<vmem>>, vector<32x384xf32>
    %c160_156 = arith.constant 160 : index
    %c0_157 = arith.constant 0 : index
    %115 = vector.load %arg9[%c160_156, %c0_157] : memref<288x384xf32, #tpu.memory_space<vmem>>, vector<32x384xf32>
    tpu.vector_store %arg9[%c160_156, %c0_157], %114 {strides = array<i32>} : memref<288x384xf32, #tpu.memory_space<vmem>>, vector<32x384xf32>,
    %c0_158 = arith.constant 0 : index
    %c145_159 = arith.constant 145 : index
    %116 = vector.load %arg8[%c0_158, %c145_159] : memref<32x640xf32, #tpu.memory_space<vmem>>, vector<32x384xf32>
    %c192_160 = arith.constant 192 : index
    %c0_161 = arith.constant 0 : index
    %117 = vector.load %arg9[%c192_160, %c0_161] : memref<288x384xf32, #tpu.memory_space<vmem>>, vector<32x384xf32>
    tpu.vector_store %arg9[%c192_160, %c0_161], %116 {strides = array<i32>} : memref<288x384xf32, #tpu.memory_space<vmem>>, vector<32x384xf32>,
    %c0_162 = arith.constant 0 : index
    %c146_163 = arith.constant 146 : index
    %118 = vector.load %arg8[%c0_162, %c146_163] : memref<32x640xf32, #tpu.memory_space<vmem>>, vector<32x384xf32>
    %c224_164 = arith.constant 224 : index
    %c0_165 = arith.constant 0 : index
    %119 = vector.load %arg9[%c224_164, %c0_165] : memref<288x384xf32, #tpu.memory_space<vmem>>, vector<32x384xf32>
    tpu.vector_store %arg9[%c224_164, %c0_165], %118 {strides = array<i32>} : memref<288x384xf32, #tpu.memory_space<vmem>>, vector<32x384xf32>,
    %c0_166 = arith.constant 0 : index
    %c147_167 = arith.constant 147 : index
    %120 = vector.load %arg8[%c0_166, %c147_167] : memref<32x640xf32, #tpu.memory_space<vmem>>, vector<32x384xf32>
    %c256_168 = arith.constant 256 : index
    %c0_169 = arith.constant 0 : index
    %121 = vector.load %arg9[%c256_168, %c0_169] : memref<288x384xf32, #tpu.memory_space<vmem>>, vector<32x384xf32>
    tpu.vector_store %arg9[%c256_168, %c0_169], %120 {strides = array<i32>} : memref<288x384xf32, #tpu.memory_space<vmem>>, vector<32x384xf32>,
    %c0_170 = arith.constant 0 : index
    %c0_171 = arith.constant 0 : index
    %122 = vector.load %arg9[%c0_170, %c0_171] : memref<288x384xf32, #tpu.memory_space<vmem>>, vector<288x384xf32>
    %cst_172 = arith.constant dense<0.000000e+00> : vector<32x384xf32>
    %123 = tpu.matmul %101, %122, %cst_172 {dimension_numbers = #tpu.dot_dimension_numbers<[1], [0], [0], [1], [0, 0, 1, 1], [], []>} : vector<32x288xf32>, vector<288x384xf32>, vector<32x384xf32> -> vector<32x384xf32>
    %124 = vector.broadcast %103 : vector<32x1xf32> to vector<32x384xf32>
    %125 = arith.addf %123, %124 : vector<32x384xf32>
    %cst_173 = arith.constant 0.000000e+00 : f32
    %126 = vector.broadcast %cst_173 : f32 to vector<32x384xf32>
    %127 = arith.maximumf %125, %126 : vector<32x384xf32>
    %128 = vector.broadcast %7 : vector<1x384xf32> to vector<32x384xf32>
    %129 = arith.mulf %127, %128 : vector<32x384xf32>
    %c0_174 = arith.constant 0 : index
    %c128_175 = arith.constant 128 : index
    %130 = vector.load %arg8[%c0_174, %c128_175] : memref<32x640xf32, #tpu.memory_space<vmem>>, vector<32x384xf32>
    tpu.vector_store %arg8[%c0_174, %c128_175], %129 {strides = array<i32>} : memref<32x640xf32, #tpu.memory_space<vmem>>, vector<32x384xf32>,
    %c0_176 = arith.constant 0 : index
    %c0_177 = arith.constant 0 : index
    %131 = vector.load %arg4[%c0_176, %c0_177] : memref<8x288xf32, #tpu.memory_space<vmem>>, vector<8x288xf32>
    %c4 = arith.constant 4 : index
    %c0_178 = arith.constant 0 : index
    %c0_179 = arith.constant 0 : index
    %132 = vector.load %arg5[%c4, %c0_178, %c0_179] : memref<5x32x1xf32, #tpu.memory_space<vmem>>, vector<1x32x1xf32>
    %133 = vector.shape_cast %132 : vector<1x32x1xf32> to vector<32x1xf32>
    %134 = vector.extract_strided_slice %133 {offsets = [0, 0], sizes = [8, 1], strides = [1, 1]} : vector<32x1xf32> to vector<8x1xf32>
    %c0_180 = arith.constant 0 : index
    %c109_181 = arith.constant 109 : index
    %135 = vector.load %arg8[%c0_180, %c109_181] : memref<32x640xf32, #tpu.memory_space<vmem>>, vector<32x384xf32>
    %c0_182 = arith.constant 0 : index
    %c0_183 = arith.constant 0 : index
    %136 = vector.load %arg9[%c0_182, %c0_183] : memref<288x384xf32, #tpu.memory_space<vmem>>, vector<32x384xf32>
    tpu.vector_store %arg9[%c0_182, %c0_183], %135 {strides = array<i32>} : memref<288x384xf32, #tpu.memory_space<vmem>>, vector<32x384xf32>,
    %c0_184 = arith.constant 0 : index
    %c110_185 = arith.constant 110 : index
    %137 = vector.load %arg8[%c0_184, %c110_185] : memref<32x640xf32, #tpu.memory_space<vmem>>, vector<32x384xf32>
    %c32_186 = arith.constant 32 : index
    %c0_187 = arith.constant 0 : index
    %138 = vector.load %arg9[%c32_186, %c0_187] : memref<288x384xf32, #tpu.memory_space<vmem>>, vector<32x384xf32>
    tpu.vector_store %arg9[%c32_186, %c0_187], %137 {strides = array<i32>} : memref<288x384xf32, #tpu.memory_space<vmem>>, vector<32x384xf32>,
    %c0_188 = arith.constant 0 : index
    %c111_189 = arith.constant 111 : index
    %139 = vector.load %arg8[%c0_188, %c111_189] : memref<32x640xf32, #tpu.memory_space<vmem>>, vector<32x384xf32>
    %c64_190 = arith.constant 64 : index
    %c0_191 = arith.constant 0 : index
    %140 = vector.load %arg9[%c64_190, %c0_191] : memref<288x384xf32, #tpu.memory_space<vmem>>, vector<32x384xf32>
    tpu.vector_store %arg9[%c64_190, %c0_191], %139 {strides = array<i32>} : memref<288x384xf32, #tpu.memory_space<vmem>>, vector<32x384xf32>,
    %c0_192 = arith.constant 0 : index
    %c127_193 = arith.constant 127 : index
    %141 = vector.load %arg8[%c0_192, %c127_193] : memref<32x640xf32, #tpu.memory_space<vmem>>, vector<32x384xf32>
    %c96_194 = arith.constant 96 : index
    %c0_195 = arith.constant 0 : index
    %142 = vector.load %arg9[%c96_194, %c0_195] : memref<288x384xf32, #tpu.memory_space<vmem>>, vector<32x384xf32>
    tpu.vector_store %arg9[%c96_194, %c0_195], %141 {strides = array<i32>} : memref<288x384xf32, #tpu.memory_space<vmem>>, vector<32x384xf32>,
    %c0_196 = arith.constant 0 : index
    %c128_197 = arith.constant 128 : index
    %143 = vector.load %arg8[%c0_196, %c128_197] : memref<32x640xf32, #tpu.memory_space<vmem>>, vector<32x384xf32>
    %c128_198 = arith.constant 128 : index
    %c0_199 = arith.constant 0 : index
    %144 = vector.load %arg9[%c128_198, %c0_199] : memref<288x384xf32, #tpu.memory_space<vmem>>, vector<32x384xf32>
    tpu.vector_store %arg9[%c128_198, %c0_199], %143 {strides = array<i32>} : memref<288x384xf32, #tpu.memory_space<vmem>>, vector<32x384xf32>,
    %c0_200 = arith.constant 0 : index
    %c129_201 = arith.constant 129 : index
    %145 = vector.load %arg8[%c0_200, %c129_201] : memref<32x640xf32, #tpu.memory_space<vmem>>, vector<32x384xf32>
    %c160_202 = arith.constant 160 : index
    %c0_203 = arith.constant 0 : index
    %146 = vector.load %arg9[%c160_202, %c0_203] : memref<288x384xf32, #tpu.memory_space<vmem>>, vector<32x384xf32>
    tpu.vector_store %arg9[%c160_202, %c0_203], %145 {strides = array<i32>} : memref<288x384xf32, #tpu.memory_space<vmem>>, vector<32x384xf32>,
    %c0_204 = arith.constant 0 : index
    %c145_205 = arith.constant 145 : index
    %147 = vector.load %arg8[%c0_204, %c145_205] : memref<32x640xf32, #tpu.memory_space<vmem>>, vector<32x384xf32>
    %c192_206 = arith.constant 192 : index
    %c0_207 = arith.constant 0 : index
    %148 = vector.load %arg9[%c192_206, %c0_207] : memref<288x384xf32, #tpu.memory_space<vmem>>, vector<32x384xf32>
    tpu.vector_store %arg9[%c192_206, %c0_207], %147 {strides = array<i32>} : memref<288x384xf32, #tpu.memory_space<vmem>>, vector<32x384xf32>,
    %c0_208 = arith.constant 0 : index
    %c146_209 = arith.constant 146 : index
    %149 = vector.load %arg8[%c0_208, %c146_209] : memref<32x640xf32, #tpu.memory_space<vmem>>, vector<32x384xf32>
    %c224_210 = arith.constant 224 : index
    %c0_211 = arith.constant 0 : index
    %150 = vector.load %arg9[%c224_210, %c0_211] : memref<288x384xf32, #tpu.memory_space<vmem>>, vector<32x384xf32>
    tpu.vector_store %arg9[%c224_210, %c0_211], %149 {strides = array<i32>} : memref<288x384xf32, #tpu.memory_space<vmem>>, vector<32x384xf32>,
    %c0_212 = arith.constant 0 : index
    %c147_213 = arith.constant 147 : index
    %151 = vector.load %arg8[%c0_212, %c147_213] : memref<32x640xf32, #tpu.memory_space<vmem>>, vector<32x384xf32>
    %c256_214 = arith.constant 256 : index
    %c0_215 = arith.constant 0 : index
    %152 = vector.load %arg9[%c256_214, %c0_215] : memref<288x384xf32, #tpu.memory_space<vmem>>, vector<32x384xf32>
    tpu.vector_store %arg9[%c256_214, %c0_215], %151 {strides = array<i32>} : memref<288x384xf32, #tpu.memory_space<vmem>>, vector<32x384xf32>,
    %c0_216 = arith.constant 0 : index
    %c0_217 = arith.constant 0 : index
    %153 = vector.load %arg9[%c0_216, %c0_217] : memref<288x384xf32, #tpu.memory_space<vmem>>, vector<288x384xf32>
    %cst_218 = arith.constant dense<0.000000e+00> : vector<8x384xf32>
    %154 = tpu.matmul %131, %153, %cst_218 {dimension_numbers = #tpu.dot_dimension_numbers<[1], [0], [0], [1], [0, 0, 1, 1], [], []>} : vector<8x288xf32>, vector<288x384xf32>, vector<8x384xf32> -> vector<8x384xf32>
    %155 = vector.broadcast %134 : vector<8x1xf32> to vector<8x384xf32>
    %156 = arith.addf %154, %155 : vector<8x384xf32>
    %c0_219 = arith.constant 0 : index
    %c0_220 = arith.constant 0 : index
    %c0_221 = arith.constant 0 : index
    %157 = vector.load %arg7[%c0_219, %c0_220, %c0_221] : memref<1x8x384xf32, #tpu.memory_space<vmem>>, vector<1x8x384xf32>
    %158 = vector.shape_cast %157 : vector<1x8x384xf32> to vector<8x384xf32>
    %159 = vector.shape_cast %156 : vector<8x384xf32> to vector<1x8x384xf32>
    tpu.vector_store %arg7[%c0_219, %c0_220, %c0_221], %159 {strides = array<i32>} : memref<1x8x384xf32, #tpu.memory_space<vmem>>, vector<1x8x384xf32>,
    return
  }
  func.func @transform_0(%arg0: i32) -> (i32, i32, i32) {
    %c0_i32 = arith.constant 0 : i32
    %c0_i32_0 = arith.constant 0 : i32
    %c0_i32_1 = arith.constant 0 : i32
    return %arg0, %c0_i32, %c0_i32_0 : i32, i32, i32
  }
  func.func @transform_1(%arg0: i32) -> (i32, i32) {
    %c0_i32 = arith.constant 0 : i32
    %c0_i32_0 = arith.constant 0 : i32
    %c0_i32_1 = arith.constant 0 : i32
    return %c0_i32, %c0_i32_0 : i32, i32
  }
  func.func @transform_2(%arg0: i32) -> (i32, i32, i32) {
    %c0_i32 = arith.constant 0 : i32
    %c0_i32_0 = arith.constant 0 : i32
    %c0_i32_1 = arith.constant 0 : i32
    %c0_i32_2 = arith.constant 0 : i32
    return %c0_i32, %c0_i32_0, %c0_i32_1 : i32, i32, i32
  }
  func.func @transform_3(%arg0: i32) -> (i32, i32) {
    %c0_i32 = arith.constant 0 : i32
    %c0_i32_0 = arith.constant 0 : i32
    %c0_i32_1 = arith.constant 0 : i32
    return %c0_i32, %c0_i32_0 : i32, i32
  }
  func.func @transform_4(%arg0: i32) -> (i32, i32, i32) {
    %c0_i32 = arith.constant 0 : i32
    %c0_i32_0 = arith.constant 0 : i32
    %c0_i32_1 = arith.constant 0 : i32
    %c0_i32_2 = arith.constant 0 : i32
    return %c0_i32, %c0_i32_0, %c0_i32_1 : i32, i32, i32
  }
  func.func @transform_5(%arg0: i32) -> (i32, i32) {
    %c0_i32 = arith.constant 0 : i32
    %c0_i32_0 = arith.constant 0 : i32
    %c0_i32_1 = arith.constant 0 : i32
    return %c0_i32, %c0_i32_0 : i32, i32
  }
  func.func @transform_6(%arg0: i32) -> (i32, i32, i32) {
    %c0_i32 = arith.constant 0 : i32
    %c0_i32_0 = arith.constant 0 : i32
    %c0_i32_1 = arith.constant 0 : i32
    return %arg0, %c0_i32, %c0_i32_0 : i32, i32, i32
  }
}

</mosaic_0001>

<llo_original>
// kernel: spectral_operator_cnn_forward.1
$region0: #{spectral_operator_cnn_forward.1}
  #allocation0 [shape = 'u32[]', space=smem, size = 0x4, offset = 0x4, fixed_abs, tag = 'smem constant byte address 0x4 - core index']
  #allocation1 [shape = 'u32[144,128]{1,0:T(1,128)}', space=vmem, size = 0x12000, scoped, tag = 'internal scratch']
  #allocation2 [shape = 'f32[32,640]{1,0:T(8,128)}', space=vmem, size = 0x14000, scoped, tag = 'scratch operand']
  #allocation3 [shape = 'f32[288,384]{1,0:T(8,128)}', space=vmem, size = 0x6c000, scoped, tag = 'scratch operand']
  %s0 = inlined_call_operand.vmem [shape: f32[2,8,384], index: 0, kind: input, shape index: {}]
  %s1 = inlined_call_operand.vmem [shape: f32[32,72], index: 1, kind: input, shape index: {}]
  %s2 = inlined_call_operand.vmem [shape: f32[3,32,288], index: 2, kind: input, shape index: {}]
  %s3 = inlined_call_operand.vmem [shape: f32[8,288], index: 3, kind: input, shape index: {}]
  %s4 = inlined_call_operand.vmem [shape: f32[5,32,1], index: 4, kind: input, shape index: {}]
  %s5 = inlined_call_operand.vmem [shape: f32[1,384], index: 5, kind: input, shape index: {}]
  %s6 = inlined_call_operand.vmem [shape: f32[2,8,384], index: 6, kind: output, shape index: {}]
  %s7 = sld [smem:[#allocation0]]
  $region57: #{spectral_operator_cnn_forward.1} parent=0
    _
  %s9 = ssub.s32 1, %s7
  %s10 = scalar_select 0, %s9, %s7
  loop: start=0, step=1, limit=4
  $region2: #{spectral_operator_cnn_forward.1} parent=0 // loop_pre_header
    _
  $region3: #{spectral_operator_cnn_forward.1} parent=0 // loop_header
    %s12 = sphi 0, %s16
    %p13 = scmp.ge.s32.totalorder %s12, 4
    %s22 = sphi 0, %s24
    %s25 = sphi 0, %s22
    %s26 = sphi 0, %s25
    %s42 = sphi 0, %s26
    %s46 = sphi 0, %s46
    %s48 = sphi 0, %s46
    %s49 = sphi 0, %s48
    %s63 = sphi 0, %s49
    %s67 = sphi 0, %s67
    %s69 = sphi 0, %s67
    %s70 = sphi 0, %s69
    %s84 = sphi 0, %s70
    %s88 = sphi 0, %s88
    %s90 = sphi 0, %s88
    %s91 = sphi 0, %s90
    %s105 = sphi 0, %s91
    %s109 = sphi 0, %s109
    %s111 = sphi 0, %s109
    %s112 = sphi 0, %s111
    %s126 = sphi 0, %s112
    %s130 = sphi 0, %s130
    %s132 = sphi 0, %s130
    %s133 = sphi 0, %s132
    %s147 = sphi 0, %s133
    %s153 = sphi 0, %s155
    %s156 = sphi 0, %s153
    %s157 = sphi 0, %s156
    %s173 = sphi 0, %s157
  $region4: #{spectral_operator_cnn_forward.1} parent=0 // loop_header_branch
    %15 = sbr.rel (%p13) target = $region8
  $region5: #{spectral_operator_cnn_forward.1} parent=0 // loop_body
    %s17 = ssub.s32 %s12, 1
    %s18 = ssub.s32 %s12, 2
    %s19 = sadd.s32 %s12, 1
    %s20 = ssub.s32 %s12, %s19
    %p21 = scmp.eq.s32.totalorder %s20, 0
    %s23 = sadd.s32 %s22, 1
    %s24 = scalar_select %p21, %s22, %s23
    %p27 = pneg %p21
    %p28 = scmp.eq.s32.totalorder %s12, 1
    %p29 = por %p27, %p28
    %p30 = scmp.ne.s32.totalorder %s22, %s25
    %p31 = scmp.eq.s32.totalorder %s12, 0
    %p32 = por %p30, %p31
    %p33 = scmp.ne.s32.totalorder %s22, %s25
    %p34 = scmp.eq.s32.totalorder %s17, 1
    %p35 = por %p33, %p34
    %p36 = scmp.ne.s32.totalorder %s25, %s26
    %p37 = scmp.eq.s32.totalorder %s17, 0
    %p38 = por %p36, %p37
    %p39 = scmp.ne.s32.totalorder %s25, %s26
    %p40 = scmp.eq.s32.totalorder %s18, 1
    %p41 = por %p39, %p40
    %p43 = scmp.ne.s32.totalorder %s26, %s42
    %p44 = scmp.eq.s32.totalorder %s18, 0
    %p45 = por %p43, %p44
    %s47 = sadd.s32 %s46, 1
    %p50 = scmp.eq.s32.totalorder %s12, 1
    %p51 = scmp.ne.s32.totalorder %s46, %s48
    %p52 = scmp.eq.s32.totalorder %s12, 0
    %p53 = por %p51, %p52
    %p54 = scmp.ne.s32.totalorder %s46, %s48
    %p55 = scmp.eq.s32.totalorder %s17, 1
    %p56 = por %p54, %p55
    %p57 = scmp.ne.s32.totalorder %s48, %s49
    %p58 = scmp.eq.s32.totalorder %s17, 0
    %p59 = por %p57, %p58
    %p60 = scmp.ne.s32.totalorder %s48, %s49
    %p61 = scmp.eq.s32.totalorder %s18, 1
    %p62 = por %p60, %p61
    %p64 = scmp.ne.s32.totalorder %s49, %s63
    %p65 = scmp.eq.s32.totalorder %s18, 0
    %p66 = por %p64, %p65
    %s68 = sadd.s32 %s67, 1
    %p71 = scmp.eq.s32.totalorder %s12, 1
    %p72 = scmp.ne.s32.totalorder %s67, %s69
    %p73 = scmp.eq.s32.totalorder %s12, 0
    %p74 = por %p72, %p73
    %p75 = scmp.ne.s32.totalorder %s67, %s69
    %p76 = scmp.eq.s32.totalorder %s17, 1
    %p77 = por %p75, %p76
    %p78 = scmp.ne.s32.totalorder %s69, %s70
    %p79 = scmp.eq.s32.totalorder %s17, 0
    %p80 = por %p78, %p79
    %p81 = scmp.ne.s32.totalorder %s69, %s70
    %p82 = scmp.eq.s32.totalorder %s18, 1
    %p83 = por %p81, %p82
    %p85 = scmp.ne.s32.totalorder %s70, %s84
    %p86 = scmp.eq.s32.totalorder %s18, 0
    %p87 = por %p85, %p86
    %s89 = sadd.s32 %s88, 1
    %p92 = scmp.eq.s32.totalorder %s12, 1
    %p93 = scmp.ne.s32.totalorder %s88, %s90
    %p94 = scmp.eq.s32.totalorder %s12, 0
    %p95 = por %p93, %p94
    %p96 = scmp.ne.s32.totalorder %s88, %s90
    %p97 = scmp.eq.s32.totalorder %s17, 1
    %p98 = por %p96, %p97
    %p99 = scmp.ne.s32.totalorder %s90, %s91
    %p100 = scmp.eq.s32.totalorder %s17, 0
    %p101 = por %p99, %p100
    %p102 = scmp.ne.s32.totalorder %s90, %s91
    %p103 = scmp.eq.s32.totalorder %s18, 1
    %p104 = por %p102, %p103
    %p106 = scmp.ne.s32.totalorder %s91, %s105
    %p107 = scmp.eq.s32.totalorder %s18, 0
    %p108 = por %p106, %p107
    %s110 = sadd.s32 %s109, 1
    %p113 = scmp.eq.s32.totalorder %s12, 1
    %p114 = scmp.ne.s32.totalorder %s109, %s111
    %p115 = scmp.eq.s32.totalorder %s12, 0
    %p116 = por %p114, %p115
    %p117 = scmp.ne.s32.totalorder %s109, %s111
    %p118 = scmp.eq.s32.totalorder %s17, 1
    %p119 = por %p117, %p118
    %p120 = scmp.ne.s32.totalorder %s111, %s112
    %p121 = scmp.eq.s32.totalorder %s17, 0
    %p122 = por %p120, %p121
    %p123 = scmp.ne.s32.totalorder %s111, %s112
    %p124 = scmp.eq.s32.totalorder %s18, 1
    %p125 = por %p123, %p124
    %p127 = scmp.ne.s32.totalorder %s112, %s126
    %p128 = scmp.eq.s32.totalorder %s18, 0
    %p129 = por %p127, %p128
    %s131 = sadd.s32 %s130, 1
    %p134 = scmp.eq.s32.totalorder %s12, 1
    %p135 = scmp.ne.s32.totalorder %s130, %s132
    %p136 = scmp.eq.s32.totalorder %s12, 0
    %p137 = por %p135, %p136
    %p138 = scmp.ne.s32.totalorder %s130, %s132
    %p139 = scmp.eq.s32.totalorder %s17, 1
    %p140 = por %p138, %p139
    %p141 = scmp.ne.s32.totalorder %s132, %s133
    %p142 = scmp.eq.s32.totalorder %s17, 0
    %p143 = por %p141, %p142
    %p144 = scmp.ne.s32.totalorder %s132, %s133
    %p145 = scmp.eq.s32.totalorder %s18, 1
    %p146 = por %p144, %p145
    %p148 = scmp.ne.s32.totalorder %s133, %s147
    %p149 = scmp.eq.s32.totalorder %s18, 0
    %p150 = por %p148, %p149
    %s151 = ssub.s32 %s12, %s19
    %p152 = scmp.eq.s32.totalorder %s151, 0
    %s154 = sadd.s32 %s153, 1
    %s155 = scalar_select %p152, %s153, %s154
    %p158 = pneg %p152
    %p159 = scmp.eq.s32.totalorder %s12, 1
    %p160 = por %p158, %p159
    %p161 = scmp.ne.s32.totalorder %s153, %s156
    %p162 = scmp.eq.s32.totalorder %s12, 0
    %p163 = por %p161, %p162
    %p164 = scmp.ne.s32.totalorder %s153, %s156
    %p165 = scmp.eq.s32.totalorder %s17, 1
    %p166 = por %p164, %p165
    %p167 = scmp.ne.s32.totalorder %s156, %s157
    %p168 = scmp.eq.s32.totalorder %s17, 0
    %p169 = por %p167, %p168
    %p170 = scmp.ne.s32.totalorder %s156, %s157
    %p171 = scmp.eq.s32.totalorder %s18, 1
    %p172 = por %p170, %p171
    %p174 = scmp.ne.s32.totalorder %s157, %s173
    %p175 = scmp.eq.s32.totalorder %s18, 0
    %p176 = por %p174, %p175
    %p177 = scmp.le.s32.totalorder 1, %s12
    %p178 = scmp.lt.s32.totalorder %s12, 3
    %p179 = pnand %p177, %p178
    %p180 = pneg %p179
    // Predicated region
    $region9: #{spectral_operator_cnn_forward.1} parent=5 // pred_check
      _
    $region10: #{spectral_operator_cnn_forward.1} parent=5 // pred_check_branch
      %182 = sbr.rel (%p179) target = $region12
    $region11: #{spectral_operator_cnn_forward.1} parent=5 // pred_region
      %s183 = ssub.s32 %s12, 1
      // Predicated region
      $region13: #{spectral_operator_cnn_forward.1} parent=11 // pred_check
        %p184 = pneg %p59
      $region14: #{spectral_operator_cnn_forward.1} parent=11 // pred_check_branch
        %186 = sbr.rel (%p184) target = $region16
      $region15: #{spectral_operator_cnn_forward.1} parent=11 // pred_region
        _
      $region16: #{spectral_operator_cnn_forward.1} parent=11 // pred_fallthru
        _
      // Predicated region
      $region17: #{spectral_operator_cnn_forward.1} parent=11 // pred_check
        %p187 = pneg %p80
      $region18: #{spectral_operator_cnn_forward.1} parent=11 // pred_check_branch
        %189 = sbr.rel (%p187) target = $region20
      $region19: #{spectral_operator_cnn_forward.1} parent=11 // pred_region
        _
      $region20: #{spectral_operator_cnn_forward.1} parent=11 // pred_fallthru
        _
      // Predicated region
      $region21: #{spectral_operator_cnn_forward.1} parent=11 // pred_check
        %p190 = pneg %p101
      $region22: #{spectral_operator_cnn_forward.1} parent=11 // pred_check_branch
        %192 = sbr.rel (%p190) target = $region24
      $region23: #{spectral_operator_cnn_forward.1} parent=11 // pred_region
        _
      $region24: #{spectral_operator_cnn_forward.1} parent=11 // pred_fallthru
        _
      // Predicated region
      $region25: #{spectral_operator_cnn_forward.1} parent=11 // pred_check
        %p193 = pneg %p122
      $region26: #{spectral_operator_cnn_forward.1} parent=11 // pred_check_branch
        %195 = sbr.rel (%p193) target = $region28
      $region27: #{spectral_operator_cnn_forward.1} parent=11 // pred_region
        _
      $region28: #{spectral_operator_cnn_forward.1} parent=11 // pred_fallthru
        _
      // Predicated region
      $region29: #{spectral_operator_cnn_forward.1} parent=11 // pred_check
        %p196 = pneg %p143
      $region30: #{spectral_operator_cnn_forward.1} parent=11 // pred_check_branch
        %198 = sbr.rel (%p196) target = $region32
      $region31: #{spectral_operator_cnn_forward.1} parent=11 // pred_region
        _
      $region32: #{spectral_operator_cnn_forward.1} parent=11 // pred_fallthru
        _
    $region12: #{spectral_operator_cnn_forward.1} parent=5 // pred_fallthru
      _
    %p199 = scmp.lt.s32.totalorder %s12, 2
    // Predicated region
    $region33: #{spectral_operator_cnn_forward.1} parent=5 // pred_check
      %p200 = pneg %p199
    $region34: #{spectral_operator_cnn_forward.1} parent=5 // pred_check_branch
      %202 = sbr.rel (%p200) target = $region36
    $region35: #{spectral_operator_cnn_forward.1} parent=5 // pred_region
      // Predicated region
      $region37: #{spectral_operator_cnn_forward.1} parent=35 // pred_check
        %p203 = pneg %p32
      $region38: #{spectral_operator_cnn_forward.1} parent=35 // pred_check_branch
        %205 = sbr.rel (%p203) target = $region40
      $region39: #{spectral_operator_cnn_forward.1} parent=35 // pred_region
        %p206 = scmp.lt.s32.totalorder %s12, 1
        %s207 = scalar_select %p206, %s12, 1
        %s208 = smul.addr %s207, 3
        %s209 = smul.addr %s208, 8
        %s210 = scalar_lea.vmem %s0, %s209
      $region40: #{spectral_operator_cnn_forward.1} parent=35 // pred_fallthru
        _
    $region36: #{spectral_operator_cnn_forward.1} parent=5 // pred_fallthru
      _
    %p211 = scmp.le.s32.totalorder 1, %s12
    %p212 = scmp.lt.s32.totalorder %s12, 3
    %p213 = pnand %p211, %p212
    %p214 = pneg %p213
    // Predicated region
    $region41: #{spectral_operator_cnn_forward.1} parent=5 // pred_check
      _
    $region42: #{spectral_operator_cnn_forward.1} parent=5 // pred_check_branch
      %216 = sbr.rel (%p213) target = $region44
    $region43: #{spectral_operator_cnn_forward.1} parent=5 // pred_region
      %s217 = ssub.s32 %s12, 1
      %p218 = scmp.lt.s32.totalorder %s17, 1
      %s219 = scalar_select %p218, %s17, 1
      %s220 = smul.addr %s219, 3
      %s221 = smul.addr %s220, 8
      %s222 = scalar_lea.vmem %s0, %s221
      %p223 = pneg %p38
      %p224 = pneg %p35
      %p225 = pneg %p59
      %p226 = pneg %p56
      %p227 = pneg %p80
      %p228 = pneg %p77
      %p229 = pneg %p101
      %p230 = pneg %p98
      %p231 = pneg %p122
      %p232 = pneg %p119
      %p233 = pneg %p143
      %p234 = pneg %p140
      %p235 = pneg %p169
      %p236 = pneg %p166
      %p237 = scmp.lt.s32.totalorder %s17, 1
      %s238 = scalar_select %p237, %s17, 1
      %s239 = smul.addr %s238, 3
      %s240 = smul.addr %s239, 8
      %s241 = scalar_lea.vmem %s6, %s240
      %p242 = scmp.lt.s32.totalorder %s17, 1
      %s243 = scalar_select %p242, %s17, 1
      %s244 = smul.addr %s243, 3
      %s245 = smul.addr %s244, 8
      %s246 = scalar_lea.vmem %s0, %s245
      %p247 = scmp.lt.s32.totalorder %s17, 1
      %s248 = scalar_select %p247, %s17, 1
      %s249 = smul.addr %s248, 3
      %s250 = smul.addr %s249, 8
      %s251 = scalar_lea.vmem %s6, %s250
      %252 = vst [vmem:[#allocation2] sm:$0xff] 0.0
      %253 = vst [vmem:[#allocation2 + $0x28] sm:$0xff] 0.0
      %254 = vst [vmem:[#allocation2 + $0x50] sm:$0xff] 0.0
      %255 = vst [vmem:[#allocation2 + $0x78] sm:$0xff] 0.0
      %256 = vst [vmem:[#allocation2 + $0x20] sm:$0xff] 0.0
      %257 = vst [vmem:[#allocation2 + $0x48] sm:$0xff] 0.0
      %258 = vst [vmem:[#allocation2 + $0x70] sm:$0xff] 0.0
      %259 = vst [vmem:[#allocation2 + $0x98] sm:$0xff] 0.0
      %v260 = vld [vmem:[%s246] sm:$0xff]
      %v261 = vld [vmem:[%s246 + $0x8] sm:$0xff]
      %v262 = vld [vmem:[%s246 + $0x10] sm:$0xff]
      %263 = vst [vmem:[#allocation2 + $0x8] sm:$0xff] %v260
      %264 = vst [vmem:[#allocation2 + $0x10] sm:$0xff] %v261
      %265 = vst [vmem:[#allocation2 + $0x18] sm:$0xff] %v262
      %v266 = vld [vmem:[%s5] sm:$0x7]
      %v267 = vld [vmem:[%s1] sm:$0xff]
      %v268 = vld [vmem:[%s1 + $0x8] sm:$0xff]
      %v269 = vld [vmem:[%s1 + $0x10] sm:$0xff]
      %v270 = vld [vmem:[%s1 + $0x18] sm:$0xff]
      %v271 = vld [vmem:[%s4] sm:$0xff]
      %v272 = vld [vmem:[%s4 + $0x8] sm:$0xff]
      %v273 = vld [vmem:[%s4 + $0x10] sm:$0xff]
      %v274 = vld [vmem:[%s4 + $0x18] sm:$0xff]
      %v275 = vld [vmem:[#allocation2] sm:$0xff]
      %v276 = vld [vmem:[#allocation2 + $0x8] sm:$0xff]
      %v277 = vld [vmem:[#allocation2 + $0x10] sm:$0xff]
      %v278 = vld [vmem:[#allocation2 + $0x18] sm:$0xff]
      %283 = vrot.lane.b32.xlu0 %v275, 19
      %v284 = vpop.permute.xlu0 %283
      %285 = vrot.lane.b32.xlu0 %v276, 19
      %v286 = vpop.permute.xlu0 %285
      %287 = vrot.lane.b32.xlu0 %v277, 19
      %v288 = vpop.permute.xlu0 %287
      %289 = vrot.lane.b32.xlu0 %v278, 19
      %v290 = vpop.permute.xlu0 %289
      %vm291 = vcmask 154624
      %v292 = vsel %vm291, %v284, %v286
      %v293 = vsel %vm291, %v286, %v288
      %v294 = vsel %vm291, %v288, %v290
      %298 = vst [vmem:[#allocation3] sm:$0xff] %v292
      %299 = vst [vmem:[#allocation3 + $0x8] sm:$0xff] %v293
      %300 = vst [vmem:[#allocation3 + $0x10] sm:$0xff] %v294
      %v301 = vld [vmem:[#allocation2] sm:$0xff]
      %v302 = vld [vmem:[#allocation2 + $0x8] sm:$0xff]
      %v303 = vld [vmem:[#allocation2 + $0x10] sm:$0xff]
      %v304 = vld [vmem:[#allocation2 + $0x18] sm:$0xff]
      %309 = vrot.lane.b32.xlu0 %v301, 18
      %v310 = vpop.permute.xlu0 %309
      %311 = vrot.lane.b32.xlu0 %v302, 18
      %v312 = vpop.permute.xlu0 %311
      %313 = vrot.lane.b32.xlu0 %v303, 18
      %v314 = vpop.permute.xlu0 %313
      %315 = vrot.lane.b32.xlu0 %v304, 18
      %v316 = vpop.permute.xlu0 %315
      %vm317 = vcmask 146432
      %v318 = vsel %vm317, %v310, %v312
      %v319 = vsel %vm317, %v312, %v314
      %v320 = vsel %vm317, %v314, %v316
      %324 = vst [vmem:[#allocation3 + $0x18] sm:$0xff] %v318
      %325 = vst [vmem:[#allocation3 + $0x20] sm:$0xff] %v319
      %326 = vst [vmem:[#allocation3 + $0x28] sm:$0xff] %v320
      %v327 = vld [vmem:[#allocation2] sm:$0xff]
      %v328 = vld [vmem:[#allocation2 + $0x8] sm:$0xff]
      %v329 = vld [vmem:[#allocation2 + $0x10] sm:$0xff]
      %v330 = vld [vmem:[#allocation2 + $0x18] sm:$0xff]
      %335 = vrot.lane.b32.xlu0 %v327, 17
      %v336 = vpop.permute.xlu0 %335
      %337 = vrot.lane.b32.xlu0 %v328, 17
      %v338 = vpop.permute.xlu0 %337
      %339 = vrot.lane.b32.xlu0 %v329, 17
      %v340 = vpop.permute.xlu0 %339
      %341 = vrot.lane.b32.xlu0 %v330, 17
      %v342 = vpop.permute.xlu0 %341
      %vm343 = vcmask 138240
      %v344 = vsel %vm343, %v336, %v338
      %v345 = vsel %vm343, %v338, %v340
      %v346 = vsel %vm343, %v340, %v342
      %350 = vst [vmem:[#allocation3 + $0x30] sm:$0xff] %v344
      %351 = vst [vmem:[#allocation3 + $0x38] sm:$0xff] %v345
      %352 = vst [vmem:[#allocation3 + $0x40] sm:$0xff] %v346
      %v353 = vld [vmem:[#allocation2] sm:$0xff]
      %v354 = vld [vmem:[#allocation2 + $0x8] sm:$0xff]
      %v355 = vld [vmem:[#allocation2 + $0x10] sm:$0xff]
      %v356 = vld [vmem:[#allocation2 + $0x18] sm:$0xff]
      %361 = vrot.lane.b32.xlu0 %v353, 1
      %v362 = vpop.permute.xlu0 %361
      %363 = vrot.lane.b32.xlu0 %v354, 1
      %v364 = vpop.permute.xlu0 %363
      %365 = vrot.lane.b32.xlu0 %v355, 1
      %v366 = vpop.permute.xlu0 %365
      %367 = vrot.lane.b32.xlu0 %v356, 1
      %v368 = vpop.permute.xlu0 %367
      %vm369 = vcmask 7168
      %v370 = vsel %vm369, %v362, %v364
      %v371 = vsel %vm369, %v364, %v366
      %v372 = vsel %vm369, %v366, %v368
      %376 = vst [vmem:[#allocation3 + $0x48] sm:$0xff] %v370
      %377 = vst [vmem:[#allocation3 + $0x50] sm:$0xff] %v371
      %378 = vst [vmem:[#allocation3 + $0x58] sm:$0xff] %v372
      %v379 = vld [vmem:[#allocation2 + $0x8] sm:$0xff]
      %v380 = vld [vmem:[#allocation2 + $0x10] sm:$0xff]
      %v381 = vld [vmem:[#allocation2 + $0x18] sm:$0xff]
      %382 = vst [vmem:[#allocation3 + $0x60] sm:$0xff] %v379
      %383 = vst [vmem:[#allocation3 + $0x68] sm:$0xff] %v380
      %384 = vst [vmem:[#allocation3 + $0x70] sm:$0xff] %v381
      %v385 = vld [vmem:[#allocation2 + $0x8] sm:$0xff]
      %v386 = vld [vmem:[#allocation2 + $0x10] sm:$0xff]
      %v387 = vld [vmem:[#allocation2 + $0x18] sm:$0xff]
      %v388 = vld [vmem:[#allocation2 + $0x20] sm:$0xff]
      %393 = vrot.lane.b32.xlu0 %v385, 127
      %v394 = vpop.permute.xlu0 %393
      %395 = vrot.lane.b32.xlu0 %v386, 127
      %v396 = vpop.permute.xlu0 %395
      %397 = vrot.lane.b32.xlu0 %v387, 127
      %v398 = vpop.permute.xlu0 %397
      %399 = vrot.lane.b32.xlu0 %v388, 127
      %v400 = vpop.permute.xlu0 %399
      %vm401 = vcmask 1039360
      %v402 = vsel %vm401, %v394, %v396
      %v403 = vsel %vm401, %v396, %v398
      %v404 = vsel %vm401, %v398, %v400
      %408 = vst [vmem:[#allocation3 + $0x78] sm:$0xff] %v402
      %409 = vst [vmem:[#allocation3 + $0x80] sm:$0xff] %v403
      %410 = vst [vmem:[#allocation3 + $0x88] sm:$0xff] %v404
      %v411 = vld [vmem:[#allocation2 + $0x8] sm:$0xff]
      %v412 = vld [vmem:[#allocation2 + $0x10] sm:$0xff]
      %v413 = vld [vmem:[#allocation2 + $0x18] sm:$0xff]
      %v414 = vld [vmem:[#allocation2 + $0x20] sm:$0xff]
      %419 = vrot.lane.b32.xlu0 %v411, 111
      %v420 = vpop.permute.xlu0 %419
      %421 = vrot.lane.b32.xlu0 %v412, 111
      %v422 = vpop.permute.xlu0 %421
      %423 = vrot.lane.b32.xlu0 %v413, 111
      %v424 = vpop.permute.xlu0 %423
      %425 = vrot.lane.b32.xlu0 %v414, 111
      %v426 = vpop.permute.xlu0 %425
      %vm427 = vcmask 908288
      %v428 = vsel %vm427, %v420, %v422
      %v429 = vsel %vm427, %v422, %v424
      %v430 = vsel %vm427, %v424, %v426
      %434 = vst [vmem:[#allocation3 + $0x90] sm:$0xff] %v428
      %435 = vst [vmem:[#allocation3 + $0x98] sm:$0xff] %v429
      %436 = vst [vmem:[#allocation3 + $0xa0] sm:$0xff] %v430
      %v437 = vld [vmem:[#allocation2 + $0x8] sm:$0xff]
      %v438 = vld [vmem:[#allocation2 + $0x10] sm:$0xff]
      %v439 = vld [vmem:[#allocation2 + $0x18] sm:$0xff]
      %v440 = vld [vmem:[#allocation2 + $0x20] sm:$0xff]
      %445 = vrot.lane.b32.xlu0 %v437, 110
      %v446 = vpop.permute.xlu0 %445
      %447 = vrot.lane.b32.xlu0 %v438, 110
      %v448 = vpop.permute.xlu0 %447
      %449 = vrot.lane.b32.xlu0 %v439, 110
      %v450 = vpop.permute.xlu0 %449
      %451 = vrot.lane.b32.xlu0 %v440, 110
      %v452 = vpop.permute.xlu0 %451
      %vm453 = vcmask 900096
      %v454 = vsel %vm453, %v446, %v448
      %v455 = vsel %vm453, %v448, %v450
      %v456 = vsel %vm453, %v450, %v452
      %460 = vst [vmem:[#allocation3 + $0xa8] sm:$0xff] %v454
      %461 = vst [vmem:[#allocation3 + $0xb0] sm:$0xff] %v455
      %462 = vst [vmem:[#allocation3 + $0xb8] sm:$0xff] %v456
      %v463 = vld [vmem:[#allocation2 + $0x8] sm:$0xff]
      %v464 = vld [vmem:[#allocation2 + $0x10] sm:$0xff]
      %v465 = vld [vmem:[#allocation2 + $0x18] sm:$0xff]
      %v466 = vld [vmem:[#allocation2 + $0x20] sm:$0xff]
      %471 = vrot.lane.b32.xlu0 %v463, 109
      %v472 = vpop.permute.xlu0 %471
      %473 = vrot.lane.b32.xlu0 %v464, 109
      %v474 = vpop.permute.xlu0 %473
      %475 = vrot.lane.b32.xlu0 %v465, 109
      %v476 = vpop.permute.xlu0 %475
      %477 = vrot.lane.b32.xlu0 %v466, 109
      %v478 = vpop.permute.xlu0 %477
      %vm479 = vcmask 891904
      %v480 = vsel %vm479, %v472, %v474
      %v481 = vsel %vm479, %v474, %v476
      %v482 = vsel %vm479, %v476, %v478
      %486 = vst [vmem:[#allocation3 + $0xc0] sm:$0xff] %v480
      %487 = vst [vmem:[#allocation3 + $0xc8] sm:$0xff] %v481
      %488 = vst [vmem:[#allocation3 + $0xd0] sm:$0xff] %v482
      %v489 = vld [vmem:[#allocation3] sm:$0xff]
      %v490 = vld [vmem:[#allocation3 + $0x8] sm:$0xff]
      %v491 = vld [vmem:[#allocation3 + $0x10] sm:$0xff]
      %v492 = vld [vmem:[#allocation3 + $0x18] sm:$0xff]
      %v493 = vld [vmem:[#allocation3 + $0x20] sm:$0xff]
      %v494 = vld [vmem:[#allocation3 + $0x28] sm:$0xff]
      %v495 = vld [vmem:[#allocation3 + $0x30] sm:$0xff]
      %v496 = vld [vmem:[#allocation3 + $0x38] sm:$0xff]
      %v497 = vld [vmem:[#allocation3 + $0x40] sm:$0xff]
      %v498 = vld [vmem:[#allocation3 + $0x48] sm:$0xff]
      %v499 = vld [vmem:[#allocation3 + $0x50] sm:$0xff]
      %v500 = vld [vmem:[#allocation3 + $0x58] sm:$0xff]
      %v501 = vld [vmem:[#allocation3 + $0x60] sm:$0xff]
      %v502 = vld [vmem:[#allocation3 + $0x68] sm:$0xff]
      %v503 = vld [vmem:[#allocation3 + $0x70] sm:$0xff]
      %v504 = vld [vmem:[#allocation3 + $0x78] sm:$0xff]
      %v505 = vld [vmem:[#allocation3 + $0x80] sm:$0xff]
      %v506 = vld [vmem:[#allocation3 + $0x88] sm:$0xff]
      %v507 = vld [vmem:[#allocation3 + $0x90] sm:$0xff]
      %v508 = vld [vmem:[#allocation3 + $0x98] sm:$0xff]
      %v509 = vld [vmem:[#allocation3 + $0xa0] sm:$0xff]
      %v510 = vld [vmem:[#allocation3 + $0xa8] sm:$0xff]
      %v511 = vld [vmem:[#allocation3 + $0xb0] sm:$0xff]
      %v512 = vld [vmem:[#allocation3 + $0xb8] sm:$0xff]
      %v513 = vld [vmem:[#allocation3 + $0xc0] sm:$0xff]
      %v514 = vld [vmem:[#allocation3 + $0xc8] sm:$0xff]
      %v515 = vld [vmem:[#allocation3 + $0xd0] sm:$0xff]
      %517 = vset.pattern.permute.xlu0 0
      %518 = vperm.xlu0 %517, %v271
      %v519 = vpop.permute.xlu0 %518
      %522 = vset.pattern.permute.xlu0 0
      %523 = vperm.xlu0 %522, %v272
      %v524 = vpop.permute.xlu0 %523
      %527 = vset.pattern.permute.xlu0 0
      %528 = vperm.xlu0 %527, %v273
      %v529 = vpop.permute.xlu0 %528
      %532 = vset.pattern.permute.xlu0 0
      %533 = vperm.xlu0 %532, %v274
      %v534 = vpop.permute.xlu0 %533
      %vm536 = vcmask 588800
      %v538 = vsel %vm536, %v267, 0
      %v541 = vsel %vm536, %v268, 0
      %v544 = vsel %vm536, %v269, 0
      %v547 = vsel %vm536, %v270, 0
      %549 = vmatprep.subr.mxu0 %v490
      %550 = vmatpush1.msra.mxu0 %v489
      %551 = vmatprep.subr.mxu0 %v493
      %552 = vmatpush1.msra.mxu0 %v492
      %553 = vmatprep.subr.mxu0 %v496
      %554 = vmatpush1.msra.mxu0 %v495
      %555 = vmatprep.subr.mxu0 %v499
      %556 = vmatpush1.msra.mxu0 %v498
      %557 = vmatprep.subr.mxu0 %v502
      %558 = vmatpush1.msra.mxu0 %v501
      %559 = vmatprep.subr.mxu0 %v505
      %560 = vmatpush1.msra.mxu0 %v504
      %561 = vmatprep.subr.mxu0 %v508
      %562 = vmatpush1.msra.mxu0 %v507
      %563 = vmatprep.subr.mxu0 %v511
      %564 = vmatpush1.msra.mxu0 %v510
      %565 = vmatprep.subr.mxu0 %v514
      %566 = vmatpush1.msra.mxu0 %v513
      %567 = vmatprep.subr.mxu0 0.0
      %568 = vmatpush1.msra.mxu0 0.0
      %569 = vmatprep.subr.mxu0 0.0
      %570 = vmatpush1.msra.mxu0 0.0
      %571 = vmatprep.subr.mxu0 0.0
      %572 = vmatpush1.msra.mxu0 0.0
      %573 = vmatprep.subr.mxu0 0.0
      %574 = vmatpush1.msra.mxu0 0.0
      %575 = vmatprep.subr.mxu0 0.0
      %576 = vmatpush1.msra.mxu0 0.0
      %577 = vmatprep.subr.mxu0 0.0
      %578 = vmatpush1.msra.mxu0 0.0
      %579 = vmatprep.subr.mxu0 0.0
      %580 = vmatpush1.msra.mxu0 0.0
      %581 = vmatprep.subr.mxu0 0.0
      %582 = vmatpush1.msra.mxu0 0.0
      %583 = vmatprep.subr.mxu0 0.0
      %584 = vmatpush1.msra.mxu0 0.0
      %585 = vmatprep.subr.mxu0 0.0
      %586 = vmatpush1.msra.mxu0 0.0
      %587 = vmatprep.subr.mxu0 0.0
      %588 = vmatpush1.msra.mxu0 0.0
      %589 = vmatprep.subr.mxu0 0.0
      %590 = vmatpush1.msra.mxu0 0.0
      %591 = vmatprep.subr.mxu0 0.0
      %592 = vmatpush1.msra.mxu0 0.0
      %593 = vmatprep.subr.mxu0 0.0
      %594 = vmatpush1.msra.mxu0 0.0
      %595 = vmatprep.subr.mxu0 0.0
      %596 = vmatpush1.msra.mxu0 0.0
      %597 = vmatprep.subr.mxu0 0.0
      %598 = vmatpush1.msra.mxu0 0.0
      %599 = vmatprep.subr.mxu0 0.0
      %600 = vmatpush1.msra.mxu0 0.0
      %601 = vmatprep.subr.mxu0 0.0
      %602 = vmatpush1.msra.mxu0 0.0
      %603 = vmatprep.subr.mxu0 0.0
      %604 = vmatpush1.msra.mxu0 0.0
      %605 = vmatprep.subr.mxu0 0.0
      %606 = vmatpush1.msra.mxu0 0.0
      %607 = vmatprep.subr.mxu0 0.0
      %608 = vmatpush1.msra.mxu0 0.0
      %609 = vmatprep.subr.mxu0 0.0
      %610 = vmatpush1.msra.mxu0 0.0
      %611 = vmatprep.subr.mxu0 0.0
      %612 = vmatpush1.msra.mxu0 0.0
      %613 = vmatprep.mubr.f32.mxu0 0.0
      %614 = vmatmul.mubr.f32.gmra.mrb[0].mxu0 %v538
      %v615 = vpop.f32.mrb[0].mxu0
      %v616 = vadd.f32 %v519, %v615
      %v617 = vpop.f32.mrb[0].mxu0
      %v618 = vadd.f32 %v519, %v617
      %619 = vmatprep.mubr.f32.mxu0 0.0
      %620 = vmatmul.mubr.f32.gmra.mrb[0].mxu0 %v541
      %v621 = vpop.f32.mrb[0].mxu0
      %v622 = vadd.f32 %v524, %v621
      %v623 = vpop.f32.mrb[0].mxu0
      %v624 = vadd.f32 %v524, %v623
      %625 = vmatprep.mubr.f32.mxu0 0.0
      %626 = vmatmul.mubr.f32.gmra.mrb[0].mxu0 %v544
      %v627 = vpop.f32.mrb[0].mxu0
      %v628 = vadd.f32 %v529, %v627
      %v629 = vpop.f32.mrb[0].mxu0
      %v630 = vadd.f32 %v529, %v629
      %631 = vmatprep.mubr.f32.mxu0 0.0
      %632 = vmatmul.mubr.f32.gmra.mrb[0].mxu0 %v547
      %v633 = vpop.f32.mrb[0].mxu0
      %v634 = vadd.f32 %v534, %v633
      %v635 = vpop.f32.mrb[0].mxu0
      %v636 = vadd.f32 %v534, %v635
      %637 = vdwg.mxu0
      %638 = vmatprep.subr.mxu0 0.0
      %639 = vmatpush1.msra.mxu0 %v491
      %640 = vmatprep.subr.mxu0 0.0
      %641 = vmatpush1.msra.mxu0 %v494
      %642 = vmatprep.subr.mxu0 0.0
      %643 = vmatpush1.msra.mxu0 %v497
      %644 = vmatprep.subr.mxu0 0.0
      %645 = vmatpush1.msra.mxu0 %v500
      %646 = vmatprep.subr.mxu0 0.0
      %647 = vmatpush1.msra.mxu0 %v503
      %648 = vmatprep.subr.mxu0 0.0
      %649 = vmatpush1.msra.mxu0 %v506
      %650 = vmatprep.subr.mxu0 0.0
      %651 = vmatpush1.msra.mxu0 %v509
      %652 = vmatprep.subr.mxu0 0.0
      %653 = vmatpush1.msra.mxu0 %v512
      %654 = vmatprep.subr.mxu0 0.0
      %655 = vmatpush1.msra.mxu0 %v515
      %656 = vmatprep.subr.mxu0 0.0
      %657 = vmatpush1.msra.mxu0 0.0
      %658 = vmatprep.subr.mxu0 0.0
      %659 = vmatpush1.msra.mxu0 0.0
      %660 = vmatprep.subr.mxu0 0.0
      %661 = vmatpush1.msra.mxu0 0.0
      %662 = vmatprep.subr.mxu0 0.0
      %663 = vmatpush1.msra.mxu0 0.0
      %664 = vmatprep.subr.mxu0 0.0
      %665 = vmatpush1.msra.mxu0 0.0
      %666 = vmatprep.subr.mxu0 0.0
      %667 = vmatpush1.msra.mxu0 0.0
      %668 = vmatprep.subr.mxu0 0.0
      %669 = vmatpush1.msra.mxu0 0.0
      %670 = vmatprep.subr.mxu0 0.0
      %671 = vmatpush1.msra.mxu0 0.0
      %672 = vmatprep.subr.mxu0 0.0
      %673 = vmatpush1.msra.mxu0 0.0
      %674 = vmatprep.subr.mxu0 0.0
      %675 = vmatpush1.msra.mxu0 0.0
      %676 = vmatprep.subr.mxu0 0.0
      %677 = vmatpush1.msra.mxu0 0.0
      %678 = vmatprep.subr.mxu0 0.0
      %679 = vmatpush1.msra.mxu0 0.0
      %680 = vmatprep.subr.mxu0 0.0
      %681 = vmatpush1.msra.mxu0 0.0
      %682 = vmatprep.subr.mxu0 0.0
      %683 = vmatpush1.msra.mxu0 0.0
      %684 = vmatprep.subr.mxu0 0.0
      %685 = vmatpush1.msra.mxu0 0.0
      %686 = vmatprep.subr.mxu0 0.0
      %687 = vmatpush1.msra.mxu0 0.0
      %688 = vmatprep.subr.mxu0 0.0
      %689 = vmatpush1.msra.mxu0 0.0
      %690 = vmatprep.subr.mxu0 0.0
      %691 = vmatpush1.msra.mxu0 0.0
      %692 = vmatprep.subr.mxu0 0.0
      %693 = vmatpush1.msra.mxu0 0.0
      %694 = vmatprep.subr.mxu0 0.0
      %695 = vmatpush1.msra.mxu0 0.0
      %696 = vmatprep.subr.mxu0 0.0
      %697 = vmatpush1.msra.mxu0 0.0
      %698 = vmatprep.subr.mxu0 0.0
      %699 = vmatpush1.msra.mxu0 0.0
      %700 = vmatprep.subr.mxu0 0.0
      %701 = vmatpush1.msra.mxu0 0.0
      %702 = vmatprep.mubr.f32.mxu0 0.0
      %703 = vmatmul.mubr.f32.gmra.mrb[0].mxu0 %v538
      %v704 = vpop.f32.mrb[0].mxu0
      %v705 = vadd.f32 %v519, %v704
      %v706 = vpop.f32.mrb[0].mxu0
      %707 = vmatprep.mubr.f32.mxu0 0.0
      %708 = vmatmul.mubr.f32.gmra.mrb[0].mxu0 %v541
      %v709 = vpop.f32.mrb[0].mxu0
      %v710 = vadd.f32 %v524, %v709
      %v711 = vpop.f32.mrb[0].mxu0
      %712 = vmatprep.mubr.f32.mxu0 0.0
      %713 = vmatmul.mubr.f32.gmra.mrb[0].mxu0 %v544
      %v714 = vpop.f32.mrb[0].mxu0
      %v715 = vadd.f32 %v529, %v714
      %v716 = vpop.f32.mrb[0].mxu0
      %717 = vmatprep.mubr.f32.mxu0 0.0
      %718 = vmatmul.mubr.f32.gmra.mrb[0].mxu0 %v547
      %v719 = vpop.f32.mrb[0].mxu0
      %v720 = vadd.f32 %v534, %v719
      %v721 = vpop.f32.mrb[0].mxu0
      %722 = vdwg.mxu0
      %v723 = vmax.f32 %v616, 0.0
      %v724 = vmax.f32 %v618, 0.0
      %v725 = vmax.f32 %v705, 0.0
      %v726 = vmax.f32 %v622, 0.0
      %v727 = vmax.f32 %v624, 0.0
      %v728 = vmax.f32 %v710, 0.0
      %v729 = vmax.f32 %v628, 0.0
      %v730 = vmax.f32 %v630, 0.0
      %v731 = vmax.f32 %v715, 0.0
      %v732 = vmax.f32 %v634, 0.0
      %v733 = vmax.f32 %v636, 0.0
      %v734 = vmax.f32 %v720, 0.0
      %v736 = vlaneseq
      %v737 = vshrl.u32 %v736, 7
      %v738 = vsub.s32 0, %v737
      %v739 = vrot.slane %v266, %v738
      %v740 = vlaneseq
      %v741 = vshrl.u32 %v740, 7
      %v742 = vsub.s32 1, %v741
      %v743 = vrot.slane %v266, %v742
      %v744 = vlaneseq
      %v745 = vshrl.u32 %v744, 7
      %v746 = vsub.s32 2, %v745
      %v747 = vrot.slane %v266, %v746
      %v751 = vmul.f32 %v723, %v739
      %v752 = vmul.f32 %v724, %v743
      %v753 = vmul.f32 %v725, %v747
      %v754 = vmul.f32 %v726, %v739
      %v755 = vmul.f32 %v727, %v743
      %v756 = vmul.f32 %v728, %v747
      %v757 = vmul.f32 %v729, %v739
      %v758 = vmul.f32 %v730, %v743
      %v759 = vmul.f32 %v731, %v747
      %v760 = vmul.f32 %v732, %v739
      %v761 = vmul.f32 %v733, %v743
      %v762 = vmul.f32 %v734, %v747
      %763 = vst [vmem:[#allocation2 + $0x8] sm:$0xff] %v751
      %764 = vst [vmem:[#allocation2 + $0x10] sm:$0xff] %v752
      %765 = vst [vmem:[#allocation2 + $0x18] sm:$0xff] %v753
      %766 = vst [vmem:[#allocation2 + $0x30] sm:$0xff] %v754
      %767 = vst [vmem:[#allocation2 + $0x38] sm:$0xff] %v755
      %768 = vst [vmem:[#allocation2 + $0x40] sm:$0xff] %v756
      %769 = vst [vmem:[#allocation2 + $0x58] sm:$0xff] %v757
      %770 = vst [vmem:[#allocation2 + $0x60] sm:$0xff] %v758
      %771 = vst [vmem:[#allocation2 + $0x68] sm:$0xff] %v759
      %772 = vst [vmem:[#allocation2 + $0x80] sm:$0xff] %v760
      %773 = vst [vmem:[#allocation2 + $0x88] sm:$0xff] %v761
      %774 = vst [vmem:[#allocation2 + $0x90] sm:$0xff] %v762
      %v775 = vld [vmem:[%s2] sm:$0xff]
      %v776 = vld [vmem:[%s2 + $0x8] sm:$0xff]
      %v777 = vld [vmem:[%s2 + $0x10] sm:$0xff]
      %v778 = vld [vmem:[%s2 + $0x18] sm:$0xff]
      %v779 = vld [vmem:[%s2 + $0x20] sm:$0xff]
      %v780 = vld [vmem:[%s2 + $0x28] sm:$0xff]
      %v781 = vld [vmem:[%s2 + $0x30] sm:$0xff]
      %v782 = vld [vmem:[%s2 + $0x38] sm:$0xff]
      %v783 = vld [vmem:[%s2 + $0x40] sm:$0xff]
      %v784 = vld [vmem:[%s2 + $0x48] sm:$0xff]
      %v785 = vld [vmem:[%s2 + $0x50] sm:$0xff]
      %v786 = vld [vmem:[%s2 + $0x58] sm:$0xff]
      %s787 = scalar_lea.vmem %s4, 32
      %v788 = vld [vmem:[%s787] sm:$0xff]
      %v789 = vld [vmem:[%s787 + $0x8] sm:$0xff]
      %v790 = vld [vmem:[%s787 + $0x10] sm:$0xff]
      %v791 = vld [vmem:[%s787 + $0x18] sm:$0xff]
      %v792 = vld [vmem:[#allocation2] sm:$0xff]
      %v793 = vld [vmem:[#allocation2 + $0x8] sm:$0xff]
      %v794 = vld [vmem:[#allocation2 + $0x10] sm:$0xff]
      %v795 = vld [vmem:[#allocation2 + $0x18] sm:$0xff]
      %v796 = vld [vmem:[#allocation2 + $0x28] sm:$0xff]
      %v797 = vld [vmem:[#allocation2 + $0x30] sm:$0xff]
      %v798 = vld [vmem:[#allocation2 + $0x38] sm:$0xff]
      %v799 = vld [vmem:[#allocation2 + $0x40] sm:$0xff]
      %v800 = vld [vmem:[#allocation2 + $0x50] sm:$0xff]
      %v801 = vld [vmem:[#allocation2 + $0x58] sm:$0xff]
      %v802 = vld [vmem:[#allocation2 + $0x60] sm:$0xff]
      %v803 = vld [vmem:[#allocation2 + $0x68] sm:$0xff]
      %v804 = vld [vmem:[#allocation2 + $0x78] sm:$0xff]
      %v805 = vld [vmem:[#allocation2 + $0x80] sm:$0xff]
      %v806 = vld [vmem:[#allocation2 + $0x88] sm:$0xff]
      %v807 = vld [vmem:[#allocation2 + $0x90] sm:$0xff]
      %824 = vrot.lane.b32.xlu0 %v792, 19
      %v825 = vpop.permute.xlu0 %824
      %826 = vrot.lane.b32.xlu0 %v793, 19
      %v827 = vpop.permute.xlu0 %826
      %828 = vrot.lane.b32.xlu0 %v794, 19
      %v829 = vpop.permute.xlu0 %828
      %830 = vrot.lane.b32.xlu0 %v795, 19
      %v831 = vpop.permute.xlu0 %830
      %832 = vrot.lane.b32.xlu0 %v796, 19
      %v833 = vpop.permute.xlu0 %832
      %834 = vrot.lane.b32.xlu0 %v797, 19
      %v835 = vpop.permute.xlu0 %834
      %836 = vrot.lane.b32.xlu0 %v798, 19
      %v837 = vpop.permute.xlu0 %836
      %838 = vrot.lane.b32.xlu0 %v799, 19
      %v839 = vpop.permute.xlu0 %838
      %840 = vrot.lane.b32.xlu0 %v800, 19
      %v841 = vpop.permute.xlu0 %840
      %842 = vrot.lane.b32.xlu0 %v801, 19
      %v843 = vpop.permute.xlu0 %842
      %844 = vrot.lane.b32.xlu0 %v802, 19
      %v845 = vpop.permute.xlu0 %844
      %846 = vrot.lane.b32.xlu0 %v803, 19
      %v847 = vpop.permute.xlu0 %846
      %848 = vrot.lane.b32.xlu0 %v804, 19
      %v849 = vpop.permute.xlu0 %848
      %850 = vrot.lane.b32.xlu0 %v805, 19
      %v851 = vpop.permute.xlu0 %850
      %852 = vrot.lane.b32.xlu0 %v806, 19
      %v853 = vpop.permute.xlu0 %852
      %854 = vrot.lane.b32.xlu0 %v807, 19
      %v855 = vpop.permute.xlu0 %854
      %v856 = vsel %vm291, %v825, %v827
      %v857 = vsel %vm291, %v827, %v829
      %v858 = vsel %vm291, %v829, %v831
      %v859 = vsel %vm291, %v833, %v835
      %v860 = vsel %vm291, %v835, %v837
      %v861 = vsel %vm291, %v837, %v839
      %v862 = vsel %vm291, %v841, %v843
      %v863 = vsel %vm291, %v843, %v845
      %v864 = vsel %vm291, %v845, %v847
      %v865 = vsel %vm291, %v849, %v851
      %v866 = vsel %vm291, %v851, %v853
      %v867 = vsel %vm291, %v853, %v855
      %880 = vst [vmem:[#allocation3] sm:$0xff] %v856
      %881 = vst [vmem:[#allocation3 + $0x8] sm:$0xff] %v857
      %882 = vst [vmem:[#allocation3 + $0x10] sm:$0xff] %v858
      %883 = vst [vmem:[#allocation3 + $0x18] sm:$0xff] %v859
      %884 = vst [vmem:[#allocation3 + $0x20] sm:$0xff] %v860
      %885 = vst [vmem:[#allocation3 + $0x28] sm:$0xff] %v861
      %886 = vst [vmem:[#allocation3 + $0x30] sm:$0xff] %v862
      %887 = vst [vmem:[#allocation3 + $0x38] sm:$0xff] %v863
      %888 = vst [vmem:[#allocation3 + $0x40] sm:$0xff] %v864
      %889 = vst [vmem:[#allocation3 + $0x48] sm:$0xff] %v865
      %890 = vst [vmem:[#allocation3 + $0x50] sm:$0xff] %v866
      %891 = vst [vmem:[#allocation3 + $0x58] sm:$0xff] %v867
      %v892 = vld [vmem:[#allocation2] sm:$0xff]
      %v893 = vld [vmem:[#allocation2 + $0x8] sm:$0xff]
      %v894 = vld [vmem:[#allocation2 + $0x10] sm:$0xff]
      %v895 = vld [vmem:[#allocation2 + $0x18] sm:$0xff]
      %v896 = vld [vmem:[#allocation2 + $0x28] sm:$0xff]
      %v897 = vld [vmem:[#allocation2 + $0x30] sm:$0xff]
      %v898 = vld [vmem:[#allocation2 + $0x38] sm:$0xff]
      %v899 = vld [vmem:[#allocation2 + $0x40] sm:$0xff]
      %v900 = vld [vmem:[#allocation2 + $0x50] sm:$0xff]
      %v901 = vld [vmem:[#allocation2 + $0x58] sm:$0xff]
      %v902 = vld [vmem:[#allocation2 + $0x60] sm:$0xff]
      %v903 = vld [vmem:[#allocation2 + $0x68] sm:$0xff]
      %v904 = vld [vmem:[#allocation2 + $0x78] sm:$0xff]
      %v905 = vld [vmem:[#allocation2 + $0x80] sm:$0xff]
      %v906 = vld [vmem:[#allocation2 + $0x88] sm:$0xff]
      %v907 = vld [vmem:[#allocation2 + $0x90] sm:$0xff]
      %924 = vrot.lane.b32.xlu0 %v892, 18
      %v925 = vpop.permute.xlu0 %924
      %926 = vrot.lane.b32.xlu0 %v893, 18
      %v927 = vpop.permute.xlu0 %926
      %928 = vrot.lane.b32.xlu0 %v894, 18
      %v929 = vpop.permute.xlu0 %928
      %930 = vrot.lane.b32.xlu0 %v895, 18
      %v931 = vpop.permute.xlu0 %930
      %932 = vrot.lane.b32.xlu0 %v896, 18
      %v933 = vpop.permute.xlu0 %932
      %934 = vrot.lane.b32.xlu0 %v897, 18
      %v935 = vpop.permute.xlu0 %934
      %936 = vrot.lane.b32.xlu0 %v898, 18
      %v937 = vpop.permute.xlu0 %936
      %938 = vrot.lane.b32.xlu0 %v899, 18
      %v939 = vpop.permute.xlu0 %938
      %940 = vrot.lane.b32.xlu0 %v900, 18
      %v941 = vpop.permute.xlu0 %940
      %942 = vrot.lane.b32.xlu0 %v901, 18
      %v943 = vpop.permute.xlu0 %942
      %944 = vrot.lane.b32.xlu0 %v902, 18
      %v945 = vpop.permute.xlu0 %944
      %946 = vrot.lane.b32.xlu0 %v903, 18
      %v947 = vpop.permute.xlu0 %946
      %948 = vrot.lane.b32.xlu0 %v904, 18
      %v949 = vpop.permute.xlu0 %948
      %950 = vrot.lane.b32.xlu0 %v905, 18
      %v951 = vpop.permute.xlu0 %950
      %952 = vrot.lane.b32.xlu0 %v906, 18
      %v953 = vpop.permute.xlu0 %952
      %954 = vrot.lane.b32.xlu0 %v907, 18
      %v955 = vpop.permute.xlu0 %954
      %v956 = vsel %vm317, %v925, %v927
      %v957 = vsel %vm317, %v927, %v929
      %v958 = vsel %vm317, %v929, %v931
      %v959 = vsel %vm317, %v933, %v935
      %v960 = vsel %vm317, %v935, %v937
      %v961 = vsel %vm317, %v937, %v939
      %v962 = vsel %vm317, %v941, %v943
      %v963 = vsel %vm317, %v943, %v945
      %v964 = vsel %vm317, %v945, %v947
      %v965 = vsel %vm317, %v949, %v951
      %v966 = vsel %vm317, %v951, %v953
      %v967 = vsel %vm317, %v953, %v955
      %980 = vst [vmem:[#allocation3 + $0x60] sm:$0xff] %v956
      %981 = vst [vmem:[#allocation3 + $0x68] sm:$0xff] %v957
      %982 = vst [vmem:[#allocation3 + $0x70] sm:$0xff] %v958
      %983 = vst [vmem:[#allocation3 + $0x78] sm:$0xff] %v959
      %984 = vst [vmem:[#allocation3 + $0x80] sm:$0xff] %v960
      %985 = vst [vmem:[#allocation3 + $0x88] sm:$0xff] %v961
      %986 = vst [vmem:[#allocation3 + $0x90] sm:$0xff] %v962
      %987 = vst [vmem:[#allocation3 + $0x98] sm:$0xff] %v963
      %988 = vst [vmem:[#allocation3 + $0xa0] sm:$0xff] %v964
      %989 = vst [vmem:[#allocation3 + $0xa8] sm:$0xff] %v965
      %990 = vst [vmem:[#allocation3 + $0xb0] sm:$0xff] %v966
      %991 = vst [vmem:[#allocation3 + $0xb8] sm:$0xff] %v967
      %v992 = vld [vmem:[#allocation2] sm:$0xff]
      %v993 = vld [vmem:[#allocation2 + $0x8] sm:$0xff]
      %v994 = vld [vmem:[#allocation2 + $0x10] sm:$0xff]
      %v995 = vld [vmem:[#allocation2 + $0x18] sm:$0xff]
      %v996 = vld [vmem:[#allocation2 + $0x28] sm:$0xff]
      %v997 = vld [vmem:[#allocation2 + $0x30] sm:$0xff]
      %v998 = vld [vmem:[#allocation2 + $0x38] sm:$0xff]
      %v999 = vld [vmem:[#allocation2 + $0x40] sm:$0xff]
      %v1000 = vld [vmem:[#allocation2 + $0x50] sm:$0xff]
      %v1001 = vld [vmem:[#allocation2 + $0x58] sm:$0xff]
      %v1002 = vld [vmem:[#allocation2 + $0x60] sm:$0xff]
      %v1003 = vld [vmem:[#allocation2 + $0x68] sm:$0xff]
      %v1004 = vld [vmem:[#allocation2 + $0x78] sm:$0xff]
      %v1005 = vld [vmem:[#allocation2 + $0x80] sm:$0xff]
      %v1006 = vld [vmem:[#allocation2 + $0x88] sm:$0xff]
      %v1007 = vld [vmem:[#allocation2 + $0x90] sm:$0xff]
      %1024 = vrot.lane.b32.xlu0 %v992, 17
      %v1025 = vpop.permute.xlu0 %1024
      %1026 = vrot.lane.b32.xlu0 %v993, 17
      %v1027 = vpop.permute.xlu0 %1026
      %1028 = vrot.lane.b32.xlu0 %v994, 17
      %v1029 = vpop.permute.xlu0 %1028
      %1030 = vrot.lane.b32.xlu0 %v995, 17
      %v1031 = vpop.permute.xlu0 %1030
      %1032 = vrot.lane.b32.xlu0 %v996, 17
      %v1033 = vpop.permute.xlu0 %1032
      %1034 = vrot.lane.b32.xlu0 %v997, 17
      %v1035 = vpop.permute.xlu0 %1034
      %1036 = vrot.lane.b32.xlu0 %v998, 17
      %v1037 = vpop.permute.xlu0 %1036
      %1038 = vrot.lane.b32.xlu0 %v999, 17
      %v1039 = vpop.permute.xlu0 %1038
      %1040 = vrot.lane.b32.xlu0 %v1000, 17
      %v1041 = vpop.permute.xlu0 %1040
      %1042 = vrot.lane.b32.xlu0 %v1001, 17
      %v1043 = vpop.permute.xlu0 %1042
      %1044 = vrot.lane.b32.xlu0 %v1002, 17
      %v1045 = vpop.permute.xlu0 %1044
      %1046 = vrot.lane.b32.xlu0 %v1003, 17
      %v1047 = vpop.permute.xlu0 %1046
      %1048 = vrot.lane.b32.xlu0 %v1004, 17
      %v1049 = vpop.permute.xlu0 %1048
      %1050 = vrot.lane.b32.xlu0 %v1005, 17
      %v1051 = vpop.permute.xlu0 %1050
      %1052 = vrot.lane.b32.xlu0 %v1006, 17
      %v1053 = vpop.permute.xlu0 %1052
      %1054 = vrot.lane.b32.xlu0 %v1007, 17
      %v1055 = vpop.permute.xlu0 %1054
      %v1056 = vsel %vm343, %v1025, %v1027
      %v1057 = vsel %vm343, %v1027, %v1029
      %v1058 = vsel %vm343, %v1029, %v1031
      %v1059 = vsel %vm343, %v1033, %v1035
      %v1060 = vsel %vm343, %v1035, %v1037
      %v1061 = vsel %vm343, %v1037, %v1039
      %v1062 = vsel %vm343, %v1041, %v1043
      %v1063 = vsel %vm343, %v1043, %v1045
      %v1064 = vsel %vm343, %v1045, %v1047
      %v1065 = vsel %vm343, %v1049, %v1051
      %v1066 = vsel %vm343, %v1051, %v1053
      %v1067 = vsel %vm343, %v1053, %v1055
      %1080 = vst [vmem:[#allocation3 + $0xc0] sm:$0xff] %v1056
      %1081 = vst [vmem:[#allocation3 + $0xc8] sm:$0xff] %v1057
      %1082 = vst [vmem:[#allocation3 + $0xd0] sm:$0xff] %v1058
      %1083 = vst [vmem:[#allocation3 + $0xd8] sm:$0xff] %v1059
      %1084 = vst [vmem:[#allocation3 + $0xe0] sm:$0xff] %v1060
      %1085 = vst [vmem:[#allocation3 + $0xe8] sm:$0xff] %v1061
      %1086 = vst [vmem:[#allocation3 + $0xf0] sm:$0xff] %v1062
      %1087 = vst [vmem:[#allocation3 + $0xf8] sm:$0xff] %v1063
      %1088 = vst [vmem:[#allocation3 + $0x100] sm:$0xff] %v1064
      %1089 = vst [vmem:[#allocation3 + $0x108] sm:$0xff] %v1065
      %1090 = vst [vmem:[#allocation3 + $0x110] sm:$0xff] %v1066
      %1091 = vst [vmem:[#allocation3 + $0x118] sm:$0xff] %v1067
      %v1092 = vld [vmem:[#allocation2] sm:$0xff]
      %v1093 = vld [vmem:[#allocation2 + $0x8] sm:$0xff]
      %v1094 = vld [vmem:[#allocation2 + $0x10] sm:$0xff]
      %v1095 = vld [vmem:[#allocation2 + $0x18] sm:$0xff]
      %v1096 = vld [vmem:[#allocation2 + $0x28] sm:$0xff]
      %v1097 = vld [vmem:[#allocation2 + $0x30] sm:$0xff]
      %v1098 = vld [vmem:[#allocation2 + $0x38] sm:$0xff]
      %v1099 = vld [vmem:[#allocation2 + $0x40] sm:$0xff]
      %v1100 = vld [vmem:[#allocation2 + $0x50] sm:$0xff]
      %v1101 = vld [vmem:[#allocation2 + $0x58] sm:$0xff]
      %v1102 = vld [vmem:[#allocation2 + $0x60] sm:$0xff]
      %v1103 = vld [vmem:[#allocation2 + $0x68] sm:$0xff]
      %v1104 = vld [vmem:[#allocation2 + $0x78] sm:$0xff]
      %v1105 = vld [vmem:[#allocation2 + $0x80] sm:$0xff]
      %v1106 = vld [vmem:[#allocation2 + $0x88] sm:$0xff]
      %v1107 = vld [vmem:[#allocation2 + $0x90] sm:$0xff]
      %1124 = vrot.lane.b32.xlu0 %v1092, 1
      %v1125 = vpop.permute.xlu0 %1124
      %1126 = vrot.lane.b32.xlu0 %v1093, 1
      %v1127 = vpop.permute.xlu0 %1126
      %1128 = vrot.lane.b32.xlu0 %v1094, 1
      %v1129 = vpop.permute.xlu0 %1128
      %1130 = vrot.lane.b32.xlu0 %v1095, 1
      %v1131 = vpop.permute.xlu0 %1130
      %1132 = vrot.lane.b32.xlu0 %v1096, 1
      %v1133 = vpop.permute.xlu0 %1132
      %1134 = vrot.lane.b32.xlu0 %v1097, 1
      %v1135 = vpop.permute.xlu0 %1134
      %1136 = vrot.lane.b32.xlu0 %v1098, 1
      %v1137 = vpop.permute.xlu0 %1136
      %1138 = vrot.lane.b32.xlu0 %v1099, 1
      %v1139 = vpop.permute.xlu0 %1138
      %1140 = vrot.lane.b32.xlu0 %v1100, 1
      %v1141 = vpop.permute.xlu0 %1140
      %1142 = vrot.lane.b32.xlu0 %v1101, 1
      %v1143 = vpop.permute.xlu0 %1142
      %1144 = vrot.lane.b32.xlu0 %v1102, 1
      %v1145 = vpop.permute.xlu0 %1144
      %1146 = vrot.lane.b32.xlu0 %v1103, 1
      %v1147 = vpop.permute.xlu0 %1146
      %1148 = vrot.lane.b32.xlu0 %v1104, 1
      %v1149 = vpop.permute.xlu0 %1148
      %1150 = vrot.lane.b32.xlu0 %v1105, 1
      %v1151 = vpop.permute.xlu0 %1150
      %1152 = vrot.lane.b32.xlu0 %v1106, 1
      %v1153 = vpop.permute.xlu0 %1152
      %1154 = vrot.lane.b32.xlu0 %v1107, 1
      %v1155 = vpop.permute.xlu0 %1154
      %v1156 = vsel %vm369, %v1125, %v1127
      %v1157 = vsel %vm369, %v1127, %v1129
      %v1158 = vsel %vm369, %v1129, %v1131
      %v1159 = vsel %vm369, %v1133, %v1135
      %v1160 = vsel %vm369, %v1135, %v1137
      %v1161 = vsel %vm369, %v1137, %v1139
      %v1162 = vsel %vm369, %v1141, %v1143
      %v1163 = vsel %vm369, %v1143, %v1145
      %v1164 = vsel %vm369, %v1145, %v1147
      %v1165 = vsel %vm369, %v1149, %v1151
      %v1166 = vsel %vm369, %v1151, %v1153
      %v1167 = vsel %vm369, %v1153, %v1155
      %1180 = vst [vmem:[#allocation3 + $0x120] sm:$0xff] %v1156
      %1181 = vst [vmem:[#allocation3 + $0x128] sm:$0xff] %v1157
      %1182 = vst [vmem:[#allocation3 + $0x130] sm:$0xff] %v1158
      %1183 = vst [vmem:[#allocation3 + $0x138] sm:$0xff] %v1159
      %1184 = vst [vmem:[#allocation3 + $0x140] sm:$0xff] %v1160
      %1185 = vst [vmem:[#allocation3 + $0x148] sm:$0xff] %v1161
      %1186 = vst [vmem:[#allocation3 + $0x150] sm:$0xff] %v1162
      %1187 = vst [vmem:[#allocation3 + $0x158] sm:$0xff] %v1163
      %1188 = vst [vmem:[#allocation3 + $0x160] sm:$0xff] %v1164
      %1189 = vst [vmem:[#allocation3 + $0x168] sm:$0xff] %v1165
      %1190 = vst [vmem:[#allocation3 + $0x170] sm:$0xff] %v1166
      %1191 = vst [vmem:[#allocation3 + $0x178] sm:$0xff] %v1167
      %v1192 = vld [vmem:[#allocation2 + $0x8] sm:$0xff]
      %v1193 = vld [vmem:[#allocation2 + $0x10] sm:$0xff]
      %v1194 = vld [vmem:[#allocation2 + $0x18] sm:$0xff]
      %v1195 = vld [vmem:[#allocation2 + $0x30] sm:$0xff]
      %v1196 = vld [vmem:[#allocation2 + $0x38] sm:$0xff]
      %v1197 = vld [vmem:[#allocation2 + $0x40] sm:$0xff]
      %v1198 = vld [vmem:[#allocation2 + $0x58] sm:$0xff]
      %v1199 = vld [vmem:[#allocation2 + $0x60] sm:$0xff]
      %v1200 = vld [vmem:[#allocation2 + $0x68] sm:$0xff]
      %v1201 = vld [vmem:[#allocation2 + $0x80] sm:$0xff]
      %v1202 = vld [vmem:[#allocation2 + $0x88] sm:$0xff]
      %v1203 = vld [vmem:[#allocation2 + $0x90] sm:$0xff]
      %1204 = vst [vmem:[#allocation3 + $0x180] sm:$0xff] %v1192
      %1205 = vst [vmem:[#allocation3 + $0x188] sm:$0xff] %v1193
      %1206 = vst [vmem:[#allocation3 + $0x190] sm:$0xff] %v1194
      %1207 = vst [vmem:[#allocation3 + $0x198] sm:$0xff] %v1195
      %1208 = vst [vmem:[#allocation3 + $0x1a0] sm:$0xff] %v1196
      %1209 = vst [vmem:[#allocation3 + $0x1a8] sm:$0xff] %v1197
      %1210 = vst [vmem:[#allocation3 + $0x1b0] sm:$0xff] %v1198
      %1211 = vst [vmem:[#allocation3 + $0x1b8] sm:$0xff] %v1199
      %1212 = vst [vmem:[#allocation3 + $0x1c0] sm:$0xff] %v1200
      %1213 = vst [vmem:[#allocation3 + $0x1c8] sm:$0xff] %v1201
      %1214 = vst [vmem:[#allocation3 + $0x1d0] sm:$0xff] %v1202
      %1215 = vst [vmem:[#allocation3 + $0x1d8] sm:$0xff] %v1203
      %v1216 = vld [vmem:[#allocation2 + $0x8] sm:$0xff]
      %v1217 = vld [vmem:[#allocation2 + $0x10] sm:$0xff]
      %v1218 = vld [vmem:[#allocation2 + $0x18] sm:$0xff]
      %v1219 = vld [vmem:[#allocation2 + $0x20] sm:$0xff]
      %v1220 = vld [vmem:[#allocation2 + $0x30] sm:$0xff]
      %v1221 = vld [vmem:[#allocation2 + $0x38] sm:$0xff]
      %v1222 = vld [vmem:[#allocation2 + $0x40] sm:$0xff]
      %v1223 = vld [vmem:[#allocation2 + $0x48] sm:$0xff]
      %v1224 = vld [vmem:[#allocation2 + $0x58] sm:$0xff]
      %v1225 = vld [vmem:[#allocation2 + $0x60] sm:$0xff]
      %v1226 = vld [vmem:[#allocation2 + $0x68] sm:$0xff]
      %v1227 = vld [vmem:[#allocation2 + $0x70] sm:$0xff]
      %v1228 = vld [vmem:[#allocation2 + $0x80] sm:$0xff]
      %v1229 = vld [vmem:[#allocation2 + $0x88] sm:$0xff]
      %v1230 = vld [vmem:[#allocation2 + $0x90] sm:$0xff]
      %v1231 = vld [vmem:[#allocation2 + $0x98] sm:$0xff]
      %1248 = vrot.lane.b32.xlu0 %v1216, 127
      %v1249 = vpop.permute.xlu0 %1248
      %1250 = vrot.lane.b32.xlu0 %v1217, 127
      %v1251 = vpop.permute.xlu0 %1250
      %1252 = vrot.lane.b32.xlu0 %v1218, 127
      %v1253 = vpop.permute.xlu0 %1252
      %1254 = vrot.lane.b32.xlu0 %v1219, 127
      %v1255 = vpop.permute.xlu0 %1254
      %1256 = vrot.lane.b32.xlu0 %v1220, 127
      %v1257 = vpop.permute.xlu0 %1256
      %1258 = vrot.lane.b32.xlu0 %v1221, 127
      %v1259 = vpop.permute.xlu0 %1258
      %1260 = vrot.lane.b32.xlu0 %v1222, 127
      %v1261 = vpop.permute.xlu0 %1260
      %1262 = vrot.lane.b32.xlu0 %v1223, 127
      %v1263 = vpop.permute.xlu0 %1262
      %1264 = vrot.lane.b32.xlu0 %v1224, 127
      %v1265 = vpop.permute.xlu0 %1264
      %1266 = vrot.lane.b32.xlu0 %v1225, 127
      %v1267 = vpop.permute.xlu0 %1266
      %1268 = vrot.lane.b32.xlu0 %v1226, 127
      %v1269 = vpop.permute.xlu0 %1268
      %1270 = vrot.lane.b32.xlu0 %v1227, 127
      %v1271 = vpop.permute.xlu0 %1270
      %1272 = vrot.lane.b32.xlu0 %v1228, 127
      %v1273 = vpop.permute.xlu0 %1272
      %1274 = vrot.lane.b32.xlu0 %v1229, 127
      %v1275 = vpop.permute.xlu0 %1274
      %1276 = vrot.lane.b32.xlu0 %v1230, 127
      %v1277 = vpop.permute.xlu0 %1276
      %1278 = vrot.lane.b32.xlu0 %v1231, 127
      %v1279 = vpop.permute.xlu0 %1278
      %v1280 = vsel %vm401, %v1249, %v1251
      %v1281 = vsel %vm401, %v1251, %v1253
      %v1282 = vsel %vm401, %v1253, %v1255
      %v1283 = vsel %vm401, %v1257, %v1259
      %v1284 = vsel %vm401, %v1259, %v1261
      %v1285 = vsel %vm401, %v1261, %v1263
      %v1286 = vsel %vm401, %v1265, %v1267
      %v1287 = vsel %vm401, %v1267, %v1269
      %v1288 = vsel %vm401, %v1269, %v1271
      %v1289 = vsel %vm401, %v1273, %v1275
      %v1290 = vsel %vm401, %v1275, %v1277
      %v1291 = vsel %vm401, %v1277, %v1279
      %1304 = vst [vmem:[#allocation3 + $0x1e0] sm:$0xff] %v1280
      %1305 = vst [vmem:[#allocation3 + $0x1e8] sm:$0xff] %v1281
      %1306 = vst [vmem:[#allocation3 + $0x1f0] sm:$0xff] %v1282
      %1307 = vst [vmem:[#allocation3 + $0x1f8] sm:$0xff] %v1283
      %1308 = vst [vmem:[#allocation3 + $0x200] sm:$0xff] %v1284
      %1309 = vst [vmem:[#allocation3 + $0x208] sm:$0xff] %v1285
      %1310 = vst [vmem:[#allocation3 + $0x210] sm:$0xff] %v1286
      %1311 = vst [vmem:[#allocation3 + $0x218] sm:$0xff] %v1287
      %1312 = vst [vmem:[#allocation3 + $0x220] sm:$0xff] %v1288
      %1313 = vst [vmem:[#allocation3 + $0x228] sm:$0xff] %v1289
      %1314 = vst [vmem:[#allocation3 + $0x230] sm:$0xff] %v1290
      %1315 = vst [vmem:[#allocation3 + $0x238] sm:$0xff] %v1291
      %v1316 = vld [vmem:[#allocation2 + $0x8] sm:$0xff]
      %v1317 = vld [vmem:[#allocation2 + $0x10] sm:$0xff]
      %v1318 = vld [vmem:[#allocation2 + $0x18] sm:$0xff]
      %v1319 = vld [vmem:[#allocation2 + $0x20] sm:$0xff]
      %v1320 = vld [vmem:[#allocation2 + $0x30] sm:$0xff]
      %v1321 = vld [vmem:[#allocation2 + $0x38] sm:$0xff]
      %v1322 = vld [vmem:[#allocation2 + $0x40] sm:$0xff]
      %v1323 = vld [vmem:[#allocation2 + $0x48] sm:$0xff]
      %v1324 = vld [vmem:[#allocation2 + $0x58] sm:$0xff]
      %v1325 = vld [vmem:[#allocation2 + $0x60] sm:$0xff]
      %v1326 = vld [vmem:[#allocation2 + $0x68] sm:$0xff]
      %v1327 = vld [vmem:[#allocation2 + $0x70] sm:$0xff]
      %v1328 = vld [vmem:[#allocation2 + $0x80] sm:$0xff]
      %v1329 = vld [vmem:[#allocation2 + $0x88] sm:$0xff]
      %v1330 = vld [vmem:[#allocation2 + $0x90] sm:$0xff]
      %v1331 = vld [vmem:[#allocation2 + $0x98] sm:$0xff]
      %1348 = vrot.lane.b32.xlu0 %v1316, 111
      %v1349 = vpop.permute.xlu0 %1348
      %1350 = vrot.lane.b32.xlu0 %v1317, 111
      %v1351 = vpop.permute.xlu0 %1350
      %1352 = vrot.lane.b32.xlu0 %v1318, 111
      %v1353 = vpop.permute.xlu0 %1352
      %1354 = vrot.lane.b32.xlu0 %v1319, 111
      %v1355 = vpop.permute.xlu0 %1354
      %1356 = vrot.lane.b32.xlu0 %v1320, 111
      %v1357 = vpop.permute.xlu0 %1356
      %1358 = vrot.lane.b32.xlu0 %v1321, 111
      %v1359 = vpop.permute.xlu0 %1358
      %1360 = vrot.lane.b32.xlu0 %v1322, 111
      %v1361 = vpop.permute.xlu0 %1360
      %1362 = vrot.lane.b32.xlu0 %v1323, 111
      %v1363 = vpop.permute.xlu0 %1362
      %1364 = vrot.lane.b32.xlu0 %v1324, 111
      %v1365 = vpop.permute.xlu0 %1364
      %1366 = vrot.lane.b32.xlu0 %v1325, 111
      %v1367 = vpop.permute.xlu0 %1366
      %1368 = vrot.lane.b32.xlu0 %v1326, 111
      %v1369 = vpop.permute.xlu0 %1368
      %1370 = vrot.lane.b32.xlu0 %v1327, 111
      %v1371 = vpop.permute.xlu0 %1370
      %1372 = vrot.lane.b32.xlu0 %v1328, 111
      %v1373 = vpop.permute.xlu0 %1372
      %1374 = vrot.lane.b32.xlu0 %v1329, 111
      %v1375 = vpop.permute.xlu0 %1374
      %1376 = vrot.lane.b32.xlu0 %v1330, 111
      %v1377 = vpop.permute.xlu0 %1376
      %1378 = vrot.lane.b32.xlu0 %v1331, 111
      %v1379 = vpop.permute.xlu0 %1378
      %v1380 = vsel %vm427, %v1349, %v1351
      %v1381 = vsel %vm427, %v1351, %v1353
      %v1382 = vsel %vm427, %v1353, %v1355
      %v1383 = vsel %vm427, %v1357, %v1359
      %v1384 = vsel %vm427, %v1359, %v1361
      %v1385 = vsel %vm427, %v1361, %v1363
      %v1386 = vsel %vm427, %v1365, %v1367
      %v1387 = vsel %vm427, %v1367, %v1369
      %v1388 = vsel %vm427, %v1369, %v1371
      %v1389 = vsel %vm427, %v1373, %v1375
      %v1390 = vsel %vm427, %v1375, %v1377
      %v1391 = vsel %vm427, %v1377, %v1379
      %1404 = vst [vmem:[#allocation3 + $0x240] sm:$0xff] %v1380
      %1405 = vst [vmem:[#allocation3 + $0x248] sm:$0xff] %v1381
      %1406 = vst [vmem:[#allocation3 + $0x250] sm:$0xff] %v1382
      %1407 = vst [vmem:[#allocation3 + $0x258] sm:$0xff] %v1383
      %1408 = vst [vmem:[#allocation3 + $0x260] sm:$0xff] %v1384
      %1409 = vst [vmem:[#allocation3 + $0x268] sm:$0xff] %v1385
      %1410 = vst [vmem:[#allocation3 + $0x270] sm:$0xff] %v1386
      %1411 = vst [vmem:[#allocation3 + $0x278] sm:$0xff] %v1387
      %1412 = vst [vmem:[#allocation3 + $0x280] sm:$0xff] %v1388
      %1413 = vst [vmem:[#allocation3 + $0x288] sm:$0xff] %v1389
      %1414 = vst [vmem:[#allocation3 + $0x290] sm:$0xff] %v1390
      %1415 = vst [vmem:[#allocation3 + $0x298] sm:$0xff] %v1391
      %v1416 = vld [vmem:[#allocation2 + $0x8] sm:$0xff]
      %v1417 = vld [vmem:[#allocation2 + $0x10] sm:$0xff]
      %v1418 = vld [vmem:[#allocation2 + $0x18] sm:$0xff]
      %v1419 = vld [vmem:[#allocation2 + $0x20] sm:$0xff]
      %v1420 = vld [vmem:[#allocation2 + $0x30] sm:$0xff]
      %v1421 = vld [vmem:[#allocation2 + $0x38] sm:$0xff]
      %v1422 = vld [vmem:[#allocation2 + $0x40] sm:$0xff]
      %v1423 = vld [vmem:[#allocation2 + $0x48] sm:$0xff]
      %v1424 = vld [vmem:[#allocation2 + $0x58] sm:$0xff]
      %v1425 = vld [vmem:[#allocation2 + $0x60] sm:$0xff]
      %v1426 = vld [vmem:[#allocation2 + $0x68] sm:$0xff]
      %v1427 = vld [vmem:[#allocation2 + $0x70] sm:$0xff]
      %v1428 = vld [vmem:[#allocation2 + $0x80] sm:$0xff]
      %v1429 = vld [vmem:[#allocation2 + $0x88] sm:$0xff]
      %v1430 = vld [vmem:[#allocation2 + $0x90] sm:$0xff]
      %v1431 = vld [vmem:[#allocation2 + $0x98] sm:$0xff]
      %1448 = vrot.lane.b32.xlu0 %v1416, 110
      %v1449 = vpop.permute.xlu0 %1448
      %1450 = vrot.lane.b32.xlu0 %v1417, 110
      %v1451 = vpop.permute.xlu0 %1450
      %1452 = vrot.lane.b32.xlu0 %v1418, 110
      %v1453 = vpop.permute.xlu0 %1452
      %1454 = vrot.lane.b32.xlu0 %v1419, 110
      %v1455 = vpop.permute.xlu0 %1454
      %1456 = vrot.lane.b32.xlu0 %v1420, 110
      %v1457 = vpop.permute.xlu0 %1456
      %1458 = vrot.lane.b32.xlu0 %v1421, 110
      %v1459 = vpop.permute.xlu0 %1458
      %1460 = vrot.lane.b32.xlu0 %v1422, 110
      %v1461 = vpop.permute.xlu0 %1460
      %1462 = vrot.lane.b32.xlu0 %v1423, 110
      %v1463 = vpop.permute.xlu0 %1462
      %1464 = vrot.lane.b32.xlu0 %v1424, 110
      %v1465 = vpop.permute.xlu0 %1464
      %1466 = vrot.lane.b32.xlu0 %v1425, 110
      %v1467 = vpop.permute.xlu0 %1466
      %1468 = vrot.lane.b32.xlu0 %v1426, 110
      %v1469 = vpop.permute.xlu0 %1468
      %1470 = vrot.lane.b32.xlu0 %v1427, 110
      %v1471 = vpop.permute.xlu0 %1470
      %1472 = vrot.lane.b32.xlu0 %v1428, 110
      %v1473 = vpop.permute.xlu0 %1472
      %1474 = vrot.lane.b32.xlu0 %v1429, 110
      %v1475 = vpop.permute.xlu0 %1474
      %1476 = vrot.lane.b32.xlu0 %v1430, 110
      %v1477 = vpop.permute.xlu0 %1476
      %1478 = vrot.lane.b32.xlu0 %v1431, 110
      %v1479 = vpop.permute.xlu0 %1478
      %v1480 = vsel %vm453, %v1449, %v1451
      %v1481 = vsel %vm453, %v1451, %v1453
      %v1482 = vsel %vm453, %v1453, %v1455
      %v1483 = vsel %vm453, %v1457, %v1459
      %v1484 = vsel %vm453, %v1459, %v1461
      %v1485 = vsel %vm453, %v1461, %v1463
      %v1486 = vsel %vm453, %v1465, %v1467
      %v1487 = vsel %vm453, %v1467, %v1469
      %v1488 = vsel %vm453, %v1469, %v1471
      %v1489 = vsel %vm453, %v1473, %v1475
      %v1490 = vsel %vm453, %v1475, %v1477
      %v1491 = vsel %vm453, %v1477, %v1479
      %1504 = vst [vmem:[#allocation3 + $0x2a0] sm:$0xff] %v1480
      %1505 = vst [vmem:[#allocation3 + $0x2a8] sm:$0xff] %v1481
      %1506 = vst [vmem:[#allocation3 + $0x2b0] sm:$0xff] %v1482
      %1507 = vst [vmem:[#allocation3 + $0x2b8] sm:$0xff] %v1483
      %1508 = vst [vmem:[#allocation3 + $0x2c0] sm:$0xff] %v1484
      %1509 = vst [vmem:[#allocation3 + $0x2c8] sm:$0xff] %v1485
      %1510 = vst [vmem:[#allocation3 + $0x2d0] sm:$0xff] %v1486
      %1511 = vst [vmem:[#allocation3 + $0x2d8] sm:$0xff] %v1487
      %1512 = vst [vmem:[#allocation3 + $0x2e0] sm:$0xff] %v1488
      %1513 = vst [vmem:[#allocation3 + $0x2e8] sm:$0xff] %v1489
      %1514 = vst [vmem:[#allocation3 + $0x2f0] sm:$0xff] %v1490
      %1515 = vst [vmem:[#allocation3 + $0x2f8] sm:$0xff] %v1491
      %v1516 = vld [vmem:[#allocation2 + $0x8] sm:$0xff]
      %v1517 = vld [vmem:[#allocation2 + $0x10] sm:$0xff]
      %v1518 = vld [vmem:[#allocation2 + $0x18] sm:$0xff]
      %v1519 = vld [vmem:[#allocation2 + $0x20] sm:$0xff]
      %v1520 = vld [vmem:[#allocation2 + $0x30] sm:$0xff]
      %v1521 = vld [vmem:[#allocation2 + $0x38] sm:$0xff]
      %v1522 = vld [vmem:[#allocation2 + $0x40] sm:$0xff]
      %v1523 = vld [vmem:[#allocation2 + $0x48] sm:$0xff]
      %v1524 = vld [vmem:[#allocation2 + $0x58] sm:$0xff]
      %v1525 = vld [vmem:[#allocation2 + $0x60] sm:$0xff]
      %v1526 = vld [vmem:[#allocation2 + $0x68] sm:$0xff]
      %v1527 = vld [vmem:[#allocation2 + $0x70] sm:$0xff]
      %v1528 = vld [vmem:[#allocation2 + $0x80] sm:$0xff]
      %v1529 = vld [vmem:[#allocation2 + $0x88] sm:$0xff]
      %v1530 = vld [vmem:[#allocation2 + $0x90] sm:$0xff]
      %v1531 = vld [vmem:[#allocation2 + $0x98] sm:$0xff]
      %1548 = vrot.lane.b32.xlu0 %v1516, 109
      %v1549 = vpop.permute.xlu0 %1548
      %1550 = vrot.lane.b32.xlu0 %v1517, 109
      %v1551 = vpop.permute.xlu0 %1550
      %1552 = vrot.lane.b32.xlu0 %v1518, 109
      %v1553 = vpop.permute.xlu0 %1552
      %1554 = vrot.lane.b32.xlu0 %v1519, 109
      %v1555 = vpop.permute.xlu0 %1554
      %1556 = vrot.lane.b32.xlu0 %v1520, 109
      %v1557 = vpop.permute.xlu0 %1556
      %1558 = vrot.lane.b32.xlu0 %v1521, 109
      %v1559 = vpop.permute.xlu0 %1558
      %1560 = vrot.lane.b32.xlu0 %v1522, 109
      %v1561 = vpop.permute.xlu0 %1560
      %1562 = vrot.lane.b32.xlu0 %v1523, 109
      %v1563 = vpop.permute.xlu0 %1562
      %1564 = vrot.lane.b32.xlu0 %v1524, 109
      %v1565 = vpop.permute.xlu0 %1564
      %1566 = vrot.lane.b32.xlu0 %v1525, 109
      %v1567 = vpop.permute.xlu0 %1566
      %1568 = vrot.lane.b32.xlu0 %v1526, 109
      %v1569 = vpop.permute.xlu0 %1568
      %1570 = vrot.lane.b32.xlu0 %v1527, 109
      %v1571 = vpop.permute.xlu0 %1570
      %1572 = vrot.lane.b32.xlu0 %v1528, 109
      %v1573 = vpop.permute.xlu0 %1572
      %1574 = vrot.lane.b32.xlu0 %v1529, 109
      %v1575 = vpop.permute.xlu0 %1574
      %1576 = vrot.lane.b32.xlu0 %v1530, 109
      %v1577 = vpop.permute.xlu0 %1576
      %1578 = vrot.lane.b32.xlu0 %v1531, 109
      %v1579 = vpop.permute.xlu0 %1578
      %v1580 = vsel %vm479, %v1549, %v1551
      %v1581 = vsel %vm479, %v1551, %v1553
      %v1582 = vsel %vm479, %v1553, %v1555
      %v1583 = vsel %vm479, %v1557, %v1559
      %v1584 = vsel %vm479, %v1559, %v1561
      %v1585 = vsel %vm479, %v1561, %v1563
      %v1586 = vsel %vm479, %v1565, %v1567
      %v1587 = vsel %vm479, %v1567, %v1569
      %v1588 = vsel %vm479, %v1569, %v1571
      %v1589 = vsel %vm479, %v1573, %v1575
      %v1590 = vsel %vm479, %v1575, %v1577
      %v1591 = vsel %vm479, %v1577, %v1579
      %1604 = vst [vmem:[#allocation3 + $0x300] sm:$0xff] %v1580
      %1605 = vst [vmem:[#allocation3 + $0x308] sm:$0xff] %v1581
      %1606 = vst [vmem:[#allocation3 + $0x310] sm:$0xff] %v1582
      %1607 = vst [vmem:[#allocation3 + $0x318] sm:$0xff] %v1583
      %1608 = vst [vmem:[#allocation3 + $0x320] sm:$0xff] %v1584
      %1609 = vst [vmem:[#allocation3 + $0x328] sm:$0xff] %v1585
      %1610 = vst [vmem:[#allocation3 + $0x330] sm:$0xff] %v1586
      %1611 = vst [vmem:[#allocation3 + $0x338] sm:$0xff] %v1587
      %1612 = vst [vmem:[#allocation3 + $0x340] sm:$0xff] %v1588
      %1613 = vst [vmem:[#allocation3 + $0x348] sm:$0xff] %v1589
      %1614 = vst [vmem:[#allocation3 + $0x350] sm:$0xff] %v1590
      %1615 = vst [vmem:[#allocation3 + $0x358] sm:$0xff] %v1591
      %v1616 = vld [vmem:[#allocation3] sm:$0xff]
      %v1617 = vld [vmem:[#allocation3 + $0x8] sm:$0xff]
      %v1618 = vld [vmem:[#allocation3 + $0x10] sm:$0xff]
      %v1619 = vld [vmem:[#allocation3 + $0x18] sm:$0xff]
      %v1620 = vld [vmem:[#allocation3 + $0x20] sm:$0xff]
      %v1621 = vld [vmem:[#allocation3 + $0x28] sm:$0xff]
      %v1622 = vld [vmem:[#allocation3 + $0x30] sm:$0xff]
      %v1623 = vld [vmem:[#allocation3 + $0x38] sm:$0xff]
      %v1624 = vld [vmem:[#allocation3 + $0x40] sm:$0xff]
      %v1625 = vld [vmem:[#allocation3 + $0x48] sm:$0xff]
      %v1626 = vld [vmem:[#allocation3 + $0x50] sm:$0xff]
      %v1627 = vld [vmem:[#allocation3 + $0x58] sm:$0xff]
      %v1628 = vld [vmem:[#allocation3 + $0x60] sm:$0xff]
      %v1629 = vld [vmem:[#allocation3 + $0x68] sm:$0xff]
      %v1630 = vld [vmem:[#allocation3 + $0x70] sm:$0xff]
      %v1631 = vld [vmem:[#allocation3 + $0x78] sm:$0xff]
      %v1632 = vld [vmem:[#allocation3 + $0x80] sm:$0xff]
      %v1633 = vld [vmem:[#allocation3 + $0x88] sm:$0xff]
      %v1634 = vld [vmem:[#allocation3 + $0x90] sm:$0xff]
      %v1635 = vld [vmem:[#allocation3 + $0x98] sm:$0xff]
      %v1636 = vld [vmem:[#allocation3 + $0xa0] sm:$0xff]
      %v1637 = vld [vmem:[#allocation3 + $0xa8] sm:$0xff]
      %v1638 = vld [vmem:[#allocation3 + $0xb0] sm:$0xff]
      %v1639 = vld [vmem:[#allocation3 + $0xb8] sm:$0xff]
      %v1640 = vld [vmem:[#allocation3 + $0xc0] sm:$0xff]
      %v1641 = vld [vmem:[#allocation3 + $0xc8] sm:$0xff]
      %v1642 = vld [vmem:[#allocation3 + $0xd0] sm:$0xff]
      %v1643 = vld [vmem:[#allocation3 + $0xd8] sm:$0xff]
      %v1644 = vld [vmem:[#allocation3 + $0xe0] sm:$0xff]
      %v1645 = vld [vmem:[#allocation3 + $0xe8] sm:$0xff]
      %v1646 = vld [vmem:[#allocation3 + $0xf0] sm:$0xff]
      %v1647 = vld [vmem:[#allocation3 + $0xf8] sm:$0xff]
      %v1648 = vld [vmem:[#allocation3 + $0x100] sm:$0xff]
      %v1649 = vld [vmem:[#allocation3 + $0x108] sm:$0xff]
      %v1650 = vld [vmem:[#allocation3 + $0x110] sm:$0xff]
      %v1651 = vld [vmem:[#allocation3 + $0x118] sm:$0xff]
      %v1652 = vld [vmem:[#allocation3 + $0x120] sm:$0xff]
      %v1653 = vld [vmem:[#allocation3 + $0x128] sm:$0xff]
      %v1654 = vld [vmem:[#allocation3 + $0x130] sm:$0xff]
      %v1655 = vld [vmem:[#allocation3 + $0x138] sm:$0xff]
      %v1656 = vld [vmem:[#allocation3 + $0x140] sm:$0xff]
      %v1657 = vld [vmem:[#allocation3 + $0x148] sm:$0xff]
      %v1658 = vld [vmem:[#allocation3 + $0x150] sm:$0xff]
      %v1659 = vld [vmem:[#allocation3 + $0x158] sm:$0xff]
      %v1660 = vld [vmem:[#allocation3 + $0x160] sm:$0xff]
      %v1661 = vld [vmem:[#allocation3 + $0x168] sm:$0xff]
      %v1662 = vld [vmem:[#allocation3 + $0x170] sm:$0xff]
      %v1663 = vld [vmem:[#allocation3 + $0x178] sm:$0xff]
      %v1664 = vld [vmem:[#allocation3 + $0x180] sm:$0xff]
      %v1665 = vld [vmem:[#allocation3 + $0x188] sm:$0xff]
      %v1666 = vld [vmem:[#allocation3 + $0x190] sm:$0xff]
      %v1667 = vld [vmem:[#allocation3 + $0x198] sm:$0xff]
      %v1668 = vld [vmem:[#allocation3 + $0x1a0] sm:$0xff]
      %v1669 = vld [vmem:[#allocation3 + $0x1a8] sm:$0xff]
      %v1670 = vld [vmem:[#allocation3 + $0x1b0] sm:$0xff]
      %v1671 = vld [vmem:[#allocation3 + $0x1b8] sm:$0xff]
      %v1672 = vld [vmem:[#allocation3 + $0x1c0] sm:$0xff]
      %v1673 = vld [vmem:[#allocation3 + $0x1c8] sm:$0xff]
      %v1674 = vld [vmem:[#allocation3 + $0x1d0] sm:$0xff]
      %v1675 = vld [vmem:[#allocation3 + $0x1d8] sm:$0xff]
      %v1676 = vld [vmem:[#allocation3 + $0x1e0] sm:$0xff]
      %v1677 = vld [vmem:[#allocation3 + $0x1e8] sm:$0xff]
      %v1678 = vld [vmem:[#allocation3 + $0x1f0] sm:$0xff]
      %v1679 = vld [vmem:[#allocation3 + $0x1f8] sm:$0xff]
      %v1680 = vld [vmem:[#allocation3 + $0x200] sm:$0xff]
      %v1681 = vld [vmem:[#allocation3 + $0x208] sm:$0xff]
      %v1682 = vld [vmem:[#allocation3 + $0x210] sm:$0xff]
      %v1683 = vld [vmem:[#allocation3 + $0x218] sm:$0xff]
      %v1684 = vld [vmem:[#allocation3 + $0x220] sm:$0xff]
      %v1685 = vld [vmem:[#allocation3 + $0x228] sm:$0xff]
      %v1686 = vld [vmem:[#allocation3 + $0x230] sm:$0xff]
      %v1687 = vld [vmem:[#allocation3 + $0x238] sm:$0xff]
      %v1688 = vld [vmem:[#allocation3 + $0x240] sm:$0xff]
      %v1689 = vld [vmem:[#allocation3 + $0x248] sm:$0xff]
      %v1690 = vld [vmem:[#allocation3 + $0x250] sm:$0xff]
      %v1691 = vld [vmem:[#allocation3 + $0x258] sm:$0xff]
      %v1692 = vld [vmem:[#allocation3 + $0x260] sm:$0xff]
      %v1693 = vld [vmem:[#allocation3 + $0x268] sm:$0xff]
      %v1694 = vld [vmem:[#allocation3 + $0x270] sm:$0xff]
      %v1695 = vld [vmem:[#allocation3 + $0x278] sm:$0xff]
      %v1696 = vld [vmem:[#allocation3 + $0x280] sm:$0xff]
      %v1697 = vld [vmem:[#allocation3 + $0x288] sm:$0xff]
      %v1698 = vld [vmem:[#allocation3 + $0x290] sm:$0xff]
      %v1699 = vld [vmem:[#allocation3 + $0x298] sm:$0xff]
      %v1700 = vld [vmem:[#allocation3 + $0x2a0] sm:$0xff]
      %v1701 = vld [vmem:[#allocation3 + $0x2a8] sm:$0xff]
      %v1702 = vld [vmem:[#allocation3 + $0x2b0] sm:$0xff]
      %v1703 = vld [vmem:[#allocation3 + $0x2b8] sm:$0xff]
      %v1704 = vld [vmem:[#allocation3 + $0x2c0] sm:$0xff]
      %v1705 = vld [vmem:[#allocation3 + $0x2c8] sm:$0xff]
      %v1706 = vld [vmem:[#allocation3 + $0x2d0] sm:$0xff]
      %v1707 = vld [vmem:[#allocation3 + $0x2d8] sm:$0xff]
      %v1708 = vld [vmem:[#allocation3 + $0x2e0] sm:$0xff]
      %v1709 = vld [vmem:[#allocation3 + $0x2e8] sm:$0xff]
      %v1710 = vld [vmem:[#allocation3 + $0x2f0] sm:$0xff]
      %v1711 = vld [vmem:[#allocation3 + $0x2f8] sm:$0xff]
      %v1712 = vld [vmem:[#allocation3 + $0x300] sm:$0xff]
      %v1713 = vld [vmem:[#allocation3 + $0x308] sm:$0xff]
      %v1714 = vld [vmem:[#allocation3 + $0x310] sm:$0xff]
      %v1715 = vld [vmem:[#allocation3 + $0x318] sm:$0xff]
      %v1716 = vld [vmem:[#allocation3 + $0x320] sm:$0xff]
      %v1717 = vld [vmem:[#allocation3 + $0x328] sm:$0xff]
      %v1718 = vld [vmem:[#allocation3 + $0x330] sm:$0xff]
      %v1719 = vld [vmem:[#allocation3 + $0x338] sm:$0xff]
      %v1720 = vld [vmem:[#allocation3 + $0x340] sm:$0xff]
      %v1721 = vld [vmem:[#allocation3 + $0x348] sm:$0xff]
      %v1722 = vld [vmem:[#allocation3 + $0x350] sm:$0xff]
      %v1723 = vld [vmem:[#allocation3 + $0x358] sm:$0xff]
      %1725 = vset.pattern.permute.xlu0 0
      %1726 = vperm.xlu0 %1725, %v788
      %v1727 = vpop.permute.xlu0 %1726
      %1730 = vset.pattern.permute.xlu0 0
      %1731 = vperm.xlu0 %1730, %v789
      %v1732 = vpop.permute.xlu0 %1731
      %1735 = vset.pattern.permute.xlu0 0
      %1736 = vperm.xlu0 %1735, %v790
      %v1737 = vpop.permute.xlu0 %1736
      %1740 = vset.pattern.permute.xlu0 0
      %1741 = vperm.xlu0 %1740, %v791
      %v1742 = vpop.permute.xlu0 %1741
      %vm1744 = vcmask 261120
      %v1746 = vsel %vm1744, %v777, 0
      %v1749 = vsel %vm1744, %v780, 0
      %v1752 = vsel %vm1744, %v783, 0
      %v1755 = vsel %vm1744, %v786, 0
      %1757 = vmatprep.subr.mxu0 %v1617
      %1758 = vmatpush1.msra.mxu0 %v1616
      %1759 = vmatprep.subr.mxu0 %v1620
      %1760 = vmatpush1.msra.mxu0 %v1619
      %1761 = vmatprep.subr.mxu0 %v1623
      %1762 = vmatpush1.msra.mxu0 %v1622
      %1763 = vmatprep.subr.mxu0 %v1626
      %1764 = vmatpush1.msra.mxu0 %v1625
      %1765 = vmatprep.subr.mxu0 %v1629
      %1766 = vmatpush1.msra.mxu0 %v1628
      %1767 = vmatprep.subr.mxu0 %v1632
      %1768 = vmatpush1.msra.mxu0 %v1631
      %1769 = vmatprep.subr.mxu0 %v1635
      %1770 = vmatpush1.msra.mxu0 %v1634
      %1771 = vmatprep.subr.mxu0 %v1638
      %1772 = vmatpush1.msra.mxu0 %v1637
      %1773 = vmatprep.subr.mxu0 %v1641
      %1774 = vmatpush1.msra.mxu0 %v1640
      %1775 = vmatprep.subr.mxu0 %v1644
      %1776 = vmatpush1.msra.mxu0 %v1643
      %1777 = vmatprep.subr.mxu0 %v1647
      %1778 = vmatpush1.msra.mxu0 %v1646
      %1779 = vmatprep.subr.mxu0 %v1650
      %1780 = vmatpush1.msra.mxu0 %v1649
      %1781 = vmatprep.subr.mxu0 %v1653
      %1782 = vmatpush1.msra.mxu0 %v1652
      %1783 = vmatprep.subr.mxu0 %v1656
      %1784 = vmatpush1.msra.mxu0 %v1655
      %1785 = vmatprep.subr.mxu0 %v1659
      %1786 = vmatpush1.msra.mxu0 %v1658
      %1787 = vmatprep.subr.mxu0 %v1662
      %1788 = vmatpush1.msra.mxu0 %v1661
      %1789 = vmatprep.subr.mxu0 %v1665
      %1790 = vmatpush1.msra.mxu0 %v1664
      %1791 = vmatprep.subr.mxu0 %v1668
      %1792 = vmatpush1.msra.mxu0 %v1667
      %1793 = vmatprep.subr.mxu0 %v1671
      %1794 = vmatpush1.msra.mxu0 %v1670
      %1795 = vmatprep.subr.mxu0 %v1674
      %1796 = vmatpush1.msra.mxu0 %v1673
      %1797 = vmatprep.subr.mxu0 %v1677
      %1798 = vmatpush1.msra.mxu0 %v1676
      %1799 = vmatprep.subr.mxu0 %v1680
      %1800 = vmatpush1.msra.mxu0 %v1679
      %1801 = vmatprep.subr.mxu0 %v1683
      %1802 = vmatpush1.msra.mxu0 %v1682
      %1803 = vmatprep.subr.mxu0 %v1686
      %1804 = vmatpush1.msra.mxu0 %v1685
      %1805 = vmatprep.subr.mxu0 %v1689
      %1806 = vmatpush1.msra.mxu0 %v1688
      %1807 = vmatprep.subr.mxu0 %v1692
      %1808 = vmatpush1.msra.mxu0 %v1691
      %1809 = vmatprep.subr.mxu0 %v1695
      %1810 = vmatpush1.msra.mxu0 %v1694
      %1811 = vmatprep.subr.mxu0 %v1698
      %1812 = vmatpush1.msra.mxu0 %v1697
      %1813 = vmatprep.subr.mxu0 %v1701
      %1814 = vmatpush1.msra.mxu0 %v1700
      %1815 = vmatprep.subr.mxu0 %v1704
      %1816 = vmatpush1.msra.mxu0 %v1703
      %1817 = vmatprep.subr.mxu0 %v1707
      %1818 = vmatpush1.msra.mxu0 %v1706
      %1819 = vmatprep.subr.mxu0 %v1710
      %1820 = vmatpush1.msra.mxu0 %v1709
      %1821 = vmatprep.mubr.f32.mxu0 %v776
      %1822 = vmatmul.mubr.f32.gmra.mrb[0].mxu0 %v775
      %v1823 = vpop.f32.mrb[0].mxu0
      %v1824 = vadd.f32 %v1727, %v1823
      %v1825 = vpop.f32.mrb[0].mxu0
      %v1826 = vadd.f32 %v1727, %v1825
      %1827 = vmatprep.mubr.f32.mxu0 %v779
      %1828 = vmatmul.mubr.f32.gmra.mrb[0].mxu0 %v778
      %v1829 = vpop.f32.mrb[0].mxu0
      %v1830 = vadd.f32 %v1732, %v1829
      %v1831 = vpop.f32.mrb[0].mxu0
      %v1832 = vadd.f32 %v1732, %v1831
      %1833 = vmatprep.mubr.f32.mxu0 %v782
      %1834 = vmatmul.mubr.f32.gmra.mrb[0].mxu0 %v781
      %v1835 = vpop.f32.mrb[0].mxu0
      %v1836 = vadd.f32 %v1737, %v1835
      %v1837 = vpop.f32.mrb[0].mxu0
      %v1838 = vadd.f32 %v1737, %v1837
      %1839 = vmatprep.mubr.f32.mxu0 %v785
      %1840 = vmatmul.mubr.f32.gmra.mrb[0].mxu0 %v784
      %v1841 = vpop.f32.mrb[0].mxu0
      %v1842 = vadd.f32 %v1742, %v1841
      %v1843 = vpop.f32.mrb[0].mxu0
      %v1844 = vadd.f32 %v1742, %v1843
      %1845 = vdwg.mxu0
      %1846 = vmatprep.subr.mxu0 %v1713
      %1847 = vmatpush1.msra.mxu0 %v1712
      %1848 = vmatprep.subr.mxu0 %v1716
      %1849 = vmatpush1.msra.mxu0 %v1715
      %1850 = vmatprep.subr.mxu0 %v1719
      %1851 = vmatpush1.msra.mxu0 %v1718
      %1852 = vmatprep.subr.mxu0 %v1722
      %1853 = vmatpush1.msra.mxu0 %v1721
      %1854 = vmatprep.subr.mxu0 0.0
      %1855 = vmatpush1.msra.mxu0 0.0
      %1856 = vmatprep.subr.mxu0 0.0
      %1857 = vmatpush1.msra.mxu0 0.0
      %1858 = vmatprep.subr.mxu0 0.0
      %1859 = vmatpush1.msra.mxu0 0.0
      %1860 = vmatprep.subr.mxu0 0.0
      %1861 = vmatpush1.msra.mxu0 0.0
      %1862 = vmatprep.subr.mxu0 0.0
      %1863 = vmatpush1.msra.mxu0 0.0
      %1864 = vmatprep.subr.mxu0 0.0
      %1865 = vmatpush1.msra.mxu0 0.0
      %1866 = vmatprep.subr.mxu0 0.0
      %1867 = vmatpush1.msra.mxu0 0.0
      %1868 = vmatprep.subr.mxu0 0.0
      %1869 = vmatpush1.msra.mxu0 0.0
      %1870 = vmatprep.subr.mxu0 0.0
      %1871 = vmatpush1.msra.mxu0 0.0
      %1872 = vmatprep.subr.mxu0 0.0
      %1873 = vmatpush1.msra.mxu0 0.0
      %1874 = vmatprep.subr.mxu0 0.0
      %1875 = vmatpush1.msra.mxu0 0.0
      %1876 = vmatprep.subr.mxu0 0.0
      %1877 = vmatpush1.msra.mxu0 0.0
      %1878 = vmatprep.subr.mxu0 0.0
      %1879 = vmatpush1.msra.mxu0 0.0
      %1880 = vmatprep.subr.mxu0 0.0
      %1881 = vmatpush1.msra.mxu0 0.0
      %1882 = vmatprep.subr.mxu0 0.0
      %1883 = vmatpush1.msra.mxu0 0.0
      %1884 = vmatprep.subr.mxu0 0.0
      %1885 = vmatpush1.msra.mxu0 0.0
      %1886 = vmatprep.subr.mxu0 0.0
      %1887 = vmatpush1.msra.mxu0 0.0
      %1888 = vmatprep.subr.mxu0 0.0
      %1889 = vmatpush1.msra.mxu0 0.0
      %1890 = vmatprep.subr.mxu0 0.0
      %1891 = vmatpush1.msra.mxu0 0.0
      %1892 = vmatprep.subr.mxu0 0.0
      %1893 = vmatpush1.msra.mxu0 0.0
      %1894 = vmatprep.subr.mxu0 0.0
      %1895 = vmatpush1.msra.mxu0 0.0
      %1896 = vmatprep.subr.mxu0 0.0
      %1897 = vmatpush1.msra.mxu0 0.0
      %1898 = vmatprep.subr.mxu0 0.0
      %1899 = vmatpush1.msra.mxu0 0.0
      %1900 = vmatprep.subr.mxu0 0.0
      %1901 = vmatpush1.msra.mxu0 0.0
      %1902 = vmatprep.subr.mxu0 0.0
      %1903 = vmatpush1.msra.mxu0 0.0
      %1904 = vmatprep.subr.mxu0 0.0
      %1905 = vmatpush1.msra.mxu0 0.0
      %1906 = vmatprep.subr.mxu0 0.0
      %1907 = vmatpush1.msra.mxu0 0.0
      %1908 = vmatprep.subr.mxu0 0.0
      %1909 = vmatpush1.msra.mxu0 0.0
      %1910 = vmatprep.mubr.f32.mxu0 0.0
      %1911 = vmatmul.mubr.f32.gmra.mrb[0].mxu0 %v1746
      %v1912 = vpop.f32.mrb[0].mxu0
      %v1913 = vadd.f32 %v1824, %v1912
      %v1914 = vpop.f32.mrb[0].mxu0
      %v1915 = vadd.f32 %v1826, %v1914
      %1916 = vmatprep.mubr.f32.mxu0 0.0
      %1917 = vmatmul.mubr.f32.gmra.mrb[0].mxu0 %v1749
      %v1918 = vpop.f32.mrb[0].mxu0
      %v1919 = vadd.f32 %v1830, %v1918
      %v1920 = vpop.f32.mrb[0].mxu0
      %v1921 = vadd.f32 %v1832, %v1920
      %1922 = vmatprep.mubr.f32.mxu0 0.0
      %1923 = vmatmul.mubr.f32.gmra.mrb[0].mxu0 %v1752
      %v1924 = vpop.f32.mrb[0].mxu0
      %v1925 = vadd.f32 %v1836, %v1924
      %v1926 = vpop.f32.mrb[0].mxu0
      %v1927 = vadd.f32 %v1838, %v1926
      %1928 = vmatprep.mubr.f32.mxu0 0.0
      %1929 = vmatmul.mubr.f32.gmra.mrb[0].mxu0 %v1755
      %v1930 = vpop.f32.mrb[0].mxu0
      %v1931 = vadd.f32 %v1842, %v1930
      %v1932 = vpop.f32.mrb[0].mxu0
      %v1933 = vadd.f32 %v1844, %v1932
      %1934 = vdwg.mxu0
      %1935 = vmatprep.subr.mxu0 0.0
      %1936 = vmatpush1.msra.mxu0 %v1618
      %1937 = vmatprep.subr.mxu0 0.0
      %1938 = vmatpush1.msra.mxu0 %v1621
      %1939 = vmatprep.subr.mxu0 0.0
      %1940 = vmatpush1.msra.mxu0 %v1624
      %1941 = vmatprep.subr.mxu0 0.0
      %1942 = vmatpush1.msra.mxu0 %v1627
      %1943 = vmatprep.subr.mxu0 0.0
      %1944 = vmatpush1.msra.mxu0 %v1630
      %1945 = vmatprep.subr.mxu0 0.0
      %1946 = vmatpush1.msra.mxu0 %v1633
      %1947 = vmatprep.subr.mxu0 0.0
      %1948 = vmatpush1.msra.mxu0 %v1636
      %1949 = vmatprep.subr.mxu0 0.0
      %1950 = vmatpush1.msra.mxu0 %v1639
      %1951 = vmatprep.subr.mxu0 0.0
      %1952 = vmatpush1.msra.mxu0 %v1642
      %1953 = vmatprep.subr.mxu0 0.0
      %1954 = vmatpush1.msra.mxu0 %v1645
      %1955 = vmatprep.subr.mxu0 0.0
      %1956 = vmatpush1.msra.mxu0 %v1648
      %1957 = vmatprep.subr.mxu0 0.0
      %1958 = vmatpush1.msra.mxu0 %v1651
      %1959 = vmatprep.subr.mxu0 0.0
      %1960 = vmatpush1.msra.mxu0 %v1654
      %1961 = vmatprep.subr.mxu0 0.0
      %1962 = vmatpush1.msra.mxu0 %v1657
      %1963 = vmatprep.subr.mxu0 0.0
      %1964 = vmatpush1.msra.mxu0 %v1660
      %1965 = vmatprep.subr.mxu0 0.0
      %1966 = vmatpush1.msra.mxu0 %v1663
      %1967 = vmatprep.subr.mxu0 0.0
      %1968 = vmatpush1.msra.mxu0 %v1666
      %1969 = vmatprep.subr.mxu0 0.0
      %1970 = vmatpush1.msra.mxu0 %v1669
      %1971 = vmatprep.subr.mxu0 0.0
      %1972 = vmatpush1.msra.mxu0 %v1672
      %1973 = vmatprep.subr.mxu0 0.0
      %1974 = vmatpush1.msra.mxu0 %v1675
      %1975 = vmatprep.subr.mxu0 0.0
      %1976 = vmatpush1.msra.mxu0 %v1678
      %1977 = vmatprep.subr.mxu0 0.0
      %1978 = vmatpush1.msra.mxu0 %v1681
      %1979 = vmatprep.subr.mxu0 0.0
      %1980 = vmatpush1.msra.mxu0 %v1684
      %1981 = vmatprep.subr.mxu0 0.0
      %1982 = vmatpush1.msra.mxu0 %v1687
      %1983 = vmatprep.subr.mxu0 0.0
      %1984 = vmatpush1.msra.mxu0 %v1690
      %1985 = vmatprep.subr.mxu0 0.0
      %1986 = vmatpush1.msra.mxu0 %v1693
      %1987 = vmatprep.subr.mxu0 0.0
      %1988 = vmatpush1.msra.mxu0 %v1696
      %1989 = vmatprep.subr.mxu0 0.0
      %1990 = vmatpush1.msra.mxu0 %v1699
      %1991 = vmatprep.subr.mxu0 0.0
      %1992 = vmatpush1.msra.mxu0 %v1702
      %1993 = vmatprep.subr.mxu0 0.0
      %1994 = vmatpush1.msra.mxu0 %v1705
      %1995 = vmatprep.subr.mxu0 0.0
      %1996 = vmatpush1.msra.mxu0 %v1708
      %1997 = vmatprep.subr.mxu0 0.0
      %1998 = vmatpush1.msra.mxu0 %v1711
      %1999 = vmatprep.mubr.f32.mxu0 %v776
      %2000 = vmatmul.mubr.f32.gmra.mrb[0].mxu0 %v775
      %v2001 = vpop.f32.mrb[0].mxu0
      %v2002 = vadd.f32 %v1727, %v2001
      %v2003 = vpop.f32.mrb[0].mxu0
      %2004 = vmatprep.mubr.f32.mxu0 %v779
      %2005 = vmatmul.mubr.f32.gmra.mrb[0].mxu0 %v778
      %v2006 = vpop.f32.mrb[0].mxu0
      %v2007 = vadd.f32 %v1732, %v2006
      %v2008 = vpop.f32.mrb[0].mxu0
      %2009 = vmatprep.mubr.f32.mxu0 %v782
      %2010 = vmatmul.mubr.f32.gmra.mrb[0].mxu0 %v781
      %v2011 = vpop.f32.mrb[0].mxu0
      %v2012 = vadd.f32 %v1737, %v2011
      %v2013 = vpop.f32.mrb[0].mxu0
      %2014 = vmatprep.mubr.f32.mxu0 %v785
      %2015 = vmatmul.mubr.f32.gmra.mrb[0].mxu0 %v784
      %v2016 = vpop.f32.mrb[0].mxu0
      %v2017 = vadd.f32 %v1742, %v2016
      %v2018 = vpop.f32.mrb[0].mxu0
      %2019 = vdwg.mxu0
      %2020 = vmatprep.subr.mxu0 0.0
      %2021 = vmatpush1.msra.mxu0 %v1714
      %2022 = vmatprep.subr.mxu0 0.0
      %2023 = vmatpush1.msra.mxu0 %v1717
      %2024 = vmatprep.subr.mxu0 0.0
      %2025 = vmatpush1.msra.mxu0 %v1720
      %2026 = vmatprep.subr.mxu0 0.0
      %2027 = vmatpush1.msra.mxu0 %v1723
      %2028 = vmatprep.subr.mxu0 0.0
      %2029 = vmatpush1.msra.mxu0 0.0
      %2030 = vmatprep.subr.mxu0 0.0
      %2031 = vmatpush1.msra.mxu0 0.0
      %2032 = vmatprep.subr.mxu0 0.0
      %2033 = vmatpush1.msra.mxu0 0.0
      %2034 = vmatprep.subr.mxu0 0.0
      %2035 = vmatpush1.msra.mxu0 0.0
      %2036 = vmatprep.subr.mxu0 0.0
      %2037 = vmatpush1.msra.mxu0 0.0
      %2038 = vmatprep.subr.mxu0 0.0
      %2039 = vmatpush1.msra.mxu0 0.0
      %2040 = vmatprep.subr.mxu0 0.0
      %2041 = vmatpush1.msra.mxu0 0.0
      %2042 = vmatprep.subr.mxu0 0.0
      %2043 = vmatpush1.msra.mxu0 0.0
      %2044 = vmatprep.subr.mxu0 0.0
      %2045 = vmatpush1.msra.mxu0 0.0
      %2046 = vmatprep.subr.mxu0 0.0
      %2047 = vmatpush1.msra.mxu0 0.0
      %2048 = vmatprep.subr.mxu0 0.0
      %2049 = vmatpush1.msra.mxu0 0.0
      %2050 = vmatprep.subr.mxu0 0.0
      %2051 = vmatpush1.msra.mxu0 0.0
      %2052 = vmatprep.subr.mxu0 0.0
      %2053 = vmatpush1.msra.mxu0 0.0
      %2054 = vmatprep.subr.mxu0 0.0
      %2055 = vmatpush1.msra.mxu0 0.0
      %2056 = vmatprep.subr.mxu0 0.0
      %2057 = vmatpush1.msra.mxu0 0.0
      %2058 = vmatprep.subr.mxu0 0.0
      %2059 = vmatpush1.msra.mxu0 0.0
      %2060 = vmatprep.subr.mxu0 0.0
      %2061 = vmatpush1.msra.mxu0 0.0
      %2062 = vmatprep.subr.mxu0 0.0
      %2063 = vmatpush1.msra.mxu0 0.0
      %2064 = vmatprep.subr.mxu0 0.0
      %2065 = vmatpush1.msra.mxu0 0.0
      %2066 = vmatprep.subr.mxu0 0.0
      %2067 = vmatpush1.msra.mxu0 0.0
      %2068 = vmatprep.subr.mxu0 0.0
      %2069 = vmatpush1.msra.mxu0 0.0
      %2070 = vmatprep.subr.mxu0 0.0
      %2071 = vmatpush1.msra.mxu0 0.0
      %2072 = vmatprep.subr.mxu0 0.0
      %2073 = vmatpush1.msra.mxu0 0.0
      %2074 = vmatprep.subr.mxu0 0.0
      %2075 = vmatpush1.msra.mxu0 0.0
      %2076 = vmatprep.subr.mxu0 0.0
      %2077 = vmatpush1.msra.mxu0 0.0
      %2078 = vmatprep.subr.mxu0 0.0
      %2079 = vmatpush1.msra.mxu0 0.0
      %2080 = vmatprep.subr.mxu0 0.0
      %2081 = vmatpush1.msra.mxu0 0.0
      %2082 = vmatprep.subr.mxu0 0.0
      %2083 = vmatpush1.msra.mxu0 0.0
      %2084 = vmatprep.mubr.f32.mxu0 0.0
      %2085 = vmatmul.mubr.f32.gmra.mrb[0].mxu0 %v1746
      %v2086 = vpop.f32.mrb[0].mxu0
      %v2087 = vadd.f32 %v2002, %v2086
      %v2088 = vpop.f32.mrb[0].mxu0
      %2089 = vmatprep.mubr.f32.mxu0 0.0
      %2090 = vmatmul.mubr.f32.gmra.mrb[0].mxu0 %v1749
      %v2091 = vpop.f32.mrb[0].mxu0
      %v2092 = vadd.f32 %v2007, %v2091
      %v2093 = vpop.f32.mrb[0].mxu0
      %2094 = vmatprep.mubr.f32.mxu0 0.0
      %2095 = vmatmul.mubr.f32.gmra.mrb[0].mxu0 %v1752
      %v2096 = vpop.f32.mrb[0].mxu0
      %v2097 = vadd.f32 %v2012, %v2096
      %v2098 = vpop.f32.mrb[0].mxu0
      %2099 = vmatprep.mubr.f32.mxu0 0.0
      %2100 = vmatmul.mubr.f32.gmra.mrb[0].mxu0 %v1755
      %v2101 = vpop.f32.mrb[0].mxu0
      %v2102 = vadd.f32 %v2017, %v2101
      %v2103 = vpop.f32.mrb[0].mxu0
      %2104 = vdwg.mxu0
      %v2105 = vmax.f32 %v1913, 0.0
      %v2106 = vmax.f32 %v1915, 0.0
      %v2107 = vmax.f32 %v2087, 0.0
      %v2108 = vmax.f32 %v1919, 0.0
      %v2109 = vmax.f32 %v1921, 0.0
      %v2110 = vmax.f32 %v2092, 0.0
      %v2111 = vmax.f32 %v1925, 0.0
      %v2112 = vmax.f32 %v1927, 0.0
      %v2113 = vmax.f32 %v2097, 0.0
      %v2114 = vmax.f32 %v1931, 0.0
      %v2115 = vmax.f32 %v1933, 0.0
      %v2116 = vmax.f32 %v2102, 0.0
      %v2117 = vmul.f32 %v2105, %v739
      %v2118 = vmul.f32 %v2106, %v743
      %v2119 = vmul.f32 %v2107, %v747
      %v2120 = vmul.f32 %v2108, %v739
      %v2121 = vmul.f32 %v2109, %v743
      %v2122 = vmul.f32 %v2110, %v747
      %v2123 = vmul.f32 %v2111, %v739
      %v2124 = vmul.f32 %v2112, %v743
      %v2125 = vmul.f32 %v2113, %v747
      %v2126 = vmul.f32 %v2114, %v739
      %v2127 = vmul.f32 %v2115, %v743
      %v2128 = vmul.f32 %v2116, %v747
      %2129 = vst [vmem:[#allocation2 + $0x8] sm:$0xff] %v2117
      %2130 = vst [vmem:[#allocation2 + $0x10] sm:$0xff] %v2118
      %2131 = vst [vmem:[#allocation2 + $0x18] sm:$0xff] %v2119
      %2132 = vst [vmem:[#allocation2 + $0x30] sm:$0xff] %v2120
      %2133 = vst [vmem:[#allocation2 + $0x38] sm:$0xff] %v2121
      %2134 = vst [vmem:[#allocation2 + $0x40] sm:$0xff] %v2122
      %2135 = vst [vmem:[#allocation2 + $0x58] sm:$0xff] %v2123
      %2136 = vst [vmem:[#allocation2 + $0x60] sm:$0xff] %v2124
      %2137 = vst [vmem:[#allocation2 + $0x68] sm:$0xff] %v2125
      %2138 = vst [vmem:[#allocation2 + $0x80] sm:$0xff] %v2126
      %2139 = vst [vmem:[#allocation2 + $0x88] sm:$0xff] %v2127
      %2140 = vst [vmem:[#allocation2 + $0x90] sm:$0xff] %v2128
      %s2141 = scalar_lea.vmem %s2, 96
      %v2142 = vld [vmem:[%s2141] sm:$0xff]
      %v2143 = vld [vmem:[%s2141 + $0x8] sm:$0xff]
      %v2144 = vld [vmem:[%s2141 + $0x10] sm:$0xff]
      %v2145 = vld [vmem:[%s2141 + $0x18] sm:$0xff]
      %v2146 = vld [vmem:[%s2141 + $0x20] sm:$0xff]
      %v2147 = vld [vmem:[%s2141 + $0x28] sm:$0xff]
      %v2148 = vld [vmem:[%s2141 + $0x30] sm:$0xff]
      %v2149 = vld [vmem:[%s2141 + $0x38] sm:$0xff]
      %v2150 = vld [vmem:[%s2141 + $0x40] sm:$0xff]
      %v2151 = vld [vmem:[%s2141 + $0x48] sm:$0xff]
      %v2152 = vld [vmem:[%s2141 + $0x50] sm:$0xff]
      %v2153 = vld [vmem:[%s2141 + $0x58] sm:$0xff]
      %s2154 = scalar_lea.vmem %s4, 64
      %v2155 = vld [vmem:[%s2154] sm:$0xff]
      %v2156 = vld [vmem:[%s2154 + $0x8] sm:$0xff]
      %v2157 = vld [vmem:[%s2154 + $0x10] sm:$0xff]
      %v2158 = vld [vmem:[%s2154 + $0x18] sm:$0xff]
      %v2159 = vld [vmem:[#allocation2] sm:$0xff]
      %v2160 = vld [vmem:[#allocation2 + $0x8] sm:$0xff]
      %v2161 = vld [vmem:[#allocation2 + $0x10] sm:$0xff]
      %v2162 = vld [vmem:[#allocation2 + $0x18] sm:$0xff]
      %v2163 = vld [vmem:[#allocation2 + $0x28] sm:$0xff]
      %v2164 = vld [vmem:[#allocation2 + $0x30] sm:$0xff]
      %v2165 = vld [vmem:[#allocation2 + $0x38] sm:$0xff]
      %v2166 = vld [vmem:[#allocation2 + $0x40] sm:$0xff]
      %v2167 = vld [vmem:[#allocation2 + $0x50] sm:$0xff]
      %v2168 = vld [vmem:[#allocation2 + $0x58] sm:$0xff]
      %v2169 = vld [vmem:[#allocation2 + $0x60] sm:$0xff]
      %v2170 = vld [vmem:[#allocation2 + $0x68] sm:$0xff]
      %v2171 = vld [vmem:[#allocation2 + $0x78] sm:$0xff]
      %v2172 = vld [vmem:[#allocation2 + $0x80] sm:$0xff]
      %v2173 = vld [vmem:[#allocation2 + $0x88] sm:$0xff]
      %v2174 = vld [vmem:[#allocation2 + $0x90] sm:$0xff]
      %2191 = vrot.lane.b32.xlu0 %v2159, 19
      %v2192 = vpop.permute.xlu0 %2191
      %2193 = vrot.lane.b32.xlu0 %v2160, 19
      %v2194 = vpop.permute.xlu0 %2193
      %2195 = vrot.lane.b32.xlu0 %v2161, 19
      %v2196 = vpop.permute.xlu0 %2195
      %2197 = vrot.lane.b32.xlu0 %v2162, 19
      %v2198 = vpop.permute.xlu0 %2197
      %2199 = vrot.lane.b32.xlu0 %v2163, 19
      %v2200 = vpop.permute.xlu0 %2199
      %2201 = vrot.lane.b32.xlu0 %v2164, 19
      %v2202 = vpop.permute.xlu0 %2201
      %2203 = vrot.lane.b32.xlu0 %v2165, 19
      %v2204 = vpop.permute.xlu0 %2203
      %2205 = vrot.lane.b32.xlu0 %v2166, 19
      %v2206 = vpop.permute.xlu0 %2205
      %2207 = vrot.lane.b32.xlu0 %v2167, 19
      %v2208 = vpop.permute.xlu0 %2207
      %2209 = vrot.lane.b32.xlu0 %v2168, 19
      %v2210 = vpop.permute.xlu0 %2209
      %2211 = vrot.lane.b32.xlu0 %v2169, 19
      %v2212 = vpop.permute.xlu0 %2211
      %2213 = vrot.lane.b32.xlu0 %v2170, 19
      %v2214 = vpop.permute.xlu0 %2213
      %2215 = vrot.lane.b32.xlu0 %v2171, 19
      %v2216 = vpop.permute.xlu0 %2215
      %2217 = vrot.lane.b32.xlu0 %v2172, 19
      %v2218 = vpop.permute.xlu0 %2217
      %2219 = vrot.lane.b32.xlu0 %v2173, 19
      %v2220 = vpop.permute.xlu0 %2219
      %2221 = vrot.lane.b32.xlu0 %v2174, 19
      %v2222 = vpop.permute.xlu0 %2221
      %v2223 = vsel %vm291, %v2192, %v2194
      %v2224 = vsel %vm291, %v2194, %v2196
      %v2225 = vsel %vm291, %v2196, %v2198
      %v2226 = vsel %vm291, %v2200, %v2202
      %v2227 = vsel %vm291, %v2202, %v2204
      %v2228 = vsel %vm291, %v2204, %v2206
      %v2229 = vsel %vm291, %v2208, %v2210
      %v2230 = vsel %vm291, %v2210, %v2212
      %v2231 = vsel %vm291, %v2212, %v2214
      %v2232 = vsel %vm291, %v2216, %v2218
      %v2233 = vsel %vm291, %v2218, %v2220
      %v2234 = vsel %vm291, %v2220, %v2222
      %2247 = vst [vmem:[#allocation3] sm:$0xff] %v2223
      %2248 = vst [vmem:[#allocation3 + $0x8] sm:$0xff] %v2224
      %2249 = vst [vmem:[#allocation3 + $0x10] sm:$0xff] %v2225
      %2250 = vst [vmem:[#allocation3 + $0x18] sm:$0xff] %v2226
      %2251 = vst [vmem:[#allocation3 + $0x20] sm:$0xff] %v2227
      %2252 = vst [vmem:[#allocation3 + $0x28] sm:$0xff] %v2228
      %2253 = vst [vmem:[#allocation3 + $0x30] sm:$0xff] %v2229
      %2254 = vst [vmem:[#allocation3 + $0x38] sm:$0xff] %v2230
      %2255 = vst [vmem:[#allocation3 + $0x40] sm:$0xff] %v2231
      %2256 = vst [vmem:[#allocation3 + $0x48] sm:$0xff] %v2232
      %2257 = vst [vmem:[#allocation3 + $0x50] sm:$0xff] %v2233
      %2258 = vst [vmem:[#allocation3 + $0x58] sm:$0xff] %v2234
      %v2259 = vld [vmem:[#allocation2] sm:$0xff]
      %v2260 = vld [vmem:[#allocation2 + $0x8] sm:$0xff]
      %v2261 = vld [vmem:[#allocation2 + $0x10] sm:$0xff]
      %v2262 = vld [vmem:[#allocation2 + $0x18] sm:$0xff]
      %v2263 = vld [vmem:[#allocation2 + $0x28] sm:$0xff]
      %v2264 = vld [vmem:[#allocation2 + $0x30] sm:$0xff]
      %v2265 = vld [vmem:[#allocation2 + $0x38] sm:$0xff]
      %v2266 = vld [vmem:[#allocation2 + $0x40] sm:$0xff]
      %v2267 = vld [vmem:[#allocation2 + $0x50] sm:$0xff]
      %v2268 = vld [vmem:[#allocation2 + $0x58] sm:$0xff]
      %v2269 = vld [vmem:[#allocation2 + $0x60] sm:$0xff]
      %v2270 = vld [vmem:[#allocation2 + $0x68] sm:$0xff]
      %v2271 = vld [vmem:[#allocation2 + $0x78] sm:$0xff]
      %v2272 = vld [vmem:[#allocation2 + $0x80] sm:$0xff]
      %v2273 = vld [vmem:[#allocation2 + $0x88] sm:$0xff]
      %v2274 = vld [vmem:[#allocation2 + $0x90] sm:$0xff]
      %2291 = vrot.lane.b32.xlu0 %v2259, 18
      %v2292 = vpop.permute.xlu0 %2291
      %2293 = vrot.lane.b32.xlu0 %v2260, 18
      %v2294 = vpop.permute.xlu0 %2293
      %2295 = vrot.lane.b32.xlu0 %v2261, 18
      %v2296 = vpop.permute.xlu0 %2295
      %2297 = vrot.lane.b32.xlu0 %v2262, 18
      %v2298 = vpop.permute.xlu0 %2297
      %2299 = vrot.lane.b32.xlu0 %v2263, 18
      %v2300 = vpop.permute.xlu0 %2299
      %2301 = vrot.lane.b32.xlu0 %v2264, 18
      %v2302 = vpop.permute.xlu0 %2301
      %2303 = vrot.lane.b32.xlu0 %v2265, 18
      %v2304 = vpop.permute.xlu0 %2303
      %2305 = vrot.lane.b32.xlu0 %v2266, 18
      %v2306 = vpop.permute.xlu0 %2305
      %2307 = vrot.lane.b32.xlu0 %v2267, 18
      %v2308 = vpop.permute.xlu0 %2307
      %2309 = vrot.lane.b32.xlu0 %v2268, 18
      %v2310 = vpop.permute.xlu0 %2309
      %2311 = vrot.lane.b32.xlu0 %v2269, 18
      %v2312 = vpop.permute.xlu0 %2311
      %2313 = vrot.lane.b32.xlu0 %v2270, 18
      %v2314 = vpop.permute.xlu0 %2313
      %2315 = vrot.lane.b32.xlu0 %v2271, 18
      %v2316 = vpop.permute.xlu0 %2315
      %2317 = vrot.lane.b32.xlu0 %v2272, 18
      %v2318 = vpop.permute.xlu0 %2317
      %2319 = vrot.lane.b32.xlu0 %v2273, 18
      %v2320 = vpop.permute.xlu0 %2319
      %2321 = vrot.lane.b32.xlu0 %v2274, 18
      %v2322 = vpop.permute.xlu0 %2321
      %v2323 = vsel %vm317, %v2292, %v2294
      %v2324 = vsel %vm317, %v2294, %v2296
      %v2325 = vsel %vm317, %v2296, %v2298
      %v2326 = vsel %vm317, %v2300, %v2302
      %v2327 = vsel %vm317, %v2302, %v2304
      %v2328 = vsel %vm317, %v2304, %v2306
      %v2329 = vsel %vm317, %v2308, %v2310
      %v2330 = vsel %vm317, %v2310, %v2312
      %v2331 = vsel %vm317, %v2312, %v2314
      %v2332 = vsel %vm317, %v2316, %v2318
      %v2333 = vsel %vm317, %v2318, %v2320
      %v2334 = vsel %vm317, %v2320, %v2322
      %2347 = vst [vmem:[#allocation3 + $0x60] sm:$0xff] %v2323
      %2348 = vst [vmem:[#allocation3 + $0x68] sm:$0xff] %v2324
      %2349 = vst [vmem:[#allocation3 + $0x70] sm:$0xff] %v2325
      %2350 = vst [vmem:[#allocation3 + $0x78] sm:$0xff] %v2326
      %2351 = vst [vmem:[#allocation3 + $0x80] sm:$0xff] %v2327
      %2352 = vst [vmem:[#allocation3 + $0x88] sm:$0xff] %v2328
      %2353 = vst [vmem:[#allocation3 + $0x90] sm:$0xff] %v2329
      %2354 = vst [vmem:[#allocation3 + $0x98] sm:$0xff] %v2330
      %2355 = vst [vmem:[#allocation3 + $0xa0] sm:$0xff] %v2331
      %2356 = vst [vmem:[#allocation3 + $0xa8] sm:$0xff] %v2332
      %2357 = vst [vmem:[#allocation3 + $0xb0] sm:$0xff] %v2333
      %2358 = vst [vmem:[#allocation3 + $0xb8] sm:$0xff] %v2334
      %v2359 = vld [vmem:[#allocation2] sm:$0xff]
      %v2360 = vld [vmem:[#allocation2 + $0x8] sm:$0xff]
      %v2361 = vld [vmem:[#allocation2 + $0x10] sm:$0xff]
      %v2362 = vld [vmem:[#allocation2 + $0x18] sm:$0xff]
      %v2363 = vld [vmem:[#allocation2 + $0x28] sm:$0xff]
      %v2364 = vld [vmem:[#allocation2 + $0x30] sm:$0xff]
      %v2365 = vld [vmem:[#allocation2 + $0x38] sm:$0xff]
      %v2366 = vld [vmem:[#allocation2 + $0x40] sm:$0xff]
      %v2367 = vld [vmem:[#allocation2 + $0x50] sm:$0xff]
      %v2368 = vld [vmem:[#allocation2 + $0x58] sm:$0xff]
      %v2369 = vld [vmem:[#allocation2 + $0x60] sm:$0xff]
      %v2370 = vld [vmem:[#allocation2 + $0x68] sm:$0xff]
      %v2371 = vld [vmem:[#allocation2 + $0x78] sm:$0xff]
      %v2372 = vld [vmem:[#allocation2 + $0x80] sm:$0xff]
      %v2373 = vld [vmem:[#allocation2 + $0x88] sm:$0xff]
      %v2374 = vld [vmem:[#allocation2 + $0x90] sm:$0xff]
      %2391 = vrot.lane.b32.xlu0 %v2359, 17
      %v2392 = vpop.permute.xlu0 %2391
      %2393 = vrot.lane.b32.xlu0 %v2360, 17
      %v2394 = vpop.permute.xlu0 %2393
      %2395 = vrot.lane.b32.xlu0 %v2361, 17
      %v2396 = vpop.permute.xlu0 %2395
      %2397 = vrot.lane.b32.xlu0 %v2362, 17
      %v2398 = vpop.permute.xlu0 %2397
      %2399 = vrot.lane.b32.xlu0 %v2363, 17
      %v2400 = vpop.permute.xlu0 %2399
      %2401 = vrot.lane.b32.xlu0 %v2364, 17
      %v2402 = vpop.permute.xlu0 %2401
      %2403 = vrot.lane.b32.xlu0 %v2365, 17
      %v2404 = vpop.permute.xlu0 %2403
      %2405 = vrot.lane.b32.xlu0 %v2366, 17
      %v2406 = vpop.permute.xlu0 %2405
      %2407 = vrot.lane.b32.xlu0 %v2367, 17
      %v2408 = vpop.permute.xlu0 %2407
      %2409 = vrot.lane.b32.xlu0 %v2368, 17
      %v2410 = vpop.permute.xlu0 %2409
      %2411 = vrot.lane.b32.xlu0 %v2369, 17
      %v2412 = vpop.permute.xlu0 %2411
      %2413 = vrot.lane.b32.xlu0 %v2370, 17
      %v2414 = vpop.permute.xlu0 %2413
      %2415 = vrot.lane.b32.xlu0 %v2371, 17
      %v2416 = vpop.permute.xlu0 %2415
      %2417 = vrot.lane.b32.xlu0 %v2372, 17
      %v2418 = vpop.permute.xlu0 %2417
      %2419 = vrot.lane.b32.xlu0 %v2373, 17
      %v2420 = vpop.permute.xlu0 %2419
      %2421 = vrot.lane.b32.xlu0 %v2374, 17
      %v2422 = vpop.permute.xlu0 %2421
      %v2423 = vsel %vm343, %v2392, %v2394
      %v2424 = vsel %vm343, %v2394, %v2396
      %v2425 = vsel %vm343, %v2396, %v2398
      %v2426 = vsel %vm343, %v2400, %v2402
      %v2427 = vsel %vm343, %v2402, %v2404
      %v2428 = vsel %vm343, %v2404, %v2406
      %v2429 = vsel %vm343, %v2408, %v2410
      %v2430 = vsel %vm343, %v2410, %v2412
      %v2431 = vsel %vm343, %v2412, %v2414
      %v2432 = vsel %vm343, %v2416, %v2418
      %v2433 = vsel %vm343, %v2418, %v2420
      %v2434 = vsel %vm343, %v2420, %v2422
      %2447 = vst [vmem:[#allocation3 + $0xc0] sm:$0xff] %v2423
      %2448 = vst [vmem:[#allocation3 + $0xc8] sm:$0xff] %v2424
      %2449 = vst [vmem:[#allocation3 + $0xd0] sm:$0xff] %v2425
      %2450 = vst [vmem:[#allocation3 + $0xd8] sm:$0xff] %v2426
      %2451 = vst [vmem:[#allocation3 + $0xe0] sm:$0xff] %v2427
      %2452 = vst [vmem:[#allocation3 + $0xe8] sm:$0xff] %v2428
      %2453 = vst [vmem:[#allocation3 + $0xf0] sm:$0xff] %v2429
      %2454 = vst [vmem:[#allocation3 + $0xf8] sm:$0xff] %v2430
      %2455 = vst [vmem:[#allocation3 + $0x100] sm:$0xff] %v2431
      %2456 = vst [vmem:[#allocation3 + $0x108] sm:$0xff] %v2432
      %2457 = vst [vmem:[#allocation3 + $0x110] sm:$0xff] %v2433
      %2458 = vst [vmem:[#allocation3 + $0x118] sm:$0xff] %v2434
      %v2459 = vld [vmem:[#allocation2] sm:$0xff]
      %v2460 = vld [vmem:[#allocation2 + $0x8] sm:$0xff]
      %v2461 = vld [vmem:[#allocation2 + $0x10] sm:$0xff]
      %v2462 = vld [vmem:[#allocation2 + $0x18] sm:$0xff]
      %v2463 = vld [vmem:[#allocation2 + $0x28] sm:$0xff]
      %v2464 = vld [vmem:[#allocation2 + $0x30] sm:$0xff]
      %v2465 = vld [vmem:[#allocation2 + $0x38] sm:$0xff]
      %v2466 = vld [vmem:[#allocation2 + $0x40] sm:$0xff]
      %v2467 = vld [vmem:[#allocation2 + $0x50] sm:$0xff]
      %v2468 = vld [vmem:[#allocation2 + $0x58] sm:$0xff]
      %v2469 = vld [vmem:[#allocation2 + $0x60] sm:$0xff]
      %v2470 = vld [vmem:[#allocation2 + $0x68] sm:$0xff]
      %v2471 = vld [vmem:[#allocation2 + $0x78] sm:$0xff]
      %v2472 = vld [vmem:[#allocation2 + $0x80] sm:$0xff]
      %v2473 = vld [vmem:[#allocation2 + $0x88] sm:$0xff]
      %v2474 = vld [vmem:[#allocation2 + $0x90] sm:$0xff]
      %2491 = vrot.lane.b32.xlu0 %v2459, 1
      %v2492 = vpop.permute.xlu0 %2491
      %2493 = vrot.lane.b32.xlu0 %v2460, 1
      %v2494 = vpop.permute.xlu0 %2493
      %2495 = vrot.lane.b32.xlu0 %v2461, 1
      %v2496 = vpop.permute.xlu0 %2495
      %2497 = vrot.lane.b32.xlu0 %v2462, 1
      %v2498 = vpop.permute.xlu0 %2497
      %2499 = vrot.lane.b32.xlu0 %v2463, 1
      %v2500 = vpop.permute.xlu0 %2499
      %2501 = vrot.lane.b32.xlu0 %v2464, 1
      %v2502 = vpop.permute.xlu0 %2501
      %2503 = vrot.lane.b32.xlu0 %v2465, 1
      %v2504 = vpop.permute.xlu0 %2503
      %2505 = vrot.lane.b32.xlu0 %v2466, 1
      %v2506 = vpop.permute.xlu0 %2505
      %2507 = vrot.lane.b32.xlu0 %v2467, 1
      %v2508 = vpop.permute.xlu0 %2507
      %2509 = vrot.lane.b32.xlu0 %v2468, 1
      %v2510 = vpop.permute.xlu0 %2509
      %2511 = vrot.lane.b32.xlu0 %v2469, 1
      %v2512 = vpop.permute.xlu0 %2511
      %2513 = vrot.lane.b32.xlu0 %v2470, 1
      %v2514 = vpop.permute.xlu0 %2513
      %2515 = vrot.lane.b32.xlu0 %v2471, 1
      %v2516 = vpop.permute.xlu0 %2515
      %2517 = vrot.lane.b32.xlu0 %v2472, 1
      %v2518 = vpop.permute.xlu0 %2517
      %2519 = vrot.lane.b32.xlu0 %v2473, 1
      %v2520 = vpop.permute.xlu0 %2519
      %2521 = vrot.lane.b32.xlu0 %v2474, 1
      %v2522 = vpop.permute.xlu0 %2521
      %v2523 = vsel %vm369, %v2492, %v2494
      %v2524 = vsel %vm369, %v2494, %v2496
      %v2525 = vsel %vm369, %v2496, %v2498
      %v2526 = vsel %vm369, %v2500, %v2502
      %v2527 = vsel %vm369, %v2502, %v2504
      %v2528 = vsel %vm369, %v2504, %v2506
      %v2529 = vsel %vm369, %v2508, %v2510
      %v2530 = vsel %vm369, %v2510, %v2512
      %v2531 = vsel %vm369, %v2512, %v2514
      %v2532 = vsel %vm369, %v2516, %v2518
      %v2533 = vsel %vm369, %v2518, %v2520
      %v2534 = vsel %vm369, %v2520, %v2522
      %2547 = vst [vmem:[#allocation3 + $0x120] sm:$0xff] %v2523
      %2548 = vst [vmem:[#allocation3 + $0x128] sm:$0xff] %v2524
      %2549 = vst [vmem:[#allocation3 + $0x130] sm:$0xff] %v2525
      %2550 = vst [vmem:[#allocation3 + $0x138] sm:$0xff] %v2526
      %2551 = vst [vmem:[#allocation3 + $0x140] sm:$0xff] %v2527
      %2552 = vst [vmem:[#allocation3 + $0x148] sm:$0xff] %v2528
      %2553 = vst [vmem:[#allocation3 + $0x150] sm:$0xff] %v2529
      %2554 = vst [vmem:[#allocation3 + $0x158] sm:$0xff] %v2530
      %2555 = vst [vmem:[#allocation3 + $0x160] sm:$0xff] %v2531
      %2556 = vst [vmem:[#allocation3 + $0x168] sm:$0xff] %v2532
      %2557 = vst [vmem:[#allocation3 + $0x170] sm:$0xff] %v2533
      %2558 = vst [vmem:[#allocation3 + $0x178] sm:$0xff] %v2534
      %v2559 = vld [vmem:[#allocation2 + $0x8] sm:$0xff]
      %v2560 = vld [vmem:[#allocation2 + $0x10] sm:$0xff]
      %v2561 = vld [vmem:[#allocation2 + $0x18] sm:$0xff]
      %v2562 = vld [vmem:[#allocation2 + $0x30] sm:$0xff]
      %v2563 = vld [vmem:[#allocation2 + $0x38] sm:$0xff]
      %v2564 = vld [vmem:[#allocation2 + $0x40] sm:$0xff]
      %v2565 = vld [vmem:[#allocation2 + $0x58] sm:$0xff]
      %v2566 = vld [vmem:[#allocation2 + $0x60] sm:$0xff]
      %v2567 = vld [vmem:[#allocation2 + $0x68] sm:$0xff]
      %v2568 = vld [vmem:[#allocation2 + $0x80] sm:$0xff]
      %v2569 = vld [vmem:[#allocation2 + $0x88] sm:$0xff]
      %v2570 = vld [vmem:[#allocation2 + $0x90] sm:$0xff]
      %2571 = vst [vmem:[#allocation3 + $0x180] sm:$0xff] %v2559
      %2572 = vst [vmem:[#allocation3 + $0x188] sm:$0xff] %v2560
      %2573 = vst [vmem:[#allocation3 + $0x190] sm:$0xff] %v2561
      %2574 = vst [vmem:[#allocation3 + $0x198] sm:$0xff] %v2562
      %2575 = vst [vmem:[#allocation3 + $0x1a0] sm:$0xff] %v2563
      %2576 = vst [vmem:[#allocation3 + $0x1a8] sm:$0xff] %v2564
      %2577 = vst [vmem:[#allocation3 + $0x1b0] sm:$0xff] %v2565
      %2578 = vst [vmem:[#allocation3 + $0x1b8] sm:$0xff] %v2566
      %2579 = vst [vmem:[#allocation3 + $0x1c0] sm:$0xff] %v2567
      %2580 = vst [vmem:[#allocation3 + $0x1c8] sm:$0xff] %v2568
      %2581 = vst [vmem:[#allocation3 + $0x1d0] sm:$0xff] %v2569
      %2582 = vst [vmem:[#allocation3 + $0x1d8] sm:$0xff] %v2570
      %v2583 = vld [vmem:[#allocation2 + $0x8] sm:$0xff]
      %v2584 = vld [vmem:[#allocation2 + $0x10] sm:$0xff]
      %v2585 = vld [vmem:[#allocation2 + $0x18] sm:$0xff]
      %v2586 = vld [vmem:[#allocation2 + $0x20] sm:$0xff]
      %v2587 = vld [vmem:[#allocation2 + $0x30] sm:$0xff]
      %v2588 = vld [vmem:[#allocation2 + $0x38] sm:$0xff]
      %v2589 = vld [vmem:[#allocation2 + $0x40] sm:$0xff]
      %v2590 = vld [vmem:[#allocation2 + $0x48] sm:$0xff]
      %v2591 = vld [vmem:[#allocation2 + $0x58] sm:$0xff]
      %v2592 = vld [vmem:[#allocation2 + $0x60] sm:$0xff]
      %v2593 = vld [vmem:[#allocation2 + $0x68] sm:$0xff]
      %v2594 = vld [vmem:[#allocation2 + $0x70] sm:$0xff]
      %v2595 = vld [vmem:[#allocation2 + $0x80] sm:$0xff]
      %v2596 = vld [vmem:[#allocation2 + $0x88] sm:$0xff]
      %v2597 = vld [vmem:[#allocation2 + $0x90] sm:$0xff]
      %v2598 = vld [vmem:[#allocation2 + $0x98] sm:$0xff]
      %2615 = vrot.lane.b32.xlu0 %v2583, 127
      %v2616 = vpop.permute.xlu0 %2615
      %2617 = vrot.lane.b32.xlu0 %v2584, 127
      %v2618 = vpop.permute.xlu0 %2617
      %2619 = vrot.lane.b32.xlu0 %v2585, 127
      %v2620 = vpop.permute.xlu0 %2619
      %2621 = vrot.lane.b32.xlu0 %v2586, 127
      %v2622 = vpop.permute.xlu0 %2621
      %2623 = vrot.lane.b32.xlu0 %v2587, 127
      %v2624 = vpop.permute.xlu0 %2623
      %2625 = vrot.lane.b32.xlu0 %v2588, 127
      %v2626 = vpop.permute.xlu0 %2625
      %2627 = vrot.lane.b32.xlu0 %v2589, 127
      %v2628 = vpop.permute.xlu0 %2627
      %2629 = vrot.lane.b32.xlu0 %v2590, 127
      %v2630 = vpop.permute.xlu0 %2629
      %2631 = vrot.lane.b32.xlu0 %v2591, 127
      %v2632 = vpop.permute.xlu0 %2631
      %2633 = vrot.lane.b32.xlu0 %v2592, 127
      %v2634 = vpop.permute.xlu0 %2633
      %2635 = vrot.lane.b32.xlu0 %v2593, 127
      %v2636 = vpop.permute.xlu0 %2635
      %2637 = vrot.lane.b32.xlu0 %v2594, 127
      %v2638 = vpop.permute.xlu0 %2637
      %2639 = vrot.lane.b32.xlu0 %v2595, 127
      %v2640 = vpop.permute.xlu0 %2639
      %2641 = vrot.lane.b32.xlu0 %v2596, 127
      %v2642 = vpop.permute.xlu0 %2641
      %2643 = vrot.lane.b32.xlu0 %v2597, 127
      %v2644 = vpop.permute.xlu0 %2643
      %2645 = vrot.lane.b32.xlu0 %v2598, 127
      %v2646 = vpop.permute.xlu0 %2645
      %v2647 = vsel %vm401, %v2616, %v2618
      %v2648 = vsel %vm401, %v2618, %v2620
      %v2649 = vsel %vm401, %v2620, %v2622
      %v2650 = vsel %vm401, %v2624, %v2626
      %v2651 = vsel %vm401, %v2626, %v2628
      %v2652 = vsel %vm401, %v2628, %v2630
      %v2653 = vsel %vm401, %v2632, %v2634
      %v2654 = vsel %vm401, %v2634, %v2636
      %v2655 = vsel %vm401, %v2636, %v2638
      %v2656 = vsel %vm401, %v2640, %v2642
      %v2657 = vsel %vm401, %v2642, %v2644
      %v2658 = vsel %vm401, %v2644, %v2646
      %2671 = vst [vmem:[#allocation3 + $0x1e0] sm:$0xff] %v2647
      %2672 = vst [vmem:[#allocation3 + $0x1e8] sm:$0xff] %v2648
      %2673 = vst [vmem:[#allocation3 + $0x1f0] sm:$0xff] %v2649
      %2674 = vst [vmem:[#allocation3 + $0x1f8] sm:$0xff] %v2650
      %2675 = vst [vmem:[#allocation3 + $0x200] sm:$0xff] %v2651
      %2676 = vst [vmem:[#allocation3 + $0x208] sm:$0xff] %v2652
      %2677 = vst [vmem:[#allocation3 + $0x210] sm:$0xff] %v2653
      %2678 = vst [vmem:[#allocation3 + $0x218] sm:$0xff] %v2654
      %2679 = vst [vmem:[#allocation3 + $0x220] sm:$0xff] %v2655
      %2680 = vst [vmem:[#allocation3 + $0x228] sm:$0xff] %v2656
      %2681 = vst [vmem:[#allocation3 + $0x230] sm:$0xff] %v2657
      %2682 = vst [vmem:[#allocation3 + $0x238] sm:$0xff] %v2658
      %v2683 = vld [vmem:[#allocation2 + $0x8] sm:$0xff]
      %v2684 = vld [vmem:[#allocation2 + $0x10] sm:$0xff]
      %v2685 = vld [vmem:[#allocation2 + $0x18] sm:$0xff]
      %v2686 = vld [vmem:[#allocation2 + $0x20] sm:$0xff]
      %v2687 = vld [vmem:[#allocation2 + $0x30] sm:$0xff]
      %v2688 = vld [vmem:[#allocation2 + $0x38] sm:$0xff]
      %v2689 = vld [vmem:[#allocation2 + $0x40] sm:$0xff]
      %v2690 = vld [vmem:[#allocation2 + $0x48] sm:$0xff]
      %v2691 = vld [vmem:[#allocation2 + $0x58] sm:$0xff]
      %v2692 = vld [vmem:[#allocation2 + $0x60] sm:$0xff]
      %v2693 = vld [vmem:[#allocation2 + $0x68] sm:$0xff]
      %v2694 = vld [vmem:[#allocation2 + $0x70] sm:$0xff]
      %v2695 = vld [vmem:[#allocation2 + $0x80] sm:$0xff]
      %v2696 = vld [vmem:[#allocation2 + $0x88] sm:$0xff]
      %v2697 = vld [vmem:[#allocation2 + $0x90] sm:$0xff]
      %v2698 = vld [vmem:[#allocation2 + $0x98] sm:$0xff]
      %2715 = vrot.lane.b32.xlu0 %v2683, 111
      %v2716 = vpop.permute.xlu0 %2715
      %2717 = vrot.lane.b32.xlu0 %v2684, 111
      %v2718 = vpop.permute.xlu0 %2717
      %2719 = vrot.lane.b32.xlu0 %v2685, 111
      %v2720 = vpop.permute.xlu0 %2719
      %2721 = vrot.lane.b32.xlu0 %v2686, 111
      %v2722 = vpop.permute.xlu0 %2721
      %2723 = vrot.lane.b32.xlu0 %v2687, 111
      %v2724 = vpop.permute.xlu0 %2723
      %2725 = vrot.lane.b32.xlu0 %v2688, 111
      %v2726 = vpop.permute.xlu0 %2725
      %2727 = vrot.lane.b32.xlu0 %v2689, 111
      %v2728 = vpop.permute.xlu0 %2727
      %2729 = vrot.lane.b32.xlu0 %v2690, 111
      %v2730 = vpop.permute.xlu0 %2729
      %2731 = vrot.lane.b32.xlu0 %v2691, 111
      %v2732 = vpop.permute.xlu0 %2731
      %2733 = vrot.lane.b32.xlu0 %v2692, 111
      %v2734 = vpop.permute.xlu0 %2733
      %2735 = vrot.lane.b32.xlu0 %v2693, 111
      %v2736 = vpop.permute.xlu0 %2735
      %2737 = vrot.lane.b32.xlu0 %v2694, 111
      %v2738 = vpop.permute.xlu0 %2737
      %2739 = vrot.lane.b32.xlu0 %v2695, 111
      %v2740 = vpop.permute.xlu0 %2739
      %2741 = vrot.lane.b32.xlu0 %v2696, 111
      %v2742 = vpop.permute.xlu0 %2741
      %2743 = vrot.lane.b32.xlu0 %v2697, 111
      %v2744 = vpop.permute.xlu0 %2743
      %2745 = vrot.lane.b32.xlu0 %v2698, 111
      %v2746 = vpop.permute.xlu0 %2745
      %v2747 = vsel %vm427, %v2716, %v2718
      %v2748 = vsel %vm427, %v2718, %v2720
      %v2749 = vsel %vm427, %v2720, %v2722
      %v2750 = vsel %vm427, %v2724, %v2726
      %v2751 = vsel %vm427, %v2726, %v2728
      %v2752 = vsel %vm427, %v2728, %v2730
      %v2753 = vsel %vm427, %v2732, %v2734
      %v2754 = vsel %vm427, %v2734, %v2736
      %v2755 = vsel %vm427, %v2736, %v2738
      %v2756 = vsel %vm427, %v2740, %v2742
      %v2757 = vsel %vm427, %v2742, %v2744
      %v2758 = vsel %vm427, %v2744, %v2746
      %2771 = vst [vmem:[#allocation3 + $0x240] sm:$0xff] %v2747
      %2772 = vst [vmem:[#allocation3 + $0x248] sm:$0xff] %v2748
      %2773 = vst [vmem:[#allocation3 + $0x250] sm:$0xff] %v2749
      %2774 = vst [vmem:[#allocation3 + $0x258] sm:$0xff] %v2750
      %2775 = vst [vmem:[#allocation3 + $0x260] sm:$0xff] %v2751
      %2776 = vst [vmem:[#allocation3 + $0x268] sm:$0xff] %v2752
      %2777 = vst [vmem:[#allocation3 + $0x270] sm:$0xff] %v2753
      %2778 = vst [vmem:[#allocation3 + $0x278] sm:$0xff] %v2754
      %2779 = vst [vmem:[#allocation3 + $0x280] sm:$0xff] %v2755
      %2780 = vst [vmem:[#allocation3 + $0x288] sm:$0xff] %v2756
      %2781 = vst [vmem:[#allocation3 + $0x290] sm:$0xff] %v2757
      %2782 = vst [vmem:[#allocation3 + $0x298] sm:$0xff] %v2758
      %v2783 = vld [vmem:[#allocation2 + $0x8] sm:$0xff]
      %v2784 = vld [vmem:[#allocation2 + $0x10] sm:$0xff]
      %v2785 = vld [vmem:[#allocation2 + $0x18] sm:$0xff]
      %v2786 = vld [vmem:[#allocation2 + $0x20] sm:$0xff]
      %v2787 = vld [vmem:[#allocation2 + $0x30] sm:$0xff]
      %v2788 = vld [vmem:[#allocation2 + $0x38] sm:$0xff]
      %v2789 = vld [vmem:[#allocation2 + $0x40] sm:$0xff]
      %v2790 = vld [vmem:[#allocation2 + $0x48] sm:$0xff]
      %v2791 = vld [vmem:[#allocation2 + $0x58] sm:$0xff]
      %v2792 = vld [vmem:[#allocation2 + $0x60] sm:$0xff]
      %v2793 = vld [vmem:[#allocation2 + $0x68] sm:$0xff]
      %v2794 = vld [vmem:[#allocation2 + $0x70] sm:$0xff]
      %v2795 = vld [vmem:[#allocation2 + $0x80] sm:$0xff]
      %v2796 = vld [vmem:[#allocation2 + $0x88] sm:$0xff]
      %v2797 = vld [vmem:[#allocation2 + $0x90] sm:$0xff]
      %v2798 = vld [vmem:[#allocation2 + $0x98] sm:$0xff]
      %2815 = vrot.lane.b32.xlu0 %v2783, 110
      %v2816 = vpop.permute.xlu0 %2815
      %2817 = vrot.lane.b32.xlu0 %v2784, 110
      %v2818 = vpop.permute.xlu0 %2817
      %2819 = vrot.lane.b32.xlu0 %v2785, 110
      %v2820 = vpop.permute.xlu0 %2819
      %2821 = vrot.lane.b32.xlu0 %v2786, 110
      %v2822 = vpop.permute.xlu0 %2821
      %2823 = vrot.lane.b32.xlu0 %v2787, 110
      %v2824 = vpop.permute.xlu0 %2823
      %2825 = vrot.lane.b32.xlu0 %v2788, 110
      %v2826 = vpop.permute.xlu0 %2825
      %2827 = vrot.lane.b32.xlu0 %v2789, 110
      %v2828 = vpop.permute.xlu0 %2827
      %2829 = vrot.lane.b32.xlu0 %v2790, 110
      %v2830 = vpop.permute.xlu0 %2829
      %2831 = vrot.lane.b32.xlu0 %v2791, 110
      %v2832 = vpop.permute.xlu0 %2831
      %2833 = vrot.lane.b32.xlu0 %v2792, 110
      %v2834 = vpop.permute.xlu0 %2833
      %2835 = vrot.lane.b32.xlu0 %v2793, 110
      %v2836 = vpop.permute.xlu0 %2835
      %2837 = vrot.lane.b32.xlu0 %v2794, 110
      %v2838 = vpop.permute.xlu0 %2837
      %2839 = vrot.lane.b32.xlu0 %v2795, 110
      %v2840 = vpop.permute.xlu0 %2839
      %2841 = vrot.lane.b32.xlu0 %v2796, 110
      %v2842 = vpop.permute.xlu0 %2841
      %2843 = vrot.lane.b32.xlu0 %v2797, 110
      %v2844 = vpop.permute.xlu0 %2843
      %2845 = vrot.lane.b32.xlu0 %v2798, 110
      %v2846 = vpop.permute.xlu0 %2845
      %v2847 = vsel %vm453, %v2816, %v2818
      %v2848 = vsel %vm453, %v2818, %v2820
      %v2849 = vsel %vm453, %v2820, %v2822
      %v2850 = vsel %vm453, %v2824, %v2826
      %v2851 = vsel %vm453, %v2826, %v2828
      %v2852 = vsel %vm453, %v2828, %v2830
      %v2853 = vsel %vm453, %v2832, %v2834
      %v2854 = vsel %vm453, %v2834, %v2836
      %v2855 = vsel %vm453, %v2836, %v2838
      %v2856 = vsel %vm453, %v2840, %v2842
      %v2857 = vsel %vm453, %v2842, %v2844
      %v2858 = vsel %vm453, %v2844, %v2846
      %2871 = vst [vmem:[#allocation3 + $0x2a0] sm:$0xff] %v2847
      %2872 = vst [vmem:[#allocation3 + $0x2a8] sm:$0xff] %v2848
      %2873 = vst [vmem:[#allocation3 + $0x2b0] sm:$0xff] %v2849
      %2874 = vst [vmem:[#allocation3 + $0x2b8] sm:$0xff] %v2850
      %2875 = vst [vmem:[#allocation3 + $0x2c0] sm:$0xff] %v2851
      %2876 = vst [vmem:[#allocation3 + $0x2c8] sm:$0xff] %v2852
      %2877 = vst [vmem:[#allocation3 + $0x2d0] sm:$0xff] %v2853
      %2878 = vst [vmem:[#allocation3 + $0x2d8] sm:$0xff] %v2854
      %2879 = vst [vmem:[#allocation3 + $0x2e0] sm:$0xff] %v2855
      %2880 = vst [vmem:[#allocation3 + $0x2e8] sm:$0xff] %v2856
      %2881 = vst [vmem:[#allocation3 + $0x2f0] sm:$0xff] %v2857
      %2882 = vst [vmem:[#allocation3 + $0x2f8] sm:$0xff] %v2858
      %v2883 = vld [vmem:[#allocation2 + $0x8] sm:$0xff]
      %v2884 = vld [vmem:[#allocation2 + $0x10] sm:$0xff]
      %v2885 = vld [vmem:[#allocation2 + $0x18] sm:$0xff]
      %v2886 = vld [vmem:[#allocation2 + $0x20] sm:$0xff]
      %v2887 = vld [vmem:[#allocation2 + $0x30] sm:$0xff]
      %v2888 = vld [vmem:[#allocation2 + $0x38] sm:$0xff]
      %v2889 = vld [vmem:[#allocation2 + $0x40] sm:$0xff]
      %v2890 = vld [vmem:[#allocation2 + $0x48] sm:$0xff]
      %v2891 = vld [vmem:[#allocation2 + $0x58] sm:$0xff]
      %v2892 = vld [vmem:[#allocation2 + $0x60] sm:$0xff]
      %v2893 = vld [vmem:[#allocation2 + $0x68] sm:$0xff]
      %v2894 = vld [vmem:[#allocation2 + $0x70] sm:$0xff]
      %v2895 = vld [vmem:[#allocation2 + $0x80] sm:$0xff]
      %v2896 = vld [vmem:[#allocation2 + $0x88] sm:$0xff]
      %v2897 = vld [vmem:[#allocation2 + $0x90] sm:$0xff]
      %v2898 = vld [vmem:[#allocation2 + $0x98] sm:$0xff]
      %2915 = vrot.lane.b32.xlu0 %v2883, 109
      %v2916 = vpop.permute.xlu0 %2915
      %2917 = vrot.lane.b32.xlu0 %v2884, 109
      %v2918 = vpop.permute.xlu0 %2917
      %2919 = vrot.lane.b32.xlu0 %v2885, 109
      %v2920 = vpop.permute.xlu0 %2919
      %2921 = vrot.lane.b32.xlu0 %v2886, 109
      %v2922 = vpop.permute.xlu0 %2921
      %2923 = vrot.lane.b32.xlu0 %v2887, 109
      %v2924 = vpop.permute.xlu0 %2923
      %2925 = vrot.lane.b32.xlu0 %v2888, 109
      %v2926 = vpop.permute.xlu0 %2925
      %2927 = vrot.lane.b32.xlu0 %v2889, 109
      %v2928 = vpop.permute.xlu0 %2927
      %2929 = vrot.lane.b32.xlu0 %v2890, 109
      %v2930 = vpop.permute.xlu0 %2929
      %2931 = vrot.lane.b32.xlu0 %v2891, 109
      %v2932 = vpop.permute.xlu0 %2931
      %2933 = vrot.lane.b32.xlu0 %v2892, 109
      %v2934 = vpop.permute.xlu0 %2933
      %2935 = vrot.lane.b32.xlu0 %v2893, 109
      %v2936 = vpop.permute.xlu0 %2935
      %2937 = vrot.lane.b32.xlu0 %v2894, 109
      %v2938 = vpop.permute.xlu0 %2937
      %2939 = vrot.lane.b32.xlu0 %v2895, 109
      %v2940 = vpop.permute.xlu0 %2939
      %2941 = vrot.lane.b32.xlu0 %v2896, 109
      %v2942 = vpop.permute.xlu0 %2941
      %2943 = vrot.lane.b32.xlu0 %v2897, 109
      %v2944 = vpop.permute.xlu0 %2943
      %2945 = vrot.lane.b32.xlu0 %v2898, 109
      %v2946 = vpop.permute.xlu0 %2945
      %v2947 = vsel %vm479, %v2916, %v2918
      %v2948 = vsel %vm479, %v2918, %v2920
      %v2949 = vsel %vm479, %v2920, %v2922
      %v2950 = vsel %vm479, %v2924, %v2926
      %v2951 = vsel %vm479, %v2926, %v2928
      %v2952 = vsel %vm479, %v2928, %v2930
      %v2953 = vsel %vm479, %v2932, %v2934
      %v2954 = vsel %vm479, %v2934, %v2936
      %v2955 = vsel %vm479, %v2936, %v2938
      %v2956 = vsel %vm479, %v2940, %v2942
      %v2957 = vsel %vm479, %v2942, %v2944
      %v2958 = vsel %vm479, %v2944, %v2946
      %2971 = vst [vmem:[#allocation3 + $0x300] sm:$0xff] %v2947
      %2972 = vst [vmem:[#allocation3 + $0x308] sm:$0xff] %v2948
      %2973 = vst [vmem:[#allocation3 + $0x310] sm:$0xff] %v2949
      %2974 = vst [vmem:[#allocation3 + $0x318] sm:$0xff] %v2950
      %2975 = vst [vmem:[#allocation3 + $0x320] sm:$0xff] %v2951
      %2976 = vst [vmem:[#allocation3 + $0x328] sm:$0xff] %v2952
      %2977 = vst [vmem:[#allocation3 + $0x330] sm:$0xff] %v2953
      %2978 = vst [vmem:[#allocation3 + $0x338] sm:$0xff] %v2954
      %2979 = vst [vmem:[#allocation3 + $0x340] sm:$0xff] %v2955
      %2980 = vst [vmem:[#allocation3 + $0x348] sm:$0xff] %v2956
      %2981 = vst [vmem:[#allocation3 + $0x350] sm:$0xff] %v2957
      %2982 = vst [vmem:[#allocation3 + $0x358] sm:$0xff] %v2958
      %v2983 = vld [vmem:[#allocation3] sm:$0xff]
      %v2984 = vld [vmem:[#allocation3 + $0x8] sm:$0xff]
      %v2985 = vld [vmem:[#allocation3 + $0x10] sm:$0xff]
      %v2986 = vld [vmem:[#allocation3 + $0x18] sm:$0xff]
      %v2987 = vld [vmem:[#allocation3 + $0x20] sm:$0xff]
      %v2988 = vld [vmem:[#allocation3 + $0x28] sm:$0xff]
      %v2989 = vld [vmem:[#allocation3 + $0x30] sm:$0xff]
      %v2990 = vld [vmem:[#allocation3 + $0x38] sm:$0xff]
      %v2991 = vld [vmem:[#allocation3 + $0x40] sm:$0xff]
      %v2992 = vld [vmem:[#allocation3 + $0x48] sm:$0xff]
      %v2993 = vld [vmem:[#allocation3 + $0x50] sm:$0xff]
      %v2994 = vld [vmem:[#allocation3 + $0x58] sm:$0xff]
      %v2995 = vld [vmem:[#allocation3 + $0x60] sm:$0xff]
      %v2996 = vld [vmem:[#allocation3 + $0x68] sm:$0xff]
      %v2997 = vld [vmem:[#allocation3 + $0x70] sm:$0xff]
      %v2998 = vld [vmem:[#allocation3 + $0x78] sm:$0xff]
      %v2999 = vld [vmem:[#allocation3 + $0x80] sm:$0xff]
      %v3000 = vld [vmem:[#allocation3 + $0x88] sm:$0xff]
      %v3001 = vld [vmem:[#allocation3 + $0x90] sm:$0xff]
      %v3002 = vld [vmem:[#allocation3 + $0x98] sm:$0xff]
      %v3003 = vld [vmem:[#allocation3 + $0xa0] sm:$0xff]
      %v3004 = vld [vmem:[#allocation3 + $0xa8] sm:$0xff]
      %v3005 = vld [vmem:[#allocation3 + $0xb0] sm:$0xff]
      %v3006 = vld [vmem:[#allocation3 + $0xb8] sm:$0xff]
      %v3007 = vld [vmem:[#allocation3 + $0xc0] sm:$0xff]
      %v3008 = vld [vmem:[#allocation3 + $0xc8] sm:$0xff]
      %v3009 = vld [vmem:[#allocation3 + $0xd0] sm:$0xff]
      %v3010 = vld [vmem:[#allocation3 + $0xd8] sm:$0xff]
      %v3011 = vld [vmem:[#allocation3 + $0xe0] sm:$0xff]
      %v3012 = vld [vmem:[#allocation3 + $0xe8] sm:$0xff]
      %v3013 = vld [vmem:[#allocation3 + $0xf0] sm:$0xff]
      %v3014 = vld [vmem:[#allocation3 + $0xf8] sm:$0xff]
      %v3015 = vld [vmem:[#allocation3 + $0x100] sm:$0xff]
      %v3016 = vld [vmem:[#allocation3 + $0x108] sm:$0xff]
      %v3017 = vld [vmem:[#allocation3 + $0x110] sm:$0xff]
      %v3018 = vld [vmem:[#allocation3 + $0x118] sm:$0xff]
      %v3019 = vld [vmem:[#allocation3 + $0x120] sm:$0xff]
      %v3020 = vld [vmem:[#allocation3 + $0x128] sm:$0xff]
      %v3021 = vld [vmem:[#allocation3 + $0x130] sm:$0xff]
      %v3022 = vld [vmem:[#allocation3 + $0x138] sm:$0xff]
      %v3023 = vld [vmem:[#allocation3 + $0x140] sm:$0xff]
      %v3024 = vld [vmem:[#allocation3 + $0x148] sm:$0xff]
      %v3025 = vld [vmem:[#allocation3 + $0x150] sm:$0xff]
      %v3026 = vld [vmem:[#allocation3 + $0x158] sm:$0xff]
      %v3027 = vld [vmem:[#allocation3 + $0x160] sm:$0xff]
      %v3028 = vld [vmem:[#allocation3 + $0x168] sm:$0xff]
      %v3029 = vld [vmem:[#allocation3 + $0x170] sm:$0xff]
      %v3030 = vld [vmem:[#allocation3 + $0x178] sm:$0xff]
      %v3031 = vld [vmem:[#allocation3 + $0x180] sm:$0xff]
      %v3032 = vld [vmem:[#allocation3 + $0x188] sm:$0xff]
      %v3033 = vld [vmem:[#allocation3 + $0x190] sm:$0xff]
      %v3034 = vld [vmem:[#allocation3 + $0x198] sm:$0xff]
      %v3035 = vld [vmem:[#allocation3 + $0x1a0] sm:$0xff]
      %v3036 = vld [vmem:[#allocation3 + $0x1a8] sm:$0xff]
      %v3037 = vld [vmem:[#allocation3 + $0x1b0] sm:$0xff]
      %v3038 = vld [vmem:[#allocation3 + $0x1b8] sm:$0xff]
      %v3039 = vld [vmem:[#allocation3 + $0x1c0] sm:$0xff]
      %v3040 = vld [vmem:[#allocation3 + $0x1c8] sm:$0xff]
      %v3041 = vld [vmem:[#allocation3 + $0x1d0] sm:$0xff]
      %v3042 = vld [vmem:[#allocation3 + $0x1d8] sm:$0xff]
      %v3043 = vld [vmem:[#allocation3 + $0x1e0] sm:$0xff]
      %v3044 = vld [vmem:[#allocation3 + $0x1e8] sm:$0xff]
      %v3045 = vld [vmem:[#allocation3 + $0x1f0] sm:$0xff]
      %v3046 = vld [vmem:[#allocation3 + $0x1f8] sm:$0xff]
      %v3047 = vld [vmem:[#allocation3 + $0x200] sm:$0xff]
      %v3048 = vld [vmem:[#allocation3 + $0x208] sm:$0xff]
      %v3049 = vld [vmem:[#allocation3 + $0x210] sm:$0xff]
      %v3050 = vld [vmem:[#allocation3 + $0x218] sm:$0xff]
      %v3051 = vld [vmem:[#allocation3 + $0x220] sm:$0xff]
      %v3052 = vld [vmem:[#allocation3 + $0x228] sm:$0xff]
      %v3053 = vld [vmem:[#allocation3 + $0x230] sm:$0xff]
      %v3054 = vld [vmem:[#allocation3 + $0x238] sm:$0xff]
      %v3055 = vld [vmem:[#allocation3 + $0x240] sm:$0xff]
      %v3056 = vld [vmem:[#allocation3 + $0x248] sm:$0xff]
      %v3057 = vld [vmem:[#allocation3 + $0x250] sm:$0xff]
      %v3058 = vld [vmem:[#allocation3 + $0x258] sm:$0xff]
      %v3059 = vld [vmem:[#allocation3 + $0x260] sm:$0xff]
      %v3060 = vld [vmem:[#allocation3 + $0x268] sm:$0xff]
      %v3061 = vld [vmem:[#allocation3 + $0x270] sm:$0xff]
      %v3062 = vld [vmem:[#allocation3 + $0x278] sm:$0xff]
      %v3063 = vld [vmem:[#allocation3 + $0x280] sm:$0xff]
      %v3064 = vld [vmem:[#allocation3 + $0x288] sm:$0xff]
      %v3065 = vld [vmem:[#allocation3 + $0x290] sm:$0xff]
      %v3066 = vld [vmem:[#allocation3 + $0x298] sm:$0xff]
      %v3067 = vld [vmem:[#allocation3 + $0x2a0] sm:$0xff]
      %v3068 = vld [vmem:[#allocation3 + $0x2a8] sm:$0xff]
      %v3069 = vld [vmem:[#allocation3 + $0x2b0] sm:$0xff]
      %v3070 = vld [vmem:[#allocation3 + $0x2b8] sm:$0xff]
      %v3071 = vld [vmem:[#allocation3 + $0x2c0] sm:$0xff]
      %v3072 = vld [vmem:[#allocation3 + $0x2c8] sm:$0xff]
      %v3073 = vld [vmem:[#allocation3 + $0x2d0] sm:$0xff]
      %v3074 = vld [vmem:[#allocation3 + $0x2d8] sm:$0xff]
      %v3075 = vld [vmem:[#allocation3 + $0x2e0] sm:$0xff]
      %v3076 = vld [vmem:[#allocation3 + $0x2e8] sm:$0xff]
      %v3077 = vld [vmem:[#allocation3 + $0x2f0] sm:$0xff]
      %v3078 = vld [vmem:[#allocation3 + $0x2f8] sm:$0xff]
      %v3079 = vld [vmem:[#allocation3 + $0x300] sm:$0xff]
      %v3080 = vld [vmem:[#allocation3 + $0x308] sm:$0xff]
      %v3081 = vld [vmem:[#allocation3 + $0x310] sm:$0xff]
      %v3082 = vld [vmem:[#allocation3 + $0x318] sm:$0xff]
      %v3083 = vld [vmem:[#allocation3 + $0x320] sm:$0xff]
      %v3084 = vld [vmem:[#allocation3 + $0x328] sm:$0xff]
      %v3085 = vld [vmem:[#allocation3 + $0x330] sm:$0xff]
      %v3086 = vld [vmem:[#allocation3 + $0x338] sm:$0xff]
      %v3087 = vld [vmem:[#allocation3 + $0x340] sm:$0xff]
      %v3088 = vld [vmem:[#allocation3 + $0x348] sm:$0xff]
      %v3089 = vld [vmem:[#allocation3 + $0x350] sm:$0xff]
      %v3090 = vld [vmem:[#allocation3 + $0x358] sm:$0xff]
      %3092 = vset.pattern.permute.xlu0 0
      %3093 = vperm.xlu0 %3092, %v2155
      %v3094 = vpop.permute.xlu0 %3093
      %3097 = vset.pattern.permute.xlu0 0
      %3098 = vperm.xlu0 %3097, %v2156
      %v3099 = vpop.permute.xlu0 %3098
      %3102 = vset.pattern.permute.xlu0 0
      %3103 = vperm.xlu0 %3102, %v2157
      %v3104 = vpop.permute.xlu0 %3103
      %3107 = vset.pattern.permute.xlu0 0
      %3108 = vperm.xlu0 %3107, %v2158
      %v3109 = vpop.permute.xlu0 %3108
      %v3112 = vsel %vm1744, %v2144, 0
      %v3115 = vsel %vm1744, %v2147, 0
      %v3118 = vsel %vm1744, %v2150, 0
      %v3121 = vsel %vm1744, %v2153, 0
      %3123 = vmatprep.subr.mxu0 %v2984
      %3124 = vmatpush1.msra.mxu0 %v2983
      %3125 = vmatprep.subr.mxu0 %v2987
      %3126 = vmatpush1.msra.mxu0 %v2986
      %3127 = vmatprep.subr.mxu0 %v2990
      %3128 = vmatpush1.msra.mxu0 %v2989
      %3129 = vmatprep.subr.mxu0 %v2993
      %3130 = vmatpush1.msra.mxu0 %v2992
      %3131 = vmatprep.subr.mxu0 %v2996
      %3132 = vmatpush1.msra.mxu0 %v2995
      %3133 = vmatprep.subr.mxu0 %v2999
      %3134 = vmatpush1.msra.mxu0 %v2998
      %3135 = vmatprep.subr.mxu0 %v3002
      %3136 = vmatpush1.msra.mxu0 %v3001
      %3137 = vmatprep.subr.mxu0 %v3005
      %3138 = vmatpush1.msra.mxu0 %v3004
      %3139 = vmatprep.subr.mxu0 %v3008
      %3140 = vmatpush1.msra.mxu0 %v3007
      %3141 = vmatprep.subr.mxu0 %v3011
      %3142 = vmatpush1.msra.mxu0 %v3010
      %3143 = vmatprep.subr.mxu0 %v3014
      %3144 = vmatpush1.msra.mxu0 %v3013
      %3145 = vmatprep.subr.mxu0 %v3017
      %3146 = vmatpush1.msra.mxu0 %v3016
      %3147 = vmatprep.subr.mxu0 %v3020
      %3148 = vmatpush1.msra.mxu0 %v3019
      %3149 = vmatprep.subr.mxu0 %v3023
      %3150 = vmatpush1.msra.mxu0 %v3022
      %3151 = vmatprep.subr.mxu0 %v3026
      %3152 = vmatpush1.msra.mxu0 %v3025
      %3153 = vmatprep.subr.mxu0 %v3029
      %3154 = vmatpush1.msra.mxu0 %v3028
      %3155 = vmatprep.subr.mxu0 %v3032
      %3156 = vmatpush1.msra.mxu0 %v3031
      %3157 = vmatprep.subr.mxu0 %v3035
      %3158 = vmatpush1.msra.mxu0 %v3034
      %3159 = vmatprep.subr.mxu0 %v3038
      %3160 = vmatpush1.msra.mxu0 %v3037
      %3161 = vmatprep.subr.mxu0 %v3041
      %3162 = vmatpush1.msra.mxu0 %v3040
      %3163 = vmatprep.subr.mxu0 %v3044
      %3164 = vmatpush1.msra.mxu0 %v3043
      %3165 = vmatprep.subr.mxu0 %v3047
      %3166 = vmatpush1.msra.mxu0 %v3046
      %3167 = vmatprep.subr.mxu0 %v3050
      %3168 = vmatpush1.msra.mxu0 %v3049
      %3169 = vmatprep.subr.mxu0 %v3053
      %3170 = vmatpush1.msra.mxu0 %v3052
      %3171 = vmatprep.subr.mxu0 %v3056
      %3172 = vmatpush1.msra.mxu0 %v3055
      %3173 = vmatprep.subr.mxu0 %v3059
      %3174 = vmatpush1.msra.mxu0 %v3058
      %3175 = vmatprep.subr.mxu0 %v3062
      %3176 = vmatpush1.msra.mxu0 %v3061
      %3177 = vmatprep.subr.mxu0 %v3065
      %3178 = vmatpush1.msra.mxu0 %v3064
      %3179 = vmatprep.subr.mxu0 %v3068
      %3180 = vmatpush1.msra.mxu0 %v3067
      %3181 = vmatprep.subr.mxu0 %v3071
      %3182 = vmatpush1.msra.mxu0 %v3070
      %3183 = vmatprep.subr.mxu0 %v3074
      %3184 = vmatpush1.msra.mxu0 %v3073
      %3185 = vmatprep.subr.mxu0 %v3077
      %3186 = vmatpush1.msra.mxu0 %v3076
      %3187 = vmatprep.mubr.f32.mxu0 %v2143
      %3188 = vmatmul.mubr.f32.gmra.mrb[0].mxu0 %v2142
      %v3189 = vpop.f32.mrb[0].mxu0
      %v3190 = vadd.f32 %v3094, %v3189
      %v3191 = vpop.f32.mrb[0].mxu0
      %v3192 = vadd.f32 %v3094, %v3191
      %3193 = vmatprep.mubr.f32.mxu0 %v2146
      %3194 = vmatmul.mubr.f32.gmra.mrb[0].mxu0 %v2145
      %v3195 = vpop.f32.mrb[0].mxu0
      %v3196 = vadd.f32 %v3099, %v3195
      %v3197 = vpop.f32.mrb[0].mxu0
      %v3198 = vadd.f32 %v3099, %v3197
      %3199 = vmatprep.mubr.f32.mxu0 %v2149
      %3200 = vmatmul.mubr.f32.gmra.mrb[0].mxu0 %v2148
      %v3201 = vpop.f32.mrb[0].mxu0
      %v3202 = vadd.f32 %v3104, %v3201
      %v3203 = vpop.f32.mrb[0].mxu0
      %v3204 = vadd.f32 %v3104, %v3203
      %3205 = vmatprep.mubr.f32.mxu0 %v2152
      %3206 = vmatmul.mubr.f32.gmra.mrb[0].mxu0 %v2151
      %v3207 = vpop.f32.mrb[0].mxu0
      %v3208 = vadd.f32 %v3109, %v3207
      %v3209 = vpop.f32.mrb[0].mxu0
      %v3210 = vadd.f32 %v3109, %v3209
      %3211 = vdwg.mxu0
      %3212 = vmatprep.subr.mxu0 %v3080
      %3213 = vmatpush1.msra.mxu0 %v3079
      %3214 = vmatprep.subr.mxu0 %v3083
      %3215 = vmatpush1.msra.mxu0 %v3082
      %3216 = vmatprep.subr.mxu0 %v3086
      %3217 = vmatpush1.msra.mxu0 %v3085
      %3218 = vmatprep.subr.mxu0 %v3089
      %3219 = vmatpush1.msra.mxu0 %v3088
      %3220 = vmatprep.subr.mxu0 0.0
      %3221 = vmatpush1.msra.mxu0 0.0
      %3222 = vmatprep.subr.mxu0 0.0
      %3223 = vmatpush1.msra.mxu0 0.0
      %3224 = vmatprep.subr.mxu0 0.0
      %3225 = vmatpush1.msra.mxu0 0.0
      %3226 = vmatprep.subr.mxu0 0.0
      %3227 = vmatpush1.msra.mxu0 0.0
      %3228 = vmatprep.subr.mxu0 0.0
      %3229 = vmatpush1.msra.mxu0 0.0
      %3230 = vmatprep.subr.mxu0 0.0
      %3231 = vmatpush1.msra.mxu0 0.0
      %3232 = vmatprep.subr.mxu0 0.0
      %3233 = vmatpush1.msra.mxu0 0.0
      %3234 = vmatprep.subr.mxu0 0.0
      %3235 = vmatpush1.msra.mxu0 0.0
      %3236 = vmatprep.subr.mxu0 0.0
      %3237 = vmatpush1.msra.mxu0 0.0
      %3238 = vmatprep.subr.mxu0 0.0
      %3239 = vmatpush1.msra.mxu0 0.0
      %3240 = vmatprep.subr.mxu0 0.0
      %3241 = vmatpush1.msra.mxu0 0.0
      %3242 = vmatprep.subr.mxu0 0.0
      %3243 = vmatpush1.msra.mxu0 0.0
      %3244 = vmatprep.subr.mxu0 0.0
      %3245 = vmatpush1.msra.mxu0 0.0
      %3246 = vmatprep.subr.mxu0 0.0
      %3247 = vmatpush1.msra.mxu0 0.0
      %3248 = vmatprep.subr.mxu0 0.0
      %3249 = vmatpush1.msra.mxu0 0.0
      %3250 = vmatprep.subr.mxu0 0.0
      %3251 = vmatpush1.msra.mxu0 0.0
      %3252 = vmatprep.subr.mxu0 0.0
      %3253 = vmatpush1.msra.mxu0 0.0
      %3254 = vmatprep.subr.mxu0 0.0
      %3255 = vmatpush1.msra.mxu0 0.0
      %3256 = vmatprep.subr.mxu0 0.0
      %3257 = vmatpush1.msra.mxu0 0.0
      %3258 = vmatprep.subr.mxu0 0.0
      %3259 = vmatpush1.msra.mxu0 0.0
      %3260 = vmatprep.subr.mxu0 0.0
      %3261 = vmatpush1.msra.mxu0 0.0
      %3262 = vmatprep.subr.mxu0 0.0
      %3263 = vmatpush1.msra.mxu0 0.0
      %3264 = vmatprep.subr.mxu0 0.0
      %3265 = vmatpush1.msra.mxu0 0.0
      %3266 = vmatprep.subr.mxu0 0.0
      %3267 = vmatpush1.msra.mxu0 0.0
      %3268 = vmatprep.subr.mxu0 0.0
      %3269 = vmatpush1.msra.mxu0 0.0
      %3270 = vmatprep.subr.mxu0 0.0
      %3271 = vmatpush1.msra.mxu0 0.0
      %3272 = vmatprep.subr.mxu0 0.0
      %3273 = vmatpush1.msra.mxu0 0.0
      %3274 = vmatprep.subr.mxu0 0.0
      %3275 = vmatpush1.msra.mxu0 0.0
      %3276 = vmatprep.mubr.f32.mxu0 0.0
      %3277 = vmatmul.mubr.f32.gmra.mrb[0].mxu0 %v3112
      %v3278 = vpop.f32.mrb[0].mxu0
      %v3279 = vadd.f32 %v3190, %v3278
      %v3280 = vpop.f32.mrb[0].mxu0
      %v3281 = vadd.f32 %v3192, %v3280
      %3282 = vmatprep.mubr.f32.mxu0 0.0
      %3283 = vmatmul.mubr.f32.gmra.mrb[0].mxu0 %v3115
      %v3284 = vpop.f32.mrb[0].mxu0
      %v3285 = vadd.f32 %v3196, %v3284
      %v3286 = vpop.f32.mrb[0].mxu0
      %v3287 = vadd.f32 %v3198, %v3286
      %3288 = vmatprep.mubr.f32.mxu0 0.0
      %3289 = vmatmul.mubr.f32.gmra.mrb[0].mxu0 %v3118
      %v3290 = vpop.f32.mrb[0].mxu0
      %v3291 = vadd.f32 %v3202, %v3290
      %v3292 = vpop.f32.mrb[0].mxu0
      %v3293 = vadd.f32 %v3204, %v3292
      %3294 = vmatprep.mubr.f32.mxu0 0.0
      %3295 = vmatmul.mubr.f32.gmra.mrb[0].mxu0 %v3121
      %v3296 = vpop.f32.mrb[0].mxu0
      %v3297 = vadd.f32 %v3208, %v3296
      %v3298 = vpop.f32.mrb[0].mxu0
      %v3299 = vadd.f32 %v3210, %v3298
      %3300 = vdwg.mxu0
      %3301 = vmatprep.subr.mxu0 0.0
      %3302 = vmatpush1.msra.mxu0 %v2985
      %3303 = vmatprep.subr.mxu0 0.0
      %3304 = vmatpush1.msra.mxu0 %v2988
      %3305 = vmatprep.subr.mxu0 0.0
      %3306 = vmatpush1.msra.mxu0 %v2991
      %3307 = vmatprep.subr.mxu0 0.0
      %3308 = vmatpush1.msra.mxu0 %v2994
      %3309 = vmatprep.subr.mxu0 0.0
      %3310 = vmatpush1.msra.mxu0 %v2997
      %3311 = vmatprep.subr.mxu0 0.0
      %3312 = vmatpush1.msra.mxu0 %v3000
      %3313 = vmatprep.subr.mxu0 0.0
      %3314 = vmatpush1.msra.mxu0 %v3003
      %3315 = vmatprep.subr.mxu0 0.0
      %3316 = vmatpush1.msra.mxu0 %v3006
      %3317 = vmatprep.subr.mxu0 0.0
      %3318 = vmatpush1.msra.mxu0 %v3009
      %3319 = vmatprep.subr.mxu0 0.0
      %3320 = vmatpush1.msra.mxu0 %v3012
      %3321 = vmatprep.subr.mxu0 0.0
      %3322 = vmatpush1.msra.mxu0 %v3015
      %3323 = vmatprep.subr.mxu0 0.0
      %3324 = vmatpush1.msra.mxu0 %v3018
      %3325 = vmatprep.subr.mxu0 0.0
      %3326 = vmatpush1.msra.mxu0 %v3021
      %3327 = vmatprep.subr.mxu0 0.0
      %3328 = vmatpush1.msra.mxu0 %v3024
      %3329 = vmatprep.subr.mxu0 0.0
      %3330 = vmatpush1.msra.mxu0 %v3027
      %3331 = vmatprep.subr.mxu0 0.0
      %3332 = vmatpush1.msra.mxu0 %v3030
      %3333 = vmatprep.subr.mxu0 0.0
      %3334 = vmatpush1.msra.mxu0 %v3033
      %3335 = vmatprep.subr.mxu0 0.0
      %3336 = vmatpush1.msra.mxu0 %v3036
      %3337 = vmatprep.subr.mxu0 0.0
      %3338 = vmatpush1.msra.mxu0 %v3039
      %3339 = vmatprep.subr.mxu0 0.0
      %3340 = vmatpush1.msra.mxu0 %v3042
      %3341 = vmatprep.subr.mxu0 0.0
      %3342 = vmatpush1.msra.mxu0 %v3045
      %3343 = vmatprep.subr.mxu0 0.0
      %3344 = vmatpush1.msra.mxu0 %v3048
      %3345 = vmatprep.subr.mxu0 0.0
      %3346 = vmatpush1.msra.mxu0 %v3051
      %3347 = vmatprep.subr.mxu0 0.0
      %3348 = vmatpush1.msra.mxu0 %v3054
      %3349 = vmatprep.subr.mxu0 0.0
      %3350 = vmatpush1.msra.mxu0 %v3057
      %3351 = vmatprep.subr.mxu0 0.0
      %3352 = vmatpush1.msra.mxu0 %v3060
      %3353 = vmatprep.subr.mxu0 0.0
      %3354 = vmatpush1.msra.mxu0 %v3063
      %3355 = vmatprep.subr.mxu0 0.0
      %3356 = vmatpush1.msra.mxu0 %v3066
      %3357 = vmatprep.subr.mxu0 0.0
      %3358 = vmatpush1.msra.mxu0 %v3069
      %3359 = vmatprep.subr.mxu0 0.0
      %3360 = vmatpush1.msra.mxu0 %v3072
      %3361 = vmatprep.subr.mxu0 0.0
      %3362 = vmatpush1.msra.mxu0 %v3075
      %3363 = vmatprep.subr.mxu0 0.0
      %3364 = vmatpush1.msra.mxu0 %v3078
      %3365 = vmatprep.mubr.f32.mxu0 %v2143
      %3366 = vmatmul.mubr.f32.gmra.mrb[0].mxu0 %v2142
      %v3367 = vpop.f32.mrb[0].mxu0
      %v3368 = vadd.f32 %v3094, %v3367
      %v3369 = vpop.f32.mrb[0].mxu0
      %3370 = vmatprep.mubr.f32.mxu0 %v2146
      %3371 = vmatmul.mubr.f32.gmra.mrb[0].mxu0 %v2145
      %v3372 = vpop.f32.mrb[0].mxu0
      %v3373 = vadd.f32 %v3099, %v3372
      %v3374 = vpop.f32.mrb[0].mxu0
      %3375 = vmatprep.mubr.f32.mxu0 %v2149
      %3376 = vmatmul.mubr.f32.gmra.mrb[0].mxu0 %v2148
      %v3377 = vpop.f32.mrb[0].mxu0
      %v3378 = vadd.f32 %v3104, %v3377
      %v3379 = vpop.f32.mrb[0].mxu0
      %3380 = vmatprep.mubr.f32.mxu0 %v2152
      %3381 = vmatmul.mubr.f32.gmra.mrb[0].mxu0 %v2151
      %v3382 = vpop.f32.mrb[0].mxu0
      %v3383 = vadd.f32 %v3109, %v3382
      %v3384 = vpop.f32.mrb[0].mxu0
      %3385 = vdwg.mxu0
      %3386 = vmatprep.subr.mxu0 0.0
      %3387 = vmatpush1.msra.mxu0 %v3081
      %3388 = vmatprep.subr.mxu0 0.0
      %3389 = vmatpush1.msra.mxu0 %v3084
      %3390 = vmatprep.subr.mxu0 0.0
      %3391 = vmatpush1.msra.mxu0 %v3087
      %3392 = vmatprep.subr.mxu0 0.0
      %3393 = vmatpush1.msra.mxu0 %v3090
      %3394 = vmatprep.subr.mxu0 0.0
      %3395 = vmatpush1.msra.mxu0 0.0
      %3396 = vmatprep.subr.mxu0 0.0
      %3397 = vmatpush1.msra.mxu0 0.0
      %3398 = vmatprep.subr.mxu0 0.0
      %3399 = vmatpush1.msra.mxu0 0.0
      %3400 = vmatprep.subr.mxu0 0.0
      %3401 = vmatpush1.msra.mxu0 0.0
      %3402 = vmatprep.subr.mxu0 0.0
      %3403 = vmatpush1.msra.mxu0 0.0
      %3404 = vmatprep.subr.mxu0 0.0
      %3405 = vmatpush1.msra.mxu0 0.0
      %3406 = vmatprep.subr.mxu0 0.0
      %3407 = vmatpush1.msra.mxu0 0.0
      %3408 = vmatprep.subr.mxu0 0.0
      %3409 = vmatpush1.msra.mxu0 0.0
      %3410 = vmatprep.subr.mxu0 0.0
      %3411 = vmatpush1.msra.mxu0 0.0
      %3412 = vmatprep.subr.mxu0 0.0
      %3413 = vmatpush1.msra.mxu0 0.0
      %3414 = vmatprep.subr.mxu0 0.0
      %3415 = vmatpush1.msra.mxu0 0.0
      %3416 = vmatprep.subr.mxu0 0.0
      %3417 = vmatpush1.msra.mxu0 0.0
      %3418 = vmatprep.subr.mxu0 0.0
      %3419 = vmatpush1.msra.mxu0 0.0
      %3420 = vmatprep.subr.mxu0 0.0
      %3421 = vmatpush1.msra.mxu0 0.0
      %3422 = vmatprep.subr.mxu0 0.0
      %3423 = vmatpush1.msra.mxu0 0.0
      %3424 = vmatprep.subr.mxu0 0.0
      %3425 = vmatpush1.msra.mxu0 0.0
      %3426 = vmatprep.subr.mxu0 0.0
      %3427 = vmatpush1.msra.mxu0 0.0
      %3428 = vmatprep.subr.mxu0 0.0
      %3429 = vmatpush1.msra.mxu0 0.0
      %3430 = vmatprep.subr.mxu0 0.0
      %3431 = vmatpush1.msra.mxu0 0.0
      %3432 = vmatprep.subr.mxu0 0.0
      %3433 = vmatpush1.msra.mxu0 0.0
      %3434 = vmatprep.subr.mxu0 0.0
      %3435 = vmatpush1.msra.mxu0 0.0
      %3436 = vmatprep.subr.mxu0 0.0
      %3437 = vmatpush1.msra.mxu0 0.0
      %3438 = vmatprep.subr.mxu0 0.0
      %3439 = vmatpush1.msra.mxu0 0.0
      %3440 = vmatprep.subr.mxu0 0.0
      %3441 = vmatpush1.msra.mxu0 0.0
      %3442 = vmatprep.subr.mxu0 0.0
      %3443 = vmatpush1.msra.mxu0 0.0
      %3444 = vmatprep.subr.mxu0 0.0
      %3445 = vmatpush1.msra.mxu0 0.0
      %3446 = vmatprep.subr.mxu0 0.0
      %3447 = vmatpush1.msra.mxu0 0.0
      %3448 = vmatprep.subr.mxu0 0.0
      %3449 = vmatpush1.msra.mxu0 0.0
      %3450 = vmatprep.mubr.f32.mxu0 0.0
      %3451 = vmatmul.mubr.f32.gmra.mrb[0].mxu0 %v3112
      %v3452 = vpop.f32.mrb[0].mxu0
      %v3453 = vadd.f32 %v3368, %v3452
      %v3454 = vpop.f32.mrb[0].mxu0
      %3455 = vmatprep.mubr.f32.mxu0 0.0
      %3456 = vmatmul.mubr.f32.gmra.mrb[0].mxu0 %v3115
      %v3457 = vpop.f32.mrb[0].mxu0
      %v3458 = vadd.f32 %v3373, %v3457
      %v3459 = vpop.f32.mrb[0].mxu0
      %3460 = vmatprep.mubr.f32.mxu0 0.0
      %3461 = vmatmul.mubr.f32.gmra.mrb[0].mxu0 %v3118
      %v3462 = vpop.f32.mrb[0].mxu0
      %v3463 = vadd.f32 %v3378, %v3462
      %v3464 = vpop.f32.mrb[0].mxu0
      %3465 = vmatprep.mubr.f32.mxu0 0.0
      %3466 = vmatmul.mubr.f32.gmra.mrb[0].mxu0 %v3121
      %v3467 = vpop.f32.mrb[0].mxu0
      %v3468 = vadd.f32 %v3383, %v3467
      %v3469 = vpop.f32.mrb[0].mxu0
      %3470 = vdwg.mxu0
      %v3471 = vmax.f32 %v3279, 0.0
      %v3472 = vmax.f32 %v3281, 0.0
      %v3473 = vmax.f32 %v3453, 0.0
      %v3474 = vmax.f32 %v3285, 0.0
      %v3475 = vmax.f32 %v3287, 0.0
      %v3476 = vmax.f32 %v3458, 0.0
      %v3477 = vmax.f32 %v3291, 0.0
      %v3478 = vmax.f32 %v3293, 0.0
      %v3479 = vmax.f32 %v3463, 0.0
      %v3480 = vmax.f32 %v3297, 0.0
      %v3481 = vmax.f32 %v3299, 0.0
      %v3482 = vmax.f32 %v3468, 0.0
      %v3483 = vmul.f32 %v3471, %v739
      %v3484 = vmul.f32 %v3472, %v743
      %v3485 = vmul.f32 %v3473, %v747
      %v3486 = vmul.f32 %v3474, %v739
      %v3487 = vmul.f32 %v3475, %v743
      %v3488 = vmul.f32 %v3476, %v747
      %v3489 = vmul.f32 %v3477, %v739
      %v3490 = vmul.f32 %v3478, %v743
      %v3491 = vmul.f32 %v3479, %v747
      %v3492 = vmul.f32 %v3480, %v739
      %v3493 = vmul.f32 %v3481, %v743
      %v3494 = vmul.f32 %v3482, %v747
      %3495 = vst [vmem:[#allocation2 + $0x8] sm:$0xff] %v3483
      %3496 = vst [vmem:[#allocation2 + $0x10] sm:$0xff] %v3484
      %3497 = vst [vmem:[#allocation2 + $0x18] sm:$0xff] %v3485
      %3498 = vst [vmem:[#allocation2 + $0x30] sm:$0xff] %v3486
      %3499 = vst [vmem:[#allocation2 + $0x38] sm:$0xff] %v3487
      %3500 = vst [vmem:[#allocation2 + $0x40] sm:$0xff] %v3488
      %3501 = vst [vmem:[#allocation2 + $0x58] sm:$0xff] %v3489
      %3502 = vst [vmem:[#allocation2 + $0x60] sm:$0xff] %v3490
      %3503 = vst [vmem:[#allocation2 + $0x68] sm:$0xff] %v3491
      %3504 = vst [vmem:[#allocation2 + $0x80] sm:$0xff] %v3492
      %3505 = vst [vmem:[#allocation2 + $0x88] sm:$0xff] %v3493
      %3506 = vst [vmem:[#allocation2 + $0x90] sm:$0xff] %v3494
      %s3507 = scalar_lea.vmem %s2, 192
      %v3508 = vld [vmem:[%s3507] sm:$0xff]
      %v3509 = vld [vmem:[%s3507 + $0x8] sm:$0xff]
      %v3510 = vld [vmem:[%s3507 + $0x10] sm:$0xff]
      %v3511 = vld [vmem:[%s3507 + $0x18] sm:$0xff]
      %v3512 = vld [vmem:[%s3507 + $0x20] sm:$0xff]
      %v3513 = vld [vmem:[%s3507 + $0x28] sm:$0xff]
      %v3514 = vld [vmem:[%s3507 + $0x30] sm:$0xff]
      %v3515 = vld [vmem:[%s3507 + $0x38] sm:$0xff]
      %v3516 = vld [vmem:[%s3507 + $0x40] sm:$0xff]
      %v3517 = vld [vmem:[%s3507 + $0x48] sm:$0xff]
      %v3518 = vld [vmem:[%s3507 + $0x50] sm:$0xff]
      %v3519 = vld [vmem:[%s3507 + $0x58] sm:$0xff]
      %s3520 = scalar_lea.vmem %s4, 96
      %v3521 = vld [vmem:[%s3520] sm:$0xff]
      %v3522 = vld [vmem:[%s3520 + $0x8] sm:$0xff]
      %v3523 = vld [vmem:[%s3520 + $0x10] sm:$0xff]
      %v3524 = vld [vmem:[%s3520 + $0x18] sm:$0xff]
      %v3525 = vld [vmem:[#allocation2] sm:$0xff]
      %v3526 = vld [vmem:[#allocation2 + $0x8] sm:$0xff]
      %v3527 = vld [vmem:[#allocation2 + $0x10] sm:$0xff]
      %v3528 = vld [vmem:[#allocation2 + $0x18] sm:$0xff]
      %v3529 = vld [vmem:[#allocation2 + $0x28] sm:$0xff]
      %v3530 = vld [vmem:[#allocation2 + $0x30] sm:$0xff]
      %v3531 = vld [vmem:[#allocation2 + $0x38] sm:$0xff]
      %v3532 = vld [vmem:[#allocation2 + $0x40] sm:$0xff]
      %v3533 = vld [vmem:[#allocation2 + $0x50] sm:$0xff]
      %v3534 = vld [vmem:[#allocation2 + $0x58] sm:$0xff]
      %v3535 = vld [vmem:[#allocation2 + $0x60] sm:$0xff]
      %v3536 = vld [vmem:[#allocation2 + $0x68] sm:$0xff]
      %v3537 = vld [vmem:[#allocation2 + $0x78] sm:$0xff]
      %v3538 = vld [vmem:[#allocation2 + $0x80] sm:$0xff]
      %v3539 = vld [vmem:[#allocation2 + $0x88] sm:$0xff]
      %v3540 = vld [vmem:[#allocation2 + $0x90] sm:$0xff]
      %3557 = vrot.lane.b32.xlu0 %v3525, 19
      %v3558 = vpop.permute.xlu0 %3557
      %3559 = vrot.lane.b32.xlu0 %v3526, 19
      %v3560 = vpop.permute.xlu0 %3559
      %3561 = vrot.lane.b32.xlu0 %v3527, 19
      %v3562 = vpop.permute.xlu0 %3561
      %3563 = vrot.lane.b32.xlu0 %v3528, 19
      %v3564 = vpop.permute.xlu0 %3563
      %3565 = vrot.lane.b32.xlu0 %v3529, 19
      %v3566 = vpop.permute.xlu0 %3565
      %3567 = vrot.lane.b32.xlu0 %v3530, 19
      %v3568 = vpop.permute.xlu0 %3567
      %3569 = vrot.lane.b32.xlu0 %v3531, 19
      %v3570 = vpop.permute.xlu0 %3569
      %3571 = vrot.lane.b32.xlu0 %v3532, 19
      %v3572 = vpop.permute.xlu0 %3571
      %3573 = vrot.lane.b32.xlu0 %v3533, 19
      %v3574 = vpop.permute.xlu0 %3573
      %3575 = vrot.lane.b32.xlu0 %v3534, 19
      %v3576 = vpop.permute.xlu0 %3575
      %3577 = vrot.lane.b32.xlu0 %v3535, 19
      %v3578 = vpop.permute.xlu0 %3577
      %3579 = vrot.lane.b32.xlu0 %v3536, 19
      %v3580 = vpop.permute.xlu0 %3579
      %3581 = vrot.lane.b32.xlu0 %v3537, 19
      %v3582 = vpop.permute.xlu0 %3581
      %3583 = vrot.lane.b32.xlu0 %v3538, 19
      %v3584 = vpop.permute.xlu0 %3583
      %3585 = vrot.lane.b32.xlu0 %v3539, 19
      %v3586 = vpop.permute.xlu0 %3585
      %3587 = vrot.lane.b32.xlu0 %v3540, 19
      %v3588 = vpop.permute.xlu0 %3587
      %v3589 = vsel %vm291, %v3558, %v3560
      %v3590 = vsel %vm291, %v3560, %v3562
      %v3591 = vsel %vm291, %v3562, %v3564
      %v3592 = vsel %vm291, %v3566, %v3568
      %v3593 = vsel %vm291, %v3568, %v3570
      %v3594 = vsel %vm291, %v3570, %v3572
      %v3595 = vsel %vm291, %v3574, %v3576
      %v3596 = vsel %vm291, %v3576, %v3578
      %v3597 = vsel %vm291, %v3578, %v3580
      %v3598 = vsel %vm291, %v3582, %v3584
      %v3599 = vsel %vm291, %v3584, %v3586
      %v3600 = vsel %vm291, %v3586, %v3588
      %3613 = vst [vmem:[#allocation3] sm:$0xff] %v3589
      %3614 = vst [vmem:[#allocation3 + $0x8] sm:$0xff] %v3590
      %3615 = vst [vmem:[#allocation3 + $0x10] sm:$0xff] %v3591
      %3616 = vst [vmem:[#allocation3 + $0x18] sm:$0xff] %v3592
      %3617 = vst [vmem:[#allocation3 + $0x20] sm:$0xff] %v3593
      %3618 = vst [vmem:[#allocation3 + $0x28] sm:$0xff] %v3594
      %3619 = vst [vmem:[#allocation3 + $0x30] sm:$0xff] %v3595
      %3620 = vst [vmem:[#allocation3 + $0x38] sm:$0xff] %v3596
      %3621 = vst [vmem:[#allocation3 + $0x40] sm:$0xff] %v3597
      %3622 = vst [vmem:[#allocation3 + $0x48] sm:$0xff] %v3598
      %3623 = vst [vmem:[#allocation3 + $0x50] sm:$0xff] %v3599
      %3624 = vst [vmem:[#allocation3 + $0x58] sm:$0xff] %v3600
      %v3625 = vld [vmem:[#allocation2] sm:$0xff]
      %v3626 = vld [vmem:[#allocation2 + $0x8] sm:$0xff]
      %v3627 = vld [vmem:[#allocation2 + $0x10] sm:$0xff]
      %v3628 = vld [vmem:[#allocation2 + $0x18] sm:$0xff]
      %v3629 = vld [vmem:[#allocation2 + $0x28] sm:$0xff]
      %v3630 = vld [vmem:[#allocation2 + $0x30] sm:$0xff]
      %v3631 = vld [vmem:[#allocation2 + $0x38] sm:$0xff]
      %v3632 = vld [vmem:[#allocation2 + $0x40] sm:$0xff]
      %v3633 = vld [vmem:[#allocation2 + $0x50] sm:$0xff]
      %v3634 = vld [vmem:[#allocation2 + $0x58] sm:$0xff]
      %v3635 = vld [vmem:[#allocation2 + $0x60] sm:$0xff]
      %v3636 = vld [vmem:[#allocation2 + $0x68] sm:$0xff]
      %v3637 = vld [vmem:[#allocation2 + $0x78] sm:$0xff]
      %v3638 = vld [vmem:[#allocation2 + $0x80] sm:$0xff]
      %v3639 = vld [vmem:[#allocation2 + $0x88] sm:$0xff]
      %v3640 = vld [vmem:[#allocation2 + $0x90] sm:$0xff]
      %3657 = vrot.lane.b32.xlu0 %v3625, 18
      %v3658 = vpop.permute.xlu0 %3657
      %3659 = vrot.lane.b32.xlu0 %v3626, 18
      %v3660 = vpop.permute.xlu0 %3659
      %3661 = vrot.lane.b32.xlu0 %v3627, 18
      %v3662 = vpop.permute.xlu0 %3661
      %3663 = vrot.lane.b32.xlu0 %v3628, 18
      %v3664 = vpop.permute.xlu0 %3663
      %3665 = vrot.lane.b32.xlu0 %v3629, 18
      %v3666 = vpop.permute.xlu0 %3665
      %3667 = vrot.lane.b32.xlu0 %v3630, 18
      %v3668 = vpop.permute.xlu0 %3667
      %3669 = vrot.lane.b32.xlu0 %v3631, 18
      %v3670 = vpop.permute.xlu0 %3669
      %3671 = vrot.lane.b32.xlu0 %v3632, 18
      %v3672 = vpop.permute.xlu0 %3671
      %3673 = vrot.lane.b32.xlu0 %v3633, 18
      %v3674 = vpop.permute.xlu0 %3673
      %3675 = vrot.lane.b32.xlu0 %v3634, 18
      %v3676 = vpop.permute.xlu0 %3675
      %3677 = vrot.lane.b32.xlu0 %v3635, 18
      %v3678 = vpop.permute.xlu0 %3677
      %3679 = vrot.lane.b32.xlu0 %v3636, 18
      %v3680 = vpop.permute.xlu0 %3679
      %3681 = vrot.lane.b32.xlu0 %v3637, 18
      %v3682 = vpop.permute.xlu0 %3681
      %3683 = vrot.lane.b32.xlu0 %v3638, 18
      %v3684 = vpop.permute.xlu0 %3683
      %3685 = vrot.lane.b32.xlu0 %v3639, 18
      %v3686 = vpop.permute.xlu0 %3685
      %3687 = vrot.lane.b32.xlu0 %v3640, 18
      %v3688 = vpop.permute.xlu0 %3687
      %v3689 = vsel %vm317, %v3658, %v3660
      %v3690 = vsel %vm317, %v3660, %v3662
      %v3691 = vsel %vm317, %v3662, %v3664
      %v3692 = vsel %vm317, %v3666, %v3668
      %v3693 = vsel %vm317, %v3668, %v3670
      %v3694 = vsel %vm317, %v3670, %v3672
      %v3695 = vsel %vm317, %v3674, %v3676
      %v3696 = vsel %vm317, %v3676, %v3678
      %v3697 = vsel %vm317, %v3678, %v3680
      %v3698 = vsel %vm317, %v3682, %v3684
      %v3699 = vsel %vm317, %v3684, %v3686
      %v3700 = vsel %vm317, %v3686, %v3688
      %3713 = vst [vmem:[#allocation3 + $0x60] sm:$0xff] %v3689
      %3714 = vst [vmem:[#allocation3 + $0x68] sm:$0xff] %v3690
      %3715 = vst [vmem:[#allocation3 + $0x70] sm:$0xff] %v3691
      %3716 = vst [vmem:[#allocation3 + $0x78] sm:$0xff] %v3692
      %3717 = vst [vmem:[#allocation3 + $0x80] sm:$0xff] %v3693
      %3718 = vst [vmem:[#allocation3 + $0x88] sm:$0xff] %v3694
      %3719 = vst [vmem:[#allocation3 + $0x90] sm:$0xff] %v3695
      %3720 = vst [vmem:[#allocation3 + $0x98] sm:$0xff] %v3696
      %3721 = vst [vmem:[#allocation3 + $0xa0] sm:$0xff] %v3697
      %3722 = vst [vmem:[#allocation3 + $0xa8] sm:$0xff] %v3698
      %3723 = vst [vmem:[#allocation3 + $0xb0] sm:$0xff] %v3699
      %3724 = vst [vmem:[#allocation3 + $0xb8] sm:$0xff] %v3700
      %v3725 = vld [vmem:[#allocation2] sm:$0xff]
      %v3726 = vld [vmem:[#allocation2 + $0x8] sm:$0xff]
      %v3727 = vld [vmem:[#allocation2 + $0x10] sm:$0xff]
      %v3728 = vld [vmem:[#allocation2 + $0x18] sm:$0xff]
      %v3729 = vld [vmem:[#allocation2 + $0x28] sm:$0xff]
      %v3730 = vld [vmem:[#allocation2 + $0x30] sm:$0xff]
      %v3731 = vld [vmem:[#allocation2 + $0x38] sm:$0xff]
      %v3732 = vld [vmem:[#allocation2 + $0x40] sm:$0xff]
      %v3733 = vld [vmem:[#allocation2 + $0x50] sm:$0xff]
      %v3734 = vld [vmem:[#allocation2 + $0x58] sm:$0xff]
      %v3735 = vld [vmem:[#allocation2 + $0x60] sm:$0xff]
      %v3736 = vld [vmem:[#allocation2 + $0x68] sm:$0xff]
      %v3737 = vld [vmem:[#allocation2 + $0x78] sm:$0xff]
      %v3738 = vld [vmem:[#allocation2 + $0x80] sm:$0xff]
      %v3739 = vld [vmem:[#allocation2 + $0x88] sm:$0xff]
      %v3740 = vld [vmem:[#allocation2 + $0x90] sm:$0xff]
      %3757 = vrot.lane.b32.xlu0 %v3725, 17
      %v3758 = vpop.permute.xlu0 %3757
      %3759 = vrot.lane.b32.xlu0 %v3726, 17
      %v3760 = vpop.permute.xlu0 %3759
      %3761 = vrot.lane.b32.xlu0 %v3727, 17
      %v3762 = vpop.permute.xlu0 %3761
      %3763 = vrot.lane.b32.xlu0 %v3728, 17
      %v3764 = vpop.permute.xlu0 %3763
      %3765 = vrot.lane.b32.xlu0 %v3729, 17
      %v3766 = vpop.permute.xlu0 %3765
      %3767 = vrot.lane.b32.xlu0 %v3730, 17
      %v3768 = vpop.permute.xlu0 %3767
      %3769 = vrot.lane.b32.xlu0 %v3731, 17
      %v3770 = vpop.permute.xlu0 %3769
      %3771 = vrot.lane.b32.xlu0 %v3732, 17
      %v3772 = vpop.permute.xlu0 %3771
      %3773 = vrot.lane.b32.xlu0 %v3733, 17
      %v3774 = vpop.permute.xlu0 %3773
      %3775 = vrot.lane.b32.xlu0 %v3734, 17
      %v3776 = vpop.permute.xlu0 %3775
      %3777 = vrot.lane.b32.xlu0 %v3735, 17
      %v3778 = vpop.permute.xlu0 %3777
      %3779 = vrot.lane.b32.xlu0 %v3736, 17
      %v3780 = vpop.permute.xlu0 %3779
      %3781 = vrot.lane.b32.xlu0 %v3737, 17
      %v3782 = vpop.permute.xlu0 %3781
      %3783 = vrot.lane.b32.xlu0 %v3738, 17
      %v3784 = vpop.permute.xlu0 %3783
      %3785 = vrot.lane.b32.xlu0 %v3739, 17
      %v3786 = vpop.permute.xlu0 %3785
      %3787 = vrot.lane.b32.xlu0 %v3740, 17
      %v3788 = vpop.permute.xlu0 %3787
      %v3789 = vsel %vm343, %v3758, %v3760
      %v3790 = vsel %vm343, %v3760, %v3762
      %v3791 = vsel %vm343, %v3762, %v3764
      %v3792 = vsel %vm343, %v3766, %v3768
      %v3793 = vsel %vm343, %v3768, %v3770
      %v3794 = vsel %vm343, %v3770, %v3772
      %v3795 = vsel %vm343, %v3774, %v3776
      %v3796 = vsel %vm343, %v3776, %v3778
      %v3797 = vsel %vm343, %v3778, %v3780
      %v3798 = vsel %vm343, %v3782, %v3784
      %v3799 = vsel %vm343, %v3784, %v3786
      %v3800 = vsel %vm343, %v3786, %v3788
      %3813 = vst [vmem:[#allocation3 + $0xc0] sm:$0xff] %v3789
      %3814 = vst [vmem:[#allocation3 + $0xc8] sm:$0xff] %v3790
      %3815 = vst [vmem:[#allocation3 + $0xd0] sm:$0xff] %v3791
      %3816 = vst [vmem:[#allocation3 + $0xd8] sm:$0xff] %v3792
      %3817 = vst [vmem:[#allocation3 + $0xe0] sm:$0xff] %v3793
      %3818 = vst [vmem:[#allocation3 + $0xe8] sm:$0xff] %v3794
      %3819 = vst [vmem:[#allocation3 + $0xf0] sm:$0xff] %v3795
      %3820 = vst [vmem:[#allocation3 + $0xf8] sm:$0xff] %v3796
      %3821 = vst [vmem:[#allocation3 + $0x100] sm:$0xff] %v3797
      %3822 = vst [vmem:[#allocation3 + $0x108] sm:$0xff] %v3798
      %3823 = vst [vmem:[#allocation3 + $0x110] sm:$0xff] %v3799
      %3824 = vst [vmem:[#allocation3 + $0x118] sm:$0xff] %v3800
      %v3825 = vld [vmem:[#allocation2] sm:$0xff]
      %v3826 = vld [vmem:[#allocation2 + $0x8] sm:$0xff]
      %v3827 = vld [vmem:[#allocation2 + $0x10] sm:$0xff]
      %v3828 = vld [vmem:[#allocation2 + $0x18] sm:$0xff]
      %v3829 = vld [vmem:[#allocation2 + $0x28] sm:$0xff]
      %v3830 = vld [vmem:[#allocation2 + $0x30] sm:$0xff]
      %v3831 = vld [vmem:[#allocation2 + $0x38] sm:$0xff]
      %v3832 = vld [vmem:[#allocation2 + $0x40] sm:$0xff]
      %v3833 = vld [vmem:[#allocation2 + $0x50] sm:$0xff]
      %v3834 = vld [vmem:[#allocation2 + $0x58] sm:$0xff]
      %v3835 = vld [vmem:[#allocation2 + $0x60] sm:$0xff]
      %v3836 = vld [vmem:[#allocation2 + $0x68] sm:$0xff]
      %v3837 = vld [vmem:[#allocation2 + $0x78] sm:$0xff]
      %v3838 = vld [vmem:[#allocation2 + $0x80] sm:$0xff]
      %v3839 = vld [vmem:[#allocation2 + $0x88] sm:$0xff]
      %v3840 = vld [vmem:[#allocation2 + $0x90] sm:$0xff]
      %3857 = vrot.lane.b32.xlu0 %v3825, 1
      %v3858 = vpop.permute.xlu0 %3857
      %3859 = vrot.lane.b32.xlu0 %v3826, 1
      %v3860 = vpop.permute.xlu0 %3859
      %3861 = vrot.lane.b32.xlu0 %v3827, 1
      %v3862 = vpop.permute.xlu0 %3861
      %3863 = vrot.lane.b32.xlu0 %v3828, 1
      %v3864 = vpop.permute.xlu0 %3863
      %3865 = vrot.lane.b32.xlu0 %v3829, 1
      %v3866 = vpop.permute.xlu0 %3865
      %3867 = vrot.lane.b32.xlu0 %v3830, 1
      %v3868 = vpop.permute.xlu0 %3867
      %3869 = vrot.lane.b32.xlu0 %v3831, 1
      %v3870 = vpop.permute.xlu0 %3869
      %3871 = vrot.lane.b32.xlu0 %v3832, 1
      %v3872 = vpop.permute.xlu0 %3871
      %3873 = vrot.lane.b32.xlu0 %v3833, 1
      %v3874 = vpop.permute.xlu0 %3873
      %3875 = vrot.lane.b32.xlu0 %v3834, 1
      %v3876 = vpop.permute.xlu0 %3875
      %3877 = vrot.lane.b32.xlu0 %v3835, 1
      %v3878 = vpop.permute.xlu0 %3877
      %3879 = vrot.lane.b32.xlu0 %v3836, 1
      %v3880 = vpop.permute.xlu0 %3879
      %3881 = vrot.lane.b32.xlu0 %v3837, 1
      %v3882 = vpop.permute.xlu0 %3881
      %3883 = vrot.lane.b32.xlu0 %v3838, 1
      %v3884 = vpop.permute.xlu0 %3883
      %3885 = vrot.lane.b32.xlu0 %v3839, 1
      %v3886 = vpop.permute.xlu0 %3885
      %3887 = vrot.lane.b32.xlu0 %v3840, 1
      %v3888 = vpop.permute.xlu0 %3887
      %v3889 = vsel %vm369, %v3858, %v3860
      %v3890 = vsel %vm369, %v3860, %v3862
      %v3891 = vsel %vm369, %v3862, %v3864
      %v3892 = vsel %vm369, %v3866, %v3868
      %v3893 = vsel %vm369, %v3868, %v3870
      %v3894 = vsel %vm369, %v3870, %v3872
      %v3895 = vsel %vm369, %v3874, %v3876
      %v3896 = vsel %vm369, %v3876, %v3878
      %v3897 = vsel %vm369, %v3878, %v3880
      %v3898 = vsel %vm369, %v3882, %v3884
      %v3899 = vsel %vm369, %v3884, %v3886
      %v3900 = vsel %vm369, %v3886, %v3888
      %3913 = vst [vmem:[#allocation3 + $0x120] sm:$0xff] %v3889
      %3914 = vst [vmem:[#allocation3 + $0x128] sm:$0xff] %v3890
      %3915 = vst [vmem:[#allocation3 + $0x130] sm:$0xff] %v3891
      %3916 = vst [vmem:[#allocation3 + $0x138] sm:$0xff] %v3892
      %3917 = vst [vmem:[#allocation3 + $0x140] sm:$0xff] %v3893
      %3918 = vst [vmem:[#allocation3 + $0x148] sm:$0xff] %v3894
      %3919 = vst [vmem:[#allocation3 + $0x150] sm:$0xff] %v3895
      %3920 = vst [vmem:[#allocation3 + $0x158] sm:$0xff] %v3896
      %3921 = vst [vmem:[#allocation3 + $0x160] sm:$0xff] %v3897
      %3922 = vst [vmem:[#allocation3 + $0x168] sm:$0xff] %v3898
      %3923 = vst [vmem:[#allocation3 + $0x170] sm:$0xff] %v3899
      %3924 = vst [vmem:[#allocation3 + $0x178] sm:$0xff] %v3900
      %v3925 = vld [vmem:[#allocation2 + $0x8] sm:$0xff]
      %v3926 = vld [vmem:[#allocation2 + $0x10] sm:$0xff]
      %v3927 = vld [vmem:[#allocation2 + $0x18] sm:$0xff]
      %v3928 = vld [vmem:[#allocation2 + $0x30] sm:$0xff]
      %v3929 = vld [vmem:[#allocation2 + $0x38] sm:$0xff]
      %v3930 = vld [vmem:[#allocation2 + $0x40] sm:$0xff]
      %v3931 = vld [vmem:[#allocation2 + $0x58] sm:$0xff]
      %v3932 = vld [vmem:[#allocation2 + $0x60] sm:$0xff]
      %v3933 = vld [vmem:[#allocation2 + $0x68] sm:$0xff]
      %v3934 = vld [vmem:[#allocation2 + $0x80] sm:$0xff]
      %v3935 = vld [vmem:[#allocation2 + $0x88] sm:$0xff]
      %v3936 = vld [vmem:[#allocation2 + $0x90] sm:$0xff]
      %3937 = vst [vmem:[#allocation3 + $0x180] sm:$0xff] %v3925
      %3938 = vst [vmem:[#allocation3 + $0x188] sm:$0xff] %v3926
      %3939 = vst [vmem:[#allocation3 + $0x190] sm:$0xff] %v3927
      %3940 = vst [vmem:[#allocation3 + $0x198] sm:$0xff] %v3928
      %3941 = vst [vmem:[#allocation3 + $0x1a0] sm:$0xff] %v3929
      %3942 = vst [vmem:[#allocation3 + $0x1a8] sm:$0xff] %v3930
      %3943 = vst [vmem:[#allocation3 + $0x1b0] sm:$0xff] %v3931
      %3944 = vst [vmem:[#allocation3 + $0x1b8] sm:$0xff] %v3932
      %3945 = vst [vmem:[#allocation3 + $0x1c0] sm:$0xff] %v3933
      %3946 = vst [vmem:[#allocation3 + $0x1c8] sm:$0xff] %v3934
      %3947 = vst [vmem:[#allocation3 + $0x1d0] sm:$0xff] %v3935
      %3948 = vst [vmem:[#allocation3 + $0x1d8] sm:$0xff] %v3936
      %v3949 = vld [vmem:[#allocation2 + $0x8] sm:$0xff]
      %v3950 = vld [vmem:[#allocation2 + $0x10] sm:$0xff]
      %v3951 = vld [vmem:[#allocation2 + $0x18] sm:$0xff]
      %v3952 = vld [vmem:[#allocation2 + $0x20] sm:$0xff]
      %v3953 = vld [vmem:[#allocation2 + $0x30] sm:$0xff]
      %v3954 = vld [vmem:[#allocation2 + $0x38] sm:$0xff]
      %v3955 = vld [vmem:[#allocation2 + $0x40] sm:$0xff]
      %v3956 = vld [vmem:[#allocation2 + $0x48] sm:$0xff]
      %v3957 = vld [vmem:[#allocation2 + $0x58] sm:$0xff]
      %v3958 = vld [vmem:[#allocation2 + $0x60] sm:$0xff]
      %v3959 = vld [vmem:[#allocation2 + $0x68] sm:$0xff]
      %v3960 = vld [vmem:[#allocation2 + $0x70] sm:$0xff]
      %v3961 = vld [vmem:[#allocation2 + $0x80] sm:$0xff]
      %v3962 = vld [vmem:[#allocation2 + $0x88] sm:$0xff]
      %v3963 = vld [vmem:[#allocation2 + $0x90] sm:$0xff]
      %v3964 = vld [vmem:[#allocation2 + $0x98] sm:$0xff]
      %3981 = vrot.lane.b32.xlu0 %v3949, 127
      %v3982 = vpop.permute.xlu0 %3981
      %3983 = vrot.lane.b32.xlu0 %v3950, 127
      %v3984 = vpop.permute.xlu0 %3983
      %3985 = vrot.lane.b32.xlu0 %v3951, 127
      %v3986 = vpop.permute.xlu0 %3985
      %3987 = vrot.lane.b32.xlu0 %v3952, 127
      %v3988 = vpop.permute.xlu0 %3987
      %3989 = vrot.lane.b32.xlu0 %v3953, 127
      %v3990 = vpop.permute.xlu0 %3989
      %3991 = vrot.lane.b32.xlu0 %v3954, 127
      %v3992 = vpop.permute.xlu0 %3991
      %3993 = vrot.lane.b32.xlu0 %v3955, 127
      %v3994 = vpop.permute.xlu0 %3993
      %3995 = vrot.lane.b32.xlu0 %v3956, 127
      %v3996 = vpop.permute.xlu0 %3995
      %3997 = vrot.lane.b32.xlu0 %v3957, 127
      %v3998 = vpop.permute.xlu0 %3997
      %3999 = vrot.lane.b32.xlu0 %v3958, 127
      %v4000 = vpop.permute.xlu0 %3999
      %4001 = vrot.lane.b32.xlu0 %v3959, 127
      %v4002 = vpop.permute.xlu0 %4001
      %4003 = vrot.lane.b32.xlu0 %v3960, 127
      %v4004 = vpop.permute.xlu0 %4003
      %4005 = vrot.lane.b32.xlu0 %v3961, 127
      %v4006 = vpop.permute.xlu0 %4005
      %4007 = vrot.lane.b32.xlu0 %v3962, 127
      %v4008 = vpop.permute.xlu0 %4007
      %4009 = vrot.lane.b32.xlu0 %v3963, 127
      %v4010 = vpop.permute.xlu0 %4009
      %4011 = vrot.lane.b32.xlu0 %v3964, 127
      %v4012 = vpop.permute.xlu0 %4011
      %v4013 = vsel %vm401, %v3982, %v3984
      %v4014 = vsel %vm401, %v3984, %v3986
      %v4015 = vsel %vm401, %v3986, %v3988
      %v4016 = vsel %vm401, %v3990, %v3992
      %v4017 = vsel %vm401, %v3992, %v3994
      %v4018 = vsel %vm401, %v3994, %v3996
      %v4019 = vsel %vm401, %v3998, %v4000
      %v4020 = vsel %vm401, %v4000, %v4002
      %v4021 = vsel %vm401, %v4002, %v4004
      %v4022 = vsel %vm401, %v4006, %v4008
      %v4023 = vsel %vm401, %v4008, %v4010
      %v4024 = vsel %vm401, %v4010, %v4012
      %4037 = vst [vmem:[#allocation3 + $0x1e0] sm:$0xff] %v4013
      %4038 = vst [vmem:[#allocation3 + $0x1e8] sm:$0xff] %v4014
      %4039 = vst [vmem:[#allocation3 + $0x1f0] sm:$0xff] %v4015
      %4040 = vst [vmem:[#allocation3 + $0x1f8] sm:$0xff] %v4016
      %4041 = vst [vmem:[#allocation3 + $0x200] sm:$0xff] %v4017
      %4042 = vst [vmem:[#allocation3 + $0x208] sm:$0xff] %v4018
      %4043 = vst [vmem:[#allocation3 + $0x210] sm:$0xff] %v4019
      %4044 = vst [vmem:[#allocation3 + $0x218] sm:$0xff] %v4020
      %4045 = vst [vmem:[#allocation3 + $0x220] sm:$0xff] %v4021
      %4046 = vst [vmem:[#allocation3 + $0x228] sm:$0xff] %v4022
      %4047 = vst [vmem:[#allocation3 + $0x230] sm:$0xff] %v4023
      %4048 = vst [vmem:[#allocation3 + $0x238] sm:$0xff] %v4024
      %v4049 = vld [vmem:[#allocation2 + $0x8] sm:$0xff]
      %v4050 = vld [vmem:[#allocation2 + $0x10] sm:$0xff]
      %v4051 = vld [vmem:[#allocation2 + $0x18] sm:$0xff]
      %v4052 = vld [vmem:[#allocation2 + $0x20] sm:$0xff]
      %v4053 = vld [vmem:[#allocation2 + $0x30] sm:$0xff]
      %v4054 = vld [vmem:[#allocation2 + $0x38] sm:$0xff]
      %v4055 = vld [vmem:[#allocation2 + $0x40] sm:$0xff]
      %v4056 = vld [vmem:[#allocation2 + $0x48] sm:$0xff]
      %v4057 = vld [vmem:[#allocation2 + $0x58] sm:$0xff]
      %v4058 = vld [vmem:[#allocation2 + $0x60] sm:$0xff]
      %v4059 = vld [vmem:[#allocation2 + $0x68] sm:$0xff]
      %v4060 = vld [vmem:[#allocation2 + $0x70] sm:$0xff]
      %v4061 = vld [vmem:[#allocation2 + $0x80] sm:$0xff]
      %v4062 = vld [vmem:[#allocation2 + $0x88] sm:$0xff]
      %v4063 = vld [vmem:[#allocation2 + $0x90] sm:$0xff]
      %v4064 = vld [vmem:[#allocation2 + $0x98] sm:$0xff]
      %4081 = vrot.lane.b32.xlu0 %v4049, 111
      %v4082 = vpop.permute.xlu0 %4081
      %4083 = vrot.lane.b32.xlu0 %v4050, 111
      %v4084 = vpop.permute.xlu0 %4083
      %4085 = vrot.lane.b32.xlu0 %v4051, 111
      %v4086 = vpop.permute.xlu0 %4085
      %4087 = vrot.lane.b32.xlu0 %v4052, 111
      %v4088 = vpop.permute.xlu0 %4087
      %4089 = vrot.lane.b32.xlu0 %v4053, 111
      %v4090 = vpop.permute.xlu0 %4089
      %4091 = vrot.lane.b32.xlu0 %v4054, 111
      %v4092 = vpop.permute.xlu0 %4091
      %4093 = vrot.lane.b32.xlu0 %v4055, 111
      %v4094 = vpop.permute.xlu0 %4093
      %4095 = vrot.lane.b32.xlu0 %v4056, 111
      %v4096 = vpop.permute.xlu0 %4095
      %4097 = vrot.lane.b32.xlu0 %v4057, 111
      %v4098 = vpop.permute.xlu0 %4097
      %4099 = vrot.lane.b32.xlu0 %v4058, 111
      %v4100 = vpop.permute.xlu0 %4099
      %4101 = vrot.lane.b32.xlu0 %v4059, 111
      %v4102 = vpop.permute.xlu0 %4101
      %4103 = vrot.lane.b32.xlu0 %v4060, 111
      %v4104 = vpop.permute.xlu0 %4103
      %4105 = vrot.lane.b32.xlu0 %v4061, 111
      %v4106 = vpop.permute.xlu0 %4105
      %4107 = vrot.lane.b32.xlu0 %v4062, 111
      %v4108 = vpop.permute.xlu0 %4107
      %4109 = vrot.lane.b32.xlu0 %v4063, 111
      %v4110 = vpop.permute.xlu0 %4109
      %4111 = vrot.lane.b32.xlu0 %v4064, 111
      %v4112 = vpop.permute.xlu0 %4111
      %v4113 = vsel %vm427, %v4082, %v4084
      %v4114 = vsel %vm427, %v4084, %v4086
      %v4115 = vsel %vm427, %v4086, %v4088
      %v4116 = vsel %vm427, %v4090, %v4092
      %v4117 = vsel %vm427, %v4092, %v4094
      %v4118 = vsel %vm427, %v4094, %v4096
      %v4119 = vsel %vm427, %v4098, %v4100
      %v4120 = vsel %vm427, %v4100, %v4102
      %v4121 = vsel %vm427, %v4102, %v4104
      %v4122 = vsel %vm427, %v4106, %v4108
      %v4123 = vsel %vm427, %v4108, %v4110
      %v4124 = vsel %vm427, %v4110, %v4112
      %4137 = vst [vmem:[#allocation3 + $0x240] sm:$0xff] %v4113
      %4138 = vst [vmem:[#allocation3 + $0x248] sm:$0xff] %v4114
      %4139 = vst [vmem:[#allocation3 + $0x250] sm:$0xff] %v4115
      %4140 = vst [vmem:[#allocation3 + $0x258] sm:$0xff] %v4116
      %4141 = vst [vmem:[#allocation3 + $0x260] sm:$0xff] %v4117
      %4142 = vst [vmem:[#allocation3 + $0x268] sm:$0xff] %v4118
      %4143 = vst [vmem:[#allocation3 + $0x270] sm:$0xff] %v4119
      %4144 = vst [vmem:[#allocation3 + $0x278] sm:$0xff] %v4120
      %4145 = vst [vmem:[#allocation3 + $0x280] sm:$0xff] %v4121
      %4146 = vst [vmem:[#allocation3 + $0x288] sm:$0xff] %v4122
      %4147 = vst [vmem:[#allocation3 + $0x290] sm:$0xff] %v4123
      %4148 = vst [vmem:[#allocation3 + $0x298] sm:$0xff] %v4124
      %v4149 = vld [vmem:[#allocation2 + $0x8] sm:$0xff]
      %v4150 = vld [vmem:[#allocation2 + $0x10] sm:$0xff]
      %v4151 = vld [vmem:[#allocation2 + $0x18] sm:$0xff]
      %v4152 = vld [vmem:[#allocation2 + $0x20] sm:$0xff]
      %v4153 = vld [vmem:[#allocation2 + $0x30] sm:$0xff]
      %v4154 = vld [vmem:[#allocation2 + $0x38] sm:$0xff]
      %v4155 = vld [vmem:[#allocation2 + $0x40] sm:$0xff]
      %v4156 = vld [vmem:[#allocation2 + $0x48] sm:$0xff]
      %v4157 = vld [vmem:[#allocation2 + $0x58] sm:$0xff]
      %v4158 = vld [vmem:[#allocation2 + $0x60] sm:$0xff]
      %v4159 = vld [vmem:[#allocation2 + $0x68] sm:$0xff]
      %v4160 = vld [vmem:[#allocation2 + $0x70] sm:$0xff]
      %v4161 = vld [vmem:[#allocation2 + $0x80] sm:$0xff]
      %v4162 = vld [vmem:[#allocation2 + $0x88] sm:$0xff]
      %v4163 = vld [vmem:[#allocation2 + $0x90] sm:$0xff]
      %v4164 = vld [vmem:[#allocation2 + $0x98] sm:$0xff]
      %4181 = vrot.lane.b32.xlu0 %v4149, 110
      %v4182 = vpop.permute.xlu0 %4181
      %4183 = vrot.lane.b32.xlu0 %v4150, 110
      %v4184 = vpop.permute.xlu0 %4183
      %4185 = vrot.lane.b32.xlu0 %v4151, 110
      %v4186 = vpop.permute.xlu0 %4185
      %4187 = vrot.lane.b32.xlu0 %v4152, 110
      %v4188 = vpop.permute.xlu0 %4187
      %4189 = vrot.lane.b32.xlu0 %v4153, 110
      %v4190 = vpop.permute.xlu0 %4189
      %4191 = vrot.lane.b32.xlu0 %v4154, 110
      %v4192 = vpop.permute.xlu0 %4191
      %4193 = vrot.lane.b32.xlu0 %v4155, 110
      %v4194 = vpop.permute.xlu0 %4193
      %4195 = vrot.lane.b32.xlu0 %v4156, 110
      %v4196 = vpop.permute.xlu0 %4195
      %4197 = vrot.lane.b32.xlu0 %v4157, 110
      %v4198 = vpop.permute.xlu0 %4197
      %4199 = vrot.lane.b32.xlu0 %v4158, 110
      %v4200 = vpop.permute.xlu0 %4199
      %4201 = vrot.lane.b32.xlu0 %v4159, 110
      %v4202 = vpop.permute.xlu0 %4201
      %4203 = vrot.lane.b32.xlu0 %v4160, 110
      %v4204 = vpop.permute.xlu0 %4203
      %4205 = vrot.lane.b32.xlu0 %v4161, 110
      %v4206 = vpop.permute.xlu0 %4205
      %4207 = vrot.lane.b32.xlu0 %v4162, 110
      %v4208 = vpop.permute.xlu0 %4207
      %4209 = vrot.lane.b32.xlu0 %v4163, 110
      %v4210 = vpop.permute.xlu0 %4209
      %4211 = vrot.lane.b32.xlu0 %v4164, 110
      %v4212 = vpop.permute.xlu0 %4211
      %v4213 = vsel %vm453, %v4182, %v4184
      %v4214 = vsel %vm453, %v4184, %v4186
      %v4215 = vsel %vm453, %v4186, %v4188
      %v4216 = vsel %vm453, %v4190, %v4192
      %v4217 = vsel %vm453, %v4192, %v4194
      %v4218 = vsel %vm453, %v4194, %v4196
      %v4219 = vsel %vm453, %v4198, %v4200
      %v4220 = vsel %vm453, %v4200, %v4202
      %v4221 = vsel %vm453, %v4202, %v4204
      %v4222 = vsel %vm453, %v4206, %v4208
      %v4223 = vsel %vm453, %v4208, %v4210
      %v4224 = vsel %vm453, %v4210, %v4212
      %4237 = vst [vmem:[#allocation3 + $0x2a0] sm:$0xff] %v4213
      %4238 = vst [vmem:[#allocation3 + $0x2a8] sm:$0xff] %v4214
      %4239 = vst [vmem:[#allocation3 + $0x2b0] sm:$0xff] %v4215
      %4240 = vst [vmem:[#allocation3 + $0x2b8] sm:$0xff] %v4216
      %4241 = vst [vmem:[#allocation3 + $0x2c0] sm:$0xff] %v4217
      %4242 = vst [vmem:[#allocation3 + $0x2c8] sm:$0xff] %v4218
      %4243 = vst [vmem:[#allocation3 + $0x2d0] sm:$0xff] %v4219
      %4244 = vst [vmem:[#allocation3 + $0x2d8] sm:$0xff] %v4220
      %4245 = vst [vmem:[#allocation3 + $0x2e0] sm:$0xff] %v4221
      %4246 = vst [vmem:[#allocation3 + $0x2e8] sm:$0xff] %v4222
      %4247 = vst [vmem:[#allocation3 + $0x2f0] sm:$0xff] %v4223
      %4248 = vst [vmem:[#allocation3 + $0x2f8] sm:$0xff] %v4224
      %v4249 = vld [vmem:[#allocation2 + $0x8] sm:$0xff]
      %v4250 = vld [vmem:[#allocation2 + $0x10] sm:$0xff]
      %v4251 = vld [vmem:[#allocation2 + $0x18] sm:$0xff]
      %v4252 = vld [vmem:[#allocation2 + $0x20] sm:$0xff]
      %v4253 = vld [vmem:[#allocation2 + $0x30] sm:$0xff]
      %v4254 = vld [vmem:[#allocation2 + $0x38] sm:$0xff]
      %v4255 = vld [vmem:[#allocation2 + $0x40] sm:$0xff]
      %v4256 = vld [vmem:[#allocation2 + $0x48] sm:$0xff]
      %v4257 = vld [vmem:[#allocation2 + $0x58] sm:$0xff]
      %v4258 = vld [vmem:[#allocation2 + $0x60] sm:$0xff]
      %v4259 = vld [vmem:[#allocation2 + $0x68] sm:$0xff]
      %v4260 = vld [vmem:[#allocation2 + $0x70] sm:$0xff]
      %v4261 = vld [vmem:[#allocation2 + $0x80] sm:$0xff]
      %v4262 = vld [vmem:[#allocation2 + $0x88] sm:$0xff]
      %v4263 = vld [vmem:[#allocation2 + $0x90] sm:$0xff]
      %v4264 = vld [vmem:[#allocation2 + $0x98] sm:$0xff]
      %4281 = vrot.lane.b32.xlu0 %v4249, 109
      %v4282 = vpop.permute.xlu0 %4281
      %4283 = vrot.lane.b32.xlu0 %v4250, 109
      %v4284 = vpop.permute.xlu0 %4283
      %4285 = vrot.lane.b32.xlu0 %v4251, 109
      %v4286 = vpop.permute.xlu0 %4285
      %4287 = vrot.lane.b32.xlu0 %v4252, 109
      %v4288 = vpop.permute.xlu0 %4287
      %4289 = vrot.lane.b32.xlu0 %v4253, 109
      %v4290 = vpop.permute.xlu0 %4289
      %4291 = vrot.lane.b32.xlu0 %v4254, 109
      %v4292 = vpop.permute.xlu0 %4291
      %4293 = vrot.lane.b32.xlu0 %v4255, 109
      %v4294 = vpop.permute.xlu0 %4293
      %4295 = vrot.lane.b32.xlu0 %v4256, 109
      %v4296 = vpop.permute.xlu0 %4295
      %4297 = vrot.lane.b32.xlu0 %v4257, 109
      %v4298 = vpop.permute.xlu0 %4297
      %4299 = vrot.lane.b32.xlu0 %v4258, 109
      %v4300 = vpop.permute.xlu0 %4299
      %4301 = vrot.lane.b32.xlu0 %v4259, 109
      %v4302 = vpop.permute.xlu0 %4301
      %4303 = vrot.lane.b32.xlu0 %v4260, 109
      %v4304 = vpop.permute.xlu0 %4303
      %4305 = vrot.lane.b32.xlu0 %v4261, 109
      %v4306 = vpop.permute.xlu0 %4305
      %4307 = vrot.lane.b32.xlu0 %v4262, 109
      %v4308 = vpop.permute.xlu0 %4307
      %4309 = vrot.lane.b32.xlu0 %v4263, 109
      %v4310 = vpop.permute.xlu0 %4309
      %4311 = vrot.lane.b32.xlu0 %v4264, 109
      %v4312 = vpop.permute.xlu0 %4311
      %v4313 = vsel %vm479, %v4282, %v4284
      %v4314 = vsel %vm479, %v4284, %v4286
      %v4315 = vsel %vm479, %v4286, %v4288
      %v4316 = vsel %vm479, %v4290, %v4292
      %v4317 = vsel %vm479, %v4292, %v4294
      %v4318 = vsel %vm479, %v4294, %v4296
      %v4319 = vsel %vm479, %v4298, %v4300
      %v4320 = vsel %vm479, %v4300, %v4302
      %v4321 = vsel %vm479, %v4302, %v4304
      %v4322 = vsel %vm479, %v4306, %v4308
      %v4323 = vsel %vm479, %v4308, %v4310
      %v4324 = vsel %vm479, %v4310, %v4312
      %4337 = vst [vmem:[#allocation3 + $0x300] sm:$0xff] %v4313
      %4338 = vst [vmem:[#allocation3 + $0x308] sm:$0xff] %v4314
      %4339 = vst [vmem:[#allocation3 + $0x310] sm:$0xff] %v4315
      %4340 = vst [vmem:[#allocation3 + $0x318] sm:$0xff] %v4316
      %4341 = vst [vmem:[#allocation3 + $0x320] sm:$0xff] %v4317
      %4342 = vst [vmem:[#allocation3 + $0x328] sm:$0xff] %v4318
      %4343 = vst [vmem:[#allocation3 + $0x330] sm:$0xff] %v4319
      %4344 = vst [vmem:[#allocation3 + $0x338] sm:$0xff] %v4320
      %4345 = vst [vmem:[#allocation3 + $0x340] sm:$0xff] %v4321
      %4346 = vst [vmem:[#allocation3 + $0x348] sm:$0xff] %v4322
      %4347 = vst [vmem:[#allocation3 + $0x350] sm:$0xff] %v4323
      %4348 = vst [vmem:[#allocation3 + $0x358] sm:$0xff] %v4324
      %v4349 = vld [vmem:[#allocation3] sm:$0xff]
      %v4350 = vld [vmem:[#allocation3 + $0x8] sm:$0xff]
      %v4351 = vld [vmem:[#allocation3 + $0x10] sm:$0xff]
      %v4352 = vld [vmem:[#allocation3 + $0x18] sm:$0xff]
      %v4353 = vld [vmem:[#allocation3 + $0x20] sm:$0xff]
      %v4354 = vld [vmem:[#allocation3 + $0x28] sm:$0xff]
      %v4355 = vld [vmem:[#allocation3 + $0x30] sm:$0xff]
      %v4356 = vld [vmem:[#allocation3 + $0x38] sm:$0xff]
      %v4357 = vld [vmem:[#allocation3 + $0x40] sm:$0xff]
      %v4358 = vld [vmem:[#allocation3 + $0x48] sm:$0xff]
      %v4359 = vld [vmem:[#allocation3 + $0x50] sm:$0xff]
      %v4360 = vld [vmem:[#allocation3 + $0x58] sm:$0xff]
      %v4361 = vld [vmem:[#allocation3 + $0x60] sm:$0xff]
      %v4362 = vld [vmem:[#allocation3 + $0x68] sm:$0xff]
      %v4363 = vld [vmem:[#allocation3 + $0x70] sm:$0xff]
      %v4364 = vld [vmem:[#allocation3 + $0x78] sm:$0xff]
      %v4365 = vld [vmem:[#allocation3 + $0x80] sm:$0xff]
      %v4366 = vld [vmem:[#allocation3 + $0x88] sm:$0xff]
      %v4367 = vld [vmem:[#allocation3 + $0x90] sm:$0xff]
      %v4368 = vld [vmem:[#allocation3 + $0x98] sm:$0xff]
      %v4369 = vld [vmem:[#allocation3 + $0xa0] sm:$0xff]
      %v4370 = vld [vmem:[#allocation3 + $0xa8] sm:$0xff]
      %v4371 = vld [vmem:[#allocation3 + $0xb0] sm:$0xff]
      %v4372 = vld [vmem:[#allocation3 + $0xb8] sm:$0xff]
      %v4373 = vld [vmem:[#allocation3 + $0xc0] sm:$0xff]
      %v4374 = vld [vmem:[#allocation3 + $0xc8] sm:$0xff]
      %v4375 = vld [vmem:[#allocation3 + $0xd0] sm:$0xff]
      %v4376 = vld [vmem:[#allocation3 + $0xd8] sm:$0xff]
      %v4377 = vld [vmem:[#allocation3 + $0xe0] sm:$0xff]
      %v4378 = vld [vmem:[#allocation3 + $0xe8] sm:$0xff]
      %v4379 = vld [vmem:[#allocation3 + $0xf0] sm:$0xff]
      %v4380 = vld [vmem:[#allocation3 + $0xf8] sm:$0xff]
      %v4381 = vld [vmem:[#allocation3 + $0x100] sm:$0xff]
      %v4382 = vld [vmem:[#allocation3 + $0x108] sm:$0xff]
      %v4383 = vld [vmem:[#allocation3 + $0x110] sm:$0xff]
      %v4384 = vld [vmem:[#allocation3 + $0x118] sm:$0xff]
      %v4385 = vld [vmem:[#allocation3 + $0x120] sm:$0xff]
      %v4386 = vld [vmem:[#allocation3 + $0x128] sm:$0xff]
      %v4387 = vld [vmem:[#allocation3 + $0x130] sm:$0xff]
      %v4388 = vld [vmem:[#allocation3 + $0x138] sm:$0xff]
      %v4389 = vld [vmem:[#allocation3 + $0x140] sm:$0xff]
      %v4390 = vld [vmem:[#allocation3 + $0x148] sm:$0xff]
      %v4391 = vld [vmem:[#allocation3 + $0x150] sm:$0xff]
      %v4392 = vld [vmem:[#allocation3 + $0x158] sm:$0xff]
      %v4393 = vld [vmem:[#allocation3 + $0x160] sm:$0xff]
      %v4394 = vld [vmem:[#allocation3 + $0x168] sm:$0xff]
      %v4395 = vld [vmem:[#allocation3 + $0x170] sm:$0xff]
      %v4396 = vld [vmem:[#allocation3 + $0x178] sm:$0xff]
      %v4397 = vld [vmem:[#allocation3 + $0x180] sm:$0xff]
      %v4398 = vld [vmem:[#allocation3 + $0x188] sm:$0xff]
      %v4399 = vld [vmem:[#allocation3 + $0x190] sm:$0xff]
      %v4400 = vld [vmem:[#allocation3 + $0x198] sm:$0xff]
      %v4401 = vld [vmem:[#allocation3 + $0x1a0] sm:$0xff]
      %v4402 = vld [vmem:[#allocation3 + $0x1a8] sm:$0xff]
      %v4403 = vld [vmem:[#allocation3 + $0x1b0] sm:$0xff]
      %v4404 = vld [vmem:[#allocation3 + $0x1b8] sm:$0xff]
      %v4405 = vld [vmem:[#allocation3 + $0x1c0] sm:$0xff]
      %v4406 = vld [vmem:[#allocation3 + $0x1c8] sm:$0xff]
      %v4407 = vld [vmem:[#allocation3 + $0x1d0] sm:$0xff]
      %v4408 = vld [vmem:[#allocation3 + $0x1d8] sm:$0xff]
      %v4409 = vld [vmem:[#allocation3 + $0x1e0] sm:$0xff]
      %v4410 = vld [vmem:[#allocation3 + $0x1e8] sm:$0xff]
      %v4411 = vld [vmem:[#allocation3 + $0x1f0] sm:$0xff]
      %v4412 = vld [vmem:[#allocation3 + $0x1f8] sm:$0xff]
      %v4413 = vld [vmem:[#allocation3 + $0x200] sm:$0xff]
      %v4414 = vld [vmem:[#allocation3 + $0x208] sm:$0xff]
      %v4415 = vld [vmem:[#allocation3 + $0x210] sm:$0xff]
      %v4416 = vld [vmem:[#allocation3 + $0x218] sm:$0xff]
      %v4417 = vld [vmem:[#allocation3 + $0x220] sm:$0xff]
      %v4418 = vld [vmem:[#allocation3 + $0x228] sm:$0xff]
      %v4419 = vld [vmem:[#allocation3 + $0x230] sm:$0xff]
      %v4420 = vld [vmem:[#allocation3 + $0x238] sm:$0xff]
      %v4421 = vld [vmem:[#allocation3 + $0x240] sm:$0xff]
      %v4422 = vld [vmem:[#allocation3 + $0x248] sm:$0xff]
      %v4423 = vld [vmem:[#allocation3 + $0x250] sm:$0xff]
      %v4424 = vld [vmem:[#allocation3 + $0x258] sm:$0xff]
      %v4425 = vld [vmem:[#allocation3 + $0x260] sm:$0xff]
      %v4426 = vld [vmem:[#allocation3 + $0x268] sm:$0xff]
      %v4427 = vld [vmem:[#allocation3 + $0x270] sm:$0xff]
      %v4428 = vld [vmem:[#allocation3 + $0x278] sm:$0xff]
      %v4429 = vld [vmem:[#allocation3 + $0x280] sm:$0xff]
      %v4430 = vld [vmem:[#allocation3 + $0x288] sm:$0xff]
      %v4431 = vld [vmem:[#allocation3 + $0x290] sm:$0xff]
      %v4432 = vld [vmem:[#allocation3 + $0x298] sm:$0xff]
      %v4433 = vld [vmem:[#allocation3 + $0x2a0] sm:$0xff]
      %v4434 = vld [vmem:[#allocation3 + $0x2a8] sm:$0xff]
      %v4435 = vld [vmem:[#allocation3 + $0x2b0] sm:$0xff]
      %v4436 = vld [vmem:[#allocation3 + $0x2b8] sm:$0xff]
      %v4437 = vld [vmem:[#allocation3 + $0x2c0] sm:$0xff]
      %v4438 = vld [vmem:[#allocation3 + $0x2c8] sm:$0xff]
      %v4439 = vld [vmem:[#allocation3 + $0x2d0] sm:$0xff]
      %v4440 = vld [vmem:[#allocation3 + $0x2d8] sm:$0xff]
      %v4441 = vld [vmem:[#allocation3 + $0x2e0] sm:$0xff]
      %v4442 = vld [vmem:[#allocation3 + $0x2e8] sm:$0xff]
      %v4443 = vld [vmem:[#allocation3 + $0x2f0] sm:$0xff]
      %v4444 = vld [vmem:[#allocation3 + $0x2f8] sm:$0xff]
      %v4445 = vld [vmem:[#allocation3 + $0x300] sm:$0xff]
      %v4446 = vld [vmem:[#allocation3 + $0x308] sm:$0xff]
      %v4447 = vld [vmem:[#allocation3 + $0x310] sm:$0xff]
      %v4448 = vld [vmem:[#allocation3 + $0x318] sm:$0xff]
      %v4449 = vld [vmem:[#allocation3 + $0x320] sm:$0xff]
      %v4450 = vld [vmem:[#allocation3 + $0x328] sm:$0xff]
      %v4451 = vld [vmem:[#allocation3 + $0x330] sm:$0xff]
      %v4452 = vld [vmem:[#allocation3 + $0x338] sm:$0xff]
      %v4453 = vld [vmem:[#allocation3 + $0x340] sm:$0xff]
      %v4454 = vld [vmem:[#allocation3 + $0x348] sm:$0xff]
      %v4455 = vld [vmem:[#allocation3 + $0x350] sm:$0xff]
      %v4456 = vld [vmem:[#allocation3 + $0x358] sm:$0xff]
      %4458 = vset.pattern.permute.xlu0 0
      %4459 = vperm.xlu0 %4458, %v3521
      %v4460 = vpop.permute.xlu0 %4459
      %4463 = vset.pattern.permute.xlu0 0
      %4464 = vperm.xlu0 %4463, %v3522
      %v4465 = vpop.permute.xlu0 %4464
      %4468 = vset.pattern.permute.xlu0 0
      %4469 = vperm.xlu0 %4468, %v3523
      %v4470 = vpop.permute.xlu0 %4469
      %4473 = vset.pattern.permute.xlu0 0
      %4474 = vperm.xlu0 %4473, %v3524
      %v4475 = vpop.permute.xlu0 %4474
      %v4478 = vsel %vm1744, %v3510, 0
      %v4481 = vsel %vm1744, %v3513, 0
      %v4484 = vsel %vm1744, %v3516, 0
      %v4487 = vsel %vm1744, %v3519, 0
      %4489 = vmatprep.subr.mxu0 %v4350
      %4490 = vmatpush1.msra.mxu0 %v4349
      %4491 = vmatprep.subr.mxu0 %v4353
      %4492 = vmatpush1.msra.mxu0 %v4352
      %4493 = vmatprep.subr.mxu0 %v4356
      %4494 = vmatpush1.msra.mxu0 %v4355
      %4495 = vmatprep.subr.mxu0 %v4359
      %4496 = vmatpush1.msra.mxu0 %v4358
      %4497 = vmatprep.subr.mxu0 %v4362
      %4498 = vmatpush1.msra.mxu0 %v4361
      %4499 = vmatprep.subr.mxu0 %v4365
      %4500 = vmatpush1.msra.mxu0 %v4364
      %4501 = vmatprep.subr.mxu0 %v4368
      %4502 = vmatpush1.msra.mxu0 %v4367
      %4503 = vmatprep.subr.mxu0 %v4371
      %4504 = vmatpush1.msra.mxu0 %v4370
      %4505 = vmatprep.subr.mxu0 %v4374
      %4506 = vmatpush1.msra.mxu0 %v4373
      %4507 = vmatprep.subr.mxu0 %v4377
      %4508 = vmatpush1.msra.mxu0 %v4376
      %4509 = vmatprep.subr.mxu0 %v4380
      %4510 = vmatpush1.msra.mxu0 %v4379
      %4511 = vmatprep.subr.mxu0 %v4383
      %4512 = vmatpush1.msra.mxu0 %v4382
      %4513 = vmatprep.subr.mxu0 %v4386
      %4514 = vmatpush1.msra.mxu0 %v4385
      %4515 = vmatprep.subr.mxu0 %v4389
      %4516 = vmatpush1.msra.mxu0 %v4388
      %4517 = vmatprep.subr.mxu0 %v4392
      %4518 = vmatpush1.msra.mxu0 %v4391
      %4519 = vmatprep.subr.mxu0 %v4395
      %4520 = vmatpush1.msra.mxu0 %v4394
      %4521 = vmatprep.subr.mxu0 %v4398
      %4522 = vmatpush1.msra.mxu0 %v4397
      %4523 = vmatprep.subr.mxu0 %v4401
      %4524 = vmatpush1.msra.mxu0 %v4400
      %4525 = vmatprep.subr.mxu0 %v4404
      %4526 = vmatpush1.msra.mxu0 %v4403
      %4527 = vmatprep.subr.mxu0 %v4407
      %4528 = vmatpush1.msra.mxu0 %v4406
      %4529 = vmatprep.subr.mxu0 %v4410
      %4530 = vmatpush1.msra.mxu0 %v4409
      %4531 = vmatprep.subr.mxu0 %v4413
      %4532 = vmatpush1.msra.mxu0 %v4412
      %4533 = vmatprep.subr.mxu0 %v4416
      %4534 = vmatpush1.msra.mxu0 %v4415
      %4535 = vmatprep.subr.mxu0 %v4419
      %4536 = vmatpush1.msra.mxu0 %v4418
      %4537 = vmatprep.subr.mxu0 %v4422
      %4538 = vmatpush1.msra.mxu0 %v4421
      %4539 = vmatprep.subr.mxu0 %v4425
      %4540 = vmatpush1.msra.mxu0 %v4424
      %4541 = vmatprep.subr.mxu0 %v4428
      %4542 = vmatpush1.msra.mxu0 %v4427
      %4543 = vmatprep.subr.mxu0 %v4431
      %4544 = vmatpush1.msra.mxu0 %v4430
      %4545 = vmatprep.subr.mxu0 %v4434
      %4546 = vmatpush1.msra.mxu0 %v4433
      %4547 = vmatprep.subr.mxu0 %v4437
      %4548 = vmatpush1.msra.mxu0 %v4436
      %4549 = vmatprep.subr.mxu0 %v4440
      %4550 = vmatpush1.msra.mxu0 %v4439
      %4551 = vmatprep.subr.mxu0 %v4443
      %4552 = vmatpush1.msra.mxu0 %v4442
      %4553 = vmatprep.mubr.f32.mxu0 %v3509
      %4554 = vmatmul.mubr.f32.gmra.mrb[0].mxu0 %v3508
      %v4555 = vpop.f32.mrb[0].mxu0
      %v4556 = vadd.f32 %v4460, %v4555
      %v4557 = vpop.f32.mrb[0].mxu0
      %v4558 = vadd.f32 %v4460, %v4557
      %4559 = vmatprep.mubr.f32.mxu0 %v3512
      %4560 = vmatmul.mubr.f32.gmra.mrb[0].mxu0 %v3511
      %v4561 = vpop.f32.mrb[0].mxu0
      %v4562 = vadd.f32 %v4465, %v4561
      %v4563 = vpop.f32.mrb[0].mxu0
      %v4564 = vadd.f32 %v4465, %v4563
      %4565 = vmatprep.mubr.f32.mxu0 %v3515
      %4566 = vmatmul.mubr.f32.gmra.mrb[0].mxu0 %v3514
      %v4567 = vpop.f32.mrb[0].mxu0
      %v4568 = vadd.f32 %v4470, %v4567
      %v4569 = vpop.f32.mrb[0].mxu0
      %v4570 = vadd.f32 %v4470, %v4569
      %4571 = vmatprep.mubr.f32.mxu0 %v3518
      %4572 = vmatmul.mubr.f32.gmra.mrb[0].mxu0 %v3517
      %v4573 = vpop.f32.mrb[0].mxu0
      %v4574 = vadd.f32 %v4475, %v4573
      %v4575 = vpop.f32.mrb[0].mxu0
      %v4576 = vadd.f32 %v4475, %v4575
      %4577 = vdwg.mxu0
      %4578 = vmatprep.subr.mxu0 %v4446
      %4579 = vmatpush1.msra.mxu0 %v4445
      %4580 = vmatprep.subr.mxu0 %v4449
      %4581 = vmatpush1.msra.mxu0 %v4448
      %4582 = vmatprep.subr.mxu0 %v4452
      %4583 = vmatpush1.msra.mxu0 %v4451
      %4584 = vmatprep.subr.mxu0 %v4455
      %4585 = vmatpush1.msra.mxu0 %v4454
      %4586 = vmatprep.subr.mxu0 0.0
      %4587 = vmatpush1.msra.mxu0 0.0
      %4588 = vmatprep.subr.mxu0 0.0
      %4589 = vmatpush1.msra.mxu0 0.0
      %4590 = vmatprep.subr.mxu0 0.0
      %4591 = vmatpush1.msra.mxu0 0.0
      %4592 = vmatprep.subr.mxu0 0.0
      %4593 = vmatpush1.msra.mxu0 0.0
      %4594 = vmatprep.subr.mxu0 0.0
      %4595 = vmatpush1.msra.mxu0 0.0
      %4596 = vmatprep.subr.mxu0 0.0
      %4597 = vmatpush1.msra.mxu0 0.0
      %4598 = vmatprep.subr.mxu0 0.0
      %4599 = vmatpush1.msra.mxu0 0.0
      %4600 = vmatprep.subr.mxu0 0.0
      %4601 = vmatpush1.msra.mxu0 0.0
      %4602 = vmatprep.subr.mxu0 0.0
      %4603 = vmatpush1.msra.mxu0 0.0
      %4604 = vmatprep.subr.mxu0 0.0
      %4605 = vmatpush1.msra.mxu0 0.0
      %4606 = vmatprep.subr.mxu0 0.0
      %4607 = vmatpush1.msra.mxu0 0.0
      %4608 = vmatprep.subr.mxu0 0.0
      %4609 = vmatpush1.msra.mxu0 0.0
      %4610 = vmatprep.subr.mxu0 0.0
      %4611 = vmatpush1.msra.mxu0 0.0
      %4612 = vmatprep.subr.mxu0 0.0
      %4613 = vmatpush1.msra.mxu0 0.0
      %4614 = vmatprep.subr.mxu0 0.0
      %4615 = vmatpush1.msra.mxu0 0.0
      %4616 = vmatprep.subr.mxu0 0.0
      %4617 = vmatpush1.msra.mxu0 0.0
      %4618 = vmatprep.subr.mxu0 0.0
      %4619 = vmatpush1.msra.mxu0 0.0
      %4620 = vmatprep.subr.mxu0 0.0
      %4621 = vmatpush1.msra.mxu0 0.0
      %4622 = vmatprep.subr.mxu0 0.0
      %4623 = vmatpush1.msra.mxu0 0.0
      %4624 = vmatprep.subr.mxu0 0.0
      %4625 = vmatpush1.msra.mxu0 0.0
      %4626 = vmatprep.subr.mxu0 0.0
      %4627 = vmatpush1.msra.mxu0 0.0
      %4628 = vmatprep.subr.mxu0 0.0
      %4629 = vmatpush1.msra.mxu0 0.0
      %4630 = vmatprep.subr.mxu0 0.0
      %4631 = vmatpush1.msra.mxu0 0.0
      %4632 = vmatprep.subr.mxu0 0.0
      %4633 = vmatpush1.msra.mxu0 0.0
      %4634 = vmatprep.subr.mxu0 0.0
      %4635 = vmatpush1.msra.mxu0 0.0
      %4636 = vmatprep.subr.mxu0 0.0
      %4637 = vmatpush1.msra.mxu0 0.0
      %4638 = vmatprep.subr.mxu0 0.0
      %4639 = vmatpush1.msra.mxu0 0.0
      %4640 = vmatprep.subr.mxu0 0.0
      %4641 = vmatpush1.msra.mxu0 0.0
      %4642 = vmatprep.mubr.f32.mxu0 0.0
      %4643 = vmatmul.mubr.f32.gmra.mrb[0].mxu0 %v4478
      %v4644 = vpop.f32.mrb[0].mxu0
      %v4645 = vadd.f32 %v4556, %v4644
      %v4646 = vpop.f32.mrb[0].mxu0
      %v4647 = vadd.f32 %v4558, %v4646
      %4648 = vmatprep.mubr.f32.mxu0 0.0
      %4649 = vmatmul.mubr.f32.gmra.mrb[0].mxu0 %v4481
      %v4650 = vpop.f32.mrb[0].mxu0
      %v4651 = vadd.f32 %v4562, %v4650
      %v4652 = vpop.f32.mrb[0].mxu0
      %v4653 = vadd.f32 %v4564, %v4652
      %4654 = vmatprep.mubr.f32.mxu0 0.0
      %4655 = vmatmul.mubr.f32.gmra.mrb[0].mxu0 %v4484
      %v4656 = vpop.f32.mrb[0].mxu0
      %v4657 = vadd.f32 %v4568, %v4656
      %v4658 = vpop.f32.mrb[0].mxu0
      %v4659 = vadd.f32 %v4570, %v4658
      %4660 = vmatprep.mubr.f32.mxu0 0.0
      %4661 = vmatmul.mubr.f32.gmra.mrb[0].mxu0 %v4487
      %v4662 = vpop.f32.mrb[0].mxu0
      %v4663 = vadd.f32 %v4574, %v4662
      %v4664 = vpop.f32.mrb[0].mxu0
      %v4665 = vadd.f32 %v4576, %v4664
      %4666 = vdwg.mxu0
      %4667 = vmatprep.subr.mxu0 0.0
      %4668 = vmatpush1.msra.mxu0 %v4351
      %4669 = vmatprep.subr.mxu0 0.0
      %4670 = vmatpush1.msra.mxu0 %v4354
      %4671 = vmatprep.subr.mxu0 0.0
      %4672 = vmatpush1.msra.mxu0 %v4357
      %4673 = vmatprep.subr.mxu0 0.0
      %4674 = vmatpush1.msra.mxu0 %v4360
      %4675 = vmatprep.subr.mxu0 0.0
      %4676 = vmatpush1.msra.mxu0 %v4363
      %4677 = vmatprep.subr.mxu0 0.0
      %4678 = vmatpush1.msra.mxu0 %v4366
      %4679 = vmatprep.subr.mxu0 0.0
      %4680 = vmatpush1.msra.mxu0 %v4369
      %4681 = vmatprep.subr.mxu0 0.0
      %4682 = vmatpush1.msra.mxu0 %v4372
      %4683 = vmatprep.subr.mxu0 0.0
      %4684 = vmatpush1.msra.mxu0 %v4375
      %4685 = vmatprep.subr.mxu0 0.0
      %4686 = vmatpush1.msra.mxu0 %v4378
      %4687 = vmatprep.subr.mxu0 0.0
      %4688 = vmatpush1.msra.mxu0 %v4381
      %4689 = vmatprep.subr.mxu0 0.0
      %4690 = vmatpush1.msra.mxu0 %v4384
      %4691 = vmatprep.subr.mxu0 0.0
      %4692 = vmatpush1.msra.mxu0 %v4387
      %4693 = vmatprep.subr.mxu0 0.0
      %4694 = vmatpush1.msra.mxu0 %v4390
      %4695 = vmatprep.subr.mxu0 0.0
      %4696 = vmatpush1.msra.mxu0 %v4393
      %4697 = vmatprep.subr.mxu0 0.0
      %4698 = vmatpush1.msra.mxu0 %v4396
      %4699 = vmatprep.subr.mxu0 0.0
      %4700 = vmatpush1.msra.mxu0 %v4399
      %4701 = vmatprep.subr.mxu0 0.0
      %4702 = vmatpush1.msra.mxu0 %v4402
      %4703 = vmatprep.subr.mxu0 0.0
      %4704 = vmatpush1.msra.mxu0 %v4405
      %4705 = vmatprep.subr.mxu0 0.0
      %4706 = vmatpush1.msra.mxu0 %v4408
      %4707 = vmatprep.subr.mxu0 0.0
      %4708 = vmatpush1.msra.mxu0 %v4411
      %4709 = vmatprep.subr.mxu0 0.0
      %4710 = vmatpush1.msra.mxu0 %v4414
      %4711 = vmatprep.subr.mxu0 0.0
      %4712 = vmatpush1.msra.mxu0 %v4417
      %4713 = vmatprep.subr.mxu0 0.0
      %4714 = vmatpush1.msra.mxu0 %v4420
      %4715 = vmatprep.subr.mxu0 0.0
      %4716 = vmatpush1.msra.mxu0 %v4423
      %4717 = vmatprep.subr.mxu0 0.0
      %4718 = vmatpush1.msra.mxu0 %v4426
      %4719 = vmatprep.subr.mxu0 0.0
      %4720 = vmatpush1.msra.mxu0 %v4429
      %4721 = vmatprep.subr.mxu0 0.0
      %4722 = vmatpush1.msra.mxu0 %v4432
      %4723 = vmatprep.subr.mxu0 0.0
      %4724 = vmatpush1.msra.mxu0 %v4435
      %4725 = vmatprep.subr.mxu0 0.0
      %4726 = vmatpush1.msra.mxu0 %v4438
      %4727 = vmatprep.subr.mxu0 0.0
      %4728 = vmatpush1.msra.mxu0 %v4441
      %4729 = vmatprep.subr.mxu0 0.0
      %4730 = vmatpush1.msra.mxu0 %v4444
      %4731 = vmatprep.mubr.f32.mxu0 %v3509
      %4732 = vmatmul.mubr.f32.gmra.mrb[0].mxu0 %v3508
      %v4733 = vpop.f32.mrb[0].mxu0
      %v4734 = vadd.f32 %v4460, %v4733
      %v4735 = vpop.f32.mrb[0].mxu0
      %4736 = vmatprep.mubr.f32.mxu0 %v3512
      %4737 = vmatmul.mubr.f32.gmra.mrb[0].mxu0 %v3511
      %v4738 = vpop.f32.mrb[0].mxu0
      %v4739 = vadd.f32 %v4465, %v4738
      %v4740 = vpop.f32.mrb[0].mxu0
      %4741 = vmatprep.mubr.f32.mxu0 %v3515
      %4742 = vmatmul.mubr.f32.gmra.mrb[0].mxu0 %v3514
      %v4743 = vpop.f32.mrb[0].mxu0
      %v4744 = vadd.f32 %v4470, %v4743
      %v4745 = vpop.f32.mrb[0].mxu0
      %4746 = vmatprep.mubr.f32.mxu0 %v3518
      %4747 = vmatmul.mubr.f32.gmra.mrb[0].mxu0 %v3517
      %v4748 = vpop.f32.mrb[0].mxu0
      %v4749 = vadd.f32 %v4475, %v4748
      %v4750 = vpop.f32.mrb[0].mxu0
      %4751 = vdwg.mxu0
      %4752 = vmatprep.subr.mxu0 0.0
      %4753 = vmatpush1.msra.mxu0 %v4447
      %4754 = vmatprep.subr.mxu0 0.0
      %4755 = vmatpush1.msra.mxu0 %v4450
      %4756 = vmatprep.subr.mxu0 0.0
      %4757 = vmatpush1.msra.mxu0 %v4453
      %4758 = vmatprep.subr.mxu0 0.0
      %4759 = vmatpush1.msra.mxu0 %v4456
      %4760 = vmatprep.subr.mxu0 0.0
      %4761 = vmatpush1.msra.mxu0 0.0
      %4762 = vmatprep.subr.mxu0 0.0
      %4763 = vmatpush1.msra.mxu0 0.0
      %4764 = vmatprep.subr.mxu0 0.0
      %4765 = vmatpush1.msra.mxu0 0.0
      %4766 = vmatprep.subr.mxu0 0.0
      %4767 = vmatpush1.msra.mxu0 0.0
      %4768 = vmatprep.subr.mxu0 0.0
      %4769 = vmatpush1.msra.mxu0 0.0
      %4770 = vmatprep.subr.mxu0 0.0
      %4771 = vmatpush1.msra.mxu0 0.0
      %4772 = vmatprep.subr.mxu0 0.0
      %4773 = vmatpush1.msra.mxu0 0.0
      %4774 = vmatprep.subr.mxu0 0.0
      %4775 = vmatpush1.msra.mxu0 0.0
      %4776 = vmatprep.subr.mxu0 0.0
      %4777 = vmatpush1.msra.mxu0 0.0
      %4778 = vmatprep.subr.mxu0 0.0
      %4779 = vmatpush1.msra.mxu0 0.0
      %4780 = vmatprep.subr.mxu0 0.0
      %4781 = vmatpush1.msra.mxu0 0.0
      %4782 = vmatprep.subr.mxu0 0.0
      %4783 = vmatpush1.msra.mxu0 0.0
      %4784 = vmatprep.subr.mxu0 0.0
      %4785 = vmatpush1.msra.mxu0 0.0
      %4786 = vmatprep.subr.mxu0 0.0
      %4787 = vmatpush1.msra.mxu0 0.0
      %4788 = vmatprep.subr.mxu0 0.0
      %4789 = vmatpush1.msra.mxu0 0.0
      %4790 = vmatprep.subr.mxu0 0.0
      %4791 = vmatpush1.msra.mxu0 0.0
      %4792 = vmatprep.subr.mxu0 0.0
      %4793 = vmatpush1.msra.mxu0 0.0
      %4794 = vmatprep.subr.mxu0 0.0
      %4795 = vmatpush1.msra.mxu0 0.0
      %4796 = vmatprep.subr.mxu0 0.0
      %4797 = vmatpush1.msra.mxu0 0.0
      %4798 = vmatprep.subr.mxu0 0.0
      %4799 = vmatpush1.msra.mxu0 0.0
      %4800 = vmatprep.subr.mxu0 0.0
      %4801 = vmatpush1.msra.mxu0 0.0
      %4802 = vmatprep.subr.mxu0 0.0
      %4803 = vmatpush1.msra.mxu0 0.0
      %4804 = vmatprep.subr.mxu0 0.0
      %4805 = vmatpush1.msra.mxu0 0.0
      %4806 = vmatprep.subr.mxu0 0.0
      %4807 = vmatpush1.msra.mxu0 0.0
      %4808 = vmatprep.subr.mxu0 0.0
      %4809 = vmatpush1.msra.mxu0 0.0
      %4810 = vmatprep.subr.mxu0 0.0
      %4811 = vmatpush1.msra.mxu0 0.0
      %4812 = vmatprep.subr.mxu0 0.0
      %4813 = vmatpush1.msra.mxu0 0.0
      %4814 = vmatprep.subr.mxu0 0.0
      %4815 = vmatpush1.msra.mxu0 0.0
      %4816 = vmatprep.mubr.f32.mxu0 0.0
      %4817 = vmatmul.mubr.f32.gmra.mrb[0].mxu0 %v4478
      %v4818 = vpop.f32.mrb[0].mxu0
      %v4819 = vadd.f32 %v4734, %v4818
      %v4820 = vpop.f32.mrb[0].mxu0
      %4821 = vmatprep.mubr.f32.mxu0 0.0
      %4822 = vmatmul.mubr.f32.gmra.mrb[0].mxu0 %v4481
      %v4823 = vpop.f32.mrb[0].mxu0
      %v4824 = vadd.f32 %v4739, %v4823
      %v4825 = vpop.f32.mrb[0].mxu0
      %4826 = vmatprep.mubr.f32.mxu0 0.0
      %4827 = vmatmul.mubr.f32.gmra.mrb[0].mxu0 %v4484
      %v4828 = vpop.f32.mrb[0].mxu0
      %v4829 = vadd.f32 %v4744, %v4828
      %v4830 = vpop.f32.mrb[0].mxu0
      %4831 = vmatprep.mubr.f32.mxu0 0.0
      %4832 = vmatmul.mubr.f32.gmra.mrb[0].mxu0 %v4487
      %v4833 = vpop.f32.mrb[0].mxu0
      %v4834 = vadd.f32 %v4749, %v4833
      %v4835 = vpop.f32.mrb[0].mxu0
      %4836 = vdwg.mxu0
      %v4837 = vmax.f32 %v4645, 0.0
      %v4838 = vmax.f32 %v4647, 0.0
      %v4839 = vmax.f32 %v4819, 0.0
      %v4840 = vmax.f32 %v4651, 0.0
      %v4841 = vmax.f32 %v4653, 0.0
      %v4842 = vmax.f32 %v4824, 0.0
      %v4843 = vmax.f32 %v4657, 0.0
      %v4844 = vmax.f32 %v4659, 0.0
      %v4845 = vmax.f32 %v4829, 0.0
      %v4846 = vmax.f32 %v4663, 0.0
      %v4847 = vmax.f32 %v4665, 0.0
      %v4848 = vmax.f32 %v4834, 0.0
      %v4849 = vmul.f32 %v4837, %v739
      %v4850 = vmul.f32 %v4838, %v743
      %v4851 = vmul.f32 %v4839, %v747
      %v4852 = vmul.f32 %v4840, %v739
      %v4853 = vmul.f32 %v4841, %v743
      %v4854 = vmul.f32 %v4842, %v747
      %v4855 = vmul.f32 %v4843, %v739
      %v4856 = vmul.f32 %v4844, %v743
      %v4857 = vmul.f32 %v4845, %v747
      %v4858 = vmul.f32 %v4846, %v739
      %v4859 = vmul.f32 %v4847, %v743
      %v4860 = vmul.f32 %v4848, %v747
      %4861 = vst [vmem:[#allocation2 + $0x8] sm:$0xff] %v4849
      %4862 = vst [vmem:[#allocation2 + $0x10] sm:$0xff] %v4850
      %4863 = vst [vmem:[#allocation2 + $0x18] sm:$0xff] %v4851
      %4864 = vst [vmem:[#allocation2 + $0x30] sm:$0xff] %v4852
      %4865 = vst [vmem:[#allocation2 + $0x38] sm:$0xff] %v4853
      %4866 = vst [vmem:[#allocation2 + $0x40] sm:$0xff] %v4854
      %4867 = vst [vmem:[#allocation2 + $0x58] sm:$0xff] %v4855
      %4868 = vst [vmem:[#allocation2 + $0x60] sm:$0xff] %v4856
      %4869 = vst [vmem:[#allocation2 + $0x68] sm:$0xff] %v4857
      %4870 = vst [vmem:[#allocation2 + $0x80] sm:$0xff] %v4858
      %4871 = vst [vmem:[#allocation2 + $0x88] sm:$0xff] %v4859
      %4872 = vst [vmem:[#allocation2 + $0x90] sm:$0xff] %v4860
      %v4873 = vld [vmem:[%s3] sm:$0xff]
      %v4874 = vld [vmem:[%s3 + $0x8] sm:$0xff]
      %v4875 = vld [vmem:[%s3 + $0x10] sm:$0xff]
      %s4876 = scalar_lea.vmem %s4, 128
      %v4877 = vld [vmem:[%s4876] sm:$0xff]
      %v4878 = vld [vmem:[#allocation2] sm:$0xff]
      %v4879 = vld [vmem:[#allocation2 + $0x8] sm:$0xff]
      %v4880 = vld [vmem:[#allocation2 + $0x10] sm:$0xff]
      %v4881 = vld [vmem:[#allocation2 + $0x18] sm:$0xff]
      %v4882 = vld [vmem:[#allocation2 + $0x28] sm:$0xff]
      %v4883 = vld [vmem:[#allocation2 + $0x30] sm:$0xff]
      %v4884 = vld [vmem:[#allocation2 + $0x38] sm:$0xff]
      %v4885 = vld [vmem:[#allocation2 + $0x40] sm:$0xff]
      %v4886 = vld [vmem:[#allocation2 + $0x50] sm:$0xff]
      %v4887 = vld [vmem:[#allocation2 + $0x58] sm:$0xff]
      %v4888 = vld [vmem:[#allocation2 + $0x60] sm:$0xff]
      %v4889 = vld [vmem:[#allocation2 + $0x68] sm:$0xff]
      %v4890 = vld [vmem:[#allocation2 + $0x78] sm:$0xff]
      %v4891 = vld [vmem:[#allocation2 + $0x80] sm:$0xff]
      %v4892 = vld [vmem:[#allocation2 + $0x88] sm:$0xff]
      %v4893 = vld [vmem:[#allocation2 + $0x90] sm:$0xff]
      %4910 = vrot.lane.b32.xlu0 %v4878, 19
      %v4911 = vpop.permute.xlu0 %4910
      %4912 = vrot.lane.b32.xlu0 %v4879, 19
      %v4913 = vpop.permute.xlu0 %4912
      %4914 = vrot.lane.b32.xlu0 %v4880, 19
      %v4915 = vpop.permute.xlu0 %4914
      %4916 = vrot.lane.b32.xlu0 %v4881, 19
      %v4917 = vpop.permute.xlu0 %4916
      %4918 = vrot.lane.b32.xlu0 %v4882, 19
      %v4919 = vpop.permute.xlu0 %4918
      %4920 = vrot.lane.b32.xlu0 %v4883, 19
      %v4921 = vpop.permute.xlu0 %4920
      %4922 = vrot.lane.b32.xlu0 %v4884, 19
      %v4923 = vpop.permute.xlu0 %4922
      %4924 = vrot.lane.b32.xlu0 %v4885, 19
      %v4925 = vpop.permute.xlu0 %4924
      %4926 = vrot.lane.b32.xlu0 %v4886, 19
      %v4927 = vpop.permute.xlu0 %4926
      %4928 = vrot.lane.b32.xlu0 %v4887, 19
      %v4929 = vpop.permute.xlu0 %4928
      %4930 = vrot.lane.b32.xlu0 %v4888, 19
      %v4931 = vpop.permute.xlu0 %4930
      %4932 = vrot.lane.b32.xlu0 %v4889, 19
      %v4933 = vpop.permute.xlu0 %4932
      %4934 = vrot.lane.b32.xlu0 %v4890, 19
      %v4935 = vpop.permute.xlu0 %4934
      %4936 = vrot.lane.b32.xlu0 %v4891, 19
      %v4937 = vpop.permute.xlu0 %4936
      %4938 = vrot.lane.b32.xlu0 %v4892, 19
      %v4939 = vpop.permute.xlu0 %4938
      %4940 = vrot.lane.b32.xlu0 %v4893, 19
      %v4941 = vpop.permute.xlu0 %4940
      %v4942 = vsel %vm291, %v4911, %v4913
      %v4943 = vsel %vm291, %v4913, %v4915
      %v4944 = vsel %vm291, %v4915, %v4917
      %v4945 = vsel %vm291, %v4919, %v4921
      %v4946 = vsel %vm291, %v4921, %v4923
      %v4947 = vsel %vm291, %v4923, %v4925
      %v4948 = vsel %vm291, %v4927, %v4929
      %v4949 = vsel %vm291, %v4929, %v4931
      %v4950 = vsel %vm291, %v4931, %v4933
      %v4951 = vsel %vm291, %v4935, %v4937
      %v4952 = vsel %vm291, %v4937, %v4939
      %v4953 = vsel %vm291, %v4939, %v4941
      %4966 = vst [vmem:[#allocation3] sm:$0xff] %v4942
      %4967 = vst [vmem:[#allocation3 + $0x8] sm:$0xff] %v4943
      %4968 = vst [vmem:[#allocation3 + $0x10] sm:$0xff] %v4944
      %4969 = vst [vmem:[#allocation3 + $0x18] sm:$0xff] %v4945
      %4970 = vst [vmem:[#allocation3 + $0x20] sm:$0xff] %v4946
      %4971 = vst [vmem:[#allocation3 + $0x28] sm:$0xff] %v4947
      %4972 = vst [vmem:[#allocation3 + $0x30] sm:$0xff] %v4948
      %4973 = vst [vmem:[#allocation3 + $0x38] sm:$0xff] %v4949
      %4974 = vst [vmem:[#allocation3 + $0x40] sm:$0xff] %v4950
      %4975 = vst [vmem:[#allocation3 + $0x48] sm:$0xff] %v4951
      %4976 = vst [vmem:[#allocation3 + $0x50] sm:$0xff] %v4952
      %4977 = vst [vmem:[#allocation3 + $0x58] sm:$0xff] %v4953
      %v4978 = vld [vmem:[#allocation2] sm:$0xff]
      %v4979 = vld [vmem:[#allocation2 + $0x8] sm:$0xff]
      %v4980 = vld [vmem:[#allocation2 + $0x10] sm:$0xff]
      %v4981 = vld [vmem:[#allocation2 + $0x18] sm:$0xff]
      %v4982 = vld [vmem:[#allocation2 + $0x28] sm:$0xff]
      %v4983 = vld [vmem:[#allocation2 + $0x30] sm:$0xff]
      %v4984 = vld [vmem:[#allocation2 + $0x38] sm:$0xff]
      %v4985 = vld [vmem:[#allocation2 + $0x40] sm:$0xff]
      %v4986 = vld [vmem:[#allocation2 + $0x50] sm:$0xff]
      %v4987 = vld [vmem:[#allocation2 + $0x58] sm:$0xff]
      %v4988 = vld [vmem:[#allocation2 + $0x60] sm:$0xff]
      %v4989 = vld [vmem:[#allocation2 + $0x68] sm:$0xff]
      %v4990 = vld [vmem:[#allocation2 + $0x78] sm:$0xff]
      %v4991 = vld [vmem:[#allocation2 + $0x80] sm:$0xff]
      %v4992 = vld [vmem:[#allocation2 + $0x88] sm:$0xff]
      %v4993 = vld [vmem:[#allocation2 + $0x90] sm:$0xff]
      %5010 = vrot.lane.b32.xlu0 %v4978, 18
      %v5011 = vpop.permute.xlu0 %5010
      %5012 = vrot.lane.b32.xlu0 %v4979, 18
      %v5013 = vpop.permute.xlu0 %5012
      %5014 = vrot.lane.b32.xlu0 %v4980, 18
      %v5015 = vpop.permute.xlu0 %5014
      %5016 = vrot.lane.b32.xlu0 %v4981, 18
      %v5017 = vpop.permute.xlu0 %5016
      %5018 = vrot.lane.b32.xlu0 %v4982, 18
      %v5019 = vpop.permute.xlu0 %5018
      %5020 = vrot.lane.b32.xlu0 %v4983, 18
      %v5021 = vpop.permute.xlu0 %5020
      %5022 = vrot.lane.b32.xlu0 %v4984, 18
      %v5023 = vpop.permute.xlu0 %5022
      %5024 = vrot.lane.b32.xlu0 %v4985, 18
      %v5025 = vpop.permute.xlu0 %5024
      %5026 = vrot.lane.b32.xlu0 %v4986, 18
      %v5027 = vpop.permute.xlu0 %5026
      %5028 = vrot.lane.b32.xlu0 %v4987, 18
      %v5029 = vpop.permute.xlu0 %5028
      %5030 = vrot.lane.b32.xlu0 %v4988, 18
      %v5031 = vpop.permute.xlu0 %5030
      %5032 = vrot.lane.b32.xlu0 %v4989, 18
      %v5033 = vpop.permute.xlu0 %5032
      %5034 = vrot.lane.b32.xlu0 %v4990, 18
      %v5035 = vpop.permute.xlu0 %5034
      %5036 = vrot.lane.b32.xlu0 %v4991, 18
      %v5037 = vpop.permute.xlu0 %5036
      %5038 = vrot.lane.b32.xlu0 %v4992, 18
      %v5039 = vpop.permute.xlu0 %5038
      %5040 = vrot.lane.b32.xlu0 %v4993, 18
      %v5041 = vpop.permute.xlu0 %5040
      %v5042 = vsel %vm317, %v5011, %v5013
      %v5043 = vsel %vm317, %v5013, %v5015
      %v5044 = vsel %vm317, %v5015, %v5017
      %v5045 = vsel %vm317, %v5019, %v5021
      %v5046 = vsel %vm317, %v5021, %v5023
      %v5047 = vsel %vm317, %v5023, %v5025
      %v5048 = vsel %vm317, %v5027, %v5029
      %v5049 = vsel %vm317, %v5029, %v5031
      %v5050 = vsel %vm317, %v5031, %v5033
      %v5051 = vsel %vm317, %v5035, %v5037
      %v5052 = vsel %vm317, %v5037, %v5039
      %v5053 = vsel %vm317, %v5039, %v5041
      %5066 = vst [vmem:[#allocation3 + $0x60] sm:$0xff] %v5042
      %5067 = vst [vmem:[#allocation3 + $0x68] sm:$0xff] %v5043
      %5068 = vst [vmem:[#allocation3 + $0x70] sm:$0xff] %v5044
      %5069 = vst [vmem:[#allocation3 + $0x78] sm:$0xff] %v5045
      %5070 = vst [vmem:[#allocation3 + $0x80] sm:$0xff] %v5046
      %5071 = vst [vmem:[#allocation3 + $0x88] sm:$0xff] %v5047
      %5072 = vst [vmem:[#allocation3 + $0x90] sm:$0xff] %v5048
      %5073 = vst [vmem:[#allocation3 + $0x98] sm:$0xff] %v5049
      %5074 = vst [vmem:[#allocation3 + $0xa0] sm:$0xff] %v5050
      %5075 = vst [vmem:[#allocation3 + $0xa8] sm:$0xff] %v5051
      %5076 = vst [vmem:[#allocation3 + $0xb0] sm:$0xff] %v5052
      %5077 = vst [vmem:[#allocation3 + $0xb8] sm:$0xff] %v5053
      %v5078 = vld [vmem:[#allocation2] sm:$0xff]
      %v5079 = vld [vmem:[#allocation2 + $0x8] sm:$0xff]
      %v5080 = vld [vmem:[#allocation2 + $0x10] sm:$0xff]
      %v5081 = vld [vmem:[#allocation2 + $0x18] sm:$0xff]
      %v5082 = vld [vmem:[#allocation2 + $0x28] sm:$0xff]
      %v5083 = vld [vmem:[#allocation2 + $0x30] sm:$0xff]
      %v5084 = vld [vmem:[#allocation2 + $0x38] sm:$0xff]
      %v5085 = vld [vmem:[#allocation2 + $0x40] sm:$0xff]
      %v5086 = vld [vmem:[#allocation2 + $0x50] sm:$0xff]
      %v5087 = vld [vmem:[#allocation2 + $0x58] sm:$0xff]
      %v5088 = vld [vmem:[#allocation2 + $0x60] sm:$0xff]
      %v5089 = vld [vmem:[#allocation2 + $0x68] sm:$0xff]
      %v5090 = vld [vmem:[#allocation2 + $0x78] sm:$0xff]
      %v5091 = vld [vmem:[#allocation2 + $0x80] sm:$0xff]
      %v5092 = vld [vmem:[#allocation2 + $0x88] sm:$0xff]
      %v5093 = vld [vmem:[#allocation2 + $0x90] sm:$0xff]
      %5110 = vrot.lane.b32.xlu0 %v5078, 17
      %v5111 = vpop.permute.xlu0 %5110
      %5112 = vrot.lane.b32.xlu0 %v5079, 17
      %v5113 = vpop.permute.xlu0 %5112
      %5114 = vrot.lane.b32.xlu0 %v5080, 17
      %v5115 = vpop.permute.xlu0 %5114
      %5116 = vrot.lane.b32.xlu0 %v5081, 17
      %v5117 = vpop.permute.xlu0 %5116
      %5118 = vrot.lane.b32.xlu0 %v5082, 17
      %v5119 = vpop.permute.xlu0 %5118
      %5120 = vrot.lane.b32.xlu0 %v5083, 17
      %v5121 = vpop.permute.xlu0 %5120
      %5122 = vrot.lane.b32.xlu0 %v5084, 17
      %v5123 = vpop.permute.xlu0 %5122
      %5124 = vrot.lane.b32.xlu0 %v5085, 17
      %v5125 = vpop.permute.xlu0 %5124
      %5126 = vrot.lane.b32.xlu0 %v5086, 17
      %v5127 = vpop.permute.xlu0 %5126
      %5128 = vrot.lane.b32.xlu0 %v5087, 17
      %v5129 = vpop.permute.xlu0 %5128
      %5130 = vrot.lane.b32.xlu0 %v5088, 17
      %v5131 = vpop.permute.xlu0 %5130
      %5132 = vrot.lane.b32.xlu0 %v5089, 17
      %v5133 = vpop.permute.xlu0 %5132
      %5134 = vrot.lane.b32.xlu0 %v5090, 17
      %v5135 = vpop.permute.xlu0 %5134
      %5136 = vrot.lane.b32.xlu0 %v5091, 17
      %v5137 = vpop.permute.xlu0 %5136
      %5138 = vrot.lane.b32.xlu0 %v5092, 17
      %v5139 = vpop.permute.xlu0 %5138
      %5140 = vrot.lane.b32.xlu0 %v5093, 17
      %v5141 = vpop.permute.xlu0 %5140
      %v5142 = vsel %vm343, %v5111, %v5113
      %v5143 = vsel %vm343, %v5113, %v5115
      %v5144 = vsel %vm343, %v5115, %v5117
      %v5145 = vsel %vm343, %v5119, %v5121
      %v5146 = vsel %vm343, %v5121, %v5123
      %v5147 = vsel %vm343, %v5123, %v5125
      %v5148 = vsel %vm343, %v5127, %v5129
      %v5149 = vsel %vm343, %v5129, %v5131
      %v5150 = vsel %vm343, %v5131, %v5133
      %v5151 = vsel %vm343, %v5135, %v5137
      %v5152 = vsel %vm343, %v5137, %v5139
      %v5153 = vsel %vm343, %v5139, %v5141
      %5166 = vst [vmem:[#allocation3 + $0xc0] sm:$0xff] %v5142
      %5167 = vst [vmem:[#allocation3 + $0xc8] sm:$0xff] %v5143
      %5168 = vst [vmem:[#allocation3 + $0xd0] sm:$0xff] %v5144
      %5169 = vst [vmem:[#allocation3 + $0xd8] sm:$0xff] %v5145
      %5170 = vst [vmem:[#allocation3 + $0xe0] sm:$0xff] %v5146
      %5171 = vst [vmem:[#allocation3 + $0xe8] sm:$0xff] %v5147
      %5172 = vst [vmem:[#allocation3 + $0xf0] sm:$0xff] %v5148
      %5173 = vst [vmem:[#allocation3 + $0xf8] sm:$0xff] %v5149
      %5174 = vst [vmem:[#allocation3 + $0x100] sm:$0xff] %v5150
      %5175 = vst [vmem:[#allocation3 + $0x108] sm:$0xff] %v5151
      %5176 = vst [vmem:[#allocation3 + $0x110] sm:$0xff] %v5152
      %5177 = vst [vmem:[#allocation3 + $0x118] sm:$0xff] %v5153
      %v5178 = vld [vmem:[#allocation2] sm:$0xff]
      %v5179 = vld [vmem:[#allocation2 + $0x8] sm:$0xff]
      %v5180 = vld [vmem:[#allocation2 + $0x10] sm:$0xff]
      %v5181 = vld [vmem:[#allocation2 + $0x18] sm:$0xff]
      %v5182 = vld [vmem:[#allocation2 + $0x28] sm:$0xff]
      %v5183 = vld [vmem:[#allocation2 + $0x30] sm:$0xff]
      %v5184 = vld [vmem:[#allocation2 + $0x38] sm:$0xff]
      %v5185 = vld [vmem:[#allocation2 + $0x40] sm:$0xff]
      %v5186 = vld [vmem:[#allocation2 + $0x50] sm:$0xff]
      %v5187 = vld [vmem:[#allocation2 + $0x58] sm:$0xff]
      %v5188 = vld [vmem:[#allocation2 + $0x60] sm:$0xff]
      %v5189 = vld [vmem:[#allocation2 + $0x68] sm:$0xff]
      %v5190 = vld [vmem:[#allocation2 + $0x78] sm:$0xff]
      %v5191 = vld [vmem:[#allocation2 + $0x80] sm:$0xff]
      %v5192 = vld [vmem:[#allocation2 + $0x88] sm:$0xff]
      %v5193 = vld [vmem:[#allocation2 + $0x90] sm:$0xff]
      %5210 = vrot.lane.b32.xlu0 %v5178, 1
      %v5211 = vpop.permute.xlu0 %5210
      %5212 = vrot.lane.b32.xlu0 %v5179, 1
      %v5213 = vpop.permute.xlu0 %5212
      %5214 = vrot.lane.b32.xlu0 %v5180, 1
      %v5215 = vpop.permute.xlu0 %5214
      %5216 = vrot.lane.b32.xlu0 %v5181, 1
      %v5217 = vpop.permute.xlu0 %5216
      %5218 = vrot.lane.b32.xlu0 %v5182, 1
      %v5219 = vpop.permute.xlu0 %5218
      %5220 = vrot.lane.b32.xlu0 %v5183, 1
      %v5221 = vpop.permute.xlu0 %5220
      %5222 = vrot.lane.b32.xlu0 %v5184, 1
      %v5223 = vpop.permute.xlu0 %5222
      %5224 = vrot.lane.b32.xlu0 %v5185, 1
      %v5225 = vpop.permute.xlu0 %5224
      %5226 = vrot.lane.b32.xlu0 %v5186, 1
      %v5227 = vpop.permute.xlu0 %5226
      %5228 = vrot.lane.b32.xlu0 %v5187, 1
      %v5229 = vpop.permute.xlu0 %5228
      %5230 = vrot.lane.b32.xlu0 %v5188, 1
      %v5231 = vpop.permute.xlu0 %5230
      %5232 = vrot.lane.b32.xlu0 %v5189, 1
      %v5233 = vpop.permute.xlu0 %5232
      %5234 = vrot.lane.b32.xlu0 %v5190, 1
      %v5235 = vpop.permute.xlu0 %5234
      %5236 = vrot.lane.b32.xlu0 %v5191, 1
      %v5237 = vpop.permute.xlu0 %5236
      %5238 = vrot.lane.b32.xlu0 %v5192, 1
      %v5239 = vpop.permute.xlu0 %5238
      %5240 = vrot.lane.b32.xlu0 %v5193, 1
      %v5241 = vpop.permute.xlu0 %5240
      %v5242 = vsel %vm369, %v5211, %v5213
      %v5243 = vsel %vm369, %v5213, %v5215
      %v5244 = vsel %vm369, %v5215, %v5217
      %v5245 = vsel %vm369, %v5219, %v5221
      %v5246 = vsel %vm369, %v5221, %v5223
      %v5247 = vsel %vm369, %v5223, %v5225
      %v5248 = vsel %vm369, %v5227, %v5229
      %v5249 = vsel %vm369, %v5229, %v5231
      %v5250 = vsel %vm369, %v5231, %v5233
      %v5251 = vsel %vm369, %v5235, %v5237
      %v5252 = vsel %vm369, %v5237, %v5239
      %v5253 = vsel %vm369, %v5239, %v5241
      %5266 = vst [vmem:[#allocation3 + $0x120] sm:$0xff] %v5242
      %5267 = vst [vmem:[#allocation3 + $0x128] sm:$0xff] %v5243
      %5268 = vst [vmem:[#allocation3 + $0x130] sm:$0xff] %v5244
      %5269 = vst [vmem:[#allocation3 + $0x138] sm:$0xff] %v5245
      %5270 = vst [vmem:[#allocation3 + $0x140] sm:$0xff] %v5246
      %5271 = vst [vmem:[#allocation3 + $0x148] sm:$0xff] %v5247
      %5272 = vst [vmem:[#allocation3 + $0x150] sm:$0xff] %v5248
      %5273 = vst [vmem:[#allocation3 + $0x158] sm:$0xff] %v5249
      %5274 = vst [vmem:[#allocation3 + $0x160] sm:$0xff] %v5250
      %5275 = vst [vmem:[#allocation3 + $0x168] sm:$0xff] %v5251
      %5276 = vst [vmem:[#allocation3 + $0x170] sm:$0xff] %v5252
      %5277 = vst [vmem:[#allocation3 + $0x178] sm:$0xff] %v5253
      %v5278 = vld [vmem:[#allocation2 + $0x8] sm:$0xff]
      %v5279 = vld [vmem:[#allocation2 + $0x10] sm:$0xff]
      %v5280 = vld [vmem:[#allocation2 + $0x18] sm:$0xff]
      %v5281 = vld [vmem:[#allocation2 + $0x30] sm:$0xff]
      %v5282 = vld [vmem:[#allocation2 + $0x38] sm:$0xff]
      %v5283 = vld [vmem:[#allocation2 + $0x40] sm:$0xff]
      %v5284 = vld [vmem:[#allocation2 + $0x58] sm:$0xff]
      %v5285 = vld [vmem:[#allocation2 + $0x60] sm:$0xff]
      %v5286 = vld [vmem:[#allocation2 + $0x68] sm:$0xff]
      %v5287 = vld [vmem:[#allocation2 + $0x80] sm:$0xff]
      %v5288 = vld [vmem:[#allocation2 + $0x88] sm:$0xff]
      %v5289 = vld [vmem:[#allocation2 + $0x90] sm:$0xff]
      %5290 = vst [vmem:[#allocation3 + $0x180] sm:$0xff] %v5278
      %5291 = vst [vmem:[#allocation3 + $0x188] sm:$0xff] %v5279
      %5292 = vst [vmem:[#allocation3 + $0x190] sm:$0xff] %v5280
      %5293 = vst [vmem:[#allocation3 + $0x198] sm:$0xff] %v5281
      %5294 = vst [vmem:[#allocation3 + $0x1a0] sm:$0xff] %v5282
      %5295 = vst [vmem:[#allocation3 + $0x1a8] sm:$0xff] %v5283
      %5296 = vst [vmem:[#allocation3 + $0x1b0] sm:$0xff] %v5284
      %5297 = vst [vmem:[#allocation3 + $0x1b8] sm:$0xff] %v5285
      %5298 = vst [vmem:[#allocation3 + $0x1c0] sm:$0xff] %v5286
      %5299 = vst [vmem:[#allocation3 + $0x1c8] sm:$0xff] %v5287
      %5300 = vst [vmem:[#allocation3 + $0x1d0] sm:$0xff] %v5288
      %5301 = vst [vmem:[#allocation3 + $0x1d8] sm:$0xff] %v5289
      %v5302 = vld [vmem:[#allocation2 + $0x8] sm:$0xff]
      %v5303 = vld [vmem:[#allocation2 + $0x10] sm:$0xff]
      %v5304 = vld [vmem:[#allocation2 + $0x18] sm:$0xff]
      %v5305 = vld [vmem:[#allocation2 + $0x20] sm:$0xff]
      %v5306 = vld [vmem:[#allocation2 + $0x30] sm:$0xff]
      %v5307 = vld [vmem:[#allocation2 + $0x38] sm:$0xff]
      %v5308 = vld [vmem:[#allocation2 + $0x40] sm:$0xff]
      %v5309 = vld [vmem:[#allocation2 + $0x48] sm:$0xff]
      %v5310 = vld [vmem:[#allocation2 + $0x58] sm:$0xff]
      %v5311 = vld [vmem:[#allocation2 + $0x60] sm:$0xff]
      %v5312 = vld [vmem:[#allocation2 + $0x68] sm:$0xff]
      %v5313 = vld [vmem:[#allocation2 + $0x70] sm:$0xff]
      %v5314 = vld [vmem:[#allocation2 + $0x80] sm:$0xff]
      %v5315 = vld [vmem:[#allocation2 + $0x88] sm:$0xff]
      %v5316 = vld [vmem:[#allocation2 + $0x90] sm:$0xff]
      %v5317 = vld [vmem:[#allocation2 + $0x98] sm:$0xff]
      %5334 = vrot.lane.b32.xlu0 %v5302, 127
      %v5335 = vpop.permute.xlu0 %5334
      %5336 = vrot.lane.b32.xlu0 %v5303, 127
      %v5337 = vpop.permute.xlu0 %5336
      %5338 = vrot.lane.b32.xlu0 %v5304, 127
      %v5339 = vpop.permute.xlu0 %5338
      %5340 = vrot.lane.b32.xlu0 %v5305, 127
      %v5341 = vpop.permute.xlu0 %5340
      %5342 = vrot.lane.b32.xlu0 %v5306, 127
      %v5343 = vpop.permute.xlu0 %5342
      %5344 = vrot.lane.b32.xlu0 %v5307, 127
      %v5345 = vpop.permute.xlu0 %5344
      %5346 = vrot.lane.b32.xlu0 %v5308, 127
      %v5347 = vpop.permute.xlu0 %5346
      %5348 = vrot.lane.b32.xlu0 %v5309, 127
      %v5349 = vpop.permute.xlu0 %5348
      %5350 = vrot.lane.b32.xlu0 %v5310, 127
      %v5351 = vpop.permute.xlu0 %5350
      %5352 = vrot.lane.b32.xlu0 %v5311, 127
      %v5353 = vpop.permute.xlu0 %5352
      %5354 = vrot.lane.b32.xlu0 %v5312, 127
      %v5355 = vpop.permute.xlu0 %5354
      %5356 = vrot.lane.b32.xlu0 %v5313, 127
      %v5357 = vpop.permute.xlu0 %5356
      %5358 = vrot.lane.b32.xlu0 %v5314, 127
      %v5359 = vpop.permute.xlu0 %5358
      %5360 = vrot.lane.b32.xlu0 %v5315, 127
      %v5361 = vpop.permute.xlu0 %5360
      %5362 = vrot.lane.b32.xlu0 %v5316, 127
      %v5363 = vpop.permute.xlu0 %5362
      %5364 = vrot.lane.b32.xlu0 %v5317, 127
      %v5365 = vpop.permute.xlu0 %5364
      %v5366 = vsel %vm401, %v5335, %v5337
      %v5367 = vsel %vm401, %v5337, %v5339
      %v5368 = vsel %vm401, %v5339, %v5341
      %v5369 = vsel %vm401, %v5343, %v5345
      %v5370 = vsel %vm401, %v5345, %v5347
      %v5371 = vsel %vm401, %v5347, %v5349
      %v5372 = vsel %vm401, %v5351, %v5353
      %v5373 = vsel %vm401, %v5353, %v5355
      %v5374 = vsel %vm401, %v5355, %v5357
      %v5375 = vsel %vm401, %v5359, %v5361
      %v5376 = vsel %vm401, %v5361, %v5363
      %v5377 = vsel %vm401, %v5363, %v5365
      %5390 = vst [vmem:[#allocation3 + $0x1e0] sm:$0xff] %v5366
      %5391 = vst [vmem:[#allocation3 + $0x1e8] sm:$0xff] %v5367
      %5392 = vst [vmem:[#allocation3 + $0x1f0] sm:$0xff] %v5368
      %5393 = vst [vmem:[#allocation3 + $0x1f8] sm:$0xff] %v5369
      %5394 = vst [vmem:[#allocation3 + $0x200] sm:$0xff] %v5370
      %5395 = vst [vmem:[#allocation3 + $0x208] sm:$0xff] %v5371
      %5396 = vst [vmem:[#allocation3 + $0x210] sm:$0xff] %v5372
      %5397 = vst [vmem:[#allocation3 + $0x218] sm:$0xff] %v5373
      %5398 = vst [vmem:[#allocation3 + $0x220] sm:$0xff] %v5374
      %5399 = vst [vmem:[#allocation3 + $0x228] sm:$0xff] %v5375
      %5400 = vst [vmem:[#allocation3 + $0x230] sm:$0xff] %v5376
      %5401 = vst [vmem:[#allocation3 + $0x238] sm:$0xff] %v5377
      %v5402 = vld [vmem:[#allocation2 + $0x8] sm:$0xff]
      %v5403 = vld [vmem:[#allocation2 + $0x10] sm:$0xff]
      %v5404 = vld [vmem:[#allocation2 + $0x18] sm:$0xff]
      %v5405 = vld [vmem:[#allocation2 + $0x20] sm:$0xff]
      %v5406 = vld [vmem:[#allocation2 + $0x30] sm:$0xff]
      %v5407 = vld [vmem:[#allocation2 + $0x38] sm:$0xff]
      %v5408 = vld [vmem:[#allocation2 + $0x40] sm:$0xff]
      %v5409 = vld [vmem:[#allocation2 + $0x48] sm:$0xff]
      %v5410 = vld [vmem:[#allocation2 + $0x58] sm:$0xff]
      %v5411 = vld [vmem:[#allocation2 + $0x60] sm:$0xff]
      %v5412 = vld [vmem:[#allocation2 + $0x68] sm:$0xff]
      %v5413 = vld [vmem:[#allocation2 + $0x70] sm:$0xff]
      %v5414 = vld [vmem:[#allocation2 + $0x80] sm:$0xff]
      %v5415 = vld [vmem:[#allocation2 + $0x88] sm:$0xff]
      %v5416 = vld [vmem:[#allocation2 + $0x90] sm:$0xff]
      %v5417 = vld [vmem:[#allocation2 + $0x98] sm:$0xff]
      %5434 = vrot.lane.b32.xlu0 %v5402, 111
      %v5435 = vpop.permute.xlu0 %5434
      %5436 = vrot.lane.b32.xlu0 %v5403, 111
      %v5437 = vpop.permute.xlu0 %5436
      %5438 = vrot.lane.b32.xlu0 %v5404, 111
      %v5439 = vpop.permute.xlu0 %5438
      %5440 = vrot.lane.b32.xlu0 %v5405, 111
      %v5441 = vpop.permute.xlu0 %5440
      %5442 = vrot.lane.b32.xlu0 %v5406, 111
      %v5443 = vpop.permute.xlu0 %5442
      %5444 = vrot.lane.b32.xlu0 %v5407, 111
      %v5445 = vpop.permute.xlu0 %5444
      %5446 = vrot.lane.b32.xlu0 %v5408, 111
      %v5447 = vpop.permute.xlu0 %5446
      %5448 = vrot.lane.b32.xlu0 %v5409, 111
      %v5449 = vpop.permute.xlu0 %5448
      %5450 = vrot.lane.b32.xlu0 %v5410, 111
      %v5451 = vpop.permute.xlu0 %5450
      %5452 = vrot.lane.b32.xlu0 %v5411, 111
      %v5453 = vpop.permute.xlu0 %5452
      %5454 = vrot.lane.b32.xlu0 %v5412, 111
      %v5455 = vpop.permute.xlu0 %5454
      %5456 = vrot.lane.b32.xlu0 %v5413, 111
      %v5457 = vpop.permute.xlu0 %5456
      %5458 = vrot.lane.b32.xlu0 %v5414, 111
      %v5459 = vpop.permute.xlu0 %5458
      %5460 = vrot.lane.b32.xlu0 %v5415, 111
      %v5461 = vpop.permute.xlu0 %5460
      %5462 = vrot.lane.b32.xlu0 %v5416, 111
      %v5463 = vpop.permute.xlu0 %5462
      %5464 = vrot.lane.b32.xlu0 %v5417, 111
      %v5465 = vpop.permute.xlu0 %5464
      %v5466 = vsel %vm427, %v5435, %v5437
      %v5467 = vsel %vm427, %v5437, %v5439
      %v5468 = vsel %vm427, %v5439, %v5441
      %v5469 = vsel %vm427, %v5443, %v5445
      %v5470 = vsel %vm427, %v5445, %v5447
      %v5471 = vsel %vm427, %v5447, %v5449
      %v5472 = vsel %vm427, %v5451, %v5453
      %v5473 = vsel %vm427, %v5453, %v5455
      %v5474 = vsel %vm427, %v5455, %v5457
      %v5475 = vsel %vm427, %v5459, %v5461
      %v5476 = vsel %vm427, %v5461, %v5463
      %v5477 = vsel %vm427, %v5463, %v5465
      %5490 = vst [vmem:[#allocation3 + $0x240] sm:$0xff] %v5466
      %5491 = vst [vmem:[#allocation3 + $0x248] sm:$0xff] %v5467
      %5492 = vst [vmem:[#allocation3 + $0x250] sm:$0xff] %v5468
      %5493 = vst [vmem:[#allocation3 + $0x258] sm:$0xff] %v5469
      %5494 = vst [vmem:[#allocation3 + $0x260] sm:$0xff] %v5470
      %5495 = vst [vmem:[#allocation3 + $0x268] sm:$0xff] %v5471
      %5496 = vst [vmem:[#allocation3 + $0x270] sm:$0xff] %v5472
      %5497 = vst [vmem:[#allocation3 + $0x278] sm:$0xff] %v5473
      %5498 = vst [vmem:[#allocation3 + $0x280] sm:$0xff] %v5474
      %5499 = vst [vmem:[#allocation3 + $0x288] sm:$0xff] %v5475
      %5500 = vst [vmem:[#allocation3 + $0x290] sm:$0xff] %v5476
      %5501 = vst [vmem:[#allocation3 + $0x298] sm:$0xff] %v5477
      %v5502 = vld [vmem:[#allocation2 + $0x8] sm:$0xff]
      %v5503 = vld [vmem:[#allocation2 + $0x10] sm:$0xff]
      %v5504 = vld [vmem:[#allocation2 + $0x18] sm:$0xff]
      %v5505 = vld [vmem:[#allocation2 + $0x20] sm:$0xff]
      %v5506 = vld [vmem:[#allocation2 + $0x30] sm:$0xff]
      %v5507 = vld [vmem:[#allocation2 + $0x38] sm:$0xff]
      %v5508 = vld [vmem:[#allocation2 + $0x40] sm:$0xff]
      %v5509 = vld [vmem:[#allocation2 + $0x48] sm:$0xff]
      %v5510 = vld [vmem:[#allocation2 + $0x58] sm:$0xff]
      %v5511 = vld [vmem:[#allocation2 + $0x60] sm:$0xff]
      %v5512 = vld [vmem:[#allocation2 + $0x68] sm:$0xff]
      %v5513 = vld [vmem:[#allocation2 + $0x70] sm:$0xff]
      %v5514 = vld [vmem:[#allocation2 + $0x80] sm:$0xff]
      %v5515 = vld [vmem:[#allocation2 + $0x88] sm:$0xff]
      %v5516 = vld [vmem:[#allocation2 + $0x90] sm:$0xff]
      %v5517 = vld [vmem:[#allocation2 + $0x98] sm:$0xff]
      %5534 = vrot.lane.b32.xlu0 %v5502, 110
      %v5535 = vpop.permute.xlu0 %5534
      %5536 = vrot.lane.b32.xlu0 %v5503, 110
      %v5537 = vpop.permute.xlu0 %5536
      %5538 = vrot.lane.b32.xlu0 %v5504, 110
      %v5539 = vpop.permute.xlu0 %5538
      %5540 = vrot.lane.b32.xlu0 %v5505, 110
      %v5541 = vpop.permute.xlu0 %5540
      %5542 = vrot.lane.b32.xlu0 %v5506, 110
      %v5543 = vpop.permute.xlu0 %5542
      %5544 = vrot.lane.b32.xlu0 %v5507, 110
      %v5545 = vpop.permute.xlu0 %5544
      %5546 = vrot.lane.b32.xlu0 %v5508, 110
      %v5547 = vpop.permute.xlu0 %5546
      %5548 = vrot.lane.b32.xlu0 %v5509, 110
      %v5549 = vpop.permute.xlu0 %5548
      %5550 = vrot.lane.b32.xlu0 %v5510, 110
      %v5551 = vpop.permute.xlu0 %5550
      %5552 = vrot.lane.b32.xlu0 %v5511, 110
      %v5553 = vpop.permute.xlu0 %5552
      %5554 = vrot.lane.b32.xlu0 %v5512, 110
      %v5555 = vpop.permute.xlu0 %5554
      %5556 = vrot.lane.b32.xlu0 %v5513, 110
      %v5557 = vpop.permute.xlu0 %5556
      %5558 = vrot.lane.b32.xlu0 %v5514, 110
      %v5559 = vpop.permute.xlu0 %5558
      %5560 = vrot.lane.b32.xlu0 %v5515, 110
      %v5561 = vpop.permute.xlu0 %5560
      %5562 = vrot.lane.b32.xlu0 %v5516, 110
      %v5563 = vpop.permute.xlu0 %5562
      %5564 = vrot.lane.b32.xlu0 %v5517, 110
      %v5565 = vpop.permute.xlu0 %5564
      %v5566 = vsel %vm453, %v5535, %v5537
      %v5567 = vsel %vm453, %v5537, %v5539
      %v5568 = vsel %vm453, %v5539, %v5541
      %v5569 = vsel %vm453, %v5543, %v5545
      %v5570 = vsel %vm453, %v5545, %v5547
      %v5571 = vsel %vm453, %v5547, %v5549
      %v5572 = vsel %vm453, %v5551, %v5553
      %v5573 = vsel %vm453, %v5553, %v5555
      %v5574 = vsel %vm453, %v5555, %v5557
      %v5575 = vsel %vm453, %v5559, %v5561
      %v5576 = vsel %vm453, %v5561, %v5563
      %v5577 = vsel %vm453, %v5563, %v5565
      %5590 = vst [vmem:[#allocation3 + $0x2a0] sm:$0xff] %v5566
      %5591 = vst [vmem:[#allocation3 + $0x2a8] sm:$0xff] %v5567
      %5592 = vst [vmem:[#allocation3 + $0x2b0] sm:$0xff] %v5568
      %5593 = vst [vmem:[#allocation3 + $0x2b8] sm:$0xff] %v5569
      %5594 = vst [vmem:[#allocation3 + $0x2c0] sm:$0xff] %v5570
      %5595 = vst [vmem:[#allocation3 + $0x2c8] sm:$0xff] %v5571
      %5596 = vst [vmem:[#allocation3 + $0x2d0] sm:$0xff] %v5572
      %5597 = vst [vmem:[#allocation3 + $0x2d8] sm:$0xff] %v5573
      %5598 = vst [vmem:[#allocation3 + $0x2e0] sm:$0xff] %v5574
      %5599 = vst [vmem:[#allocation3 + $0x2e8] sm:$0xff] %v5575
      %5600 = vst [vmem:[#allocation3 + $0x2f0] sm:$0xff] %v5576
      %5601 = vst [vmem:[#allocation3 + $0x2f8] sm:$0xff] %v5577
      %v5602 = vld [vmem:[#allocation2 + $0x8] sm:$0xff]
      %v5603 = vld [vmem:[#allocation2 + $0x10] sm:$0xff]
      %v5604 = vld [vmem:[#allocation2 + $0x18] sm:$0xff]
      %v5605 = vld [vmem:[#allocation2 + $0x20] sm:$0xff]
      %v5606 = vld [vmem:[#allocation2 + $0x30] sm:$0xff]
      %v5607 = vld [vmem:[#allocation2 + $0x38] sm:$0xff]
      %v5608 = vld [vmem:[#allocation2 + $0x40] sm:$0xff]
      %v5609 = vld [vmem:[#allocation2 + $0x48] sm:$0xff]
      %v5610 = vld [vmem:[#allocation2 + $0x58] sm:$0xff]
      %v5611 = vld [vmem:[#allocation2 + $0x60] sm:$0xff]
      %v5612 = vld [vmem:[#allocation2 + $0x68] sm:$0xff]
      %v5613 = vld [vmem:[#allocation2 + $0x70] sm:$0xff]
      %v5614 = vld [vmem:[#allocation2 + $0x80] sm:$0xff]
      %v5615 = vld [vmem:[#allocation2 + $0x88] sm:$0xff]
      %v5616 = vld [vmem:[#allocation2 + $0x90] sm:$0xff]
      %v5617 = vld [vmem:[#allocation2 + $0x98] sm:$0xff]
      %5634 = vrot.lane.b32.xlu0 %v5602, 109
      %v5635 = vpop.permute.xlu0 %5634
      %5636 = vrot.lane.b32.xlu0 %v5603, 109
      %v5637 = vpop.permute.xlu0 %5636
      %5638 = vrot.lane.b32.xlu0 %v5604, 109
      %v5639 = vpop.permute.xlu0 %5638
      %5640 = vrot.lane.b32.xlu0 %v5605, 109
      %v5641 = vpop.permute.xlu0 %5640
      %5642 = vrot.lane.b32.xlu0 %v5606, 109
      %v5643 = vpop.permute.xlu0 %5642
      %5644 = vrot.lane.b32.xlu0 %v5607, 109
      %v5645 = vpop.permute.xlu0 %5644
      %5646 = vrot.lane.b32.xlu0 %v5608, 109
      %v5647 = vpop.permute.xlu0 %5646
      %5648 = vrot.lane.b32.xlu0 %v5609, 109
      %v5649 = vpop.permute.xlu0 %5648
      %5650 = vrot.lane.b32.xlu0 %v5610, 109
      %v5651 = vpop.permute.xlu0 %5650
      %5652 = vrot.lane.b32.xlu0 %v5611, 109
      %v5653 = vpop.permute.xlu0 %5652
      %5654 = vrot.lane.b32.xlu0 %v5612, 109
      %v5655 = vpop.permute.xlu0 %5654
      %5656 = vrot.lane.b32.xlu0 %v5613, 109
      %v5657 = vpop.permute.xlu0 %5656
      %5658 = vrot.lane.b32.xlu0 %v5614, 109
      %v5659 = vpop.permute.xlu0 %5658
      %5660 = vrot.lane.b32.xlu0 %v5615, 109
      %v5661 = vpop.permute.xlu0 %5660
      %5662 = vrot.lane.b32.xlu0 %v5616, 109
      %v5663 = vpop.permute.xlu0 %5662
      %5664 = vrot.lane.b32.xlu0 %v5617, 109
      %v5665 = vpop.permute.xlu0 %5664
      %v5666 = vsel %vm479, %v5635, %v5637
      %v5667 = vsel %vm479, %v5637, %v5639
      %v5668 = vsel %vm479, %v5639, %v5641
      %v5669 = vsel %vm479, %v5643, %v5645
      %v5670 = vsel %vm479, %v5645, %v5647
      %v5671 = vsel %vm479, %v5647, %v5649
      %v5672 = vsel %vm479, %v5651, %v5653
      %v5673 = vsel %vm479, %v5653, %v5655
      %v5674 = vsel %vm479, %v5655, %v5657
      %v5675 = vsel %vm479, %v5659, %v5661
      %v5676 = vsel %vm479, %v5661, %v5663
      %v5677 = vsel %vm479, %v5663, %v5665
      %5690 = vst [vmem:[#allocation3 + $0x300] sm:$0xff] %v5666
      %5691 = vst [vmem:[#allocation3 + $0x308] sm:$0xff] %v5667
      %5692 = vst [vmem:[#allocation3 + $0x310] sm:$0xff] %v5668
      %5693 = vst [vmem:[#allocation3 + $0x318] sm:$0xff] %v5669
      %5694 = vst [vmem:[#allocation3 + $0x320] sm:$0xff] %v5670
      %5695 = vst [vmem:[#allocation3 + $0x328] sm:$0xff] %v5671
      %5696 = vst [vmem:[#allocation3 + $0x330] sm:$0xff] %v5672
      %5697 = vst [vmem:[#allocation3 + $0x338] sm:$0xff] %v5673
      %5698 = vst [vmem:[#allocation3 + $0x340] sm:$0xff] %v5674
      %5699 = vst [vmem:[#allocation3 + $0x348] sm:$0xff] %v5675
      %5700 = vst [vmem:[#allocation3 + $0x350] sm:$0xff] %v5676
      %5701 = vst [vmem:[#allocation3 + $0x358] sm:$0xff] %v5677
      %v5702 = vld [vmem:[#allocation3] sm:$0xff]
      %v5703 = vld [vmem:[#allocation3 + $0x8] sm:$0xff]
      %v5704 = vld [vmem:[#allocation3 + $0x10] sm:$0xff]
      %v5705 = vld [vmem:[#allocation3 + $0x18] sm:$0xff]
      %v5706 = vld [vmem:[#allocation3 + $0x20] sm:$0xff]
      %v5707 = vld [vmem:[#allocation3 + $0x28] sm:$0xff]
      %v5708 = vld [vmem:[#allocation3 + $0x30] sm:$0xff]
      %v5709 = vld [vmem:[#allocation3 + $0x38] sm:$0xff]
      %v5710 = vld [vmem:[#allocation3 + $0x40] sm:$0xff]
      %v5711 = vld [vmem:[#allocation3 + $0x48] sm:$0xff]
      %v5712 = vld [vmem:[#allocation3 + $0x50] sm:$0xff]
      %v5713 = vld [vmem:[#allocation3 + $0x58] sm:$0xff]
      %v5714 = vld [vmem:[#allocation3 + $0x60] sm:$0xff]
      %v5715 = vld [vmem:[#allocation3 + $0x68] sm:$0xff]
      %v5716 = vld [vmem:[#allocation3 + $0x70] sm:$0xff]
      %v5717 = vld [vmem:[#allocation3 + $0x78] sm:$0xff]
      %v5718 = vld [vmem:[#allocation3 + $0x80] sm:$0xff]
      %v5719 = vld [vmem:[#allocation3 + $0x88] sm:$0xff]
      %v5720 = vld [vmem:[#allocation3 + $0x90] sm:$0xff]
      %v5721 = vld [vmem:[#allocation3 + $0x98] sm:$0xff]
      %v5722 = vld [vmem:[#allocation3 + $0xa0] sm:$0xff]
      %v5723 = vld [vmem:[#allocation3 + $0xa8] sm:$0xff]
      %v5724 = vld [vmem:[#allocation3 + $0xb0] sm:$0xff]
      %v5725 = vld [vmem:[#allocation3 + $0xb8] sm:$0xff]
      %v5726 = vld [vmem:[#allocation3 + $0xc0] sm:$0xff]
      %v5727 = vld [vmem:[#allocation3 + $0xc8] sm:$0xff]
      %v5728 = vld [vmem:[#allocation3 + $0xd0] sm:$0xff]
      %v5729 = vld [vmem:[#allocation3 + $0xd8] sm:$0xff]
      %v5730 = vld [vmem:[#allocation3 + $0xe0] sm:$0xff]
      %v5731 = vld [vmem:[#allocation3 + $0xe8] sm:$0xff]
      %v5732 = vld [vmem:[#allocation3 + $0xf0] sm:$0xff]
      %v5733 = vld [vmem:[#allocation3 + $0xf8] sm:$0xff]
      %v5734 = vld [vmem:[#allocation3 + $0x100] sm:$0xff]
      %v5735 = vld [vmem:[#allocation3 + $0x108] sm:$0xff]
      %v5736 = vld [vmem:[#allocation3 + $0x110] sm:$0xff]
      %v5737 = vld [vmem:[#allocation3 + $0x118] sm:$0xff]
      %v5738 = vld [vmem:[#allocation3 + $0x120] sm:$0xff]
      %v5739 = vld [vmem:[#allocation3 + $0x128] sm:$0xff]
      %v5740 = vld [vmem:[#allocation3 + $0x130] sm:$0xff]
      %v5741 = vld [vmem:[#allocation3 + $0x138] sm:$0xff]
      %v5742 = vld [vmem:[#allocation3 + $0x140] sm:$0xff]
      %v5743 = vld [vmem:[#allocation3 + $0x148] sm:$0xff]
      %v5744 = vld [vmem:[#allocation3 + $0x150] sm:$0xff]
      %v5745 = vld [vmem:[#allocation3 + $0x158] sm:$0xff]
      %v5746 = vld [vmem:[#allocation3 + $0x160] sm:$0xff]
      %v5747 = vld [vmem:[#allocation3 + $0x168] sm:$0xff]
      %v5748 = vld [vmem:[#allocation3 + $0x170] sm:$0xff]
      %v5749 = vld [vmem:[#allocation3 + $0x178] sm:$0xff]
      %v5750 = vld [vmem:[#allocation3 + $0x180] sm:$0xff]
      %v5751 = vld [vmem:[#allocation3 + $0x188] sm:$0xff]
      %v5752 = vld [vmem:[#allocation3 + $0x190] sm:$0xff]
      %v5753 = vld [vmem:[#allocation3 + $0x198] sm:$0xff]
      %v5754 = vld [vmem:[#allocation3 + $0x1a0] sm:$0xff]
      %v5755 = vld [vmem:[#allocation3 + $0x1a8] sm:$0xff]
      %v5756 = vld [vmem:[#allocation3 + $0x1b0] sm:$0xff]
      %v5757 = vld [vmem:[#allocation3 + $0x1b8] sm:$0xff]
      %v5758 = vld [vmem:[#allocation3 + $0x1c0] sm:$0xff]
      %v5759 = vld [vmem:[#allocation3 + $0x1c8] sm:$0xff]
      %v5760 = vld [vmem:[#allocation3 + $0x1d0] sm:$0xff]
      %v5761 = vld [vmem:[#allocation3 + $0x1d8] sm:$0xff]
      %v5762 = vld [vmem:[#allocation3 + $0x1e0] sm:$0xff]
      %v5763 = vld [vmem:[#allocation3 + $0x1e8] sm:$0xff]
      %v5764 = vld [vmem:[#allocation3 + $0x1f0] sm:$0xff]
      %v5765 = vld [vmem:[#allocation3 + $0x1f8] sm:$0xff]
      %v5766 = vld [vmem:[#allocation3 + $0x200] sm:$0xff]
      %v5767 = vld [vmem:[#allocation3 + $0x208] sm:$0xff]
      %v5768 = vld [vmem:[#allocation3 + $0x210] sm:$0xff]
      %v5769 = vld [vmem:[#allocation3 + $0x218] sm:$0xff]
      %v5770 = vld [vmem:[#allocation3 + $0x220] sm:$0xff]
      %v5771 = vld [vmem:[#allocation3 + $0x228] sm:$0xff]
      %v5772 = vld [vmem:[#allocation3 + $0x230] sm:$0xff]
      %v5773 = vld [vmem:[#allocation3 + $0x238] sm:$0xff]
      %v5774 = vld [vmem:[#allocation3 + $0x240] sm:$0xff]
      %v5775 = vld [vmem:[#allocation3 + $0x248] sm:$0xff]
      %v5776 = vld [vmem:[#allocation3 + $0x250] sm:$0xff]
      %v5777 = vld [vmem:[#allocation3 + $0x258] sm:$0xff]
      %v5778 = vld [vmem:[#allocation3 + $0x260] sm:$0xff]
      %v5779 = vld [vmem:[#allocation3 + $0x268] sm:$0xff]
      %v5780 = vld [vmem:[#allocation3 + $0x270] sm:$0xff]
      %v5781 = vld [vmem:[#allocation3 + $0x278] sm:$0xff]
      %v5782 = vld [vmem:[#allocation3 + $0x280] sm:$0xff]
      %v5783 = vld [vmem:[#allocation3 + $0x288] sm:$0xff]
      %v5784 = vld [vmem:[#allocation3 + $0x290] sm:$0xff]
      %v5785 = vld [vmem:[#allocation3 + $0x298] sm:$0xff]
      %v5786 = vld [vmem:[#allocation3 + $0x2a0] sm:$0xff]
      %v5787 = vld [vmem:[#allocation3 + $0x2a8] sm:$0xff]
      %v5788 = vld [vmem:[#allocation3 + $0x2b0] sm:$0xff]
      %v5789 = vld [vmem:[#allocation3 + $0x2b8] sm:$0xff]
      %v5790 = vld [vmem:[#allocation3 + $0x2c0] sm:$0xff]
      %v5791 = vld [vmem:[#allocation3 + $0x2c8] sm:$0xff]
      %v5792 = vld [vmem:[#allocation3 + $0x2d0] sm:$0xff]
      %v5793 = vld [vmem:[#allocation3 + $0x2d8] sm:$0xff]
      %v5794 = vld [vmem:[#allocation3 + $0x2e0] sm:$0xff]
      %v5795 = vld [vmem:[#allocation3 + $0x2e8] sm:$0xff]
      %v5796 = vld [vmem:[#allocation3 + $0x2f0] sm:$0xff]
      %v5797 = vld [vmem:[#allocation3 + $0x2f8] sm:$0xff]
      %v5798 = vld [vmem:[#allocation3 + $0x300] sm:$0xff]
      %v5799 = vld [vmem:[#allocation3 + $0x308] sm:$0xff]
      %v5800 = vld [vmem:[#allocation3 + $0x310] sm:$0xff]
      %v5801 = vld [vmem:[#allocation3 + $0x318] sm:$0xff]
      %v5802 = vld [vmem:[#allocation3 + $0x320] sm:$0xff]
      %v5803 = vld [vmem:[#allocation3 + $0x328] sm:$0xff]
      %v5804 = vld [vmem:[#allocation3 + $0x330] sm:$0xff]
      %v5805 = vld [vmem:[#allocation3 + $0x338] sm:$0xff]
      %v5806 = vld [vmem:[#allocation3 + $0x340] sm:$0xff]
      %v5807 = vld [vmem:[#allocation3 + $0x348] sm:$0xff]
      %v5808 = vld [vmem:[#allocation3 + $0x350] sm:$0xff]
      %v5809 = vld [vmem:[#allocation3 + $0x358] sm:$0xff]
      %5811 = vset.pattern.permute.xlu0 0
      %5812 = vperm.xlu0 %5811, %v4877
      %v5813 = vpop.permute.xlu0 %5812
      %v5816 = vsel %vm1744, %v4875, 0
      %5818 = vmatprep.subr.mxu0 %v5703
      %5819 = vmatpush1.msra.mxu0 %v5702
      %5820 = vmatprep.subr.mxu0 %v5706
      %5821 = vmatpush1.msra.mxu0 %v5705
      %5822 = vmatprep.subr.mxu0 %v5709
      %5823 = vmatpush1.msra.mxu0 %v5708
      %5824 = vmatprep.subr.mxu0 %v5712
      %5825 = vmatpush1.msra.mxu0 %v5711
      %5826 = vmatprep.subr.mxu0 %v5715
      %5827 = vmatpush1.msra.mxu0 %v5714
      %5828 = vmatprep.subr.mxu0 %v5718
      %5829 = vmatpush1.msra.mxu0 %v5717
      %5830 = vmatprep.subr.mxu0 %v5721
      %5831 = vmatpush1.msra.mxu0 %v5720
      %5832 = vmatprep.subr.mxu0 %v5724
      %5833 = vmatpush1.msra.mxu0 %v5723
      %5834 = vmatprep.subr.mxu0 %v5727
      %5835 = vmatpush1.msra.mxu0 %v5726
      %5836 = vmatprep.subr.mxu0 %v5730
      %5837 = vmatpush1.msra.mxu0 %v5729
      %5838 = vmatprep.subr.mxu0 %v5733
      %5839 = vmatpush1.msra.mxu0 %v5732
      %5840 = vmatprep.subr.mxu0 %v5736
      %5841 = vmatpush1.msra.mxu0 %v5735
      %5842 = vmatprep.subr.mxu0 %v5739
      %5843 = vmatpush1.msra.mxu0 %v5738
      %5844 = vmatprep.subr.mxu0 %v5742
      %5845 = vmatpush1.msra.mxu0 %v5741
      %5846 = vmatprep.subr.mxu0 %v5745
      %5847 = vmatpush1.msra.mxu0 %v5744
      %5848 = vmatprep.subr.mxu0 %v5748
      %5849 = vmatpush1.msra.mxu0 %v5747
      %5850 = vmatprep.subr.mxu0 %v5751
      %5851 = vmatpush1.msra.mxu0 %v5750
      %5852 = vmatprep.subr.mxu0 %v5754
      %5853 = vmatpush1.msra.mxu0 %v5753
      %5854 = vmatprep.subr.mxu0 %v5757
      %5855 = vmatpush1.msra.mxu0 %v5756
      %5856 = vmatprep.subr.mxu0 %v5760
      %5857 = vmatpush1.msra.mxu0 %v5759
      %5858 = vmatprep.subr.mxu0 %v5763
      %5859 = vmatpush1.msra.mxu0 %v5762
      %5860 = vmatprep.subr.mxu0 %v5766
      %5861 = vmatpush1.msra.mxu0 %v5765
      %5862 = vmatprep.subr.mxu0 %v5769
      %5863 = vmatpush1.msra.mxu0 %v5768
      %5864 = vmatprep.subr.mxu0 %v5772
      %5865 = vmatpush1.msra.mxu0 %v5771
      %5866 = vmatprep.subr.mxu0 %v5775
      %5867 = vmatpush1.msra.mxu0 %v5774
      %5868 = vmatprep.subr.mxu0 %v5778
      %5869 = vmatpush1.msra.mxu0 %v5777
      %5870 = vmatprep.subr.mxu0 %v5781
      %5871 = vmatpush1.msra.mxu0 %v5780
      %5872 = vmatprep.subr.mxu0 %v5784
      %5873 = vmatpush1.msra.mxu0 %v5783
      %5874 = vmatprep.subr.mxu0 %v5787
      %5875 = vmatpush1.msra.mxu0 %v5786
      %5876 = vmatprep.subr.mxu0 %v5790
      %5877 = vmatpush1.msra.mxu0 %v5789
      %5878 = vmatprep.subr.mxu0 %v5793
      %5879 = vmatpush1.msra.mxu0 %v5792
      %5880 = vmatprep.subr.mxu0 %v5796
      %5881 = vmatpush1.msra.mxu0 %v5795
      %5882 = vmatprep.mubr.f32.mxu0 %v4874
      %5883 = vmatmul.mubr.f32.gmra.mrb[0].mxu0 %v4873
      %v5884 = vpop.f32.mrb[0].mxu0
      %v5885 = vadd.f32 %v5813, %v5884
      %v5886 = vpop.f32.mrb[0].mxu0
      %v5887 = vadd.f32 %v5813, %v5886
      %5888 = vdwg.mxu0
      %5889 = vmatprep.subr.mxu0 %v5799
      %5890 = vmatpush1.msra.mxu0 %v5798
      %5891 = vmatprep.subr.mxu0 %v5802
      %5892 = vmatpush1.msra.mxu0 %v5801
      %5893 = vmatprep.subr.mxu0 %v5805
      %5894 = vmatpush1.msra.mxu0 %v5804
      %5895 = vmatprep.subr.mxu0 %v5808
      %5896 = vmatpush1.msra.mxu0 %v5807
      %5897 = vmatprep.subr.mxu0 0.0
      %5898 = vmatpush1.msra.mxu0 0.0
      %5899 = vmatprep.subr.mxu0 0.0
      %5900 = vmatpush1.msra.mxu0 0.0
      %5901 = vmatprep.subr.mxu0 0.0
      %5902 = vmatpush1.msra.mxu0 0.0
      %5903 = vmatprep.subr.mxu0 0.0
      %5904 = vmatpush1.msra.mxu0 0.0
      %5905 = vmatprep.subr.mxu0 0.0
      %5906 = vmatpush1.msra.mxu0 0.0
      %5907 = vmatprep.subr.mxu0 0.0
      %5908 = vmatpush1.msra.mxu0 0.0
      %5909 = vmatprep.subr.mxu0 0.0
      %5910 = vmatpush1.msra.mxu0 0.0
      %5911 = vmatprep.subr.mxu0 0.0
      %5912 = vmatpush1.msra.mxu0 0.0
      %5913 = vmatprep.subr.mxu0 0.0
      %5914 = vmatpush1.msra.mxu0 0.0
      %5915 = vmatprep.subr.mxu0 0.0
      %5916 = vmatpush1.msra.mxu0 0.0
      %5917 = vmatprep.subr.mxu0 0.0
      %5918 = vmatpush1.msra.mxu0 0.0
      %5919 = vmatprep.subr.mxu0 0.0
      %5920 = vmatpush1.msra.mxu0 0.0
      %5921 = vmatprep.subr.mxu0 0.0
      %5922 = vmatpush1.msra.mxu0 0.0
      %5923 = vmatprep.subr.mxu0 0.0
      %5924 = vmatpush1.msra.mxu0 0.0
      %5925 = vmatprep.subr.mxu0 0.0
      %5926 = vmatpush1.msra.mxu0 0.0
      %5927 = vmatprep.subr.mxu0 0.0
      %5928 = vmatpush1.msra.mxu0 0.0
      %5929 = vmatprep.subr.mxu0 0.0
      %5930 = vmatpush1.msra.mxu0 0.0
      %5931 = vmatprep.subr.mxu0 0.0
      %5932 = vmatpush1.msra.mxu0 0.0
      %5933 = vmatprep.subr.mxu0 0.0
      %5934 = vmatpush1.msra.mxu0 0.0
      %5935 = vmatprep.subr.mxu0 0.0
      %5936 = vmatpush1.msra.mxu0 0.0
      %5937 = vmatprep.subr.mxu0 0.0
      %5938 = vmatpush1.msra.mxu0 0.0
      %5939 = vmatprep.subr.mxu0 0.0
      %5940 = vmatpush1.msra.mxu0 0.0
      %5941 = vmatprep.subr.mxu0 0.0
      %5942 = vmatpush1.msra.mxu0 0.0
      %5943 = vmatprep.subr.mxu0 0.0
      %5944 = vmatpush1.msra.mxu0 0.0
      %5945 = vmatprep.subr.mxu0 0.0
      %5946 = vmatpush1.msra.mxu0 0.0
      %5947 = vmatprep.subr.mxu0 0.0
      %5948 = vmatpush1.msra.mxu0 0.0
      %5949 = vmatprep.subr.mxu0 0.0
      %5950 = vmatpush1.msra.mxu0 0.0
      %5951 = vmatprep.subr.mxu0 0.0
      %5952 = vmatpush1.msra.mxu0 0.0
      %5953 = vmatprep.mubr.f32.mxu0 0.0
      %5954 = vmatmul.mubr.f32.gmra.mrb[0].mxu0 %v5816
      %v5955 = vpop.f32.mrb[0].mxu0
      %v5956 = vadd.f32 %v5885, %v5955
      %v5957 = vpop.f32.mrb[0].mxu0
      %v5958 = vadd.f32 %v5887, %v5957
      %5959 = vdwg.mxu0
      %5960 = vmatprep.subr.mxu0 0.0
      %5961 = vmatpush1.msra.mxu0 %v5704
      %5962 = vmatprep.subr.mxu0 0.0
      %5963 = vmatpush1.msra.mxu0 %v5707
      %5964 = vmatprep.subr.mxu0 0.0
      %5965 = vmatpush1.msra.mxu0 %v5710
      %5966 = vmatprep.subr.mxu0 0.0
      %5967 = vmatpush1.msra.mxu0 %v5713
      %5968 = vmatprep.subr.mxu0 0.0
      %5969 = vmatpush1.msra.mxu0 %v5716
      %5970 = vmatprep.subr.mxu0 0.0
      %5971 = vmatpush1.msra.mxu0 %v5719
      %5972 = vmatprep.subr.mxu0 0.0
      %5973 = vmatpush1.msra.mxu0 %v5722
      %5974 = vmatprep.subr.mxu0 0.0
      %5975 = vmatpush1.msra.mxu0 %v5725
      %5976 = vmatprep.subr.mxu0 0.0
      %5977 = vmatpush1.msra.mxu0 %v5728
      %5978 = vmatprep.subr.mxu0 0.0
      %5979 = vmatpush1.msra.mxu0 %v5731
      %5980 = vmatprep.subr.mxu0 0.0
      %5981 = vmatpush1.msra.mxu0 %v5734
      %5982 = vmatprep.subr.mxu0 0.0
      %5983 = vmatpush1.msra.mxu0 %v5737
      %5984 = vmatprep.subr.mxu0 0.0
      %5985 = vmatpush1.msra.mxu0 %v5740
      %5986 = vmatprep.subr.mxu0 0.0
      %5987 = vmatpush1.msra.mxu0 %v5743
      %5988 = vmatprep.subr.mxu0 0.0
      %5989 = vmatpush1.msra.mxu0 %v5746
      %5990 = vmatprep.subr.mxu0 0.0
      %5991 = vmatpush1.msra.mxu0 %v5749
      %5992 = vmatprep.subr.mxu0 0.0
      %5993 = vmatpush1.msra.mxu0 %v5752
      %5994 = vmatprep.subr.mxu0 0.0
      %5995 = vmatpush1.msra.mxu0 %v5755
      %5996 = vmatprep.subr.mxu0 0.0
      %5997 = vmatpush1.msra.mxu0 %v5758
      %5998 = vmatprep.subr.mxu0 0.0
      %5999 = vmatpush1.msra.mxu0 %v5761
      %6000 = vmatprep.subr.mxu0 0.0
      %6001 = vmatpush1.msra.mxu0 %v5764
      %6002 = vmatprep.subr.mxu0 0.0
      %6003 = vmatpush1.msra.mxu0 %v5767
      %6004 = vmatprep.subr.mxu0 0.0
      %6005 = vmatpush1.msra.mxu0 %v5770
      %6006 = vmatprep.subr.mxu0 0.0
      %6007 = vmatpush1.msra.mxu0 %v5773
      %6008 = vmatprep.subr.mxu0 0.0
      %6009 = vmatpush1.msra.mxu0 %v5776
      %6010 = vmatprep.subr.mxu0 0.0
      %6011 = vmatpush1.msra.mxu0 %v5779
      %6012 = vmatprep.subr.mxu0 0.0
      %6013 = vmatpush1.msra.mxu0 %v5782
      %6014 = vmatprep.subr.mxu0 0.0
      %6015 = vmatpush1.msra.mxu0 %v5785
      %6016 = vmatprep.subr.mxu0 0.0
      %6017 = vmatpush1.msra.mxu0 %v5788
      %6018 = vmatprep.subr.mxu0 0.0
      %6019 = vmatpush1.msra.mxu0 %v5791
      %6020 = vmatprep.subr.mxu0 0.0
      %6021 = vmatpush1.msra.mxu0 %v5794
      %6022 = vmatprep.subr.mxu0 0.0
      %6023 = vmatpush1.msra.mxu0 %v5797
      %6024 = vmatprep.mubr.f32.mxu0 %v4874
      %6025 = vmatmul.mubr.f32.gmra.mrb[0].mxu0 %v4873
      %v6026 = vpop.f32.mrb[0].mxu0
      %v6027 = vadd.f32 %v5813, %v6026
      %v6028 = vpop.f32.mrb[0].mxu0
      %6029 = vdwg.mxu0
      %6030 = vmatprep.subr.mxu0 0.0
      %6031 = vmatpush1.msra.mxu0 %v5800
      %6032 = vmatprep.subr.mxu0 0.0
      %6033 = vmatpush1.msra.mxu0 %v5803
      %6034 = vmatprep.subr.mxu0 0.0
      %6035 = vmatpush1.msra.mxu0 %v5806
      %6036 = vmatprep.subr.mxu0 0.0
      %6037 = vmatpush1.msra.mxu0 %v5809
      %6038 = vmatprep.subr.mxu0 0.0
      %6039 = vmatpush1.msra.mxu0 0.0
      %6040 = vmatprep.subr.mxu0 0.0
      %6041 = vmatpush1.msra.mxu0 0.0
      %6042 = vmatprep.subr.mxu0 0.0
      %6043 = vmatpush1.msra.mxu0 0.0
      %6044 = vmatprep.subr.mxu0 0.0
      %6045 = vmatpush1.msra.mxu0 0.0
      %6046 = vmatprep.subr.mxu0 0.0
      %6047 = vmatpush1.msra.mxu0 0.0
      %6048 = vmatprep.subr.mxu0 0.0
      %6049 = vmatpush1.msra.mxu0 0.0
      %6050 = vmatprep.subr.mxu0 0.0
      %6051 = vmatpush1.msra.mxu0 0.0
      %6052 = vmatprep.subr.mxu0 0.0
      %6053 = vmatpush1.msra.mxu0 0.0
      %6054 = vmatprep.subr.mxu0 0.0
      %6055 = vmatpush1.msra.mxu0 0.0
      %6056 = vmatprep.subr.mxu0 0.0
      %6057 = vmatpush1.msra.mxu0 0.0
      %6058 = vmatprep.subr.mxu0 0.0
      %6059 = vmatpush1.msra.mxu0 0.0
      %6060 = vmatprep.subr.mxu0 0.0
      %6061 = vmatpush1.msra.mxu0 0.0
      %6062 = vmatprep.subr.mxu0 0.0
      %6063 = vmatpush1.msra.mxu0 0.0
      %6064 = vmatprep.subr.mxu0 0.0
      %6065 = vmatpush1.msra.mxu0 0.0
      %6066 = vmatprep.subr.mxu0 0.0
      %6067 = vmatpush1.msra.mxu0 0.0
      %6068 = vmatprep.subr.mxu0 0.0
      %6069 = vmatpush1.msra.mxu0 0.0
      %6070 = vmatprep.subr.mxu0 0.0
      %6071 = vmatpush1.msra.mxu0 0.0
      %6072 = vmatprep.subr.mxu0 0.0
      %6073 = vmatpush1.msra.mxu0 0.0
      %6074 = vmatprep.subr.mxu0 0.0
      %6075 = vmatpush1.msra.mxu0 0.0
      %6076 = vmatprep.subr.mxu0 0.0
      %6077 = vmatpush1.msra.mxu0 0.0
      %6078 = vmatprep.subr.mxu0 0.0
      %6079 = vmatpush1.msra.mxu0 0.0
      %6080 = vmatprep.subr.mxu0 0.0
      %6081 = vmatpush1.msra.mxu0 0.0
      %6082 = vmatprep.subr.mxu0 0.0
      %6083 = vmatpush1.msra.mxu0 0.0
      %6084 = vmatprep.subr.mxu0 0.0
      %6085 = vmatpush1.msra.mxu0 0.0
      %6086 = vmatprep.subr.mxu0 0.0
      %6087 = vmatpush1.msra.mxu0 0.0
      %6088 = vmatprep.subr.mxu0 0.0
      %6089 = vmatpush1.msra.mxu0 0.0
      %6090 = vmatprep.subr.mxu0 0.0
      %6091 = vmatpush1.msra.mxu0 0.0
      %6092 = vmatprep.subr.mxu0 0.0
      %6093 = vmatpush1.msra.mxu0 0.0
      %6094 = vmatprep.mubr.f32.mxu0 0.0
      %6095 = vmatmul.mubr.f32.gmra.mrb[0].mxu0 %v5816
      %v6096 = vpop.f32.mrb[0].mxu0
      %v6097 = vadd.f32 %v6027, %v6096
      %v6098 = vpop.f32.mrb[0].mxu0
      %6099 = vdwg.mxu0
      %6100 = vst [vmem:[%s251] sm:$0xff] %v5956
      %6101 = vst [vmem:[%s251 + $0x8] sm:$0xff] %v5958
      %6102 = vst [vmem:[%s251 + $0x10] sm:$0xff] %v6097
      %p6103 = scmp.lt.s32.totalorder %s17, 1
      %s6104 = scalar_select %p6103, %s17, 1
      %s6105 = smul.addr %s6104, 3
      %s6106 = smul.addr %s6105, 8
      %s6107 = scalar_lea.vmem %s6, %s6106
      // Predicated region
      $region45: #{spectral_operator_cnn_forward.1} parent=43 // pred_check
        %p6108 = pneg %p166
      $region46: #{spectral_operator_cnn_forward.1} parent=43 // pred_check_branch
        %6110 = sbr.rel (%p6108) target = $region48
      $region47: #{spectral_operator_cnn_forward.1} parent=43 // pred_region
        _
      $region48: #{spectral_operator_cnn_forward.1} parent=43 // pred_fallthru
        _
    $region44: #{spectral_operator_cnn_forward.1} parent=5 // pred_fallthru
      _
    %p6111 = scmp.le.s32.totalorder 2, %s12
    // Predicated region
    $region49: #{spectral_operator_cnn_forward.1} parent=5 // pred_check
      %p6112 = pneg %p6111
    $region50: #{spectral_operator_cnn_forward.1} parent=5 // pred_check_branch
      %6114 = sbr.rel (%p6112) target = $region52
    $region51: #{spectral_operator_cnn_forward.1} parent=5 // pred_region
      %s6115 = ssub.s32 %s12, 2
      // Predicated region
      $region53: #{spectral_operator_cnn_forward.1} parent=51 // pred_check
        %p6116 = pneg %p172
      $region54: #{spectral_operator_cnn_forward.1} parent=51 // pred_check_branch
        %6118 = sbr.rel (%p6116) target = $region56
      $region55: #{spectral_operator_cnn_forward.1} parent=51 // pred_region
        %p6119 = scmp.lt.s32.totalorder %s18, 1
        %s6120 = scalar_select %p6119, %s18, 1
        %s6121 = smul.addr %s6120, 3
        %s6122 = smul.addr %s6121, 8
        %s6123 = scalar_lea.vmem %s6, %s6122
      $region56: #{spectral_operator_cnn_forward.1} parent=51 // pred_fallthru
        _
    $region52: #{spectral_operator_cnn_forward.1} parent=5 // pred_fallthru
      _
  $region6: #{spectral_operator_cnn_forward.1} parent=0 // loop_footer
    %s16 = sadd.s32 1, %s12
  $region7: #{spectral_operator_cnn_forward.1} parent=0 // loop_footer_branch
    %11 = sbr.rel target = $region3
  $region8: #{spectral_operator_cnn_forward.1} parent=0 // loop_exit
    _

</llo_original>
